<compile_context>
chip_gen: v7x
topology: tpu7x:2x2x1
jax: 0.10.0
libtpu: 0.0.40
codegen_flags: <defaults>
</compile_context>

<pallas_src>
import functools

import jax
import jax.numpy as jnp
from jax.experimental import pallas as pl
from jax.experimental.pallas import tpu as pltpu


# ---------------------------------------------------------------------------
# small math helpers (used both inside the Pallas kernel and in the JAX reference)
# ---------------------------------------------------------------------------
def _silu(x):
    return x * jax.nn.sigmoid(x)


def _mxdot(a, b):
    """MXU matmul: bf16 operands, f32 accumulation."""
    return jnp.dot(a.astype(jnp.bfloat16), b.astype(jnp.bfloat16),
                   preferred_element_type=jnp.float32)


def _small_dot(x, w):
    """x @ w for tiny contraction dims (K < 8): rank-1 VPU accumulation, stays f32."""
    acc = x[:, 0:1] * w[0:1, :]
    for k in range(1, x.shape[1]):
        acc = acc + x[:, k:k + 1] * w[k:k + 1, :]
    return acc


# ---------------------------------------------------------------------------
# The full forward-pass math.  Operates on plain arrays, so it can be called
# both from inside the fused Pallas kernel (on loaded refs) and as a pure-JAX
# reference for validation.
# ---------------------------------------------------------------------------
def _egnn_math(h0, radial, edge_attr, node_mask, edge_mask,
               row_e1, col_e1, row_1e,
               emb_w, emb_b,
               ew1_src, ew1_dst, ew1_rad, ew1_ea, eb1, ew2, eb2,
               nw1_h, nw1_agg, nw1_h0, nb1, nw2, nb2,
               e1w1, e1b1, e1w2, e1b2,
               f1w1, f1b1, f1w2, f1b2,
               e2w1, e2b1, e2w2, e2b2,
               f2w1, f2b1, f2w2, f2b2,
               *, n_nodes):
    n_total = h0.shape[0]
    n_edges = radial.shape[0]
    n_layers = ew1_src.shape[0]
    batch = n_total // n_nodes

    # 0/1 selection matrices (built once, stay on-chip, contracted on the MXU)
    e_iota = jax.lax.broadcasted_iota(jnp.int32, (n_edges, n_total), 1)
    gat_row = (e_iota == row_e1).astype(jnp.float32)          # (E, N): picks h[row[e]]
    gat_col = (e_iota == col_e1).astype(jnp.float32)          # (E, N): picks h[col[e]]
    n_iota = jax.lax.broadcasted_iota(jnp.int32, (n_total, n_edges), 0)
    scat_row = (n_iota == row_1e).astype(jnp.float32)         # (N, E): segment-sum by row

    n_idx = jax.lax.broadcasted_iota(jnp.int32, (batch, n_total), 1)
    b_idx = jax.lax.broadcasted_iota(jnp.int32, (batch, n_total), 0)
    pool = ((n_idx >= b_idx * n_nodes)
            & (n_idx < (b_idx + 1) * n_nodes)).astype(jnp.float32)   # (B, N) per-graph sum

    # h = embedding(h0)                                  (tiny K=in_node_nf -> VPU)
    h = _small_dot(h0, emb_w) + emb_b

    for l in range(n_layers):
        # ---- edge_model: silu(silu([h_row|h_col|radial|edge_attr]@W1 + b1)@W2 + b2) * edge_mask
        h_row = _mxdot(gat_row, h)
        h_col = _mxdot(gat_col, h)
        m = (_mxdot(h_row, ew1_src[l]) + _mxdot(h_col, ew1_dst[l])
             + radial * ew1_rad[l] + _small_dot(edge_attr, ew1_ea[l]) + eb1[l])
        edge_feat = _silu(_mxdot(_silu(m), ew2[l]) + eb2[l]) * edge_mask

        # ---- node_model: h = h + ( [h|agg|h0]@W1 + b1 -> silu -> @W2 + b2 )
        agg = _mxdot(scat_row, edge_feat)                     # unsorted_segment_sum
        nm = (_mxdot(h, nw1_h[l]) + _mxdot(agg, nw1_agg[l])
              + _small_dot(h0, nw1_h0[l]) + nb1[l])
        h = h + _mxdot(_silu(nm), nw2[l]) + nb2[l]
        # (coordinates are NOT updated in E_GCL_mask.forward)

    # ---- energy head: energy_2( sum_nodes( energy_1(h) * node_mask ) )
    e = (_mxdot(_silu(_mxdot(h, e1w1) + e1b1), e1w2) + e1b2) * node_mask
    e_sum = _mxdot(pool, e)                                   # (B, H) per-graph node sum
    energy = _mxdot(_silu(_mxdot(e_sum, e2w1) + e2b1), e2w2) + e2b2   # (B, 1)

    # ---- force head: force_2( force_1(h) * node_mask )  (applied per node)
    f = (_mxdot(_silu(_mxdot(h, f1w1) + f1b1), f1w2) + f1b2) * node_mask
    force = _mxdot(_silu(_mxdot(f, f2w1) + f2b1), f2w2) + f2b2        # (N, 3)
    return energy, force


# ---------------------------------------------------------------------------
# Fused Pallas kernel: one invocation, all operands resident in VMEM.
# ---------------------------------------------------------------------------
def _egnn_fused_kernel(*refs, n_nodes):
    energy_ref, force_ref = refs[-2], refs[-1]
    energy, force = _egnn_math(*(r[...] for r in refs[:-2]), n_nodes=n_nodes)
    energy_ref[...] = energy
    force_ref[...] = force


# ---------------------------------------------------------------------------
# Host-side input preparation: radial glue, W1 row-splitting, per-layer stacking,
# bf16 casting of MXU weights.
# ---------------------------------------------------------------------------
def _prepare_inputs(params, h0, x, edges, edge_attr, node_mask, edge_mask):
    row, col = edges
    n_edges = row.shape[0]
    hidden = params["embedding"][0].shape[1]

    # coord2radial (tiny 3-wide geometry glue)
    coord_diff = x[row] - x[col]
    radial = jnp.sum(coord_diff * coord_diff, axis=1, keepdims=True)

    row = row.astype(jnp.int32)
    col = col.astype(jnp.int32)
    row_e1 = row.reshape(n_edges, 1)
    col_e1 = col.reshape(n_edges, 1)
    row_1e = row.reshape(1, n_edges)

    def stack(name):
        return jnp.stack([p[name] for p in params["gcl"]])

    bf16 = jnp.bfloat16
    ew1 = stack("edge_w1")                      # (L, 2H + 1 + edge_nf, H)
    nw1 = stack("node_w1")                      # (L, 2H + node_nf, H)
    emb_w, emb_b = params["embedding"]

    inputs = [
        h0, radial, edge_attr, node_mask, edge_mask, row_e1, col_e1, row_1e,
        emb_w, emb_b.reshape(1, -1),
        ew1[:, :hidden, :].astype(bf16),              # W1 rows for h[row]   (MXU)
        ew1[:, hidden:2 * hidden, :].astype(bf16),    # W1 rows for h[col]   (MXU)
        ew1[:, 2 * hidden:2 * hidden + 1, :],         # W1 row  for radial   (VPU, f32)
        ew1[:, 2 * hidden + 1:, :],                   # W1 rows for edge_attr(VPU, f32)
        stack("edge_b1")[:, None, :],
        stack("edge_w2").astype(bf16),
        stack("edge_b2")[:, None, :],
        nw1[:, :hidden, :].astype(bf16),              # W1 rows for h        (MXU)
        nw1[:, hidden:2 * hidden, :].astype(bf16),    # W1 rows for agg      (MXU)
        nw1[:, 2 * hidden:, :],                       # W1 rows for h0       (VPU, f32)
        stack("node_b1")[:, None, :],
        stack("node_w2").astype(bf16),
        stack("node_b2")[:, None, :],
    ]
    for name in ("energy_1", "force_1", "energy_2", "force_2"):
        w1, b1, w2, b2 = params[name]
        inputs += [w1.astype(bf16), b1.reshape(1, -1), w2.astype(bf16), b2.reshape(1, -1)]
    return inputs


# ---------------------------------------------------------------------------
# Public forward (Pallas) and pure-JAX reference (identical math).
# ---------------------------------------------------------------------------
@functools.partial(jax.jit, static_argnums=(7,))
def two_headed_egnn_forward(params, h0, x, edges, edge_attr, node_mask, edge_mask, n_nodes):
    n_total = h0.shape[0]
    batch = n_total // n_nodes
    inputs = _prepare_inputs(params, h0, x, edges, edge_attr, node_mask, edge_mask)

    def vmem():
        return pl.BlockSpec(memory_space=pltpu.MemorySpace.VMEM)

    energy, force = pl.pallas_call(
        functools.partial(_egnn_fused_kernel, n_nodes=n_nodes),
        out_shape=(jax.ShapeDtypeStruct((batch, 1), jnp.float32),
                   jax.ShapeDtypeStruct((n_total, 3), jnp.float32)),
        in_specs=[vmem() for _ in inputs],
        out_specs=(vmem(), vmem()),
        compiler_params=pltpu.CompilerParams(vmem_limit_bytes=32 * 1024 * 1024),
    )(*inputs)

    pred_energy = energy[:, 0]                    # torch .squeeze(1)
    pred_force = force.reshape(batch, n_nodes, 3)
    if n_nodes == 1:                              # torch .squeeze(1)
        pred_force = pred_force[:, 0, :]
    return {"energy": pred_energy, "force": pred_force}


def two_headed_egnn_reference(params, h0, x, edges, edge_attr, node_mask, edge_mask, n_nodes):
    n_total = h0.shape[0]
    batch = n_total // n_nodes
    inputs = _prepare_inputs(params, h0, x, edges, edge_attr, node_mask, edge_mask)
    energy, force = _egnn_math(*inputs, n_nodes=n_nodes)
    pred_energy = energy[:, 0]
    pred_force = force.reshape(batch, n_nodes, 3)
    if n_nodes == 1:
        pred_force = pred_force[:, 0, :]
    return {"energy": pred_energy, "force": pred_force}


# ---------------------------------------------------------------------------
# Parameter init (deterministic, PyTorch-Linear-style uniform(-1/sqrt(fan_in), ...)).
# Weights stored as [in, out] so the kernel computes x @ W (== torch's x @ W.T).
# ---------------------------------------------------------------------------
def init_params(key, in_node_nf, in_edge_nf, hidden_nf, n_layers):
    keys = iter(jax.random.split(key, 8 + 8 * n_layers + 16))

    def lin(din, dout):
        k1, k2 = jax.random.split(next(keys))
        bound = 1.0 / (din ** 0.5)
        w = jax.random.uniform(k1, (din, dout), jnp.float32, -bound, bound)
        b = jax.random.uniform(k2, (dout,), jnp.float32, -bound, bound)
        return w, b

    params = {"embedding": lin(in_node_nf, hidden_nf), "gcl": []}
    for _ in range(n_layers):
        ew1, eb1 = lin(2 * hidden_nf + 1 + in_edge_nf, hidden_nf)      # edge_mlp[0]
        ew2, eb2 = lin(hidden_nf, hidden_nf)                           # edge_mlp[2]
        nw1, nb1 = lin(hidden_nf + hidden_nf + in_node_nf, hidden_nf)  # node_mlp[0]
        nw2, nb2 = lin(hidden_nf, hidden_nf)                           # node_mlp[2]
        params["gcl"].append(
            dict(edge_w1=ew1, edge_b1=eb1, edge_w2=ew2, edge_b2=eb2,
                 node_w1=nw1, node_b1=nb1, node_w2=nw2, node_b2=nb2))

    def head(d_last):
        w1, b1 = lin(hidden_nf, hidden_nf)
        w2, b2 = lin(hidden_nf, d_last)
        return (w1, b1, w2, b2)

    params["energy_1"] = head(hidden_nf)
    params["force_1"] = head(hidden_nf)
    params["energy_2"] = head(1)
    params["force_2"] = head(3)
    return params


# ---------------------------------------------------------------------------
if __name__ == "__main__":
    key = jax.random.PRNGKey(0)
    in_node_nf, in_edge_nf, hidden_nf = 5, 2, 32
    n_layers = 4
    batch, n_nodes = 2, 8
    n_total = batch * n_nodes

    kp, kh, kx, ke = jax.random.split(key, 4)
    params = init_params(kp, in_node_nf, in_edge_nf, hidden_nf, n_layers)

    h0 = jax.random.normal(kh, (n_total, in_node_nf), jnp.float32)
    x = jax.random.normal(kx, (n_total, 3), jnp.float32)

    # fully-connected edges within each graph (no self loops)
    rows, cols = [], []
    for b in range(batch):
        for i in range(n_nodes):
            for j in range(n_nodes):
                if i != j:
                    rows.append(b * n_nodes + i)
                    cols.append(b * n_nodes + j)
    row = jnp.array(rows, dtype=jnp.int32)
    col = jnp.array(cols, dtype=jnp.int32)
    n_edges = row.shape[0]
    edge_attr = jax.random.normal(ke, (n_edges, in_edge_nf), jnp.float32)

    # node_mask: graph 0 fully present, graph 1 has its last 2 nodes masked out
    node_valid = jnp.array([1.0] * n_nodes + [1.0] * (n_nodes - 2) + [0.0] * 2, jnp.float32)
    node_mask = node_valid.reshape(n_total, 1)
    edge_mask = (node_valid[row] * node_valid[col]).reshape(n_edges, 1)

    out = two_headed_egnn_forward(
        params, h0, x, (row, col), edge_attr, node_mask, edge_mask, n_nodes)
    jax.block_until_ready(out)

    assert out["energy"].shape == (batch,)
    assert out["force"].shape == (batch, n_nodes, 3)

    # validate the Pallas kernel against a pure-JAX run of the identical math
    ref = two_headed_egnn_reference(
        params, h0, x, (row, col), edge_attr, node_mask, edge_mask, n_nodes)
    assert jnp.allclose(out["energy"], ref["energy"], rtol=1e-2, atol=1e-2)
    assert jnp.allclose(out["force"], ref["force"], rtol=1e-2, atol=1e-2)

    print("KERNEL_OK")
</pallas_src>

<mosaic_0001>
module attributes {stable_mosaic.version = 11 : i64} {
  func.func @_egnn_fused_kernel(%arg0: memref<16x5xf32, #tpu.memory_space<vmem>>, %arg1: memref<112x1xf32, #tpu.memory_space<vmem>>, %arg2: memref<112x2xf32, #tpu.memory_space<vmem>>, %arg3: memref<16x1xf32, #tpu.memory_space<vmem>>, %arg4: memref<112x1xf32, #tpu.memory_space<vmem>>, %arg5: memref<112x1xi32, #tpu.memory_space<vmem>>, %arg6: memref<112x1xi32, #tpu.memory_space<vmem>>, %arg7: memref<1x112xi32, #tpu.memory_space<vmem>>, %arg8: memref<5x32xf32, #tpu.memory_space<vmem>>, %arg9: memref<1x32xf32, #tpu.memory_space<vmem>>, %arg10: memref<4x32x32xbf16, #tpu.memory_space<vmem>>, %arg11: memref<4x32x32xbf16, #tpu.memory_space<vmem>>, %arg12: memref<4x1x32xf32, #tpu.memory_space<vmem>>, %arg13: memref<4x2x32xf32, #tpu.memory_space<vmem>>, %arg14: memref<4x1x32xf32, #tpu.memory_space<vmem>>, %arg15: memref<4x32x32xbf16, #tpu.memory_space<vmem>>, %arg16: memref<4x1x32xf32, #tpu.memory_space<vmem>>, %arg17: memref<4x32x32xbf16, #tpu.memory_space<vmem>>, %arg18: memref<4x32x32xbf16, #tpu.memory_space<vmem>>, %arg19: memref<4x5x32xf32, #tpu.memory_space<vmem>>, %arg20: memref<4x1x32xf32, #tpu.memory_space<vmem>>, %arg21: memref<4x32x32xbf16, #tpu.memory_space<vmem>>, %arg22: memref<4x1x32xf32, #tpu.memory_space<vmem>>, %arg23: memref<32x32xbf16, #tpu.memory_space<vmem>>, %arg24: memref<1x32xf32, #tpu.memory_space<vmem>>, %arg25: memref<32x32xbf16, #tpu.memory_space<vmem>>, %arg26: memref<1x32xf32, #tpu.memory_space<vmem>>, %arg27: memref<32x32xbf16, #tpu.memory_space<vmem>>, %arg28: memref<1x32xf32, #tpu.memory_space<vmem>>, %arg29: memref<32x32xbf16, #tpu.memory_space<vmem>>, %arg30: memref<1x32xf32, #tpu.memory_space<vmem>>, %arg31: memref<32x32xbf16, #tpu.memory_space<vmem>>, %arg32: memref<1x32xf32, #tpu.memory_space<vmem>>, %arg33: memref<32x1xbf16, #tpu.memory_space<vmem>>, %arg34: memref<1x1xf32, #tpu.memory_space<vmem>>, %arg35: memref<32x32xbf16, #tpu.memory_space<vmem>>, %arg36: memref<1x32xf32, #tpu.memory_space<vmem>>, %arg37: memref<32x3xbf16, #tpu.memory_space<vmem>>, %arg38: memref<1x3xf32, #tpu.memory_space<vmem>>, %arg39: memref<2x1xf32, #tpu.memory_space<vmem>>, %arg40: memref<16x3xf32, #tpu.memory_space<vmem>>) attributes {dimension_semantics = [], scalar_prefetch = 0 : i64, scratch_operands = 0 : i64, tpu.core_type = #tpu.core_type<tc>} {
    %c0 = arith.constant 0 : index
    %c0_0 = arith.constant 0 : index
    %0 = vector.load %arg0[%c0, %c0_0] : memref<16x5xf32, #tpu.memory_space<vmem>>, vector<16x5xf32>
    %c0_1 = arith.constant 0 : index
    %c0_2 = arith.constant 0 : index
    %1 = vector.load %arg1[%c0_1, %c0_2] : memref<112x1xf32, #tpu.memory_space<vmem>>, vector<112x1xf32>
    %c0_3 = arith.constant 0 : index
    %c0_4 = arith.constant 0 : index
    %2 = vector.load %arg2[%c0_3, %c0_4] : memref<112x2xf32, #tpu.memory_space<vmem>>, vector<112x2xf32>
    %c0_5 = arith.constant 0 : index
    %c0_6 = arith.constant 0 : index
    %3 = vector.load %arg3[%c0_5, %c0_6] : memref<16x1xf32, #tpu.memory_space<vmem>>, vector<16x1xf32>
    %c0_7 = arith.constant 0 : index
    %c0_8 = arith.constant 0 : index
    %4 = vector.load %arg4[%c0_7, %c0_8] : memref<112x1xf32, #tpu.memory_space<vmem>>, vector<112x1xf32>
    %c0_9 = arith.constant 0 : index
    %c0_10 = arith.constant 0 : index
    %5 = vector.load %arg5[%c0_9, %c0_10] : memref<112x1xi32, #tpu.memory_space<vmem>>, vector<112x1xi32>
    %c0_11 = arith.constant 0 : index
    %c0_12 = arith.constant 0 : index
    %6 = vector.load %arg6[%c0_11, %c0_12] : memref<112x1xi32, #tpu.memory_space<vmem>>, vector<112x1xi32>
    %c0_13 = arith.constant 0 : index
    %c0_14 = arith.constant 0 : index
    %7 = vector.load %arg7[%c0_13, %c0_14] : memref<1x112xi32, #tpu.memory_space<vmem>>, vector<1x112xi32>
    %c0_15 = arith.constant 0 : index
    %c0_16 = arith.constant 0 : index
    %8 = vector.load %arg8[%c0_15, %c0_16] : memref<5x32xf32, #tpu.memory_space<vmem>>, vector<5x32xf32>
    %c0_17 = arith.constant 0 : index
    %c0_18 = arith.constant 0 : index
    %9 = vector.load %arg9[%c0_17, %c0_18] : memref<1x32xf32, #tpu.memory_space<vmem>>, vector<1x32xf32>
    %c0_19 = arith.constant 0 : index
    %c0_20 = arith.constant 0 : index
    %c0_21 = arith.constant 0 : index
    %10 = vector.load %arg10[%c0_19, %c0_20, %c0_21] : memref<4x32x32xbf16, #tpu.memory_space<vmem>>, vector<4x32x32xbf16>
    %c0_22 = arith.constant 0 : index
    %c0_23 = arith.constant 0 : index
    %c0_24 = arith.constant 0 : index
    %11 = vector.load %arg11[%c0_22, %c0_23, %c0_24] : memref<4x32x32xbf16, #tpu.memory_space<vmem>>, vector<4x32x32xbf16>
    %c0_25 = arith.constant 0 : index
    %c0_26 = arith.constant 0 : index
    %c0_27 = arith.constant 0 : index
    %12 = vector.load %arg12[%c0_25, %c0_26, %c0_27] : memref<4x1x32xf32, #tpu.memory_space<vmem>>, vector<4x1x32xf32>
    %c0_28 = arith.constant 0 : index
    %c0_29 = arith.constant 0 : index
    %c0_30 = arith.constant 0 : index
    %13 = vector.load %arg13[%c0_28, %c0_29, %c0_30] : memref<4x2x32xf32, #tpu.memory_space<vmem>>, vector<4x2x32xf32>
    %c0_31 = arith.constant 0 : index
    %c0_32 = arith.constant 0 : index
    %c0_33 = arith.constant 0 : index
    %14 = vector.load %arg14[%c0_31, %c0_32, %c0_33] : memref<4x1x32xf32, #tpu.memory_space<vmem>>, vector<4x1x32xf32>
    %c0_34 = arith.constant 0 : index
    %c0_35 = arith.constant 0 : index
    %c0_36 = arith.constant 0 : index
    %15 = vector.load %arg15[%c0_34, %c0_35, %c0_36] : memref<4x32x32xbf16, #tpu.memory_space<vmem>>, vector<4x32x32xbf16>
    %c0_37 = arith.constant 0 : index
    %c0_38 = arith.constant 0 : index
    %c0_39 = arith.constant 0 : index
    %16 = vector.load %arg16[%c0_37, %c0_38, %c0_39] : memref<4x1x32xf32, #tpu.memory_space<vmem>>, vector<4x1x32xf32>
    %c0_40 = arith.constant 0 : index
    %c0_41 = arith.constant 0 : index
    %c0_42 = arith.constant 0 : index
    %17 = vector.load %arg17[%c0_40, %c0_41, %c0_42] : memref<4x32x32xbf16, #tpu.memory_space<vmem>>, vector<4x32x32xbf16>
    %c0_43 = arith.constant 0 : index
    %c0_44 = arith.constant 0 : index
    %c0_45 = arith.constant 0 : index
    %18 = vector.load %arg18[%c0_43, %c0_44, %c0_45] : memref<4x32x32xbf16, #tpu.memory_space<vmem>>, vector<4x32x32xbf16>
    %c0_46 = arith.constant 0 : index
    %c0_47 = arith.constant 0 : index
    %c0_48 = arith.constant 0 : index
    %19 = vector.load %arg19[%c0_46, %c0_47, %c0_48] : memref<4x5x32xf32, #tpu.memory_space<vmem>>, vector<4x5x32xf32>
    %c0_49 = arith.constant 0 : index
    %c0_50 = arith.constant 0 : index
    %c0_51 = arith.constant 0 : index
    %20 = vector.load %arg20[%c0_49, %c0_50, %c0_51] : memref<4x1x32xf32, #tpu.memory_space<vmem>>, vector<4x1x32xf32>
    %c0_52 = arith.constant 0 : index
    %c0_53 = arith.constant 0 : index
    %c0_54 = arith.constant 0 : index
    %21 = vector.load %arg21[%c0_52, %c0_53, %c0_54] : memref<4x32x32xbf16, #tpu.memory_space<vmem>>, vector<4x32x32xbf16>
    %c0_55 = arith.constant 0 : index
    %c0_56 = arith.constant 0 : index
    %c0_57 = arith.constant 0 : index
    %22 = vector.load %arg22[%c0_55, %c0_56, %c0_57] : memref<4x1x32xf32, #tpu.memory_space<vmem>>, vector<4x1x32xf32>
    %c0_58 = arith.constant 0 : index
    %c0_59 = arith.constant 0 : index
    %23 = vector.load %arg23[%c0_58, %c0_59] : memref<32x32xbf16, #tpu.memory_space<vmem>>, vector<32x32xbf16>
    %c0_60 = arith.constant 0 : index
    %c0_61 = arith.constant 0 : index
    %24 = vector.load %arg24[%c0_60, %c0_61] : memref<1x32xf32, #tpu.memory_space<vmem>>, vector<1x32xf32>
    %c0_62 = arith.constant 0 : index
    %c0_63 = arith.constant 0 : index
    %25 = vector.load %arg25[%c0_62, %c0_63] : memref<32x32xbf16, #tpu.memory_space<vmem>>, vector<32x32xbf16>
    %c0_64 = arith.constant 0 : index
    %c0_65 = arith.constant 0 : index
    %26 = vector.load %arg26[%c0_64, %c0_65] : memref<1x32xf32, #tpu.memory_space<vmem>>, vector<1x32xf32>
    %c0_66 = arith.constant 0 : index
    %c0_67 = arith.constant 0 : index
    %27 = vector.load %arg27[%c0_66, %c0_67] : memref<32x32xbf16, #tpu.memory_space<vmem>>, vector<32x32xbf16>
    %c0_68 = arith.constant 0 : index
    %c0_69 = arith.constant 0 : index
    %28 = vector.load %arg28[%c0_68, %c0_69] : memref<1x32xf32, #tpu.memory_space<vmem>>, vector<1x32xf32>
    %c0_70 = arith.constant 0 : index
    %c0_71 = arith.constant 0 : index
    %29 = vector.load %arg29[%c0_70, %c0_71] : memref<32x32xbf16, #tpu.memory_space<vmem>>, vector<32x32xbf16>
    %c0_72 = arith.constant 0 : index
    %c0_73 = arith.constant 0 : index
    %30 = vector.load %arg30[%c0_72, %c0_73] : memref<1x32xf32, #tpu.memory_space<vmem>>, vector<1x32xf32>
    %c0_74 = arith.constant 0 : index
    %c0_75 = arith.constant 0 : index
    %31 = vector.load %arg31[%c0_74, %c0_75] : memref<32x32xbf16, #tpu.memory_space<vmem>>, vector<32x32xbf16>
    %c0_76 = arith.constant 0 : index
    %c0_77 = arith.constant 0 : index
    %32 = vector.load %arg32[%c0_76, %c0_77] : memref<1x32xf32, #tpu.memory_space<vmem>>, vector<1x32xf32>
    %c0_78 = arith.constant 0 : index
    %c0_79 = arith.constant 0 : index
    %33 = vector.load %arg33[%c0_78, %c0_79] : memref<32x1xbf16, #tpu.memory_space<vmem>>, vector<32x1xbf16>
    %c0_80 = arith.constant 0 : index
    %c0_81 = arith.constant 0 : index
    %34 = vector.load %arg34[%c0_80, %c0_81] : memref<1x1xf32, #tpu.memory_space<vmem>>, vector<1x1xf32>
    %c0_82 = arith.constant 0 : index
    %c0_83 = arith.constant 0 : index
    %35 = vector.load %arg35[%c0_82, %c0_83] : memref<32x32xbf16, #tpu.memory_space<vmem>>, vector<32x32xbf16>
    %c0_84 = arith.constant 0 : index
    %c0_85 = arith.constant 0 : index
    %36 = vector.load %arg36[%c0_84, %c0_85] : memref<1x32xf32, #tpu.memory_space<vmem>>, vector<1x32xf32>
    %c0_86 = arith.constant 0 : index
    %c0_87 = arith.constant 0 : index
    %37 = vector.load %arg37[%c0_86, %c0_87] : memref<32x3xbf16, #tpu.memory_space<vmem>>, vector<32x3xbf16>
    %c0_88 = arith.constant 0 : index
    %c0_89 = arith.constant 0 : index
    %38 = vector.load %arg38[%c0_88, %c0_89] : memref<1x3xf32, #tpu.memory_space<vmem>>, vector<1x3xf32>
    %39 = tpu.iota {dimensions = array<i32: 1>} : vector<112x16xi32>
    %40 = vector.broadcast %5 : vector<112x1xi32> to vector<112x16xi32>
    %41 = arith.cmpi eq, %39, %40 : vector<112x16xi32>
    %42 = arith.extui %41 : vector<112x16xi1> to vector<112x16xi32>
    %43 = arith.sitofp %42 : vector<112x16xi32> to vector<112x16xf32>
    %44 = vector.broadcast %6 : vector<112x1xi32> to vector<112x16xi32>
    %45 = arith.cmpi eq, %39, %44 : vector<112x16xi32>
    %46 = arith.extui %45 : vector<112x16xi1> to vector<112x16xi32>
    %47 = arith.sitofp %46 : vector<112x16xi32> to vector<112x16xf32>
    %48 = tpu.iota {dimensions = array<i32: 0>} : vector<16x112xi32>
    %49 = vector.broadcast %7 : vector<1x112xi32> to vector<16x112xi32>
    %50 = arith.cmpi eq, %48, %49 : vector<16x112xi32>
    %51 = arith.extui %50 : vector<16x112xi1> to vector<16x112xi32>
    %52 = arith.sitofp %51 : vector<16x112xi32> to vector<16x112xf32>
    %53 = tpu.iota {dimensions = array<i32: 1>} : vector<2x16xi32>
    %54 = tpu.iota {dimensions = array<i32: 0>} : vector<2x16xi32>
    %c8_i32 = arith.constant 8 : i32
    %55 = vector.broadcast %c8_i32 : i32 to vector<2x16xi32>
    %56 = arith.muli %54, %55 : vector<2x16xi32>
    %57 = arith.cmpi sge, %53, %56 : vector<2x16xi32>
    %c1_i32 = arith.constant 1 : i32
    %58 = vector.broadcast %c1_i32 : i32 to vector<2x16xi32>
    %59 = arith.addi %54, %58 : vector<2x16xi32>
    %c8_i32_90 = arith.constant 8 : i32
    %60 = vector.broadcast %c8_i32_90 : i32 to vector<2x16xi32>
    %61 = arith.muli %59, %60 : vector<2x16xi32>
    %62 = arith.cmpi slt, %53, %61 : vector<2x16xi32>
    %63 = arith.andi %57, %62 : vector<2x16xi1>
    %64 = arith.extui %63 : vector<2x16xi1> to vector<2x16xi32>
    %65 = arith.sitofp %64 : vector<2x16xi32> to vector<2x16xf32>
    %66 = vector.extract_strided_slice %0 {offsets = [0, 0], sizes = [16, 1], strides = [1, 1]} : vector<16x5xf32> to vector<16x1xf32>
    %67 = vector.extract_strided_slice %8 {offsets = [0, 0], sizes = [1, 32], strides = [1, 1]} : vector<5x32xf32> to vector<1x32xf32>
    %68 = vector.broadcast %66 : vector<16x1xf32> to vector<16x32xf32>
    %69 = vector.broadcast %67 : vector<1x32xf32> to vector<16x32xf32>
    %70 = arith.mulf %68, %69 : vector<16x32xf32>
    %71 = vector.extract_strided_slice %0 {offsets = [0, 1], sizes = [16, 1], strides = [1, 1]} : vector<16x5xf32> to vector<16x1xf32>
    %72 = vector.extract_strided_slice %8 {offsets = [1, 0], sizes = [1, 32], strides = [1, 1]} : vector<5x32xf32> to vector<1x32xf32>
    %73 = vector.broadcast %71 : vector<16x1xf32> to vector<16x32xf32>
    %74 = vector.broadcast %72 : vector<1x32xf32> to vector<16x32xf32>
    %75 = arith.mulf %73, %74 : vector<16x32xf32>
    %76 = arith.addf %70, %75 : vector<16x32xf32>
    %77 = vector.extract_strided_slice %0 {offsets = [0, 2], sizes = [16, 1], strides = [1, 1]} : vector<16x5xf32> to vector<16x1xf32>
    %78 = vector.extract_strided_slice %8 {offsets = [2, 0], sizes = [1, 32], strides = [1, 1]} : vector<5x32xf32> to vector<1x32xf32>
    %79 = vector.broadcast %77 : vector<16x1xf32> to vector<16x32xf32>
    %80 = vector.broadcast %78 : vector<1x32xf32> to vector<16x32xf32>
    %81 = arith.mulf %79, %80 : vector<16x32xf32>
    %82 = arith.addf %76, %81 : vector<16x32xf32>
    %83 = vector.extract_strided_slice %0 {offsets = [0, 3], sizes = [16, 1], strides = [1, 1]} : vector<16x5xf32> to vector<16x1xf32>
    %84 = vector.extract_strided_slice %8 {offsets = [3, 0], sizes = [1, 32], strides = [1, 1]} : vector<5x32xf32> to vector<1x32xf32>
    %85 = vector.broadcast %83 : vector<16x1xf32> to vector<16x32xf32>
    %86 = vector.broadcast %84 : vector<1x32xf32> to vector<16x32xf32>
    %87 = arith.mulf %85, %86 : vector<16x32xf32>
    %88 = arith.addf %82, %87 : vector<16x32xf32>
    %89 = vector.extract_strided_slice %0 {offsets = [0, 4], sizes = [16, 1], strides = [1, 1]} : vector<16x5xf32> to vector<16x1xf32>
    %90 = vector.extract_strided_slice %8 {offsets = [4, 0], sizes = [1, 32], strides = [1, 1]} : vector<5x32xf32> to vector<1x32xf32>
    %91 = vector.broadcast %89 : vector<16x1xf32> to vector<16x32xf32>
    %92 = vector.broadcast %90 : vector<1x32xf32> to vector<16x32xf32>
    %93 = arith.mulf %91, %92 : vector<16x32xf32>
    %94 = arith.addf %88, %93 : vector<16x32xf32>
    %95 = vector.broadcast %9 : vector<1x32xf32> to vector<16x32xf32>
    %96 = arith.addf %94, %95 : vector<16x32xf32>
    %97 = arith.truncf %43 : vector<112x16xf32> to vector<112x16xbf16>
    %98 = arith.truncf %96 : vector<16x32xf32> to vector<16x32xbf16>
    %cst = arith.constant dense<0.000000e+00> : vector<112x32xf32>
    %99 = tpu.matmul %97, %98, %cst {dimension_numbers = #tpu.dot_dimension_numbers<[1], [0], [0], [1], [0, 0, 1, 1], [], []>} : vector<112x16xbf16>, vector<16x32xbf16>, vector<112x32xf32> -> vector<112x32xf32>
    %100 = arith.truncf %47 : vector<112x16xf32> to vector<112x16xbf16>
    %101 = arith.truncf %96 : vector<16x32xf32> to vector<16x32xbf16>
    %cst_91 = arith.constant dense<0.000000e+00> : vector<112x32xf32>
    %102 = tpu.matmul %100, %101, %cst_91 {dimension_numbers = #tpu.dot_dimension_numbers<[1], [0], [0], [1], [0, 0, 1, 1], [], []>} : vector<112x16xbf16>, vector<16x32xbf16>, vector<112x32xf32> -> vector<112x32xf32>
    %103 = vector.extract_strided_slice %10 {offsets = [0, 0, 0], sizes = [1, 32, 32], strides = [1, 1, 1]} : vector<4x32x32xbf16> to vector<1x32x32xbf16>
    %104 = vector.shape_cast %103 : vector<1x32x32xbf16> to vector<32x32xbf16>
    %105 = arith.truncf %99 : vector<112x32xf32> to vector<112x32xbf16>
    %cst_92 = arith.constant dense<0.000000e+00> : vector<112x32xf32>
    %106 = tpu.matmul %105, %104, %cst_92 {dimension_numbers = #tpu.dot_dimension_numbers<[1], [0], [0], [1], [0, 0, 1, 1], [], []>} : vector<112x32xbf16>, vector<32x32xbf16>, vector<112x32xf32> -> vector<112x32xf32>
    %107 = vector.extract_strided_slice %11 {offsets = [0, 0, 0], sizes = [1, 32, 32], strides = [1, 1, 1]} : vector<4x32x32xbf16> to vector<1x32x32xbf16>
    %108 = vector.shape_cast %107 : vector<1x32x32xbf16> to vector<32x32xbf16>
    %109 = arith.truncf %102 : vector<112x32xf32> to vector<112x32xbf16>
    %cst_93 = arith.constant dense<0.000000e+00> : vector<112x32xf32>
    %110 = tpu.matmul %109, %108, %cst_93 {dimension_numbers = #tpu.dot_dimension_numbers<[1], [0], [0], [1], [0, 0, 1, 1], [], []>} : vector<112x32xbf16>, vector<32x32xbf16>, vector<112x32xf32> -> vector<112x32xf32>
    %111 = arith.addf %106, %110 : vector<112x32xf32>
    %112 = vector.extract_strided_slice %12 {offsets = [0, 0, 0], sizes = [1, 1, 32], strides = [1, 1, 1]} : vector<4x1x32xf32> to vector<1x1x32xf32>
    %113 = vector.shape_cast %112 : vector<1x1x32xf32> to vector<1x32xf32>
    %114 = vector.broadcast %1 : vector<112x1xf32> to vector<112x32xf32>
    %115 = vector.broadcast %113 : vector<1x32xf32> to vector<112x32xf32>
    %116 = arith.mulf %114, %115 : vector<112x32xf32>
    %117 = arith.addf %111, %116 : vector<112x32xf32>
    %118 = vector.extract_strided_slice %13 {offsets = [0, 0, 0], sizes = [1, 2, 32], strides = [1, 1, 1]} : vector<4x2x32xf32> to vector<1x2x32xf32>
    %119 = vector.shape_cast %118 : vector<1x2x32xf32> to vector<2x32xf32>
    %120 = vector.extract_strided_slice %2 {offsets = [0, 0], sizes = [112, 1], strides = [1, 1]} : vector<112x2xf32> to vector<112x1xf32>
    %121 = vector.extract_strided_slice %119 {offsets = [0, 0], sizes = [1, 32], strides = [1, 1]} : vector<2x32xf32> to vector<1x32xf32>
    %122 = vector.broadcast %120 : vector<112x1xf32> to vector<112x32xf32>
    %123 = vector.broadcast %121 : vector<1x32xf32> to vector<112x32xf32>
    %124 = arith.mulf %122, %123 : vector<112x32xf32>
    %125 = vector.extract_strided_slice %2 {offsets = [0, 1], sizes = [112, 1], strides = [1, 1]} : vector<112x2xf32> to vector<112x1xf32>
    %126 = vector.extract_strided_slice %119 {offsets = [1, 0], sizes = [1, 32], strides = [1, 1]} : vector<2x32xf32> to vector<1x32xf32>
    %127 = vector.broadcast %125 : vector<112x1xf32> to vector<112x32xf32>
    %128 = vector.broadcast %126 : vector<1x32xf32> to vector<112x32xf32>
    %129 = arith.mulf %127, %128 : vector<112x32xf32>
    %130 = arith.addf %124, %129 : vector<112x32xf32>
    %131 = arith.addf %117, %130 : vector<112x32xf32>
    %132 = vector.extract_strided_slice %14 {offsets = [0, 0, 0], sizes = [1, 1, 32], strides = [1, 1, 1]} : vector<4x1x32xf32> to vector<1x1x32xf32>
    %133 = vector.shape_cast %132 : vector<1x1x32xf32> to vector<1x32xf32>
    %134 = vector.broadcast %133 : vector<1x32xf32> to vector<112x32xf32>
    %135 = arith.addf %131, %134 : vector<112x32xf32>
    %136 = arith.negf %135 : vector<112x32xf32>
    %137 = math.exp %136 : vector<112x32xf32>
    %cst_94 = arith.constant 1.000000e+00 : f32
    %138 = vector.broadcast %cst_94 : f32 to vector<112x32xf32>
    %139 = arith.addf %138, %137 : vector<112x32xf32>
    %140 = arith.divf %138, %139 : vector<112x32xf32>
    %141 = arith.mulf %135, %140 : vector<112x32xf32>
    %142 = vector.extract_strided_slice %15 {offsets = [0, 0, 0], sizes = [1, 32, 32], strides = [1, 1, 1]} : vector<4x32x32xbf16> to vector<1x32x32xbf16>
    %143 = vector.shape_cast %142 : vector<1x32x32xbf16> to vector<32x32xbf16>
    %144 = arith.truncf %141 : vector<112x32xf32> to vector<112x32xbf16>
    %cst_95 = arith.constant dense<0.000000e+00> : vector<112x32xf32>
    %145 = tpu.matmul %144, %143, %cst_95 {dimension_numbers = #tpu.dot_dimension_numbers<[1], [0], [0], [1], [0, 0, 1, 1], [], []>} : vector<112x32xbf16>, vector<32x32xbf16>, vector<112x32xf32> -> vector<112x32xf32>
    %146 = vector.extract_strided_slice %16 {offsets = [0, 0, 0], sizes = [1, 1, 32], strides = [1, 1, 1]} : vector<4x1x32xf32> to vector<1x1x32xf32>
    %147 = vector.shape_cast %146 : vector<1x1x32xf32> to vector<1x32xf32>
    %148 = vector.broadcast %147 : vector<1x32xf32> to vector<112x32xf32>
    %149 = arith.addf %145, %148 : vector<112x32xf32>
    %150 = arith.negf %149 : vector<112x32xf32>
    %151 = math.exp %150 : vector<112x32xf32>
    %cst_96 = arith.constant 1.000000e+00 : f32
    %152 = vector.broadcast %cst_96 : f32 to vector<112x32xf32>
    %153 = arith.addf %152, %151 : vector<112x32xf32>
    %154 = arith.divf %152, %153 : vector<112x32xf32>
    %155 = arith.mulf %149, %154 : vector<112x32xf32>
    %156 = vector.broadcast %4 : vector<112x1xf32> to vector<112x32xf32>
    %157 = arith.mulf %155, %156 : vector<112x32xf32>
    %158 = arith.truncf %52 : vector<16x112xf32> to vector<16x112xbf16>
    %159 = arith.truncf %157 : vector<112x32xf32> to vector<112x32xbf16>
    %cst_97 = arith.constant dense<0.000000e+00> : vector<16x32xf32>
    %160 = tpu.matmul %158, %159, %cst_97 {dimension_numbers = #tpu.dot_dimension_numbers<[1], [0], [0], [1], [0, 0, 1, 1], [], []>} : vector<16x112xbf16>, vector<112x32xbf16>, vector<16x32xf32> -> vector<16x32xf32>
    %161 = vector.extract_strided_slice %17 {offsets = [0, 0, 0], sizes = [1, 32, 32], strides = [1, 1, 1]} : vector<4x32x32xbf16> to vector<1x32x32xbf16>
    %162 = vector.shape_cast %161 : vector<1x32x32xbf16> to vector<32x32xbf16>
    %163 = arith.truncf %96 : vector<16x32xf32> to vector<16x32xbf16>
    %cst_98 = arith.constant dense<0.000000e+00> : vector<16x32xf32>
    %164 = tpu.matmul %163, %162, %cst_98 {dimension_numbers = #tpu.dot_dimension_numbers<[1], [0], [0], [1], [0, 0, 1, 1], [], []>} : vector<16x32xbf16>, vector<32x32xbf16>, vector<16x32xf32> -> vector<16x32xf32>
    %165 = vector.extract_strided_slice %18 {offsets = [0, 0, 0], sizes = [1, 32, 32], strides = [1, 1, 1]} : vector<4x32x32xbf16> to vector<1x32x32xbf16>
    %166 = vector.shape_cast %165 : vector<1x32x32xbf16> to vector<32x32xbf16>
    %167 = arith.truncf %160 : vector<16x32xf32> to vector<16x32xbf16>
    %cst_99 = arith.constant dense<0.000000e+00> : vector<16x32xf32>
    %168 = tpu.matmul %167, %166, %cst_99 {dimension_numbers = #tpu.dot_dimension_numbers<[1], [0], [0], [1], [0, 0, 1, 1], [], []>} : vector<16x32xbf16>, vector<32x32xbf16>, vector<16x32xf32> -> vector<16x32xf32>
    %169 = arith.addf %164, %168 : vector<16x32xf32>
    %170 = vector.extract_strided_slice %19 {offsets = [0, 0, 0], sizes = [1, 5, 32], strides = [1, 1, 1]} : vector<4x5x32xf32> to vector<1x5x32xf32>
    %171 = vector.shape_cast %170 : vector<1x5x32xf32> to vector<5x32xf32>
    %172 = vector.extract_strided_slice %0 {offsets = [0, 0], sizes = [16, 1], strides = [1, 1]} : vector<16x5xf32> to vector<16x1xf32>
    %173 = vector.extract_strided_slice %171 {offsets = [0, 0], sizes = [1, 32], strides = [1, 1]} : vector<5x32xf32> to vector<1x32xf32>
    %174 = vector.broadcast %172 : vector<16x1xf32> to vector<16x32xf32>
    %175 = vector.broadcast %173 : vector<1x32xf32> to vector<16x32xf32>
    %176 = arith.mulf %174, %175 : vector<16x32xf32>
    %177 = vector.extract_strided_slice %0 {offsets = [0, 1], sizes = [16, 1], strides = [1, 1]} : vector<16x5xf32> to vector<16x1xf32>
    %178 = vector.extract_strided_slice %171 {offsets = [1, 0], sizes = [1, 32], strides = [1, 1]} : vector<5x32xf32> to vector<1x32xf32>
    %179 = vector.broadcast %177 : vector<16x1xf32> to vector<16x32xf32>
    %180 = vector.broadcast %178 : vector<1x32xf32> to vector<16x32xf32>
    %181 = arith.mulf %179, %180 : vector<16x32xf32>
    %182 = arith.addf %176, %181 : vector<16x32xf32>
    %183 = vector.extract_strided_slice %0 {offsets = [0, 2], sizes = [16, 1], strides = [1, 1]} : vector<16x5xf32> to vector<16x1xf32>
    %184 = vector.extract_strided_slice %171 {offsets = [2, 0], sizes = [1, 32], strides = [1, 1]} : vector<5x32xf32> to vector<1x32xf32>
    %185 = vector.broadcast %183 : vector<16x1xf32> to vector<16x32xf32>
    %186 = vector.broadcast %184 : vector<1x32xf32> to vector<16x32xf32>
    %187 = arith.mulf %185, %186 : vector<16x32xf32>
    %188 = arith.addf %182, %187 : vector<16x32xf32>
    %189 = vector.extract_strided_slice %0 {offsets = [0, 3], sizes = [16, 1], strides = [1, 1]} : vector<16x5xf32> to vector<16x1xf32>
    %190 = vector.extract_strided_slice %171 {offsets = [3, 0], sizes = [1, 32], strides = [1, 1]} : vector<5x32xf32> to vector<1x32xf32>
    %191 = vector.broadcast %189 : vector<16x1xf32> to vector<16x32xf32>
    %192 = vector.broadcast %190 : vector<1x32xf32> to vector<16x32xf32>
    %193 = arith.mulf %191, %192 : vector<16x32xf32>
    %194 = arith.addf %188, %193 : vector<16x32xf32>
    %195 = vector.extract_strided_slice %0 {offsets = [0, 4], sizes = [16, 1], strides = [1, 1]} : vector<16x5xf32> to vector<16x1xf32>
    %196 = vector.extract_strided_slice %171 {offsets = [4, 0], sizes = [1, 32], strides = [1, 1]} : vector<5x32xf32> to vector<1x32xf32>
    %197 = vector.broadcast %195 : vector<16x1xf32> to vector<16x32xf32>
    %198 = vector.broadcast %196 : vector<1x32xf32> to vector<16x32xf32>
    %199 = arith.mulf %197, %198 : vector<16x32xf32>
    %200 = arith.addf %194, %199 : vector<16x32xf32>
    %201 = arith.addf %169, %200 : vector<16x32xf32>
    %202 = vector.extract_strided_slice %20 {offsets = [0, 0, 0], sizes = [1, 1, 32], strides = [1, 1, 1]} : vector<4x1x32xf32> to vector<1x1x32xf32>
    %203 = vector.shape_cast %202 : vector<1x1x32xf32> to vector<1x32xf32>
    %204 = vector.broadcast %203 : vector<1x32xf32> to vector<16x32xf32>
    %205 = arith.addf %201, %204 : vector<16x32xf32>
    %206 = arith.negf %205 : vector<16x32xf32>
    %207 = math.exp %206 : vector<16x32xf32>
    %cst_100 = arith.constant 1.000000e+00 : f32
    %208 = vector.broadcast %cst_100 : f32 to vector<16x32xf32>
    %209 = arith.addf %208, %207 : vector<16x32xf32>
    %210 = arith.divf %208, %209 : vector<16x32xf32>
    %211 = arith.mulf %205, %210 : vector<16x32xf32>
    %212 = vector.extract_strided_slice %21 {offsets = [0, 0, 0], sizes = [1, 32, 32], strides = [1, 1, 1]} : vector<4x32x32xbf16> to vector<1x32x32xbf16>
    %213 = vector.shape_cast %212 : vector<1x32x32xbf16> to vector<32x32xbf16>
    %214 = arith.truncf %211 : vector<16x32xf32> to vector<16x32xbf16>
    %cst_101 = arith.constant dense<0.000000e+00> : vector<16x32xf32>
    %215 = tpu.matmul %214, %213, %cst_101 {dimension_numbers = #tpu.dot_dimension_numbers<[1], [0], [0], [1], [0, 0, 1, 1], [], []>} : vector<16x32xbf16>, vector<32x32xbf16>, vector<16x32xf32> -> vector<16x32xf32>
    %216 = arith.addf %96, %215 : vector<16x32xf32>
    %217 = vector.extract_strided_slice %22 {offsets = [0, 0, 0], sizes = [1, 1, 32], strides = [1, 1, 1]} : vector<4x1x32xf32> to vector<1x1x32xf32>
    %218 = vector.shape_cast %217 : vector<1x1x32xf32> to vector<1x32xf32>
    %219 = vector.broadcast %218 : vector<1x32xf32> to vector<16x32xf32>
    %220 = arith.addf %216, %219 : vector<16x32xf32>
    %221 = arith.truncf %43 : vector<112x16xf32> to vector<112x16xbf16>
    %222 = arith.truncf %220 : vector<16x32xf32> to vector<16x32xbf16>
    %cst_102 = arith.constant dense<0.000000e+00> : vector<112x32xf32>
    %223 = tpu.matmul %221, %222, %cst_102 {dimension_numbers = #tpu.dot_dimension_numbers<[1], [0], [0], [1], [0, 0, 1, 1], [], []>} : vector<112x16xbf16>, vector<16x32xbf16>, vector<112x32xf32> -> vector<112x32xf32>
    %224 = arith.truncf %47 : vector<112x16xf32> to vector<112x16xbf16>
    %225 = arith.truncf %220 : vector<16x32xf32> to vector<16x32xbf16>
    %cst_103 = arith.constant dense<0.000000e+00> : vector<112x32xf32>
    %226 = tpu.matmul %224, %225, %cst_103 {dimension_numbers = #tpu.dot_dimension_numbers<[1], [0], [0], [1], [0, 0, 1, 1], [], []>} : vector<112x16xbf16>, vector<16x32xbf16>, vector<112x32xf32> -> vector<112x32xf32>
    %227 = vector.extract_strided_slice %10 {offsets = [1, 0, 0], sizes = [1, 32, 32], strides = [1, 1, 1]} : vector<4x32x32xbf16> to vector<1x32x32xbf16>
    %228 = vector.shape_cast %227 : vector<1x32x32xbf16> to vector<32x32xbf16>
    %229 = arith.truncf %223 : vector<112x32xf32> to vector<112x32xbf16>
    %cst_104 = arith.constant dense<0.000000e+00> : vector<112x32xf32>
    %230 = tpu.matmul %229, %228, %cst_104 {dimension_numbers = #tpu.dot_dimension_numbers<[1], [0], [0], [1], [0, 0, 1, 1], [], []>} : vector<112x32xbf16>, vector<32x32xbf16>, vector<112x32xf32> -> vector<112x32xf32>
    %231 = vector.extract_strided_slice %11 {offsets = [1, 0, 0], sizes = [1, 32, 32], strides = [1, 1, 1]} : vector<4x32x32xbf16> to vector<1x32x32xbf16>
    %232 = vector.shape_cast %231 : vector<1x32x32xbf16> to vector<32x32xbf16>
    %233 = arith.truncf %226 : vector<112x32xf32> to vector<112x32xbf16>
    %cst_105 = arith.constant dense<0.000000e+00> : vector<112x32xf32>
    %234 = tpu.matmul %233, %232, %cst_105 {dimension_numbers = #tpu.dot_dimension_numbers<[1], [0], [0], [1], [0, 0, 1, 1], [], []>} : vector<112x32xbf16>, vector<32x32xbf16>, vector<112x32xf32> -> vector<112x32xf32>
    %235 = arith.addf %230, %234 : vector<112x32xf32>
    %236 = vector.extract_strided_slice %12 {offsets = [1, 0, 0], sizes = [1, 1, 32], strides = [1, 1, 1]} : vector<4x1x32xf32> to vector<1x1x32xf32>
    %237 = vector.shape_cast %236 : vector<1x1x32xf32> to vector<1x32xf32>
    %238 = vector.broadcast %1 : vector<112x1xf32> to vector<112x32xf32>
    %239 = vector.broadcast %237 : vector<1x32xf32> to vector<112x32xf32>
    %240 = arith.mulf %238, %239 : vector<112x32xf32>
    %241 = arith.addf %235, %240 : vector<112x32xf32>
    %242 = vector.extract_strided_slice %13 {offsets = [1, 0, 0], sizes = [1, 2, 32], strides = [1, 1, 1]} : vector<4x2x32xf32> to vector<1x2x32xf32>
    %243 = vector.shape_cast %242 : vector<1x2x32xf32> to vector<2x32xf32>
    %244 = vector.extract_strided_slice %2 {offsets = [0, 0], sizes = [112, 1], strides = [1, 1]} : vector<112x2xf32> to vector<112x1xf32>
    %245 = vector.extract_strided_slice %243 {offsets = [0, 0], sizes = [1, 32], strides = [1, 1]} : vector<2x32xf32> to vector<1x32xf32>
    %246 = vector.broadcast %244 : vector<112x1xf32> to vector<112x32xf32>
    %247 = vector.broadcast %245 : vector<1x32xf32> to vector<112x32xf32>
    %248 = arith.mulf %246, %247 : vector<112x32xf32>
    %249 = vector.extract_strided_slice %2 {offsets = [0, 1], sizes = [112, 1], strides = [1, 1]} : vector<112x2xf32> to vector<112x1xf32>
    %250 = vector.extract_strided_slice %243 {offsets = [1, 0], sizes = [1, 32], strides = [1, 1]} : vector<2x32xf32> to vector<1x32xf32>
    %251 = vector.broadcast %249 : vector<112x1xf32> to vector<112x32xf32>
    %252 = vector.broadcast %250 : vector<1x32xf32> to vector<112x32xf32>
    %253 = arith.mulf %251, %252 : vector<112x32xf32>
    %254 = arith.addf %248, %253 : vector<112x32xf32>
    %255 = arith.addf %241, %254 : vector<112x32xf32>
    %256 = vector.extract_strided_slice %14 {offsets = [1, 0, 0], sizes = [1, 1, 32], strides = [1, 1, 1]} : vector<4x1x32xf32> to vector<1x1x32xf32>
    %257 = vector.shape_cast %256 : vector<1x1x32xf32> to vector<1x32xf32>
    %258 = vector.broadcast %257 : vector<1x32xf32> to vector<112x32xf32>
    %259 = arith.addf %255, %258 : vector<112x32xf32>
    %260 = arith.negf %259 : vector<112x32xf32>
    %261 = math.exp %260 : vector<112x32xf32>
    %cst_106 = arith.constant 1.000000e+00 : f32
    %262 = vector.broadcast %cst_106 : f32 to vector<112x32xf32>
    %263 = arith.addf %262, %261 : vector<112x32xf32>
    %264 = arith.divf %262, %263 : vector<112x32xf32>
    %265 = arith.mulf %259, %264 : vector<112x32xf32>
    %266 = vector.extract_strided_slice %15 {offsets = [1, 0, 0], sizes = [1, 32, 32], strides = [1, 1, 1]} : vector<4x32x32xbf16> to vector<1x32x32xbf16>
    %267 = vector.shape_cast %266 : vector<1x32x32xbf16> to vector<32x32xbf16>
    %268 = arith.truncf %265 : vector<112x32xf32> to vector<112x32xbf16>
    %cst_107 = arith.constant dense<0.000000e+00> : vector<112x32xf32>
    %269 = tpu.matmul %268, %267, %cst_107 {dimension_numbers = #tpu.dot_dimension_numbers<[1], [0], [0], [1], [0, 0, 1, 1], [], []>} : vector<112x32xbf16>, vector<32x32xbf16>, vector<112x32xf32> -> vector<112x32xf32>
    %270 = vector.extract_strided_slice %16 {offsets = [1, 0, 0], sizes = [1, 1, 32], strides = [1, 1, 1]} : vector<4x1x32xf32> to vector<1x1x32xf32>
    %271 = vector.shape_cast %270 : vector<1x1x32xf32> to vector<1x32xf32>
    %272 = vector.broadcast %271 : vector<1x32xf32> to vector<112x32xf32>
    %273 = arith.addf %269, %272 : vector<112x32xf32>
    %274 = arith.negf %273 : vector<112x32xf32>
    %275 = math.exp %274 : vector<112x32xf32>
    %cst_108 = arith.constant 1.000000e+00 : f32
    %276 = vector.broadcast %cst_108 : f32 to vector<112x32xf32>
    %277 = arith.addf %276, %275 : vector<112x32xf32>
    %278 = arith.divf %276, %277 : vector<112x32xf32>
    %279 = arith.mulf %273, %278 : vector<112x32xf32>
    %280 = vector.broadcast %4 : vector<112x1xf32> to vector<112x32xf32>
    %281 = arith.mulf %279, %280 : vector<112x32xf32>
    %282 = arith.truncf %52 : vector<16x112xf32> to vector<16x112xbf16>
    %283 = arith.truncf %281 : vector<112x32xf32> to vector<112x32xbf16>
    %cst_109 = arith.constant dense<0.000000e+00> : vector<16x32xf32>
    %284 = tpu.matmul %282, %283, %cst_109 {dimension_numbers = #tpu.dot_dimension_numbers<[1], [0], [0], [1], [0, 0, 1, 1], [], []>} : vector<16x112xbf16>, vector<112x32xbf16>, vector<16x32xf32> -> vector<16x32xf32>
    %285 = vector.extract_strided_slice %17 {offsets = [1, 0, 0], sizes = [1, 32, 32], strides = [1, 1, 1]} : vector<4x32x32xbf16> to vector<1x32x32xbf16>
    %286 = vector.shape_cast %285 : vector<1x32x32xbf16> to vector<32x32xbf16>
    %287 = arith.truncf %220 : vector<16x32xf32> to vector<16x32xbf16>
    %cst_110 = arith.constant dense<0.000000e+00> : vector<16x32xf32>
    %288 = tpu.matmul %287, %286, %cst_110 {dimension_numbers = #tpu.dot_dimension_numbers<[1], [0], [0], [1], [0, 0, 1, 1], [], []>} : vector<16x32xbf16>, vector<32x32xbf16>, vector<16x32xf32> -> vector<16x32xf32>
    %289 = vector.extract_strided_slice %18 {offsets = [1, 0, 0], sizes = [1, 32, 32], strides = [1, 1, 1]} : vector<4x32x32xbf16> to vector<1x32x32xbf16>
    %290 = vector.shape_cast %289 : vector<1x32x32xbf16> to vector<32x32xbf16>
    %291 = arith.truncf %284 : vector<16x32xf32> to vector<16x32xbf16>
    %cst_111 = arith.constant dense<0.000000e+00> : vector<16x32xf32>
    %292 = tpu.matmul %291, %290, %cst_111 {dimension_numbers = #tpu.dot_dimension_numbers<[1], [0], [0], [1], [0, 0, 1, 1], [], []>} : vector<16x32xbf16>, vector<32x32xbf16>, vector<16x32xf32> -> vector<16x32xf32>
    %293 = arith.addf %288, %292 : vector<16x32xf32>
    %294 = vector.extract_strided_slice %19 {offsets = [1, 0, 0], sizes = [1, 5, 32], strides = [1, 1, 1]} : vector<4x5x32xf32> to vector<1x5x32xf32>
    %295 = vector.shape_cast %294 : vector<1x5x32xf32> to vector<5x32xf32>
    %296 = vector.extract_strided_slice %0 {offsets = [0, 0], sizes = [16, 1], strides = [1, 1]} : vector<16x5xf32> to vector<16x1xf32>
    %297 = vector.extract_strided_slice %295 {offsets = [0, 0], sizes = [1, 32], strides = [1, 1]} : vector<5x32xf32> to vector<1x32xf32>
    %298 = vector.broadcast %296 : vector<16x1xf32> to vector<16x32xf32>
    %299 = vector.broadcast %297 : vector<1x32xf32> to vector<16x32xf32>
    %300 = arith.mulf %298, %299 : vector<16x32xf32>
    %301 = vector.extract_strided_slice %0 {offsets = [0, 1], sizes = [16, 1], strides = [1, 1]} : vector<16x5xf32> to vector<16x1xf32>
    %302 = vector.extract_strided_slice %295 {offsets = [1, 0], sizes = [1, 32], strides = [1, 1]} : vector<5x32xf32> to vector<1x32xf32>
    %303 = vector.broadcast %301 : vector<16x1xf32> to vector<16x32xf32>
    %304 = vector.broadcast %302 : vector<1x32xf32> to vector<16x32xf32>
    %305 = arith.mulf %303, %304 : vector<16x32xf32>
    %306 = arith.addf %300, %305 : vector<16x32xf32>
    %307 = vector.extract_strided_slice %0 {offsets = [0, 2], sizes = [16, 1], strides = [1, 1]} : vector<16x5xf32> to vector<16x1xf32>
    %308 = vector.extract_strided_slice %295 {offsets = [2, 0], sizes = [1, 32], strides = [1, 1]} : vector<5x32xf32> to vector<1x32xf32>
    %309 = vector.broadcast %307 : vector<16x1xf32> to vector<16x32xf32>
    %310 = vector.broadcast %308 : vector<1x32xf32> to vector<16x32xf32>
    %311 = arith.mulf %309, %310 : vector<16x32xf32>
    %312 = arith.addf %306, %311 : vector<16x32xf32>
    %313 = vector.extract_strided_slice %0 {offsets = [0, 3], sizes = [16, 1], strides = [1, 1]} : vector<16x5xf32> to vector<16x1xf32>
    %314 = vector.extract_strided_slice %295 {offsets = [3, 0], sizes = [1, 32], strides = [1, 1]} : vector<5x32xf32> to vector<1x32xf32>
    %315 = vector.broadcast %313 : vector<16x1xf32> to vector<16x32xf32>
    %316 = vector.broadcast %314 : vector<1x32xf32> to vector<16x32xf32>
    %317 = arith.mulf %315, %316 : vector<16x32xf32>
    %318 = arith.addf %312, %317 : vector<16x32xf32>
    %319 = vector.extract_strided_slice %0 {offsets = [0, 4], sizes = [16, 1], strides = [1, 1]} : vector<16x5xf32> to vector<16x1xf32>
    %320 = vector.extract_strided_slice %295 {offsets = [4, 0], sizes = [1, 32], strides = [1, 1]} : vector<5x32xf32> to vector<1x32xf32>
    %321 = vector.broadcast %319 : vector<16x1xf32> to vector<16x32xf32>
    %322 = vector.broadcast %320 : vector<1x32xf32> to vector<16x32xf32>
    %323 = arith.mulf %321, %322 : vector<16x32xf32>
    %324 = arith.addf %318, %323 : vector<16x32xf32>
    %325 = arith.addf %293, %324 : vector<16x32xf32>
    %326 = vector.extract_strided_slice %20 {offsets = [1, 0, 0], sizes = [1, 1, 32], strides = [1, 1, 1]} : vector<4x1x32xf32> to vector<1x1x32xf32>
    %327 = vector.shape_cast %326 : vector<1x1x32xf32> to vector<1x32xf32>
    %328 = vector.broadcast %327 : vector<1x32xf32> to vector<16x32xf32>
    %329 = arith.addf %325, %328 : vector<16x32xf32>
    %330 = arith.negf %329 : vector<16x32xf32>
    %331 = math.exp %330 : vector<16x32xf32>
    %cst_112 = arith.constant 1.000000e+00 : f32
    %332 = vector.broadcast %cst_112 : f32 to vector<16x32xf32>
    %333 = arith.addf %332, %331 : vector<16x32xf32>
    %334 = arith.divf %332, %333 : vector<16x32xf32>
    %335 = arith.mulf %329, %334 : vector<16x32xf32>
    %336 = vector.extract_strided_slice %21 {offsets = [1, 0, 0], sizes = [1, 32, 32], strides = [1, 1, 1]} : vector<4x32x32xbf16> to vector<1x32x32xbf16>
    %337 = vector.shape_cast %336 : vector<1x32x32xbf16> to vector<32x32xbf16>
    %338 = arith.truncf %335 : vector<16x32xf32> to vector<16x32xbf16>
    %cst_113 = arith.constant dense<0.000000e+00> : vector<16x32xf32>
    %339 = tpu.matmul %338, %337, %cst_113 {dimension_numbers = #tpu.dot_dimension_numbers<[1], [0], [0], [1], [0, 0, 1, 1], [], []>} : vector<16x32xbf16>, vector<32x32xbf16>, vector<16x32xf32> -> vector<16x32xf32>
    %340 = arith.addf %220, %339 : vector<16x32xf32>
    %341 = vector.extract_strided_slice %22 {offsets = [1, 0, 0], sizes = [1, 1, 32], strides = [1, 1, 1]} : vector<4x1x32xf32> to vector<1x1x32xf32>
    %342 = vector.shape_cast %341 : vector<1x1x32xf32> to vector<1x32xf32>
    %343 = vector.broadcast %342 : vector<1x32xf32> to vector<16x32xf32>
    %344 = arith.addf %340, %343 : vector<16x32xf32>
    %345 = arith.truncf %43 : vector<112x16xf32> to vector<112x16xbf16>
    %346 = arith.truncf %344 : vector<16x32xf32> to vector<16x32xbf16>
    %cst_114 = arith.constant dense<0.000000e+00> : vector<112x32xf32>
    %347 = tpu.matmul %345, %346, %cst_114 {dimension_numbers = #tpu.dot_dimension_numbers<[1], [0], [0], [1], [0, 0, 1, 1], [], []>} : vector<112x16xbf16>, vector<16x32xbf16>, vector<112x32xf32> -> vector<112x32xf32>
    %348 = arith.truncf %47 : vector<112x16xf32> to vector<112x16xbf16>
    %349 = arith.truncf %344 : vector<16x32xf32> to vector<16x32xbf16>
    %cst_115 = arith.constant dense<0.000000e+00> : vector<112x32xf32>
    %350 = tpu.matmul %348, %349, %cst_115 {dimension_numbers = #tpu.dot_dimension_numbers<[1], [0], [0], [1], [0, 0, 1, 1], [], []>} : vector<112x16xbf16>, vector<16x32xbf16>, vector<112x32xf32> -> vector<112x32xf32>
    %351 = vector.extract_strided_slice %10 {offsets = [2, 0, 0], sizes = [1, 32, 32], strides = [1, 1, 1]} : vector<4x32x32xbf16> to vector<1x32x32xbf16>
    %352 = vector.shape_cast %351 : vector<1x32x32xbf16> to vector<32x32xbf16>
    %353 = arith.truncf %347 : vector<112x32xf32> to vector<112x32xbf16>
    %cst_116 = arith.constant dense<0.000000e+00> : vector<112x32xf32>
    %354 = tpu.matmul %353, %352, %cst_116 {dimension_numbers = #tpu.dot_dimension_numbers<[1], [0], [0], [1], [0, 0, 1, 1], [], []>} : vector<112x32xbf16>, vector<32x32xbf16>, vector<112x32xf32> -> vector<112x32xf32>
    %355 = vector.extract_strided_slice %11 {offsets = [2, 0, 0], sizes = [1, 32, 32], strides = [1, 1, 1]} : vector<4x32x32xbf16> to vector<1x32x32xbf16>
    %356 = vector.shape_cast %355 : vector<1x32x32xbf16> to vector<32x32xbf16>
    %357 = arith.truncf %350 : vector<112x32xf32> to vector<112x32xbf16>
    %cst_117 = arith.constant dense<0.000000e+00> : vector<112x32xf32>
    %358 = tpu.matmul %357, %356, %cst_117 {dimension_numbers = #tpu.dot_dimension_numbers<[1], [0], [0], [1], [0, 0, 1, 1], [], []>} : vector<112x32xbf16>, vector<32x32xbf16>, vector<112x32xf32> -> vector<112x32xf32>
    %359 = arith.addf %354, %358 : vector<112x32xf32>
    %360 = vector.extract_strided_slice %12 {offsets = [2, 0, 0], sizes = [1, 1, 32], strides = [1, 1, 1]} : vector<4x1x32xf32> to vector<1x1x32xf32>
    %361 = vector.shape_cast %360 : vector<1x1x32xf32> to vector<1x32xf32>
    %362 = vector.broadcast %1 : vector<112x1xf32> to vector<112x32xf32>
    %363 = vector.broadcast %361 : vector<1x32xf32> to vector<112x32xf32>
    %364 = arith.mulf %362, %363 : vector<112x32xf32>
    %365 = arith.addf %359, %364 : vector<112x32xf32>
    %366 = vector.extract_strided_slice %13 {offsets = [2, 0, 0], sizes = [1, 2, 32], strides = [1, 1, 1]} : vector<4x2x32xf32> to vector<1x2x32xf32>
    %367 = vector.shape_cast %366 : vector<1x2x32xf32> to vector<2x32xf32>
    %368 = vector.extract_strided_slice %2 {offsets = [0, 0], sizes = [112, 1], strides = [1, 1]} : vector<112x2xf32> to vector<112x1xf32>
    %369 = vector.extract_strided_slice %367 {offsets = [0, 0], sizes = [1, 32], strides = [1, 1]} : vector<2x32xf32> to vector<1x32xf32>
    %370 = vector.broadcast %368 : vector<112x1xf32> to vector<112x32xf32>
    %371 = vector.broadcast %369 : vector<1x32xf32> to vector<112x32xf32>
    %372 = arith.mulf %370, %371 : vector<112x32xf32>
    %373 = vector.extract_strided_slice %2 {offsets = [0, 1], sizes = [112, 1], strides = [1, 1]} : vector<112x2xf32> to vector<112x1xf32>
    %374 = vector.extract_strided_slice %367 {offsets = [1, 0], sizes = [1, 32], strides = [1, 1]} : vector<2x32xf32> to vector<1x32xf32>
    %375 = vector.broadcast %373 : vector<112x1xf32> to vector<112x32xf32>
    %376 = vector.broadcast %374 : vector<1x32xf32> to vector<112x32xf32>
    %377 = arith.mulf %375, %376 : vector<112x32xf32>
    %378 = arith.addf %372, %377 : vector<112x32xf32>
    %379 = arith.addf %365, %378 : vector<112x32xf32>
    %380 = vector.extract_strided_slice %14 {offsets = [2, 0, 0], sizes = [1, 1, 32], strides = [1, 1, 1]} : vector<4x1x32xf32> to vector<1x1x32xf32>
    %381 = vector.shape_cast %380 : vector<1x1x32xf32> to vector<1x32xf32>
    %382 = vector.broadcast %381 : vector<1x32xf32> to vector<112x32xf32>
    %383 = arith.addf %379, %382 : vector<112x32xf32>
    %384 = arith.negf %383 : vector<112x32xf32>
    %385 = math.exp %384 : vector<112x32xf32>
    %cst_118 = arith.constant 1.000000e+00 : f32
    %386 = vector.broadcast %cst_118 : f32 to vector<112x32xf32>
    %387 = arith.addf %386, %385 : vector<112x32xf32>
    %388 = arith.divf %386, %387 : vector<112x32xf32>
    %389 = arith.mulf %383, %388 : vector<112x32xf32>
    %390 = vector.extract_strided_slice %15 {offsets = [2, 0, 0], sizes = [1, 32, 32], strides = [1, 1, 1]} : vector<4x32x32xbf16> to vector<1x32x32xbf16>
    %391 = vector.shape_cast %390 : vector<1x32x32xbf16> to vector<32x32xbf16>
    %392 = arith.truncf %389 : vector<112x32xf32> to vector<112x32xbf16>
    %cst_119 = arith.constant dense<0.000000e+00> : vector<112x32xf32>
    %393 = tpu.matmul %392, %391, %cst_119 {dimension_numbers = #tpu.dot_dimension_numbers<[1], [0], [0], [1], [0, 0, 1, 1], [], []>} : vector<112x32xbf16>, vector<32x32xbf16>, vector<112x32xf32> -> vector<112x32xf32>
    %394 = vector.extract_strided_slice %16 {offsets = [2, 0, 0], sizes = [1, 1, 32], strides = [1, 1, 1]} : vector<4x1x32xf32> to vector<1x1x32xf32>
    %395 = vector.shape_cast %394 : vector<1x1x32xf32> to vector<1x32xf32>
    %396 = vector.broadcast %395 : vector<1x32xf32> to vector<112x32xf32>
    %397 = arith.addf %393, %396 : vector<112x32xf32>
    %398 = arith.negf %397 : vector<112x32xf32>
    %399 = math.exp %398 : vector<112x32xf32>
    %cst_120 = arith.constant 1.000000e+00 : f32
    %400 = vector.broadcast %cst_120 : f32 to vector<112x32xf32>
    %401 = arith.addf %400, %399 : vector<112x32xf32>
    %402 = arith.divf %400, %401 : vector<112x32xf32>
    %403 = arith.mulf %397, %402 : vector<112x32xf32>
    %404 = vector.broadcast %4 : vector<112x1xf32> to vector<112x32xf32>
    %405 = arith.mulf %403, %404 : vector<112x32xf32>
    %406 = arith.truncf %52 : vector<16x112xf32> to vector<16x112xbf16>
    %407 = arith.truncf %405 : vector<112x32xf32> to vector<112x32xbf16>
    %cst_121 = arith.constant dense<0.000000e+00> : vector<16x32xf32>
    %408 = tpu.matmul %406, %407, %cst_121 {dimension_numbers = #tpu.dot_dimension_numbers<[1], [0], [0], [1], [0, 0, 1, 1], [], []>} : vector<16x112xbf16>, vector<112x32xbf16>, vector<16x32xf32> -> vector<16x32xf32>
    %409 = vector.extract_strided_slice %17 {offsets = [2, 0, 0], sizes = [1, 32, 32], strides = [1, 1, 1]} : vector<4x32x32xbf16> to vector<1x32x32xbf16>
    %410 = vector.shape_cast %409 : vector<1x32x32xbf16> to vector<32x32xbf16>
    %411 = arith.truncf %344 : vector<16x32xf32> to vector<16x32xbf16>
    %cst_122 = arith.constant dense<0.000000e+00> : vector<16x32xf32>
    %412 = tpu.matmul %411, %410, %cst_122 {dimension_numbers = #tpu.dot_dimension_numbers<[1], [0], [0], [1], [0, 0, 1, 1], [], []>} : vector<16x32xbf16>, vector<32x32xbf16>, vector<16x32xf32> -> vector<16x32xf32>
    %413 = vector.extract_strided_slice %18 {offsets = [2, 0, 0], sizes = [1, 32, 32], strides = [1, 1, 1]} : vector<4x32x32xbf16> to vector<1x32x32xbf16>
    %414 = vector.shape_cast %413 : vector<1x32x32xbf16> to vector<32x32xbf16>
    %415 = arith.truncf %408 : vector<16x32xf32> to vector<16x32xbf16>
    %cst_123 = arith.constant dense<0.000000e+00> : vector<16x32xf32>
    %416 = tpu.matmul %415, %414, %cst_123 {dimension_numbers = #tpu.dot_dimension_numbers<[1], [0], [0], [1], [0, 0, 1, 1], [], []>} : vector<16x32xbf16>, vector<32x32xbf16>, vector<16x32xf32> -> vector<16x32xf32>
    %417 = arith.addf %412, %416 : vector<16x32xf32>
    %418 = vector.extract_strided_slice %19 {offsets = [2, 0, 0], sizes = [1, 5, 32], strides = [1, 1, 1]} : vector<4x5x32xf32> to vector<1x5x32xf32>
    %419 = vector.shape_cast %418 : vector<1x5x32xf32> to vector<5x32xf32>
    %420 = vector.extract_strided_slice %0 {offsets = [0, 0], sizes = [16, 1], strides = [1, 1]} : vector<16x5xf32> to vector<16x1xf32>
    %421 = vector.extract_strided_slice %419 {offsets = [0, 0], sizes = [1, 32], strides = [1, 1]} : vector<5x32xf32> to vector<1x32xf32>
    %422 = vector.broadcast %420 : vector<16x1xf32> to vector<16x32xf32>
    %423 = vector.broadcast %421 : vector<1x32xf32> to vector<16x32xf32>
    %424 = arith.mulf %422, %423 : vector<16x32xf32>
    %425 = vector.extract_strided_slice %0 {offsets = [0, 1], sizes = [16, 1], strides = [1, 1]} : vector<16x5xf32> to vector<16x1xf32>
    %426 = vector.extract_strided_slice %419 {offsets = [1, 0], sizes = [1, 32], strides = [1, 1]} : vector<5x32xf32> to vector<1x32xf32>
    %427 = vector.broadcast %425 : vector<16x1xf32> to vector<16x32xf32>
    %428 = vector.broadcast %426 : vector<1x32xf32> to vector<16x32xf32>
    %429 = arith.mulf %427, %428 : vector<16x32xf32>
    %430 = arith.addf %424, %429 : vector<16x32xf32>
    %431 = vector.extract_strided_slice %0 {offsets = [0, 2], sizes = [16, 1], strides = [1, 1]} : vector<16x5xf32> to vector<16x1xf32>
    %432 = vector.extract_strided_slice %419 {offsets = [2, 0], sizes = [1, 32], strides = [1, 1]} : vector<5x32xf32> to vector<1x32xf32>
    %433 = vector.broadcast %431 : vector<16x1xf32> to vector<16x32xf32>
    %434 = vector.broadcast %432 : vector<1x32xf32> to vector<16x32xf32>
    %435 = arith.mulf %433, %434 : vector<16x32xf32>
    %436 = arith.addf %430, %435 : vector<16x32xf32>
    %437 = vector.extract_strided_slice %0 {offsets = [0, 3], sizes = [16, 1], strides = [1, 1]} : vector<16x5xf32> to vector<16x1xf32>
    %438 = vector.extract_strided_slice %419 {offsets = [3, 0], sizes = [1, 32], strides = [1, 1]} : vector<5x32xf32> to vector<1x32xf32>
    %439 = vector.broadcast %437 : vector<16x1xf32> to vector<16x32xf32>
    %440 = vector.broadcast %438 : vector<1x32xf32> to vector<16x32xf32>
    %441 = arith.mulf %439, %440 : vector<16x32xf32>
    %442 = arith.addf %436, %441 : vector<16x32xf32>
    %443 = vector.extract_strided_slice %0 {offsets = [0, 4], sizes = [16, 1], strides = [1, 1]} : vector<16x5xf32> to vector<16x1xf32>
    %444 = vector.extract_strided_slice %419 {offsets = [4, 0], sizes = [1, 32], strides = [1, 1]} : vector<5x32xf32> to vector<1x32xf32>
    %445 = vector.broadcast %443 : vector<16x1xf32> to vector<16x32xf32>
    %446 = vector.broadcast %444 : vector<1x32xf32> to vector<16x32xf32>
    %447 = arith.mulf %445, %446 : vector<16x32xf32>
    %448 = arith.addf %442, %447 : vector<16x32xf32>
    %449 = arith.addf %417, %448 : vector<16x32xf32>
    %450 = vector.extract_strided_slice %20 {offsets = [2, 0, 0], sizes = [1, 1, 32], strides = [1, 1, 1]} : vector<4x1x32xf32> to vector<1x1x32xf32>
    %451 = vector.shape_cast %450 : vector<1x1x32xf32> to vector<1x32xf32>
    %452 = vector.broadcast %451 : vector<1x32xf32> to vector<16x32xf32>
    %453 = arith.addf %449, %452 : vector<16x32xf32>
    %454 = arith.negf %453 : vector<16x32xf32>
    %455 = math.exp %454 : vector<16x32xf32>
    %cst_124 = arith.constant 1.000000e+00 : f32
    %456 = vector.broadcast %cst_124 : f32 to vector<16x32xf32>
    %457 = arith.addf %456, %455 : vector<16x32xf32>
    %458 = arith.divf %456, %457 : vector<16x32xf32>
    %459 = arith.mulf %453, %458 : vector<16x32xf32>
    %460 = vector.extract_strided_slice %21 {offsets = [2, 0, 0], sizes = [1, 32, 32], strides = [1, 1, 1]} : vector<4x32x32xbf16> to vector<1x32x32xbf16>
    %461 = vector.shape_cast %460 : vector<1x32x32xbf16> to vector<32x32xbf16>
    %462 = arith.truncf %459 : vector<16x32xf32> to vector<16x32xbf16>
    %cst_125 = arith.constant dense<0.000000e+00> : vector<16x32xf32>
    %463 = tpu.matmul %462, %461, %cst_125 {dimension_numbers = #tpu.dot_dimension_numbers<[1], [0], [0], [1], [0, 0, 1, 1], [], []>} : vector<16x32xbf16>, vector<32x32xbf16>, vector<16x32xf32> -> vector<16x32xf32>
    %464 = arith.addf %344, %463 : vector<16x32xf32>
    %465 = vector.extract_strided_slice %22 {offsets = [2, 0, 0], sizes = [1, 1, 32], strides = [1, 1, 1]} : vector<4x1x32xf32> to vector<1x1x32xf32>
    %466 = vector.shape_cast %465 : vector<1x1x32xf32> to vector<1x32xf32>
    %467 = vector.broadcast %466 : vector<1x32xf32> to vector<16x32xf32>
    %468 = arith.addf %464, %467 : vector<16x32xf32>
    %469 = arith.truncf %43 : vector<112x16xf32> to vector<112x16xbf16>
    %470 = arith.truncf %468 : vector<16x32xf32> to vector<16x32xbf16>
    %cst_126 = arith.constant dense<0.000000e+00> : vector<112x32xf32>
    %471 = tpu.matmul %469, %470, %cst_126 {dimension_numbers = #tpu.dot_dimension_numbers<[1], [0], [0], [1], [0, 0, 1, 1], [], []>} : vector<112x16xbf16>, vector<16x32xbf16>, vector<112x32xf32> -> vector<112x32xf32>
    %472 = arith.truncf %47 : vector<112x16xf32> to vector<112x16xbf16>
    %473 = arith.truncf %468 : vector<16x32xf32> to vector<16x32xbf16>
    %cst_127 = arith.constant dense<0.000000e+00> : vector<112x32xf32>
    %474 = tpu.matmul %472, %473, %cst_127 {dimension_numbers = #tpu.dot_dimension_numbers<[1], [0], [0], [1], [0, 0, 1, 1], [], []>} : vector<112x16xbf16>, vector<16x32xbf16>, vector<112x32xf32> -> vector<112x32xf32>
    %475 = vector.extract_strided_slice %10 {offsets = [3, 0, 0], sizes = [1, 32, 32], strides = [1, 1, 1]} : vector<4x32x32xbf16> to vector<1x32x32xbf16>
    %476 = vector.shape_cast %475 : vector<1x32x32xbf16> to vector<32x32xbf16>
    %477 = arith.truncf %471 : vector<112x32xf32> to vector<112x32xbf16>
    %cst_128 = arith.constant dense<0.000000e+00> : vector<112x32xf32>
    %478 = tpu.matmul %477, %476, %cst_128 {dimension_numbers = #tpu.dot_dimension_numbers<[1], [0], [0], [1], [0, 0, 1, 1], [], []>} : vector<112x32xbf16>, vector<32x32xbf16>, vector<112x32xf32> -> vector<112x32xf32>
    %479 = vector.extract_strided_slice %11 {offsets = [3, 0, 0], sizes = [1, 32, 32], strides = [1, 1, 1]} : vector<4x32x32xbf16> to vector<1x32x32xbf16>
    %480 = vector.shape_cast %479 : vector<1x32x32xbf16> to vector<32x32xbf16>
    %481 = arith.truncf %474 : vector<112x32xf32> to vector<112x32xbf16>
    %cst_129 = arith.constant dense<0.000000e+00> : vector<112x32xf32>
    %482 = tpu.matmul %481, %480, %cst_129 {dimension_numbers = #tpu.dot_dimension_numbers<[1], [0], [0], [1], [0, 0, 1, 1], [], []>} : vector<112x32xbf16>, vector<32x32xbf16>, vector<112x32xf32> -> vector<112x32xf32>
    %483 = arith.addf %478, %482 : vector<112x32xf32>
    %484 = vector.extract_strided_slice %12 {offsets = [3, 0, 0], sizes = [1, 1, 32], strides = [1, 1, 1]} : vector<4x1x32xf32> to vector<1x1x32xf32>
    %485 = vector.shape_cast %484 : vector<1x1x32xf32> to vector<1x32xf32>
    %486 = vector.broadcast %1 : vector<112x1xf32> to vector<112x32xf32>
    %487 = vector.broadcast %485 : vector<1x32xf32> to vector<112x32xf32>
    %488 = arith.mulf %486, %487 : vector<112x32xf32>
    %489 = arith.addf %483, %488 : vector<112x32xf32>
    %490 = vector.extract_strided_slice %13 {offsets = [3, 0, 0], sizes = [1, 2, 32], strides = [1, 1, 1]} : vector<4x2x32xf32> to vector<1x2x32xf32>
    %491 = vector.shape_cast %490 : vector<1x2x32xf32> to vector<2x32xf32>
    %492 = vector.extract_strided_slice %2 {offsets = [0, 0], sizes = [112, 1], strides = [1, 1]} : vector<112x2xf32> to vector<112x1xf32>
    %493 = vector.extract_strided_slice %491 {offsets = [0, 0], sizes = [1, 32], strides = [1, 1]} : vector<2x32xf32> to vector<1x32xf32>
    %494 = vector.broadcast %492 : vector<112x1xf32> to vector<112x32xf32>
    %495 = vector.broadcast %493 : vector<1x32xf32> to vector<112x32xf32>
    %496 = arith.mulf %494, %495 : vector<112x32xf32>
    %497 = vector.extract_strided_slice %2 {offsets = [0, 1], sizes = [112, 1], strides = [1, 1]} : vector<112x2xf32> to vector<112x1xf32>
    %498 = vector.extract_strided_slice %491 {offsets = [1, 0], sizes = [1, 32], strides = [1, 1]} : vector<2x32xf32> to vector<1x32xf32>
    %499 = vector.broadcast %497 : vector<112x1xf32> to vector<112x32xf32>
    %500 = vector.broadcast %498 : vector<1x32xf32> to vector<112x32xf32>
    %501 = arith.mulf %499, %500 : vector<112x32xf32>
    %502 = arith.addf %496, %501 : vector<112x32xf32>
    %503 = arith.addf %489, %502 : vector<112x32xf32>
    %504 = vector.extract_strided_slice %14 {offsets = [3, 0, 0], sizes = [1, 1, 32], strides = [1, 1, 1]} : vector<4x1x32xf32> to vector<1x1x32xf32>
    %505 = vector.shape_cast %504 : vector<1x1x32xf32> to vector<1x32xf32>
    %506 = vector.broadcast %505 : vector<1x32xf32> to vector<112x32xf32>
    %507 = arith.addf %503, %506 : vector<112x32xf32>
    %508 = arith.negf %507 : vector<112x32xf32>
    %509 = math.exp %508 : vector<112x32xf32>
    %cst_130 = arith.constant 1.000000e+00 : f32
    %510 = vector.broadcast %cst_130 : f32 to vector<112x32xf32>
    %511 = arith.addf %510, %509 : vector<112x32xf32>
    %512 = arith.divf %510, %511 : vector<112x32xf32>
    %513 = arith.mulf %507, %512 : vector<112x32xf32>
    %514 = vector.extract_strided_slice %15 {offsets = [3, 0, 0], sizes = [1, 32, 32], strides = [1, 1, 1]} : vector<4x32x32xbf16> to vector<1x32x32xbf16>
    %515 = vector.shape_cast %514 : vector<1x32x32xbf16> to vector<32x32xbf16>
    %516 = arith.truncf %513 : vector<112x32xf32> to vector<112x32xbf16>
    %cst_131 = arith.constant dense<0.000000e+00> : vector<112x32xf32>
    %517 = tpu.matmul %516, %515, %cst_131 {dimension_numbers = #tpu.dot_dimension_numbers<[1], [0], [0], [1], [0, 0, 1, 1], [], []>} : vector<112x32xbf16>, vector<32x32xbf16>, vector<112x32xf32> -> vector<112x32xf32>
    %518 = vector.extract_strided_slice %16 {offsets = [3, 0, 0], sizes = [1, 1, 32], strides = [1, 1, 1]} : vector<4x1x32xf32> to vector<1x1x32xf32>
    %519 = vector.shape_cast %518 : vector<1x1x32xf32> to vector<1x32xf32>
    %520 = vector.broadcast %519 : vector<1x32xf32> to vector<112x32xf32>
    %521 = arith.addf %517, %520 : vector<112x32xf32>
    %522 = arith.negf %521 : vector<112x32xf32>
    %523 = math.exp %522 : vector<112x32xf32>
    %cst_132 = arith.constant 1.000000e+00 : f32
    %524 = vector.broadcast %cst_132 : f32 to vector<112x32xf32>
    %525 = arith.addf %524, %523 : vector<112x32xf32>
    %526 = arith.divf %524, %525 : vector<112x32xf32>
    %527 = arith.mulf %521, %526 : vector<112x32xf32>
    %528 = vector.broadcast %4 : vector<112x1xf32> to vector<112x32xf32>
    %529 = arith.mulf %527, %528 : vector<112x32xf32>
    %530 = arith.truncf %52 : vector<16x112xf32> to vector<16x112xbf16>
    %531 = arith.truncf %529 : vector<112x32xf32> to vector<112x32xbf16>
    %cst_133 = arith.constant dense<0.000000e+00> : vector<16x32xf32>
    %532 = tpu.matmul %530, %531, %cst_133 {dimension_numbers = #tpu.dot_dimension_numbers<[1], [0], [0], [1], [0, 0, 1, 1], [], []>} : vector<16x112xbf16>, vector<112x32xbf16>, vector<16x32xf32> -> vector<16x32xf32>
    %533 = vector.extract_strided_slice %17 {offsets = [3, 0, 0], sizes = [1, 32, 32], strides = [1, 1, 1]} : vector<4x32x32xbf16> to vector<1x32x32xbf16>
    %534 = vector.shape_cast %533 : vector<1x32x32xbf16> to vector<32x32xbf16>
    %535 = arith.truncf %468 : vector<16x32xf32> to vector<16x32xbf16>
    %cst_134 = arith.constant dense<0.000000e+00> : vector<16x32xf32>
    %536 = tpu.matmul %535, %534, %cst_134 {dimension_numbers = #tpu.dot_dimension_numbers<[1], [0], [0], [1], [0, 0, 1, 1], [], []>} : vector<16x32xbf16>, vector<32x32xbf16>, vector<16x32xf32> -> vector<16x32xf32>
    %537 = vector.extract_strided_slice %18 {offsets = [3, 0, 0], sizes = [1, 32, 32], strides = [1, 1, 1]} : vector<4x32x32xbf16> to vector<1x32x32xbf16>
    %538 = vector.shape_cast %537 : vector<1x32x32xbf16> to vector<32x32xbf16>
    %539 = arith.truncf %532 : vector<16x32xf32> to vector<16x32xbf16>
    %cst_135 = arith.constant dense<0.000000e+00> : vector<16x32xf32>
    %540 = tpu.matmul %539, %538, %cst_135 {dimension_numbers = #tpu.dot_dimension_numbers<[1], [0], [0], [1], [0, 0, 1, 1], [], []>} : vector<16x32xbf16>, vector<32x32xbf16>, vector<16x32xf32> -> vector<16x32xf32>
    %541 = arith.addf %536, %540 : vector<16x32xf32>
    %542 = vector.extract_strided_slice %19 {offsets = [3, 0, 0], sizes = [1, 5, 32], strides = [1, 1, 1]} : vector<4x5x32xf32> to vector<1x5x32xf32>
    %543 = vector.shape_cast %542 : vector<1x5x32xf32> to vector<5x32xf32>
    %544 = vector.extract_strided_slice %0 {offsets = [0, 0], sizes = [16, 1], strides = [1, 1]} : vector<16x5xf32> to vector<16x1xf32>
    %545 = vector.extract_strided_slice %543 {offsets = [0, 0], sizes = [1, 32], strides = [1, 1]} : vector<5x32xf32> to vector<1x32xf32>
    %546 = vector.broadcast %544 : vector<16x1xf32> to vector<16x32xf32>
    %547 = vector.broadcast %545 : vector<1x32xf32> to vector<16x32xf32>
    %548 = arith.mulf %546, %547 : vector<16x32xf32>
    %549 = vector.extract_strided_slice %0 {offsets = [0, 1], sizes = [16, 1], strides = [1, 1]} : vector<16x5xf32> to vector<16x1xf32>
    %550 = vector.extract_strided_slice %543 {offsets = [1, 0], sizes = [1, 32], strides = [1, 1]} : vector<5x32xf32> to vector<1x32xf32>
    %551 = vector.broadcast %549 : vector<16x1xf32> to vector<16x32xf32>
    %552 = vector.broadcast %550 : vector<1x32xf32> to vector<16x32xf32>
    %553 = arith.mulf %551, %552 : vector<16x32xf32>
    %554 = arith.addf %548, %553 : vector<16x32xf32>
    %555 = vector.extract_strided_slice %0 {offsets = [0, 2], sizes = [16, 1], strides = [1, 1]} : vector<16x5xf32> to vector<16x1xf32>
    %556 = vector.extract_strided_slice %543 {offsets = [2, 0], sizes = [1, 32], strides = [1, 1]} : vector<5x32xf32> to vector<1x32xf32>
    %557 = vector.broadcast %555 : vector<16x1xf32> to vector<16x32xf32>
    %558 = vector.broadcast %556 : vector<1x32xf32> to vector<16x32xf32>
    %559 = arith.mulf %557, %558 : vector<16x32xf32>
    %560 = arith.addf %554, %559 : vector<16x32xf32>
    %561 = vector.extract_strided_slice %0 {offsets = [0, 3], sizes = [16, 1], strides = [1, 1]} : vector<16x5xf32> to vector<16x1xf32>
    %562 = vector.extract_strided_slice %543 {offsets = [3, 0], sizes = [1, 32], strides = [1, 1]} : vector<5x32xf32> to vector<1x32xf32>
    %563 = vector.broadcast %561 : vector<16x1xf32> to vector<16x32xf32>
    %564 = vector.broadcast %562 : vector<1x32xf32> to vector<16x32xf32>
    %565 = arith.mulf %563, %564 : vector<16x32xf32>
    %566 = arith.addf %560, %565 : vector<16x32xf32>
    %567 = vector.extract_strided_slice %0 {offsets = [0, 4], sizes = [16, 1], strides = [1, 1]} : vector<16x5xf32> to vector<16x1xf32>
    %568 = vector.extract_strided_slice %543 {offsets = [4, 0], sizes = [1, 32], strides = [1, 1]} : vector<5x32xf32> to vector<1x32xf32>
    %569 = vector.broadcast %567 : vector<16x1xf32> to vector<16x32xf32>
    %570 = vector.broadcast %568 : vector<1x32xf32> to vector<16x32xf32>
    %571 = arith.mulf %569, %570 : vector<16x32xf32>
    %572 = arith.addf %566, %571 : vector<16x32xf32>
    %573 = arith.addf %541, %572 : vector<16x32xf32>
    %574 = vector.extract_strided_slice %20 {offsets = [3, 0, 0], sizes = [1, 1, 32], strides = [1, 1, 1]} : vector<4x1x32xf32> to vector<1x1x32xf32>
    %575 = vector.shape_cast %574 : vector<1x1x32xf32> to vector<1x32xf32>
    %576 = vector.broadcast %575 : vector<1x32xf32> to vector<16x32xf32>
    %577 = arith.addf %573, %576 : vector<16x32xf32>
    %578 = arith.negf %577 : vector<16x32xf32>
    %579 = math.exp %578 : vector<16x32xf32>
    %cst_136 = arith.constant 1.000000e+00 : f32
    %580 = vector.broadcast %cst_136 : f32 to vector<16x32xf32>
    %581 = arith.addf %580, %579 : vector<16x32xf32>
    %582 = arith.divf %580, %581 : vector<16x32xf32>
    %583 = arith.mulf %577, %582 : vector<16x32xf32>
    %584 = vector.extract_strided_slice %21 {offsets = [3, 0, 0], sizes = [1, 32, 32], strides = [1, 1, 1]} : vector<4x32x32xbf16> to vector<1x32x32xbf16>
    %585 = vector.shape_cast %584 : vector<1x32x32xbf16> to vector<32x32xbf16>
    %586 = arith.truncf %583 : vector<16x32xf32> to vector<16x32xbf16>
    %cst_137 = arith.constant dense<0.000000e+00> : vector<16x32xf32>
    %587 = tpu.matmul %586, %585, %cst_137 {dimension_numbers = #tpu.dot_dimension_numbers<[1], [0], [0], [1], [0, 0, 1, 1], [], []>} : vector<16x32xbf16>, vector<32x32xbf16>, vector<16x32xf32> -> vector<16x32xf32>
    %588 = arith.addf %468, %587 : vector<16x32xf32>
    %589 = vector.extract_strided_slice %22 {offsets = [3, 0, 0], sizes = [1, 1, 32], strides = [1, 1, 1]} : vector<4x1x32xf32> to vector<1x1x32xf32>
    %590 = vector.shape_cast %589 : vector<1x1x32xf32> to vector<1x32xf32>
    %591 = vector.broadcast %590 : vector<1x32xf32> to vector<16x32xf32>
    %592 = arith.addf %588, %591 : vector<16x32xf32>
    %593 = arith.truncf %592 : vector<16x32xf32> to vector<16x32xbf16>
    %cst_138 = arith.constant dense<0.000000e+00> : vector<16x32xf32>
    %594 = tpu.matmul %593, %23, %cst_138 {dimension_numbers = #tpu.dot_dimension_numbers<[1], [0], [0], [1], [0, 0, 1, 1], [], []>} : vector<16x32xbf16>, vector<32x32xbf16>, vector<16x32xf32> -> vector<16x32xf32>
    %595 = vector.broadcast %24 : vector<1x32xf32> to vector<16x32xf32>
    %596 = arith.addf %594, %595 : vector<16x32xf32>
    %597 = arith.negf %596 : vector<16x32xf32>
    %598 = math.exp %597 : vector<16x32xf32>
    %cst_139 = arith.constant 1.000000e+00 : f32
    %599 = vector.broadcast %cst_139 : f32 to vector<16x32xf32>
    %600 = arith.addf %599, %598 : vector<16x32xf32>
    %601 = arith.divf %599, %600 : vector<16x32xf32>
    %602 = arith.mulf %596, %601 : vector<16x32xf32>
    %603 = arith.truncf %602 : vector<16x32xf32> to vector<16x32xbf16>
    %cst_140 = arith.constant dense<0.000000e+00> : vector<16x32xf32>
    %604 = tpu.matmul %603, %25, %cst_140 {dimension_numbers = #tpu.dot_dimension_numbers<[1], [0], [0], [1], [0, 0, 1, 1], [], []>} : vector<16x32xbf16>, vector<32x32xbf16>, vector<16x32xf32> -> vector<16x32xf32>
    %605 = vector.broadcast %26 : vector<1x32xf32> to vector<16x32xf32>
    %606 = arith.addf %604, %605 : vector<16x32xf32>
    %607 = vector.broadcast %3 : vector<16x1xf32> to vector<16x32xf32>
    %608 = arith.mulf %606, %607 : vector<16x32xf32>
    %609 = arith.truncf %65 : vector<2x16xf32> to vector<2x16xbf16>
    %610 = arith.truncf %608 : vector<16x32xf32> to vector<16x32xbf16>
    %cst_141 = arith.constant dense<0.000000e+00> : vector<2x32xf32>
    %611 = tpu.matmul %609, %610, %cst_141 {dimension_numbers = #tpu.dot_dimension_numbers<[1], [0], [0], [1], [0, 0, 1, 1], [], []>} : vector<2x16xbf16>, vector<16x32xbf16>, vector<2x32xf32> -> vector<2x32xf32>
    %612 = arith.truncf %611 : vector<2x32xf32> to vector<2x32xbf16>
    %cst_142 = arith.constant dense<0.000000e+00> : vector<2x32xf32>
    %613 = tpu.matmul %612, %31, %cst_142 {dimension_numbers = #tpu.dot_dimension_numbers<[1], [0], [0], [1], [0, 0, 1, 1], [], []>} : vector<2x32xbf16>, vector<32x32xbf16>, vector<2x32xf32> -> vector<2x32xf32>
    %614 = vector.broadcast %32 : vector<1x32xf32> to vector<2x32xf32>
    %615 = arith.addf %613, %614 : vector<2x32xf32>
    %616 = arith.negf %615 : vector<2x32xf32>
    %617 = math.exp %616 : vector<2x32xf32>
    %cst_143 = arith.constant 1.000000e+00 : f32
    %618 = vector.broadcast %cst_143 : f32 to vector<2x32xf32>
    %619 = arith.addf %618, %617 : vector<2x32xf32>
    %620 = arith.divf %618, %619 : vector<2x32xf32>
    %621 = arith.mulf %615, %620 : vector<2x32xf32>
    %622 = arith.truncf %621 : vector<2x32xf32> to vector<2x32xbf16>
    %cst_144 = arith.constant dense<0.000000e+00> : vector<2x1xf32>
    %623 = tpu.matmul %622, %33, %cst_144 {dimension_numbers = #tpu.dot_dimension_numbers<[1], [0], [0], [1], [0, 0, 1, 1], [], []>} : vector<2x32xbf16>, vector<32x1xbf16>, vector<2x1xf32> -> vector<2x1xf32>
    %624 = vector.broadcast %34 : vector<1x1xf32> to vector<2x1xf32>
    %625 = arith.addf %623, %624 : vector<2x1xf32>
    %626 = arith.truncf %592 : vector<16x32xf32> to vector<16x32xbf16>
    %cst_145 = arith.constant dense<0.000000e+00> : vector<16x32xf32>
    %627 = tpu.matmul %626, %27, %cst_145 {dimension_numbers = #tpu.dot_dimension_numbers<[1], [0], [0], [1], [0, 0, 1, 1], [], []>} : vector<16x32xbf16>, vector<32x32xbf16>, vector<16x32xf32> -> vector<16x32xf32>
    %628 = vector.broadcast %28 : vector<1x32xf32> to vector<16x32xf32>
    %629 = arith.addf %627, %628 : vector<16x32xf32>
    %630 = arith.negf %629 : vector<16x32xf32>
    %631 = math.exp %630 : vector<16x32xf32>
    %cst_146 = arith.constant 1.000000e+00 : f32
    %632 = vector.broadcast %cst_146 : f32 to vector<16x32xf32>
    %633 = arith.addf %632, %631 : vector<16x32xf32>
    %634 = arith.divf %632, %633 : vector<16x32xf32>
    %635 = arith.mulf %629, %634 : vector<16x32xf32>
    %636 = arith.truncf %635 : vector<16x32xf32> to vector<16x32xbf16>
    %cst_147 = arith.constant dense<0.000000e+00> : vector<16x32xf32>
    %637 = tpu.matmul %636, %29, %cst_147 {dimension_numbers = #tpu.dot_dimension_numbers<[1], [0], [0], [1], [0, 0, 1, 1], [], []>} : vector<16x32xbf16>, vector<32x32xbf16>, vector<16x32xf32> -> vector<16x32xf32>
    %638 = vector.broadcast %30 : vector<1x32xf32> to vector<16x32xf32>
    %639 = arith.addf %637, %638 : vector<16x32xf32>
    %640 = vector.broadcast %3 : vector<16x1xf32> to vector<16x32xf32>
    %641 = arith.mulf %639, %640 : vector<16x32xf32>
    %642 = arith.truncf %641 : vector<16x32xf32> to vector<16x32xbf16>
    %cst_148 = arith.constant dense<0.000000e+00> : vector<16x32xf32>
    %643 = tpu.matmul %642, %35, %cst_148 {dimension_numbers = #tpu.dot_dimension_numbers<[1], [0], [0], [1], [0, 0, 1, 1], [], []>} : vector<16x32xbf16>, vector<32x32xbf16>, vector<16x32xf32> -> vector<16x32xf32>
    %644 = vector.broadcast %36 : vector<1x32xf32> to vector<16x32xf32>
    %645 = arith.addf %643, %644 : vector<16x32xf32>
    %646 = arith.negf %645 : vector<16x32xf32>
    %647 = math.exp %646 : vector<16x32xf32>
    %cst_149 = arith.constant 1.000000e+00 : f32
    %648 = vector.broadcast %cst_149 : f32 to vector<16x32xf32>
    %649 = arith.addf %648, %647 : vector<16x32xf32>
    %650 = arith.divf %648, %649 : vector<16x32xf32>
    %651 = arith.mulf %645, %650 : vector<16x32xf32>
    %652 = arith.truncf %651 : vector<16x32xf32> to vector<16x32xbf16>
    %cst_150 = arith.constant dense<0.000000e+00> : vector<16x3xf32>
    %653 = tpu.matmul %652, %37, %cst_150 {dimension_numbers = #tpu.dot_dimension_numbers<[1], [0], [0], [1], [0, 0, 1, 1], [], []>} : vector<16x32xbf16>, vector<32x3xbf16>, vector<16x3xf32> -> vector<16x3xf32>
    %654 = vector.broadcast %38 : vector<1x3xf32> to vector<16x3xf32>
    %655 = arith.addf %653, %654 : vector<16x3xf32>
    %c0_151 = arith.constant 0 : index
    %c0_152 = arith.constant 0 : index
    %656 = vector.load %arg39[%c0_151, %c0_152] : memref<2x1xf32, #tpu.memory_space<vmem>>, vector<2x1xf32>
    tpu.vector_store %arg39[%c0_151, %c0_152], %625 {strides = array<i32>} : memref<2x1xf32, #tpu.memory_space<vmem>>, vector<2x1xf32>,
    %c0_153 = arith.constant 0 : index
    %c0_154 = arith.constant 0 : index
    %657 = vector.load %arg40[%c0_153, %c0_154] : memref<16x3xf32, #tpu.memory_space<vmem>>, vector<16x3xf32>
    tpu.vector_store %arg40[%c0_153, %c0_154], %655 {strides = array<i32>} : memref<16x3xf32, #tpu.memory_space<vmem>>, vector<16x3xf32>,
    return
  }
}

</mosaic_0001>

<llo_original>
// kernel: two_headed_egnn_forward.1
$region0: #{two_headed_egnn_forward.1}
  #allocation0 [shape = 'u32[]', space=smem, size = 0x4, offset = 0x4, fixed_abs, tag = 'smem constant byte address 0x4 - core index']
  #allocation1 [shape = 'u32[144,128]{1,0:T(1,128)}', space=vmem, size = 0x12000, scoped, tag = 'internal scratch']
  #allocation2 [shape = 'f32[1,1]{1,0:T(1,128)S(1)}', space=vmem, size = 0x200, scoped, tag = 'scoped memory for two_headed_egnn_forward.1']
  %s0 = inlined_call_operand.smem [shape: u32[41], index: -1, kind: input, shape index: {}]
  %s1 = sld [smem:[%s0]]
  %s2 = scalar_lea.smem %s0, 1
  %s3 = sld [smem:[%s2]]
  %s4 = scalar_lea.smem %s0, 2
  %s5 = sld [smem:[%s4]]
  %s6 = scalar_lea.smem %s0, 3
  %s7 = sld [smem:[%s6]]
  %s8 = scalar_lea.smem %s0, 4
  %s9 = sld [smem:[%s8]]
  %s10 = scalar_lea.smem %s0, 5
  %s11 = sld [smem:[%s10]]
  %s12 = scalar_lea.smem %s0, 6
  %s13 = sld [smem:[%s12]]
  %s14 = scalar_lea.smem %s0, 7
  %s15 = sld [smem:[%s14]]
  %s16 = scalar_lea.smem %s0, 8
  %s17 = sld [smem:[%s16]]
  %s18 = scalar_lea.smem %s0, 9
  %s19 = sld [smem:[%s18]]
  %s20 = scalar_lea.smem %s0, 10
  %s21 = sld [smem:[%s20]]
  %s22 = scalar_lea.smem %s0, 11
  %s23 = sld [smem:[%s22]]
  %s24 = scalar_lea.smem %s0, 12
  %s25 = sld [smem:[%s24]]
  %s26 = scalar_lea.smem %s0, 13
  %s27 = sld [smem:[%s26]]
  %s28 = scalar_lea.smem %s0, 14
  %s29 = sld [smem:[%s28]]
  %s30 = scalar_lea.smem %s0, 15
  %s31 = sld [smem:[%s30]]
  %s32 = scalar_lea.smem %s0, 16
  %s33 = sld [smem:[%s32]]
  %s34 = scalar_lea.smem %s0, 17
  %s35 = sld [smem:[%s34]]
  %s36 = scalar_lea.smem %s0, 18
  %s37 = sld [smem:[%s36]]
  %s38 = scalar_lea.smem %s0, 19
  %s39 = sld [smem:[%s38]]
  %s40 = scalar_lea.smem %s0, 20
  %s41 = sld [smem:[%s40]]
  %s42 = scalar_lea.smem %s0, 21
  %s43 = sld [smem:[%s42]]
  %s44 = scalar_lea.smem %s0, 22
  %s45 = sld [smem:[%s44]]
  %s46 = scalar_lea.smem %s0, 23
  %s47 = sld [smem:[%s46]]
  %s48 = scalar_lea.smem %s0, 24
  %s49 = sld [smem:[%s48]]
  %s50 = scalar_lea.smem %s0, 25
  %s51 = sld [smem:[%s50]]
  %s52 = scalar_lea.smem %s0, 26
  %s53 = sld [smem:[%s52]]
  %s54 = scalar_lea.smem %s0, 27
  %s55 = sld [smem:[%s54]]
  %s56 = scalar_lea.smem %s0, 28
  %s57 = sld [smem:[%s56]]
  %s58 = scalar_lea.smem %s0, 29
  %s59 = sld [smem:[%s58]]
  %s60 = scalar_lea.smem %s0, 30
  %s61 = sld [smem:[%s60]]
  %s62 = scalar_lea.smem %s0, 31
  %s63 = sld [smem:[%s62]]
  %s64 = scalar_lea.smem %s0, 32
  %s65 = sld [smem:[%s64]]
  %s66 = scalar_lea.smem %s0, 33
  %s67 = sld [smem:[%s66]]
  %s68 = scalar_lea.smem %s0, 34
  %s69 = sld [smem:[%s68]]
  %s70 = scalar_lea.smem %s0, 35
  %s71 = sld [smem:[%s70]]
  %s72 = scalar_lea.smem %s0, 36
  %s73 = sld [smem:[%s72]]
  %s74 = scalar_lea.smem %s0, 37
  %s75 = sld [smem:[%s74]]
  %s76 = scalar_lea.smem %s0, 38
  %s77 = sld [smem:[%s76]]
  %s78 = scalar_lea.smem %s0, 39
  %s79 = sld [smem:[%s78]]
  %s80 = scalar_lea.smem %s0, 40
  %s81 = sld [smem:[%s80]]
  %82 = xla_tuple %s79, %s81
  %s83 = sld [smem:[#allocation0]]
  $region174: #{two_headed_egnn_forward.1} parent=0
    _
  %s85 = ssub.s32 1, %s83
  %s86 = scalar_select 0, %s85, %s83
  %v87 = vstv %s69
  %88 = vst [vmem:[#allocation2] sm:$0x1] %v87
  // Predicated region
  $region2: #{two_headed_egnn_forward.1} parent=0 // pred_check
    _
  $region3: #{two_headed_egnn_forward.1} parent=0 // pred_check_branch
    %90 = sbr.rel (0) target = $region5
  $region4: #{two_headed_egnn_forward.1} parent=0 // pred_region
    _
  $region5: #{two_headed_egnn_forward.1} parent=0 // pred_fallthru
    _
  // Predicated region
  $region6: #{two_headed_egnn_forward.1} parent=0 // pred_check
    _
  $region7: #{two_headed_egnn_forward.1} parent=0 // pred_check_branch
    %92 = sbr.rel (0) target = $region9
  $region8: #{two_headed_egnn_forward.1} parent=0 // pred_region
    _
  $region9: #{two_headed_egnn_forward.1} parent=0 // pred_fallthru
    _
  // Predicated region
  $region10: #{two_headed_egnn_forward.1} parent=0 // pred_check
    _
  $region11: #{two_headed_egnn_forward.1} parent=0 // pred_check_branch
    %94 = sbr.rel (0) target = $region13
  $region12: #{two_headed_egnn_forward.1} parent=0 // pred_region
    _
  $region13: #{two_headed_egnn_forward.1} parent=0 // pred_fallthru
    _
  // Predicated region
  $region14: #{two_headed_egnn_forward.1} parent=0 // pred_check
    _
  $region15: #{two_headed_egnn_forward.1} parent=0 // pred_check_branch
    %96 = sbr.rel (0) target = $region17
  $region16: #{two_headed_egnn_forward.1} parent=0 // pred_region
    _
  $region17: #{two_headed_egnn_forward.1} parent=0 // pred_fallthru
    _
  // Predicated region
  $region18: #{two_headed_egnn_forward.1} parent=0 // pred_check
    _
  $region19: #{two_headed_egnn_forward.1} parent=0 // pred_check_branch
    %98 = sbr.rel (0) target = $region21
  $region20: #{two_headed_egnn_forward.1} parent=0 // pred_region
    _
  $region21: #{two_headed_egnn_forward.1} parent=0 // pred_fallthru
    _
  // Predicated region
  $region22: #{two_headed_egnn_forward.1} parent=0 // pred_check
    _
  $region23: #{two_headed_egnn_forward.1} parent=0 // pred_check_branch
    %100 = sbr.rel (0) target = $region25
  $region24: #{two_headed_egnn_forward.1} parent=0 // pred_region
    _
  $region25: #{two_headed_egnn_forward.1} parent=0 // pred_fallthru
    _
  // Predicated region
  $region26: #{two_headed_egnn_forward.1} parent=0 // pred_check
    _
  $region27: #{two_headed_egnn_forward.1} parent=0 // pred_check_branch
    %102 = sbr.rel (0) target = $region29
  $region28: #{two_headed_egnn_forward.1} parent=0 // pred_region
    _
  $region29: #{two_headed_egnn_forward.1} parent=0 // pred_fallthru
    _
  // Predicated region
  $region30: #{two_headed_egnn_forward.1} parent=0 // pred_check
    _
  $region31: #{two_headed_egnn_forward.1} parent=0 // pred_check_branch
    %104 = sbr.rel (0) target = $region33
  $region32: #{two_headed_egnn_forward.1} parent=0 // pred_region
    _
  $region33: #{two_headed_egnn_forward.1} parent=0 // pred_fallthru
    _
  // Predicated region
  $region34: #{two_headed_egnn_forward.1} parent=0 // pred_check
    _
  $region35: #{two_headed_egnn_forward.1} parent=0 // pred_check_branch
    %106 = sbr.rel (0) target = $region37
  $region36: #{two_headed_egnn_forward.1} parent=0 // pred_region
    _
  $region37: #{two_headed_egnn_forward.1} parent=0 // pred_fallthru
    _
  // Predicated region
  $region38: #{two_headed_egnn_forward.1} parent=0 // pred_check
    _
  $region39: #{two_headed_egnn_forward.1} parent=0 // pred_check_branch
    %108 = sbr.rel (0) target = $region41
  $region40: #{two_headed_egnn_forward.1} parent=0 // pred_region
    _
  $region41: #{two_headed_egnn_forward.1} parent=0 // pred_fallthru
    _
  // Predicated region
  $region42: #{two_headed_egnn_forward.1} parent=0 // pred_check
    _
  $region43: #{two_headed_egnn_forward.1} parent=0 // pred_check_branch
    %110 = sbr.rel (0) target = $region45
  $region44: #{two_headed_egnn_forward.1} parent=0 // pred_region
    _
  $region45: #{two_headed_egnn_forward.1} parent=0 // pred_fallthru
    _
  // Predicated region
  $region46: #{two_headed_egnn_forward.1} parent=0 // pred_check
    _
  $region47: #{two_headed_egnn_forward.1} parent=0 // pred_check_branch
    %112 = sbr.rel (0) target = $region49
  $region48: #{two_headed_egnn_forward.1} parent=0 // pred_region
    _
  $region49: #{two_headed_egnn_forward.1} parent=0 // pred_fallthru
    _
  // Predicated region
  $region50: #{two_headed_egnn_forward.1} parent=0 // pred_check
    _
  $region51: #{two_headed_egnn_forward.1} parent=0 // pred_check_branch
    %114 = sbr.rel (0) target = $region53
  $region52: #{two_headed_egnn_forward.1} parent=0 // pred_region
    _
  $region53: #{two_headed_egnn_forward.1} parent=0 // pred_fallthru
    _
  // Predicated region
  $region54: #{two_headed_egnn_forward.1} parent=0 // pred_check
    _
  $region55: #{two_headed_egnn_forward.1} parent=0 // pred_check_branch
    %116 = sbr.rel (0) target = $region57
  $region56: #{two_headed_egnn_forward.1} parent=0 // pred_region
    _
  $region57: #{two_headed_egnn_forward.1} parent=0 // pred_fallthru
    _
  // Predicated region
  $region58: #{two_headed_egnn_forward.1} parent=0 // pred_check
    _
  $region59: #{two_headed_egnn_forward.1} parent=0 // pred_check_branch
    %118 = sbr.rel (0) target = $region61
  $region60: #{two_headed_egnn_forward.1} parent=0 // pred_region
    _
  $region61: #{two_headed_egnn_forward.1} parent=0 // pred_fallthru
    _
  // Predicated region
  $region62: #{two_headed_egnn_forward.1} parent=0 // pred_check
    _
  $region63: #{two_headed_egnn_forward.1} parent=0 // pred_check_branch
    %120 = sbr.rel (0) target = $region65
  $region64: #{two_headed_egnn_forward.1} parent=0 // pred_region
    _
  $region65: #{two_headed_egnn_forward.1} parent=0 // pred_fallthru
    _
  // Predicated region
  $region66: #{two_headed_egnn_forward.1} parent=0 // pred_check
    _
  $region67: #{two_headed_egnn_forward.1} parent=0 // pred_check_branch
    %122 = sbr.rel (0) target = $region69
  $region68: #{two_headed_egnn_forward.1} parent=0 // pred_region
    _
  $region69: #{two_headed_egnn_forward.1} parent=0 // pred_fallthru
    _
  // Predicated region
  $region70: #{two_headed_egnn_forward.1} parent=0 // pred_check
    _
  $region71: #{two_headed_egnn_forward.1} parent=0 // pred_check_branch
    %124 = sbr.rel (0) target = $region73
  $region72: #{two_headed_egnn_forward.1} parent=0 // pred_region
    _
  $region73: #{two_headed_egnn_forward.1} parent=0 // pred_fallthru
    _
  // Predicated region
  $region74: #{two_headed_egnn_forward.1} parent=0 // pred_check
    _
  $region75: #{two_headed_egnn_forward.1} parent=0 // pred_check_branch
    %126 = sbr.rel (0) target = $region77
  $region76: #{two_headed_egnn_forward.1} parent=0 // pred_region
    _
  $region77: #{two_headed_egnn_forward.1} parent=0 // pred_fallthru
    _
  // Predicated region
  $region78: #{two_headed_egnn_forward.1} parent=0 // pred_check
    _
  $region79: #{two_headed_egnn_forward.1} parent=0 // pred_check_branch
    %128 = sbr.rel (0) target = $region81
  $region80: #{two_headed_egnn_forward.1} parent=0 // pred_region
    _
  $region81: #{two_headed_egnn_forward.1} parent=0 // pred_fallthru
    _
  // Predicated region
  $region82: #{two_headed_egnn_forward.1} parent=0 // pred_check
    _
  $region83: #{two_headed_egnn_forward.1} parent=0 // pred_check_branch
    %130 = sbr.rel (0) target = $region85
  $region84: #{two_headed_egnn_forward.1} parent=0 // pred_region
    _
  $region85: #{two_headed_egnn_forward.1} parent=0 // pred_fallthru
    _
  // Predicated region
  $region86: #{two_headed_egnn_forward.1} parent=0 // pred_check
    _
  $region87: #{two_headed_egnn_forward.1} parent=0 // pred_check_branch
    %132 = sbr.rel (0) target = $region89
  $region88: #{two_headed_egnn_forward.1} parent=0 // pred_region
    _
  $region89: #{two_headed_egnn_forward.1} parent=0 // pred_fallthru
    _
  // Predicated region
  $region90: #{two_headed_egnn_forward.1} parent=0 // pred_check
    _
  $region91: #{two_headed_egnn_forward.1} parent=0 // pred_check_branch
    %134 = sbr.rel (0) target = $region93
  $region92: #{two_headed_egnn_forward.1} parent=0 // pred_region
    _
  $region93: #{two_headed_egnn_forward.1} parent=0 // pred_fallthru
    _
  // Predicated region
  $region94: #{two_headed_egnn_forward.1} parent=0 // pred_check
    _
  $region95: #{two_headed_egnn_forward.1} parent=0 // pred_check_branch
    %136 = sbr.rel (0) target = $region97
  $region96: #{two_headed_egnn_forward.1} parent=0 // pred_region
    _
  $region97: #{two_headed_egnn_forward.1} parent=0 // pred_fallthru
    _
  // Predicated region
  $region98: #{two_headed_egnn_forward.1} parent=0 // pred_check
    _
  $region99: #{two_headed_egnn_forward.1} parent=0 // pred_check_branch
    %138 = sbr.rel (0) target = $region101
  $region100: #{two_headed_egnn_forward.1} parent=0 // pred_region
    _
  $region101: #{two_headed_egnn_forward.1} parent=0 // pred_fallthru
    _
  // Predicated region
  $region102: #{two_headed_egnn_forward.1} parent=0 // pred_check
    _
  $region103: #{two_headed_egnn_forward.1} parent=0 // pred_check_branch
    %140 = sbr.rel (0) target = $region105
  $region104: #{two_headed_egnn_forward.1} parent=0 // pred_region
    _
  $region105: #{two_headed_egnn_forward.1} parent=0 // pred_fallthru
    _
  // Predicated region
  $region106: #{two_headed_egnn_forward.1} parent=0 // pred_check
    _
  $region107: #{two_headed_egnn_forward.1} parent=0 // pred_check_branch
    %142 = sbr.rel (0) target = $region109
  $region108: #{two_headed_egnn_forward.1} parent=0 // pred_region
    _
  $region109: #{two_headed_egnn_forward.1} parent=0 // pred_fallthru
    _
  // Predicated region
  $region110: #{two_headed_egnn_forward.1} parent=0 // pred_check
    _
  $region111: #{two_headed_egnn_forward.1} parent=0 // pred_check_branch
    %144 = sbr.rel (0) target = $region113
  $region112: #{two_headed_egnn_forward.1} parent=0 // pred_region
    _
  $region113: #{two_headed_egnn_forward.1} parent=0 // pred_fallthru
    _
  // Predicated region
  $region114: #{two_headed_egnn_forward.1} parent=0 // pred_check
    _
  $region115: #{two_headed_egnn_forward.1} parent=0 // pred_check_branch
    %146 = sbr.rel (0) target = $region117
  $region116: #{two_headed_egnn_forward.1} parent=0 // pred_region
    _
  $region117: #{two_headed_egnn_forward.1} parent=0 // pred_fallthru
    _
  // Predicated region
  $region118: #{two_headed_egnn_forward.1} parent=0 // pred_check
    _
  $region119: #{two_headed_egnn_forward.1} parent=0 // pred_check_branch
    %148 = sbr.rel (0) target = $region121
  $region120: #{two_headed_egnn_forward.1} parent=0 // pred_region
    _
  $region121: #{two_headed_egnn_forward.1} parent=0 // pred_fallthru
    _
  // Predicated region
  $region122: #{two_headed_egnn_forward.1} parent=0 // pred_check
    _
  $region123: #{two_headed_egnn_forward.1} parent=0 // pred_check_branch
    %150 = sbr.rel (0) target = $region125
  $region124: #{two_headed_egnn_forward.1} parent=0 // pred_region
    _
  $region125: #{two_headed_egnn_forward.1} parent=0 // pred_fallthru
    _
  // Predicated region
  $region126: #{two_headed_egnn_forward.1} parent=0 // pred_check
    _
  $region127: #{two_headed_egnn_forward.1} parent=0 // pred_check_branch
    %152 = sbr.rel (0) target = $region129
  $region128: #{two_headed_egnn_forward.1} parent=0 // pred_region
    _
  $region129: #{two_headed_egnn_forward.1} parent=0 // pred_fallthru
    _
  // Predicated region
  $region130: #{two_headed_egnn_forward.1} parent=0 // pred_check
    _
  $region131: #{two_headed_egnn_forward.1} parent=0 // pred_check_branch
    %154 = sbr.rel (0) target = $region133
  $region132: #{two_headed_egnn_forward.1} parent=0 // pred_region
    _
  $region133: #{two_headed_egnn_forward.1} parent=0 // pred_fallthru
    _
  // Predicated region
  $region134: #{two_headed_egnn_forward.1} parent=0 // pred_check
    _
  $region135: #{two_headed_egnn_forward.1} parent=0 // pred_check_branch
    %156 = sbr.rel (0) target = $region137
  $region136: #{two_headed_egnn_forward.1} parent=0 // pred_region
    _
  $region137: #{two_headed_egnn_forward.1} parent=0 // pred_fallthru
    _
  // Predicated region
  $region138: #{two_headed_egnn_forward.1} parent=0 // pred_check
    _
  $region139: #{two_headed_egnn_forward.1} parent=0 // pred_check_branch
    %158 = sbr.rel (0) target = $region141
  $region140: #{two_headed_egnn_forward.1} parent=0 // pred_region
    _
  $region141: #{two_headed_egnn_forward.1} parent=0 // pred_fallthru
    _
  // Predicated region
  $region142: #{two_headed_egnn_forward.1} parent=0 // pred_check
    _
  $region143: #{two_headed_egnn_forward.1} parent=0 // pred_check_branch
    %160 = sbr.rel (0) target = $region145
  $region144: #{two_headed_egnn_forward.1} parent=0 // pred_region
    _
  $region145: #{two_headed_egnn_forward.1} parent=0 // pred_fallthru
    _
  // Predicated region
  $region146: #{two_headed_egnn_forward.1} parent=0 // pred_check
    _
  $region147: #{two_headed_egnn_forward.1} parent=0 // pred_check_branch
    %162 = sbr.rel (0) target = $region149
  $region148: #{two_headed_egnn_forward.1} parent=0 // pred_region
    _
  $region149: #{two_headed_egnn_forward.1} parent=0 // pred_fallthru
    _
  // Predicated region
  $region150: #{two_headed_egnn_forward.1} parent=0 // pred_check
    _
  $region151: #{two_headed_egnn_forward.1} parent=0 // pred_check_branch
    %164 = sbr.rel (0) target = $region153
  $region152: #{two_headed_egnn_forward.1} parent=0 // pred_region
    _
  $region153: #{two_headed_egnn_forward.1} parent=0 // pred_fallthru
    _
  // Predicated region
  $region154: #{two_headed_egnn_forward.1} parent=0 // pred_check
    _
  $region155: #{two_headed_egnn_forward.1} parent=0 // pred_check_branch
    %166 = sbr.rel (0) target = $region157
  $region156: #{two_headed_egnn_forward.1} parent=0 // pred_region
    _
  $region157: #{two_headed_egnn_forward.1} parent=0 // pred_fallthru
    _
  %v168 = vld [vmem:[%s1] sm:$0xff]
  %v169 = vld [vmem:[%s1 + $0x8] sm:$0xff]
  %v170 = vld [vmem:[%s3] sm:$0xff]
  %v171 = vld [vmem:[%s3 + $0x8] sm:$0xff]
  %v172 = vld [vmem:[%s3 + $0x10] sm:$0xff]
  %v173 = vld [vmem:[%s3 + $0x18] sm:$0xff]
  %v174 = vld [vmem:[%s3 + $0x20] sm:$0xff]
  %v175 = vld [vmem:[%s3 + $0x28] sm:$0xff]
  %v176 = vld [vmem:[%s3 + $0x30] sm:$0xff]
  %v177 = vld [vmem:[%s3 + $0x38] sm:$0xff]
  %v178 = vld [vmem:[%s3 + $0x40] sm:$0xff]
  %v179 = vld [vmem:[%s3 + $0x48] sm:$0xff]
  %v180 = vld [vmem:[%s3 + $0x50] sm:$0xff]
  %v181 = vld [vmem:[%s3 + $0x58] sm:$0xff]
  %v182 = vld [vmem:[%s3 + $0x60] sm:$0xff]
  %v183 = vld [vmem:[%s3 + $0x68] sm:$0xff]
  %v184 = vld [vmem:[%s5] sm:$0xff]
  %v185 = vld [vmem:[%s5 + $0x8] sm:$0xff]
  %v186 = vld [vmem:[%s5 + $0x10] sm:$0xff]
  %v187 = vld [vmem:[%s5 + $0x18] sm:$0xff]
  %v188 = vld [vmem:[%s5 + $0x20] sm:$0xff]
  %v189 = vld [vmem:[%s5 + $0x28] sm:$0xff]
  %v190 = vld [vmem:[%s5 + $0x30] sm:$0xff]
  %v191 = vld [vmem:[%s5 + $0x38] sm:$0xff]
  %v192 = vld [vmem:[%s5 + $0x40] sm:$0xff]
  %v193 = vld [vmem:[%s5 + $0x48] sm:$0xff]
  %v194 = vld [vmem:[%s5 + $0x50] sm:$0xff]
  %v195 = vld [vmem:[%s5 + $0x58] sm:$0xff]
  %v196 = vld [vmem:[%s5 + $0x60] sm:$0xff]
  %v197 = vld [vmem:[%s5 + $0x68] sm:$0xff]
  %v198 = vld [vmem:[%s7] sm:$0xff]
  %v199 = vld [vmem:[%s7 + $0x8] sm:$0xff]
  %v200 = vld [vmem:[%s9] sm:$0xff]
  %v201 = vld [vmem:[%s9 + $0x8] sm:$0xff]
  %v202 = vld [vmem:[%s9 + $0x10] sm:$0xff]
  %v203 = vld [vmem:[%s9 + $0x18] sm:$0xff]
  %v204 = vld [vmem:[%s9 + $0x20] sm:$0xff]
  %v205 = vld [vmem:[%s9 + $0x28] sm:$0xff]
  %v206 = vld [vmem:[%s9 + $0x30] sm:$0xff]
  %v207 = vld [vmem:[%s9 + $0x38] sm:$0xff]
  %v208 = vld [vmem:[%s9 + $0x40] sm:$0xff]
  %v209 = vld [vmem:[%s9 + $0x48] sm:$0xff]
  %v210 = vld [vmem:[%s9 + $0x50] sm:$0xff]
  %v211 = vld [vmem:[%s9 + $0x58] sm:$0xff]
  %v212 = vld [vmem:[%s9 + $0x60] sm:$0xff]
  %v213 = vld [vmem:[%s9 + $0x68] sm:$0xff]
  %v214 = vld [vmem:[%s11] sm:$0xff]
  %v215 = vld [vmem:[%s11 + $0x8] sm:$0xff]
  %v216 = vld [vmem:[%s11 + $0x10] sm:$0xff]
  %v217 = vld [vmem:[%s11 + $0x18] sm:$0xff]
  %v218 = vld [vmem:[%s11 + $0x20] sm:$0xff]
  %v219 = vld [vmem:[%s11 + $0x28] sm:$0xff]
  %v220 = vld [vmem:[%s11 + $0x30] sm:$0xff]
  %v221 = vld [vmem:[%s11 + $0x38] sm:$0xff]
  %v222 = vld [vmem:[%s11 + $0x40] sm:$0xff]
  %v223 = vld [vmem:[%s11 + $0x48] sm:$0xff]
  %v224 = vld [vmem:[%s11 + $0x50] sm:$0xff]
  %v225 = vld [vmem:[%s11 + $0x58] sm:$0xff]
  %v226 = vld [vmem:[%s11 + $0x60] sm:$0xff]
  %v227 = vld [vmem:[%s11 + $0x68] sm:$0xff]
  %v228 = vld [vmem:[%s13] sm:$0xff]
  %v229 = vld [vmem:[%s13 + $0x8] sm:$0xff]
  %v230 = vld [vmem:[%s13 + $0x10] sm:$0xff]
  %v231 = vld [vmem:[%s13 + $0x18] sm:$0xff]
  %v232 = vld [vmem:[%s13 + $0x20] sm:$0xff]
  %v233 = vld [vmem:[%s13 + $0x28] sm:$0xff]
  %v234 = vld [vmem:[%s13 + $0x30] sm:$0xff]
  %v235 = vld [vmem:[%s13 + $0x38] sm:$0xff]
  %v236 = vld [vmem:[%s13 + $0x40] sm:$0xff]
  %v237 = vld [vmem:[%s13 + $0x48] sm:$0xff]
  %v238 = vld [vmem:[%s13 + $0x50] sm:$0xff]
  %v239 = vld [vmem:[%s13 + $0x58] sm:$0xff]
  %v240 = vld [vmem:[%s13 + $0x60] sm:$0xff]
  %v241 = vld [vmem:[%s13 + $0x68] sm:$0xff]
  %v242 = vld [vmem:[%s15] sm:$0x1]
  %v243 = vld [vmem:[%s17] sm:$0x1f]
  %v244 = vld [vmem:[%s19] sm:$0x1]
  %v245 = vld [vmem:[%s21] sm:$0xf]
  %v246 = vld [vmem:[%s21 + $0x4] sm:$0xf]
  %v247 = vld [vmem:[%s21 + $0x8] sm:$0xf]
  %v248 = vld [vmem:[%s21 + $0xc] sm:$0xf]
  %v249 = vld [vmem:[%s21 + $0x10] sm:$0xf]
  %v250 = vld [vmem:[%s21 + $0x14] sm:$0xf]
  %v251 = vld [vmem:[%s21 + $0x18] sm:$0xf]
  %v252 = vld [vmem:[%s21 + $0x1c] sm:$0xf]
  %v253 = vld [vmem:[%s21 + $0x20] sm:$0xf]
  %v254 = vld [vmem:[%s21 + $0x24] sm:$0xf]
  %v255 = vld [vmem:[%s21 + $0x28] sm:$0xf]
  %v256 = vld [vmem:[%s21 + $0x2c] sm:$0xf]
  %v257 = vld [vmem:[%s21 + $0x30] sm:$0xf]
  %v258 = vld [vmem:[%s21 + $0x34] sm:$0xf]
  %v259 = vld [vmem:[%s21 + $0x38] sm:$0xf]
  %v260 = vld [vmem:[%s21 + $0x3c] sm:$0xf]
  %v261 = vld [vmem:[%s23] sm:$0xf]
  %v262 = vld [vmem:[%s23 + $0x4] sm:$0xf]
  %v263 = vld [vmem:[%s23 + $0x8] sm:$0xf]
  %v264 = vld [vmem:[%s23 + $0xc] sm:$0xf]
  %v265 = vld [vmem:[%s23 + $0x10] sm:$0xf]
  %v266 = vld [vmem:[%s23 + $0x14] sm:$0xf]
  %v267 = vld [vmem:[%s23 + $0x18] sm:$0xf]
  %v268 = vld [vmem:[%s23 + $0x1c] sm:$0xf]
  %v269 = vld [vmem:[%s23 + $0x20] sm:$0xf]
  %v270 = vld [vmem:[%s23 + $0x24] sm:$0xf]
  %v271 = vld [vmem:[%s23 + $0x28] sm:$0xf]
  %v272 = vld [vmem:[%s23 + $0x2c] sm:$0xf]
  %v273 = vld [vmem:[%s23 + $0x30] sm:$0xf]
  %v274 = vld [vmem:[%s23 + $0x34] sm:$0xf]
  %v275 = vld [vmem:[%s23 + $0x38] sm:$0xf]
  %v276 = vld [vmem:[%s23 + $0x3c] sm:$0xf]
  %v277 = vld [vmem:[%s25] sm:$0x1]
  %v278 = vld [vmem:[%s25 + $0x1] sm:$0x1]
  %v279 = vld [vmem:[%s25 + $0x2] sm:$0x1]
  %v280 = vld [vmem:[%s25 + $0x3] sm:$0x1]
  %v281 = vld [vmem:[%s27] sm:$0x3]
  %v282 = vld [vmem:[%s27 + $0x2] sm:$0x3]
  %v283 = vld [vmem:[%s27 + $0x4] sm:$0x3]
  %v284 = vld [vmem:[%s27 + $0x6] sm:$0x3]
  %v285 = vld [vmem:[%s29] sm:$0x1]
  %v286 = vld [vmem:[%s29 + $0x1] sm:$0x1]
  %v287 = vld [vmem:[%s29 + $0x2] sm:$0x1]
  %v288 = vld [vmem:[%s29 + $0x3] sm:$0x1]
  %v289 = vld [vmem:[%s31] sm:$0xf]
  %v290 = vld [vmem:[%s31 + $0x4] sm:$0xf]
  %v291 = vld [vmem:[%s31 + $0x8] sm:$0xf]
  %v292 = vld [vmem:[%s31 + $0xc] sm:$0xf]
  %v293 = vld [vmem:[%s31 + $0x10] sm:$0xf]
  %v294 = vld [vmem:[%s31 + $0x14] sm:$0xf]
  %v295 = vld [vmem:[%s31 + $0x18] sm:$0xf]
  %v296 = vld [vmem:[%s31 + $0x1c] sm:$0xf]
  %v297 = vld [vmem:[%s31 + $0x20] sm:$0xf]
  %v298 = vld [vmem:[%s31 + $0x24] sm:$0xf]
  %v299 = vld [vmem:[%s31 + $0x28] sm:$0xf]
  %v300 = vld [vmem:[%s31 + $0x2c] sm:$0xf]
  %v301 = vld [vmem:[%s31 + $0x30] sm:$0xf]
  %v302 = vld [vmem:[%s31 + $0x34] sm:$0xf]
  %v303 = vld [vmem:[%s31 + $0x38] sm:$0xf]
  %v304 = vld [vmem:[%s31 + $0x3c] sm:$0xf]
  %v305 = vld [vmem:[%s33] sm:$0x1]
  %v306 = vld [vmem:[%s33 + $0x1] sm:$0x1]
  %v307 = vld [vmem:[%s33 + $0x2] sm:$0x1]
  %v308 = vld [vmem:[%s33 + $0x3] sm:$0x1]
  %v309 = vld [vmem:[%s35] sm:$0xf]
  %v310 = vld [vmem:[%s35 + $0x4] sm:$0xf]
  %v311 = vld [vmem:[%s35 + $0x8] sm:$0xf]
  %v312 = vld [vmem:[%s35 + $0xc] sm:$0xf]
  %v313 = vld [vmem:[%s35 + $0x10] sm:$0xf]
  %v314 = vld [vmem:[%s35 + $0x14] sm:$0xf]
  %v315 = vld [vmem:[%s35 + $0x18] sm:$0xf]
  %v316 = vld [vmem:[%s35 + $0x1c] sm:$0xf]
  %v317 = vld [vmem:[%s35 + $0x20] sm:$0xf]
  %v318 = vld [vmem:[%s35 + $0x24] sm:$0xf]
  %v319 = vld [vmem:[%s35 + $0x28] sm:$0xf]
  %v320 = vld [vmem:[%s35 + $0x2c] sm:$0xf]
  %v321 = vld [vmem:[%s35 + $0x30] sm:$0xf]
  %v322 = vld [vmem:[%s35 + $0x34] sm:$0xf]
  %v323 = vld [vmem:[%s35 + $0x38] sm:$0xf]
  %v324 = vld [vmem:[%s35 + $0x3c] sm:$0xf]
  %v325 = vld [vmem:[%s37] sm:$0xf]
  %v326 = vld [vmem:[%s37 + $0x4] sm:$0xf]
  %v327 = vld [vmem:[%s37 + $0x8] sm:$0xf]
  %v328 = vld [vmem:[%s37 + $0xc] sm:$0xf]
  %v329 = vld [vmem:[%s37 + $0x10] sm:$0xf]
  %v330 = vld [vmem:[%s37 + $0x14] sm:$0xf]
  %v331 = vld [vmem:[%s37 + $0x18] sm:$0xf]
  %v332 = vld [vmem:[%s37 + $0x1c] sm:$0xf]
  %v333 = vld [vmem:[%s37 + $0x20] sm:$0xf]
  %v334 = vld [vmem:[%s37 + $0x24] sm:$0xf]
  %v335 = vld [vmem:[%s37 + $0x28] sm:$0xf]
  %v336 = vld [vmem:[%s37 + $0x2c] sm:$0xf]
  %v337 = vld [vmem:[%s37 + $0x30] sm:$0xf]
  %v338 = vld [vmem:[%s37 + $0x34] sm:$0xf]
  %v339 = vld [vmem:[%s37 + $0x38] sm:$0xf]
  %v340 = vld [vmem:[%s37 + $0x3c] sm:$0xf]
  %v341 = vld [vmem:[%s39] sm:$0x1f]
  %v342 = vld [vmem:[%s39 + $0x8] sm:$0x1f]
  %v343 = vld [vmem:[%s39 + $0x10] sm:$0x1f]
  %v344 = vld [vmem:[%s39 + $0x18] sm:$0x1f]
  %v345 = vld [vmem:[%s41] sm:$0x1]
  %v346 = vld [vmem:[%s41 + $0x1] sm:$0x1]
  %v347 = vld [vmem:[%s41 + $0x2] sm:$0x1]
  %v348 = vld [vmem:[%s41 + $0x3] sm:$0x1]
  %v349 = vld [vmem:[%s43] sm:$0xf]
  %v350 = vld [vmem:[%s43 + $0x4] sm:$0xf]
  %v351 = vld [vmem:[%s43 + $0x8] sm:$0xf]
  %v352 = vld [vmem:[%s43 + $0xc] sm:$0xf]
  %v353 = vld [vmem:[%s43 + $0x10] sm:$0xf]
  %v354 = vld [vmem:[%s43 + $0x14] sm:$0xf]
  %v355 = vld [vmem:[%s43 + $0x18] sm:$0xf]
  %v356 = vld [vmem:[%s43 + $0x1c] sm:$0xf]
  %v357 = vld [vmem:[%s43 + $0x20] sm:$0xf]
  %v358 = vld [vmem:[%s43 + $0x24] sm:$0xf]
  %v359 = vld [vmem:[%s43 + $0x28] sm:$0xf]
  %v360 = vld [vmem:[%s43 + $0x2c] sm:$0xf]
  %v361 = vld [vmem:[%s43 + $0x30] sm:$0xf]
  %v362 = vld [vmem:[%s43 + $0x34] sm:$0xf]
  %v363 = vld [vmem:[%s43 + $0x38] sm:$0xf]
  %v364 = vld [vmem:[%s43 + $0x3c] sm:$0xf]
  %v365 = vld [vmem:[%s45] sm:$0x1]
  %v366 = vld [vmem:[%s45 + $0x1] sm:$0x1]
  %v367 = vld [vmem:[%s45 + $0x2] sm:$0x1]
  %v368 = vld [vmem:[%s45 + $0x3] sm:$0x1]
  %v369 = vld [vmem:[%s47] sm:$0xf]
  %v370 = vld [vmem:[%s47 + $0x4] sm:$0xf]
  %v371 = vld [vmem:[%s47 + $0x8] sm:$0xf]
  %v372 = vld [vmem:[%s47 + $0xc] sm:$0xf]
  %v373 = vld [vmem:[%s49] sm:$0x1]
  %v374 = vld [vmem:[%s51] sm:$0xf]
  %v375 = vld [vmem:[%s51 + $0x4] sm:$0xf]
  %v376 = vld [vmem:[%s51 + $0x8] sm:$0xf]
  %v377 = vld [vmem:[%s51 + $0xc] sm:$0xf]
  %v378 = vld [vmem:[%s53] sm:$0x1]
  %v379 = vld [vmem:[%s55] sm:$0xf]
  %v380 = vld [vmem:[%s55 + $0x4] sm:$0xf]
  %v381 = vld [vmem:[%s55 + $0x8] sm:$0xf]
  %v382 = vld [vmem:[%s55 + $0xc] sm:$0xf]
  %v383 = vld [vmem:[%s57] sm:$0x1]
  %v384 = vld [vmem:[%s59] sm:$0xf]
  %v385 = vld [vmem:[%s59 + $0x4] sm:$0xf]
  %v386 = vld [vmem:[%s59 + $0x8] sm:$0xf]
  %v387 = vld [vmem:[%s59 + $0xc] sm:$0xf]
  %v388 = vld [vmem:[%s61] sm:$0x1]
  %v389 = vld [vmem:[%s63] sm:$0xf]
  %v390 = vld [vmem:[%s63 + $0x4] sm:$0xf]
  %v391 = vld [vmem:[%s63 + $0x8] sm:$0xf]
  %v392 = vld [vmem:[%s63 + $0xc] sm:$0xf]
  %v393 = vld [vmem:[%s65] sm:$0x1]
  %v394 = vld [vmem:[%s67] sm:$0xf]
  %v395 = vld [vmem:[%s67 + $0x4] sm:$0xf]
  %v396 = vld [vmem:[%s67 + $0x8] sm:$0xf]
  %v397 = vld [vmem:[%s67 + $0xc] sm:$0xf]
  %v398 = vld [vmem:[#allocation2] sm:$0x1]
  %v399 = vld [vmem:[%s71] sm:$0xf]
  %v400 = vld [vmem:[%s71 + $0x4] sm:$0xf]
  %v401 = vld [vmem:[%s71 + $0x8] sm:$0xf]
  %v402 = vld [vmem:[%s71 + $0xc] sm:$0xf]
  %v403 = vld [vmem:[%s73] sm:$0x1]
  %v404 = vld [vmem:[%s75] sm:$0xf]
  %v405 = vld [vmem:[%s75 + $0x4] sm:$0xf]
  %v406 = vld [vmem:[%s75 + $0x8] sm:$0xf]
  %v407 = vld [vmem:[%s75 + $0xc] sm:$0xf]
  %v408 = vld [vmem:[%s77] sm:$0x1]
  %v409 = vlaneseq
  %v410 = vand.u32 %v409, 127
  %411 = vset.pattern.permute.xlu0 0
  %412 = vperm.xlu0 %411, %v214
  %v413 = vpop.permute.xlu0 %412
  %414 = vset.pattern.permute.xlu0 0
  %415 = vperm.xlu0 %414, %v215
  %v416 = vpop.permute.xlu0 %415
  %417 = vset.pattern.permute.xlu0 0
  %418 = vperm.xlu0 %417, %v216
  %v419 = vpop.permute.xlu0 %418
  %420 = vset.pattern.permute.xlu0 0
  %421 = vperm.xlu0 %420, %v217
  %v422 = vpop.permute.xlu0 %421
  %423 = vset.pattern.permute.xlu0 0
  %424 = vperm.xlu0 %423, %v218
  %v425 = vpop.permute.xlu0 %424
  %426 = vset.pattern.permute.xlu0 0
  %427 = vperm.xlu0 %426, %v219
  %v428 = vpop.permute.xlu0 %427
  %429 = vset.pattern.permute.xlu0 0
  %430 = vperm.xlu0 %429, %v220
  %v431 = vpop.permute.xlu0 %430
  %432 = vset.pattern.permute.xlu0 0
  %433 = vperm.xlu0 %432, %v221
  %v434 = vpop.permute.xlu0 %433
  %435 = vset.pattern.permute.xlu0 0
  %436 = vperm.xlu0 %435, %v222
  %v437 = vpop.permute.xlu0 %436
  %438 = vset.pattern.permute.xlu0 0
  %439 = vperm.xlu0 %438, %v223
  %v440 = vpop.permute.xlu0 %439
  %441 = vset.pattern.permute.xlu0 0
  %442 = vperm.xlu0 %441, %v224
  %v443 = vpop.permute.xlu0 %442
  %444 = vset.pattern.permute.xlu0 0
  %445 = vperm.xlu0 %444, %v225
  %v446 = vpop.permute.xlu0 %445
  %447 = vset.pattern.permute.xlu0 0
  %448 = vperm.xlu0 %447, %v226
  %v449 = vpop.permute.xlu0 %448
  %450 = vset.pattern.permute.xlu0 0
  %451 = vperm.xlu0 %450, %v227
  %v452 = vpop.permute.xlu0 %451
  %vm453 = vcmp.eq.s32.totalorder %v410, %v413
  %vm454 = vcmp.eq.s32.totalorder %v410, %v416
  %vm455 = vcmp.eq.s32.totalorder %v410, %v419
  %vm456 = vcmp.eq.s32.totalorder %v410, %v422
  %vm457 = vcmp.eq.s32.totalorder %v410, %v425
  %vm458 = vcmp.eq.s32.totalorder %v410, %v428
  %vm459 = vcmp.eq.s32.totalorder %v410, %v431
  %vm460 = vcmp.eq.s32.totalorder %v410, %v434
  %vm461 = vcmp.eq.s32.totalorder %v410, %v437
  %vm462 = vcmp.eq.s32.totalorder %v410, %v440
  %vm463 = vcmp.eq.s32.totalorder %v410, %v443
  %vm464 = vcmp.eq.s32.totalorder %v410, %v446
  %vm465 = vcmp.eq.s32.totalorder %v410, %v449
  %vm466 = vcmp.eq.s32.totalorder %v410, %v452
  %467 = vset.pattern.permute.xlu0 0
  %468 = vperm.xlu0 %467, %v228
  %v469 = vpop.permute.xlu0 %468
  %470 = vset.pattern.permute.xlu0 0
  %471 = vperm.xlu0 %470, %v229
  %v472 = vpop.permute.xlu0 %471
  %473 = vset.pattern.permute.xlu0 0
  %474 = vperm.xlu0 %473, %v230
  %v475 = vpop.permute.xlu0 %474
  %476 = vset.pattern.permute.xlu0 0
  %477 = vperm.xlu0 %476, %v231
  %v478 = vpop.permute.xlu0 %477
  %479 = vset.pattern.permute.xlu0 0
  %480 = vperm.xlu0 %479, %v232
  %v481 = vpop.permute.xlu0 %480
  %482 = vset.pattern.permute.xlu0 0
  %483 = vperm.xlu0 %482, %v233
  %v484 = vpop.permute.xlu0 %483
  %485 = vset.pattern.permute.xlu0 0
  %486 = vperm.xlu0 %485, %v234
  %v487 = vpop.permute.xlu0 %486
  %488 = vset.pattern.permute.xlu0 0
  %489 = vperm.xlu0 %488, %v235
  %v490 = vpop.permute.xlu0 %489
  %491 = vset.pattern.permute.xlu0 0
  %492 = vperm.xlu0 %491, %v236
  %v493 = vpop.permute.xlu0 %492
  %494 = vset.pattern.permute.xlu0 0
  %495 = vperm.xlu0 %494, %v237
  %v496 = vpop.permute.xlu0 %495
  %497 = vset.pattern.permute.xlu0 0
  %498 = vperm.xlu0 %497, %v238
  %v499 = vpop.permute.xlu0 %498
  %500 = vset.pattern.permute.xlu0 0
  %501 = vperm.xlu0 %500, %v239
  %v502 = vpop.permute.xlu0 %501
  %503 = vset.pattern.permute.xlu0 0
  %504 = vperm.xlu0 %503, %v240
  %v505 = vpop.permute.xlu0 %504
  %506 = vset.pattern.permute.xlu0 0
  %507 = vperm.xlu0 %506, %v241
  %v508 = vpop.permute.xlu0 %507
  %vm509 = vcmp.eq.s32.totalorder %v410, %v469
  %vm510 = vcmp.eq.s32.totalorder %v410, %v472
  %vm511 = vcmp.eq.s32.totalorder %v410, %v475
  %vm512 = vcmp.eq.s32.totalorder %v410, %v478
  %vm513 = vcmp.eq.s32.totalorder %v410, %v481
  %vm514 = vcmp.eq.s32.totalorder %v410, %v484
  %vm515 = vcmp.eq.s32.totalorder %v410, %v487
  %vm516 = vcmp.eq.s32.totalorder %v410, %v490
  %vm517 = vcmp.eq.s32.totalorder %v410, %v493
  %vm518 = vcmp.eq.s32.totalorder %v410, %v496
  %vm519 = vcmp.eq.s32.totalorder %v410, %v499
  %vm520 = vcmp.eq.s32.totalorder %v410, %v502
  %vm521 = vcmp.eq.s32.totalorder %v410, %v505
  %vm522 = vcmp.eq.s32.totalorder %v410, %v508
  %v523 = vlaneseq
  %v524 = vshrl.u32 %v523, 7
  %v525 = vadd.s32 %v524, 8
  %v526 = vlaneseq
  %v527 = vshrl.u32 %v526, 7
  %v528 = vsub.s32 0, %v527
  %v529 = vrot.slane %v242, %v528
  %vm530 = vcmp.eq.s32.totalorder %v524, %v529
  %vm531 = vcmp.eq.s32.totalorder %v525, %v529
  %v532 = vmul.u32 %v524, 8
  %vm533 = vcmp.ge.s32.totalorder %v410, %v532
  %v534 = vadd.s32 %v524, 1
  %v535 = vmul.u32 %v534, 8
  %vm536 = vcmp.lt.s32.totalorder %v410, %v535
  %vm537 = vmand %vm533, %vm536
  %539 = vset.pattern.permute.xlu0 0
  %540 = vperm.xlu0 %539, %v168
  %v541 = vpop.permute.xlu0 %540
  %544 = vset.pattern.permute.xlu0 0
  %545 = vperm.xlu0 %544, %v169
  %v546 = vpop.permute.xlu0 %545
  %v548 = vlaneseq
  %v549 = vshrl.u32 %v548, 7
  %v550 = vsub.s32 0, %v549
  %v551 = vrot.slane %v243, %v550
  %v552 = vmul.f32 %v541, %v551
  %v553 = vmul.f32 %v546, %v551
  %554 = vset.pattern.permute.xlu0 1
  %555 = vperm.xlu0 %554, %v168
  %v556 = vpop.permute.xlu0 %555
  %558 = vset.pattern.permute.xlu0 1
  %559 = vperm.xlu0 %558, %v169
  %v560 = vpop.permute.xlu0 %559
  %v562 = vlaneseq
  %v563 = vshrl.u32 %v562, 7
  %v564 = vsub.s32 1, %v563
  %v565 = vrot.slane %v243, %v564
  %v566 = vmul.f32 %v556, %v565
  %v567 = vmul.f32 %v560, %v565
  %v568 = vadd.f32 %v552, %v566
  %v569 = vadd.f32 %v553, %v567
  %570 = vset.pattern.permute.xlu0 2
  %571 = vperm.xlu0 %570, %v168
  %v572 = vpop.permute.xlu0 %571
  %574 = vset.pattern.permute.xlu0 2
  %575 = vperm.xlu0 %574, %v169
  %v576 = vpop.permute.xlu0 %575
  %v578 = vlaneseq
  %v579 = vshrl.u32 %v578, 7
  %v580 = vsub.s32 2, %v579
  %v581 = vrot.slane %v243, %v580
  %v582 = vmul.f32 %v572, %v581
  %v583 = vmul.f32 %v576, %v581
  %v584 = vadd.f32 %v568, %v582
  %v585 = vadd.f32 %v569, %v583
  %586 = vset.pattern.permute.xlu0 3
  %587 = vperm.xlu0 %586, %v168
  %v588 = vpop.permute.xlu0 %587
  %590 = vset.pattern.permute.xlu0 3
  %591 = vperm.xlu0 %590, %v169
  %v592 = vpop.permute.xlu0 %591
  %v594 = vlaneseq
  %v595 = vshrl.u32 %v594, 7
  %v596 = vsub.s32 3, %v595
  %v597 = vrot.slane %v243, %v596
  %v598 = vmul.f32 %v588, %v597
  %v599 = vmul.f32 %v592, %v597
  %v600 = vadd.f32 %v584, %v598
  %v601 = vadd.f32 %v585, %v599
  %602 = vset.pattern.permute.xlu0 4
  %603 = vperm.xlu0 %602, %v168
  %v604 = vpop.permute.xlu0 %603
  %606 = vset.pattern.permute.xlu0 4
  %607 = vperm.xlu0 %606, %v169
  %v608 = vpop.permute.xlu0 %607
  %v610 = vlaneseq
  %v611 = vshrl.u32 %v610, 7
  %v612 = vsub.s32 4, %v611
  %v613 = vrot.slane %v243, %v612
  %v614 = vmul.f32 %v604, %v613
  %v615 = vmul.f32 %v608, %v613
  %v616 = vadd.f32 %v600, %v614
  %v617 = vadd.f32 %v601, %v615
  %v619 = vlaneseq
  %v620 = vshrl.u32 %v619, 7
  %v621 = vsub.s32 0, %v620
  %v622 = vrot.slane %v244, %v621
  %v624 = vadd.f32 %v616, %v622
  %v625 = vadd.f32 %v617, %v622
  %v626 = vsel %vm453, 1, 0
  %v627 = vsel %vm454, 1, 0
  %v628 = vsel %vm455, 1, 0
  %v629 = vsel %vm456, 1, 0
  %v630 = vsel %vm457, 1, 0
  %v631 = vsel %vm458, 1, 0
  %v632 = vsel %vm459, 1, 0
  %v633 = vsel %vm460, 1, 0
  %v634 = vsel %vm461, 1, 0
  %v635 = vsel %vm462, 1, 0
  %v636 = vsel %vm463, 1, 0
  %v637 = vsel %vm464, 1, 0
  %v638 = vsel %vm465, 1, 0
  %v639 = vsel %vm466, 1, 0
  %v640 = vcvt.s32.f32 %v626
  %v641 = vcvt.s32.f32 %v627
  %v642 = vcvt.s32.f32 %v628
  %v643 = vcvt.s32.f32 %v629
  %v644 = vcvt.s32.f32 %v630
  %v645 = vcvt.s32.f32 %v631
  %v646 = vcvt.s32.f32 %v632
  %v647 = vcvt.s32.f32 %v633
  %v648 = vcvt.s32.f32 %v634
  %v649 = vcvt.s32.f32 %v635
  %v650 = vcvt.s32.f32 %v636
  %v651 = vcvt.s32.f32 %v637
  %v652 = vcvt.s32.f32 %v638
  %v653 = vcvt.s32.f32 %v639
  %v654 = vpack.c.bf16 %v641, %v640
  %v655 = vpack.c.bf16 %v643, %v642
  %v656 = vpack.c.bf16 %v645, %v644
  %v657 = vpack.c.bf16 %v647, %v646
  %v658 = vpack.c.bf16 %v649, %v648
  %v659 = vpack.c.bf16 %v651, %v650
  %v660 = vpack.c.bf16 %v653, %v652
  %v661 = vpack.c.bf16 %v625, %v624
  %vm662 = vcmask 130048
  %v664 = vsel %vm662, %v654, 0
  %v667 = vsel %vm662, %v655, 0
  %v670 = vsel %vm662, %v656, 0
  %v673 = vsel %vm662, %v657, 0
  %v676 = vsel %vm662, %v658, 0
  %v679 = vsel %vm662, %v659, 0
  %v682 = vsel %vm662, %v660, 0
  %684 = vmatprep.subr.bf16.mxu0 0
  %685 = vmatpush1.bf16.msra.mxu0 %v661
  %686 = vmatprep.subr.bf16.mxu0 0
  %687 = vmatpush1.bf16.msra.mxu0 0
  %688 = vmatprep.subr.bf16.mxu0 0
  %689 = vmatpush1.bf16.msra.mxu0 0
  %690 = vmatprep.subr.bf16.mxu0 0
  %691 = vmatpush1.bf16.msra.mxu0 0
  %692 = vmatprep.subr.bf16.mxu0 0
  %693 = vmatpush1.bf16.msra.mxu0 0
  %694 = vmatprep.subr.bf16.mxu0 0
  %695 = vmatpush1.bf16.msra.mxu0 0
  %696 = vmatprep.subr.bf16.mxu0 0
  %697 = vmatpush1.bf16.msra.mxu0 0
  %698 = vmatprep.subr.bf16.mxu0 0
  %699 = vmatpush1.bf16.msra.mxu0 0
  %700 = vmatprep.subr.bf16.mxu0 0
  %701 = vmatpush1.bf16.msra.mxu0 0
  %702 = vmatprep.subr.bf16.mxu0 0
  %703 = vmatpush1.bf16.msra.mxu0 0
  %704 = vmatprep.subr.bf16.mxu0 0
  %705 = vmatpush1.bf16.msra.mxu0 0
  %706 = vmatprep.subr.bf16.mxu0 0
  %707 = vmatpush1.bf16.msra.mxu0 0
  %708 = vmatprep.subr.bf16.mxu0 0
  %709 = vmatpush1.bf16.msra.mxu0 0
  %710 = vmatprep.subr.bf16.mxu0 0
  %711 = vmatpush1.bf16.msra.mxu0 0
  %712 = vmatprep.subr.bf16.mxu0 0
  %713 = vmatpush1.bf16.msra.mxu0 0
  %714 = vmatprep.subr.bf16.mxu0 0
  %715 = vmatpush1.bf16.msra.mxu0 0
  %716 = vmatprep.mubr.bf16.mxu0 0
  %717 = vmatmul.mubr.bf16.gmra.mrb[0].mxu0 %v664
  %v718 = vpop.f32.mrb[0].mxu0
  %v719 = vadd.f32 0.0, %v718
  %v720 = vpop.f32.mrb[0].mxu0
  %v721 = vpop.f32.mrb[0].mxu0
  %v722 = vadd.f32 0.0, %v721
  %v723 = vpop.f32.mrb[0].mxu0
  %724 = vmatprep.mubr.bf16.mxu0 0
  %725 = vmatmul.mubr.bf16.gmra.mrb[0].mxu0 %v667
  %v726 = vpop.f32.mrb[0].mxu0
  %v727 = vadd.f32 0.0, %v726
  %v728 = vpop.f32.mrb[0].mxu0
  %v729 = vpop.f32.mrb[0].mxu0
  %v730 = vadd.f32 0.0, %v729
  %v731 = vpop.f32.mrb[0].mxu0
  %732 = vmatprep.mubr.bf16.mxu0 0
  %733 = vmatmul.mubr.bf16.gmra.mrb[0].mxu0 %v670
  %v734 = vpop.f32.mrb[0].mxu0
  %v735 = vadd.f32 0.0, %v734
  %v736 = vpop.f32.mrb[0].mxu0
  %v737 = vpop.f32.mrb[0].mxu0
  %v738 = vadd.f32 0.0, %v737
  %v739 = vpop.f32.mrb[0].mxu0
  %740 = vmatprep.mubr.bf16.mxu0 0
  %741 = vmatmul.mubr.bf16.gmra.mrb[0].mxu0 %v673
  %v742 = vpop.f32.mrb[0].mxu0
  %v743 = vadd.f32 0.0, %v742
  %v744 = vpop.f32.mrb[0].mxu0
  %v745 = vpop.f32.mrb[0].mxu0
  %v746 = vadd.f32 0.0, %v745
  %v747 = vpop.f32.mrb[0].mxu0
  %748 = vmatprep.mubr.bf16.mxu0 0
  %749 = vmatmul.mubr.bf16.gmra.mrb[0].mxu0 %v676
  %v750 = vpop.f32.mrb[0].mxu0
  %v751 = vadd.f32 0.0, %v750
  %v752 = vpop.f32.mrb[0].mxu0
  %v753 = vpop.f32.mrb[0].mxu0
  %v754 = vadd.f32 0.0, %v753
  %v755 = vpop.f32.mrb[0].mxu0
  %756 = vmatprep.mubr.bf16.mxu0 0
  %757 = vmatmul.mubr.bf16.gmra.mrb[0].mxu0 %v679
  %v758 = vpop.f32.mrb[0].mxu0
  %v759 = vadd.f32 0.0, %v758
  %v760 = vpop.f32.mrb[0].mxu0
  %v761 = vpop.f32.mrb[0].mxu0
  %v762 = vadd.f32 0.0, %v761
  %v763 = vpop.f32.mrb[0].mxu0
  %764 = vmatprep.mubr.bf16.mxu0 0
  %765 = vmatmul.mubr.bf16.gmra.mrb[0].mxu0 %v682
  %v766 = vpop.f32.mrb[0].mxu0
  %v767 = vadd.f32 0.0, %v766
  %v768 = vpop.f32.mrb[0].mxu0
  %v769 = vpop.f32.mrb[0].mxu0
  %v770 = vadd.f32 0.0, %v769
  %v771 = vpop.f32.mrb[0].mxu0
  %772 = vdwg.mxu0
  %v773 = vsel %vm509, 1, 0
  %v774 = vsel %vm510, 1, 0
  %v775 = vsel %vm511, 1, 0
  %v776 = vsel %vm512, 1, 0
  %v777 = vsel %vm513, 1, 0
  %v778 = vsel %vm514, 1, 0
  %v779 = vsel %vm515, 1, 0
  %v780 = vsel %vm516, 1, 0
  %v781 = vsel %vm517, 1, 0
  %v782 = vsel %vm518, 1, 0
  %v783 = vsel %vm519, 1, 0
  %v784 = vsel %vm520, 1, 0
  %v785 = vsel %vm521, 1, 0
  %v786 = vsel %vm522, 1, 0
  %v787 = vcvt.s32.f32 %v773
  %v788 = vcvt.s32.f32 %v774
  %v789 = vcvt.s32.f32 %v775
  %v790 = vcvt.s32.f32 %v776
  %v791 = vcvt.s32.f32 %v777
  %v792 = vcvt.s32.f32 %v778
  %v793 = vcvt.s32.f32 %v779
  %v794 = vcvt.s32.f32 %v780
  %v795 = vcvt.s32.f32 %v781
  %v796 = vcvt.s32.f32 %v782
  %v797 = vcvt.s32.f32 %v783
  %v798 = vcvt.s32.f32 %v784
  %v799 = vcvt.s32.f32 %v785
  %v800 = vcvt.s32.f32 %v786
  %v801 = vpack.c.bf16 %v788, %v787
  %v802 = vpack.c.bf16 %v790, %v789
  %v803 = vpack.c.bf16 %v792, %v791
  %v804 = vpack.c.bf16 %v794, %v793
  %v805 = vpack.c.bf16 %v796, %v795
  %v806 = vpack.c.bf16 %v798, %v797
  %v807 = vpack.c.bf16 %v800, %v799
  %v809 = vsel %vm662, %v801, 0
  %v812 = vsel %vm662, %v802, 0
  %v815 = vsel %vm662, %v803, 0
  %v818 = vsel %vm662, %v804, 0
  %v821 = vsel %vm662, %v805, 0
  %v824 = vsel %vm662, %v806, 0
  %v827 = vsel %vm662, %v807, 0
  %829 = vmatprep.subr.bf16.mxu0 0
  %830 = vmatpush1.bf16.msra.mxu0 %v661
  %831 = vmatprep.subr.bf16.mxu0 0
  %832 = vmatpush1.bf16.msra.mxu0 0
  %833 = vmatprep.subr.bf16.mxu0 0
  %834 = vmatpush1.bf16.msra.mxu0 0
  %835 = vmatprep.subr.bf16.mxu0 0
  %836 = vmatpush1.bf16.msra.mxu0 0
  %837 = vmatprep.subr.bf16.mxu0 0
  %838 = vmatpush1.bf16.msra.mxu0 0
  %839 = vmatprep.subr.bf16.mxu0 0
  %840 = vmatpush1.bf16.msra.mxu0 0
  %841 = vmatprep.subr.bf16.mxu0 0
  %842 = vmatpush1.bf16.msra.mxu0 0
  %843 = vmatprep.subr.bf16.mxu0 0
  %844 = vmatpush1.bf16.msra.mxu0 0
  %845 = vmatprep.subr.bf16.mxu0 0
  %846 = vmatpush1.bf16.msra.mxu0 0
  %847 = vmatprep.subr.bf16.mxu0 0
  %848 = vmatpush1.bf16.msra.mxu0 0
  %849 = vmatprep.subr.bf16.mxu0 0
  %850 = vmatpush1.bf16.msra.mxu0 0
  %851 = vmatprep.subr.bf16.mxu0 0
  %852 = vmatpush1.bf16.msra.mxu0 0
  %853 = vmatprep.subr.bf16.mxu0 0
  %854 = vmatpush1.bf16.msra.mxu0 0
  %855 = vmatprep.subr.bf16.mxu0 0
  %856 = vmatpush1.bf16.msra.mxu0 0
  %857 = vmatprep.subr.bf16.mxu0 0
  %858 = vmatpush1.bf16.msra.mxu0 0
  %859 = vmatprep.subr.bf16.mxu0 0
  %860 = vmatpush1.bf16.msra.mxu0 0
  %861 = vmatprep.mubr.bf16.mxu0 0
  %862 = vmatmul.mubr.bf16.gmra.mrb[0].mxu0 %v809
  %v863 = vpop.f32.mrb[0].mxu0
  %v864 = vadd.f32 0.0, %v863
  %v865 = vpop.f32.mrb[0].mxu0
  %v866 = vpop.f32.mrb[0].mxu0
  %v867 = vadd.f32 0.0, %v866
  %v868 = vpop.f32.mrb[0].mxu0
  %869 = vmatprep.mubr.bf16.mxu0 0
  %870 = vmatmul.mubr.bf16.gmra.mrb[0].mxu0 %v812
  %v871 = vpop.f32.mrb[0].mxu0
  %v872 = vadd.f32 0.0, %v871
  %v873 = vpop.f32.mrb[0].mxu0
  %v874 = vpop.f32.mrb[0].mxu0
  %v875 = vadd.f32 0.0, %v874
  %v876 = vpop.f32.mrb[0].mxu0
  %877 = vmatprep.mubr.bf16.mxu0 0
  %878 = vmatmul.mubr.bf16.gmra.mrb[0].mxu0 %v815
  %v879 = vpop.f32.mrb[0].mxu0
  %v880 = vadd.f32 0.0, %v879
  %v881 = vpop.f32.mrb[0].mxu0
  %v882 = vpop.f32.mrb[0].mxu0
  %v883 = vadd.f32 0.0, %v882
  %v884 = vpop.f32.mrb[0].mxu0
  %885 = vmatprep.mubr.bf16.mxu0 0
  %886 = vmatmul.mubr.bf16.gmra.mrb[0].mxu0 %v818
  %v887 = vpop.f32.mrb[0].mxu0
  %v888 = vadd.f32 0.0, %v887
  %v889 = vpop.f32.mrb[0].mxu0
  %v890 = vpop.f32.mrb[0].mxu0
  %v891 = vadd.f32 0.0, %v890
  %v892 = vpop.f32.mrb[0].mxu0
  %893 = vmatprep.mubr.bf16.mxu0 0
  %894 = vmatmul.mubr.bf16.gmra.mrb[0].mxu0 %v821
  %v895 = vpop.f32.mrb[0].mxu0
  %v896 = vadd.f32 0.0, %v895
  %v897 = vpop.f32.mrb[0].mxu0
  %v898 = vpop.f32.mrb[0].mxu0
  %v899 = vadd.f32 0.0, %v898
  %v900 = vpop.f32.mrb[0].mxu0
  %901 = vmatprep.mubr.bf16.mxu0 0
  %902 = vmatmul.mubr.bf16.gmra.mrb[0].mxu0 %v824
  %v903 = vpop.f32.mrb[0].mxu0
  %v904 = vadd.f32 0.0, %v903
  %v905 = vpop.f32.mrb[0].mxu0
  %v906 = vpop.f32.mrb[0].mxu0
  %v907 = vadd.f32 0.0, %v906
  %v908 = vpop.f32.mrb[0].mxu0
  %909 = vmatprep.mubr.bf16.mxu0 0
  %910 = vmatmul.mubr.bf16.gmra.mrb[0].mxu0 %v827
  %v911 = vpop.f32.mrb[0].mxu0
  %v912 = vadd.f32 0.0, %v911
  %v913 = vpop.f32.mrb[0].mxu0
  %v914 = vpop.f32.mrb[0].mxu0
  %v915 = vadd.f32 0.0, %v914
  %v916 = vpop.f32.mrb[0].mxu0
  %917 = vdwg.mxu0
  %v918 = vpack.c.bf16 %v722, %v719
  %v919 = vpack.c.bf16 %v730, %v727
  %v920 = vpack.c.bf16 %v738, %v735
  %v921 = vpack.c.bf16 %v746, %v743
  %v922 = vpack.c.bf16 %v754, %v751
  %v923 = vpack.c.bf16 %v762, %v759
  %v924 = vpack.c.bf16 %v770, %v767
  %v925 = vpack.c.bf16 %v867, %v864
  %v926 = vpack.c.bf16 %v875, %v872
  %v927 = vpack.c.bf16 %v883, %v880
  %v928 = vpack.c.bf16 %v891, %v888
  %v929 = vpack.c.bf16 %v899, %v896
  %v930 = vpack.c.bf16 %v907, %v904
  %v931 = vpack.c.bf16 %v915, %v912
  %v936 = vunpack.c.l.b16 %v261
  %v937 = vunpack.c.l.b16 %v262
  %v938 = vunpack.c.l.b16 %v263
  %v939 = vunpack.c.l.b16 %v264
  %v940 = vpack.c.b16 %v937, %v936
  %v941 = vpack.c.b16 %v939, %v938
  %vm944 = vcmask 261120
  %v946 = vsel %vm944, %v925, 0
  %v949 = vsel %vm944, %v926, 0
  %v952 = vsel %vm944, %v927, 0
  %v955 = vsel %vm944, %v928, 0
  %v958 = vsel %vm944, %v929, 0
  %v961 = vsel %vm944, %v930, 0
  %v964 = vsel %vm944, %v931, 0
  %966 = vmatprep.subr.bf16.mxu0 0
  %967 = vmatpush1.bf16.msra.mxu0 %v940
  %968 = vmatprep.subr.bf16.mxu0 0
  %969 = vmatpush1.bf16.msra.mxu0 %v941
  %970 = vmatprep.subr.bf16.mxu0 0
  %971 = vmatpush1.bf16.msra.mxu0 0
  %972 = vmatprep.subr.bf16.mxu0 0
  %973 = vmatpush1.bf16.msra.mxu0 0
  %974 = vmatprep.subr.bf16.mxu0 0
  %975 = vmatpush1.bf16.msra.mxu0 0
  %976 = vmatprep.subr.bf16.mxu0 0
  %977 = vmatpush1.bf16.msra.mxu0 0
  %978 = vmatprep.subr.bf16.mxu0 0
  %979 = vmatpush1.bf16.msra.mxu0 0
  %980 = vmatprep.subr.bf16.mxu0 0
  %981 = vmatpush1.bf16.msra.mxu0 0
  %982 = vmatprep.subr.bf16.mxu0 0
  %983 = vmatpush1.bf16.msra.mxu0 0
  %984 = vmatprep.subr.bf16.mxu0 0
  %985 = vmatpush1.bf16.msra.mxu0 0
  %986 = vmatprep.subr.bf16.mxu0 0
  %987 = vmatpush1.bf16.msra.mxu0 0
  %988 = vmatprep.subr.bf16.mxu0 0
  %989 = vmatpush1.bf16.msra.mxu0 0
  %990 = vmatprep.subr.bf16.mxu0 0
  %991 = vmatpush1.bf16.msra.mxu0 0
  %992 = vmatprep.subr.bf16.mxu0 0
  %993 = vmatpush1.bf16.msra.mxu0 0
  %994 = vmatprep.subr.bf16.mxu0 0
  %995 = vmatpush1.bf16.msra.mxu0 0
  %996 = vmatprep.subr.bf16.mxu0 0
  %997 = vmatpush1.bf16.msra.mxu0 0
  %998 = vmatprep.mubr.bf16.mxu0 0
  %999 = vmatmul.mubr.bf16.gmra.mrb[0].mxu0 %v946
  %v1000 = vpop.f32.mrb[0].mxu0
  %v1001 = vadd.f32 0.0, %v1000
  %v1002 = vpop.f32.mrb[0].mxu0
  %v1003 = vpop.f32.mrb[0].mxu0
  %v1004 = vadd.f32 0.0, %v1003
  %v1005 = vpop.f32.mrb[0].mxu0
  %1006 = vmatprep.mubr.bf16.mxu0 0
  %1007 = vmatmul.mubr.bf16.gmra.mrb[0].mxu0 %v949
  %v1008 = vpop.f32.mrb[0].mxu0
  %v1009 = vadd.f32 0.0, %v1008
  %v1010 = vpop.f32.mrb[0].mxu0
  %v1011 = vpop.f32.mrb[0].mxu0
  %v1012 = vadd.f32 0.0, %v1011
  %v1013 = vpop.f32.mrb[0].mxu0
  %1014 = vmatprep.mubr.bf16.mxu0 0
  %1015 = vmatmul.mubr.bf16.gmra.mrb[0].mxu0 %v952
  %v1016 = vpop.f32.mrb[0].mxu0
  %v1017 = vadd.f32 0.0, %v1016
  %v1018 = vpop.f32.mrb[0].mxu0
  %v1019 = vpop.f32.mrb[0].mxu0
  %v1020 = vadd.f32 0.0, %v1019
  %v1021 = vpop.f32.mrb[0].mxu0
  %1022 = vmatprep.mubr.bf16.mxu0 0
  %1023 = vmatmul.mubr.bf16.gmra.mrb[0].mxu0 %v955
  %v1024 = vpop.f32.mrb[0].mxu0
  %v1025 = vadd.f32 0.0, %v1024
  %v1026 = vpop.f32.mrb[0].mxu0
  %v1027 = vpop.f32.mrb[0].mxu0
  %v1028 = vadd.f32 0.0, %v1027
  %v1029 = vpop.f32.mrb[0].mxu0
  %1030 = vmatprep.mubr.bf16.mxu0 0
  %1031 = vmatmul.mubr.bf16.gmra.mrb[0].mxu0 %v958
  %v1032 = vpop.f32.mrb[0].mxu0
  %v1033 = vadd.f32 0.0, %v1032
  %v1034 = vpop.f32.mrb[0].mxu0
  %v1035 = vpop.f32.mrb[0].mxu0
  %v1036 = vadd.f32 0.0, %v1035
  %v1037 = vpop.f32.mrb[0].mxu0
  %1038 = vmatprep.mubr.bf16.mxu0 0
  %1039 = vmatmul.mubr.bf16.gmra.mrb[0].mxu0 %v961
  %v1040 = vpop.f32.mrb[0].mxu0
  %v1041 = vadd.f32 0.0, %v1040
  %v1042 = vpop.f32.mrb[0].mxu0
  %v1043 = vpop.f32.mrb[0].mxu0
  %v1044 = vadd.f32 0.0, %v1043
  %v1045 = vpop.f32.mrb[0].mxu0
  %1046 = vmatprep.mubr.bf16.mxu0 0
  %1047 = vmatmul.mubr.bf16.gmra.mrb[0].mxu0 %v964
  %v1048 = vpop.f32.mrb[0].mxu0
  %v1049 = vadd.f32 0.0, %v1048
  %v1050 = vpop.f32.mrb[0].mxu0
  %v1051 = vpop.f32.mrb[0].mxu0
  %v1052 = vadd.f32 0.0, %v1051
  %v1053 = vpop.f32.mrb[0].mxu0
  %1054 = vdwg.mxu0
  %v1059 = vunpack.c.l.b16 %v245
  %v1060 = vunpack.c.l.b16 %v246
  %v1061 = vunpack.c.l.b16 %v247
  %v1062 = vunpack.c.l.b16 %v248
  %v1063 = vpack.c.b16 %v1060, %v1059
  %v1064 = vpack.c.b16 %v1062, %v1061
  %v1068 = vsel %vm944, %v918, 0
  %v1071 = vsel %vm944, %v919, 0
  %v1074 = vsel %vm944, %v920, 0
  %v1077 = vsel %vm944, %v921, 0
  %v1080 = vsel %vm944, %v922, 0
  %v1083 = vsel %vm944, %v923, 0
  %v1086 = vsel %vm944, %v924, 0
  %1088 = vmatprep.subr.bf16.mxu0 0
  %1089 = vmatpush1.bf16.msra.mxu0 %v1063
  %1090 = vmatprep.subr.bf16.mxu0 0
  %1091 = vmatpush1.bf16.msra.mxu0 %v1064
  %1092 = vmatprep.subr.bf16.mxu0 0
  %1093 = vmatpush1.bf16.msra.mxu0 0
  %1094 = vmatprep.subr.bf16.mxu0 0
  %1095 = vmatpush1.bf16.msra.mxu0 0
  %1096 = vmatprep.subr.bf16.mxu0 0
  %1097 = vmatpush1.bf16.msra.mxu0 0
  %1098 = vmatprep.subr.bf16.mxu0 0
  %1099 = vmatpush1.bf16.msra.mxu0 0
  %1100 = vmatprep.subr.bf16.mxu0 0
  %1101 = vmatpush1.bf16.msra.mxu0 0
  %1102 = vmatprep.subr.bf16.mxu0 0
  %1103 = vmatpush1.bf16.msra.mxu0 0
  %1104 = vmatprep.subr.bf16.mxu0 0
  %1105 = vmatpush1.bf16.msra.mxu0 0
  %1106 = vmatprep.subr.bf16.mxu0 0
  %1107 = vmatpush1.bf16.msra.mxu0 0
  %1108 = vmatprep.subr.bf16.mxu0 0
  %1109 = vmatpush1.bf16.msra.mxu0 0
  %1110 = vmatprep.subr.bf16.mxu0 0
  %1111 = vmatpush1.bf16.msra.mxu0 0
  %1112 = vmatprep.subr.bf16.mxu0 0
  %1113 = vmatpush1.bf16.msra.mxu0 0
  %1114 = vmatprep.subr.bf16.mxu0 0
  %1115 = vmatpush1.bf16.msra.mxu0 0
  %1116 = vmatprep.subr.bf16.mxu0 0
  %1117 = vmatpush1.bf16.msra.mxu0 0
  %1118 = vmatprep.subr.bf16.mxu0 0
  %1119 = vmatpush1.bf16.msra.mxu0 0
  %1120 = vmatprep.mubr.bf16.mxu0 0
  %1121 = vmatmul.mubr.bf16.gmra.mrb[0].mxu0 %v1068
  %v1122 = vpop.f32.mrb[0].mxu0
  %v1123 = vadd.f32 %v1001, %v1122
  %v1124 = vpop.f32.mrb[0].mxu0
  %v1125 = vpop.f32.mrb[0].mxu0
  %v1126 = vadd.f32 %v1004, %v1125
  %v1127 = vpop.f32.mrb[0].mxu0
  %1128 = vmatprep.mubr.bf16.mxu0 0
  %1129 = vmatmul.mubr.bf16.gmra.mrb[0].mxu0 %v1071
  %v1130 = vpop.f32.mrb[0].mxu0
  %v1131 = vadd.f32 %v1009, %v1130
  %v1132 = vpop.f32.mrb[0].mxu0
  %v1133 = vpop.f32.mrb[0].mxu0
  %v1134 = vadd.f32 %v1012, %v1133
  %v1135 = vpop.f32.mrb[0].mxu0
  %1136 = vmatprep.mubr.bf16.mxu0 0
  %1137 = vmatmul.mubr.bf16.gmra.mrb[0].mxu0 %v1074
  %v1138 = vpop.f32.mrb[0].mxu0
  %v1139 = vadd.f32 %v1017, %v1138
  %v1140 = vpop.f32.mrb[0].mxu0
  %v1141 = vpop.f32.mrb[0].mxu0
  %v1142 = vadd.f32 %v1020, %v1141
  %v1143 = vpop.f32.mrb[0].mxu0
  %1144 = vmatprep.mubr.bf16.mxu0 0
  %1145 = vmatmul.mubr.bf16.gmra.mrb[0].mxu0 %v1077
  %v1146 = vpop.f32.mrb[0].mxu0
  %v1147 = vadd.f32 %v1025, %v1146
  %v1148 = vpop.f32.mrb[0].mxu0
  %v1149 = vpop.f32.mrb[0].mxu0
  %v1150 = vadd.f32 %v1028, %v1149
  %v1151 = vpop.f32.mrb[0].mxu0
  %1152 = vmatprep.mubr.bf16.mxu0 0
  %1153 = vmatmul.mubr.bf16.gmra.mrb[0].mxu0 %v1080
  %v1154 = vpop.f32.mrb[0].mxu0
  %v1155 = vadd.f32 %v1033, %v1154
  %v1156 = vpop.f32.mrb[0].mxu0
  %v1157 = vpop.f32.mrb[0].mxu0
  %v1158 = vadd.f32 %v1036, %v1157
  %v1159 = vpop.f32.mrb[0].mxu0
  %1160 = vmatprep.mubr.bf16.mxu0 0
  %1161 = vmatmul.mubr.bf16.gmra.mrb[0].mxu0 %v1083
  %v1162 = vpop.f32.mrb[0].mxu0
  %v1163 = vadd.f32 %v1041, %v1162
  %v1164 = vpop.f32.mrb[0].mxu0
  %v1165 = vpop.f32.mrb[0].mxu0
  %v1166 = vadd.f32 %v1044, %v1165
  %v1167 = vpop.f32.mrb[0].mxu0
  %1168 = vmatprep.mubr.bf16.mxu0 0
  %1169 = vmatmul.mubr.bf16.gmra.mrb[0].mxu0 %v1086
  %v1170 = vpop.f32.mrb[0].mxu0
  %v1171 = vadd.f32 %v1049, %v1170
  %v1172 = vpop.f32.mrb[0].mxu0
  %v1173 = vpop.f32.mrb[0].mxu0
  %v1174 = vadd.f32 %v1052, %v1173
  %v1175 = vpop.f32.mrb[0].mxu0
  %1176 = vdwg.mxu0
  %1178 = vset.pattern.permute.xlu0 0
  %1179 = vperm.xlu0 %1178, %v170
  %v1180 = vpop.permute.xlu0 %1179
  %1183 = vset.pattern.permute.xlu0 0
  %1184 = vperm.xlu0 %1183, %v171
  %v1185 = vpop.permute.xlu0 %1184
  %1188 = vset.pattern.permute.xlu0 0
  %1189 = vperm.xlu0 %1188, %v172
  %v1190 = vpop.permute.xlu0 %1189
  %1193 = vset.pattern.permute.xlu0 0
  %1194 = vperm.xlu0 %1193, %v173
  %v1195 = vpop.permute.xlu0 %1194
  %1198 = vset.pattern.permute.xlu0 0
  %1199 = vperm.xlu0 %1198, %v174
  %v1200 = vpop.permute.xlu0 %1199
  %1203 = vset.pattern.permute.xlu0 0
  %1204 = vperm.xlu0 %1203, %v175
  %v1205 = vpop.permute.xlu0 %1204
  %1208 = vset.pattern.permute.xlu0 0
  %1209 = vperm.xlu0 %1208, %v176
  %v1210 = vpop.permute.xlu0 %1209
  %1213 = vset.pattern.permute.xlu0 0
  %1214 = vperm.xlu0 %1213, %v177
  %v1215 = vpop.permute.xlu0 %1214
  %1218 = vset.pattern.permute.xlu0 0
  %1219 = vperm.xlu0 %1218, %v178
  %v1220 = vpop.permute.xlu0 %1219
  %1223 = vset.pattern.permute.xlu0 0
  %1224 = vperm.xlu0 %1223, %v179
  %v1225 = vpop.permute.xlu0 %1224
  %1228 = vset.pattern.permute.xlu0 0
  %1229 = vperm.xlu0 %1228, %v180
  %v1230 = vpop.permute.xlu0 %1229
  %1233 = vset.pattern.permute.xlu0 0
  %1234 = vperm.xlu0 %1233, %v181
  %v1235 = vpop.permute.xlu0 %1234
  %1238 = vset.pattern.permute.xlu0 0
  %1239 = vperm.xlu0 %1238, %v182
  %v1240 = vpop.permute.xlu0 %1239
  %1243 = vset.pattern.permute.xlu0 0
  %1244 = vperm.xlu0 %1243, %v183
  %v1245 = vpop.permute.xlu0 %1244
  %v1248 = vlaneseq
  %v1249 = vshrl.u32 %v1248, 7
  %v1250 = vsub.s32 0, %v1249
  %v1251 = vrot.slane %v277, %v1250
  %v1253 = vmul.f32 %v1180, %v1251
  %v1254 = vmul.f32 %v1185, %v1251
  %v1255 = vmul.f32 %v1190, %v1251
  %v1256 = vmul.f32 %v1195, %v1251
  %v1257 = vmul.f32 %v1200, %v1251
  %v1258 = vmul.f32 %v1205, %v1251
  %v1259 = vmul.f32 %v1210, %v1251
  %v1260 = vmul.f32 %v1215, %v1251
  %v1261 = vmul.f32 %v1220, %v1251
  %v1262 = vmul.f32 %v1225, %v1251
  %v1263 = vmul.f32 %v1230, %v1251
  %v1264 = vmul.f32 %v1235, %v1251
  %v1265 = vmul.f32 %v1240, %v1251
  %v1266 = vmul.f32 %v1245, %v1251
  %v1267 = vadd.f32 %v1123, %v1253
  %v1268 = vadd.f32 %v1126, %v1254
  %v1269 = vadd.f32 %v1131, %v1255
  %v1270 = vadd.f32 %v1134, %v1256
  %v1271 = vadd.f32 %v1139, %v1257
  %v1272 = vadd.f32 %v1142, %v1258
  %v1273 = vadd.f32 %v1147, %v1259
  %v1274 = vadd.f32 %v1150, %v1260
  %v1275 = vadd.f32 %v1155, %v1261
  %v1276 = vadd.f32 %v1158, %v1262
  %v1277 = vadd.f32 %v1163, %v1263
  %v1278 = vadd.f32 %v1166, %v1264
  %v1279 = vadd.f32 %v1171, %v1265
  %v1280 = vadd.f32 %v1174, %v1266
  %1282 = vset.pattern.permute.xlu0 0
  %1283 = vperm.xlu0 %1282, %v184
  %v1284 = vpop.permute.xlu0 %1283
  %1287 = vset.pattern.permute.xlu0 0
  %1288 = vperm.xlu0 %1287, %v185
  %v1289 = vpop.permute.xlu0 %1288
  %1292 = vset.pattern.permute.xlu0 0
  %1293 = vperm.xlu0 %1292, %v186
  %v1294 = vpop.permute.xlu0 %1293
  %1297 = vset.pattern.permute.xlu0 0
  %1298 = vperm.xlu0 %1297, %v187
  %v1299 = vpop.permute.xlu0 %1298
  %1302 = vset.pattern.permute.xlu0 0
  %1303 = vperm.xlu0 %1302, %v188
  %v1304 = vpop.permute.xlu0 %1303
  %1307 = vset.pattern.permute.xlu0 0
  %1308 = vperm.xlu0 %1307, %v189
  %v1309 = vpop.permute.xlu0 %1308
  %1312 = vset.pattern.permute.xlu0 0
  %1313 = vperm.xlu0 %1312, %v190
  %v1314 = vpop.permute.xlu0 %1313
  %1317 = vset.pattern.permute.xlu0 0
  %1318 = vperm.xlu0 %1317, %v191
  %v1319 = vpop.permute.xlu0 %1318
  %1322 = vset.pattern.permute.xlu0 0
  %1323 = vperm.xlu0 %1322, %v192
  %v1324 = vpop.permute.xlu0 %1323
  %1327 = vset.pattern.permute.xlu0 0
  %1328 = vperm.xlu0 %1327, %v193
  %v1329 = vpop.permute.xlu0 %1328
  %1332 = vset.pattern.permute.xlu0 0
  %1333 = vperm.xlu0 %1332, %v194
  %v1334 = vpop.permute.xlu0 %1333
  %1337 = vset.pattern.permute.xlu0 0
  %1338 = vperm.xlu0 %1337, %v195
  %v1339 = vpop.permute.xlu0 %1338
  %1342 = vset.pattern.permute.xlu0 0
  %1343 = vperm.xlu0 %1342, %v196
  %v1344 = vpop.permute.xlu0 %1343
  %1347 = vset.pattern.permute.xlu0 0
  %1348 = vperm.xlu0 %1347, %v197
  %v1349 = vpop.permute.xlu0 %1348
  %v1351 = vlaneseq
  %v1352 = vshrl.u32 %v1351, 7
  %v1353 = vsub.s32 0, %v1352
  %v1354 = vrot.slane %v281, %v1353
  %v1355 = vmul.f32 %v1284, %v1354
  %v1356 = vmul.f32 %v1289, %v1354
  %v1357 = vmul.f32 %v1294, %v1354
  %v1358 = vmul.f32 %v1299, %v1354
  %v1359 = vmul.f32 %v1304, %v1354
  %v1360 = vmul.f32 %v1309, %v1354
  %v1361 = vmul.f32 %v1314, %v1354
  %v1362 = vmul.f32 %v1319, %v1354
  %v1363 = vmul.f32 %v1324, %v1354
  %v1364 = vmul.f32 %v1329, %v1354
  %v1365 = vmul.f32 %v1334, %v1354
  %v1366 = vmul.f32 %v1339, %v1354
  %v1367 = vmul.f32 %v1344, %v1354
  %v1368 = vmul.f32 %v1349, %v1354
  %1369 = vset.pattern.permute.xlu0 1
  %1370 = vperm.xlu0 %1369, %v184
  %v1371 = vpop.permute.xlu0 %1370
  %1373 = vset.pattern.permute.xlu0 1
  %1374 = vperm.xlu0 %1373, %v185
  %v1375 = vpop.permute.xlu0 %1374
  %1377 = vset.pattern.permute.xlu0 1
  %1378 = vperm.xlu0 %1377, %v186
  %v1379 = vpop.permute.xlu0 %1378
  %1381 = vset.pattern.permute.xlu0 1
  %1382 = vperm.xlu0 %1381, %v187
  %v1383 = vpop.permute.xlu0 %1382
  %1385 = vset.pattern.permute.xlu0 1
  %1386 = vperm.xlu0 %1385, %v188
  %v1387 = vpop.permute.xlu0 %1386
  %1389 = vset.pattern.permute.xlu0 1
  %1390 = vperm.xlu0 %1389, %v189
  %v1391 = vpop.permute.xlu0 %1390
  %1393 = vset.pattern.permute.xlu0 1
  %1394 = vperm.xlu0 %1393, %v190
  %v1395 = vpop.permute.xlu0 %1394
  %1397 = vset.pattern.permute.xlu0 1
  %1398 = vperm.xlu0 %1397, %v191
  %v1399 = vpop.permute.xlu0 %1398
  %1401 = vset.pattern.permute.xlu0 1
  %1402 = vperm.xlu0 %1401, %v192
  %v1403 = vpop.permute.xlu0 %1402
  %1405 = vset.pattern.permute.xlu0 1
  %1406 = vperm.xlu0 %1405, %v193
  %v1407 = vpop.permute.xlu0 %1406
  %1409 = vset.pattern.permute.xlu0 1
  %1410 = vperm.xlu0 %1409, %v194
  %v1411 = vpop.permute.xlu0 %1410
  %1413 = vset.pattern.permute.xlu0 1
  %1414 = vperm.xlu0 %1413, %v195
  %v1415 = vpop.permute.xlu0 %1414
  %1417 = vset.pattern.permute.xlu0 1
  %1418 = vperm.xlu0 %1417, %v196
  %v1419 = vpop.permute.xlu0 %1418
  %1421 = vset.pattern.permute.xlu0 1
  %1422 = vperm.xlu0 %1421, %v197
  %v1423 = vpop.permute.xlu0 %1422
  %v1425 = vlaneseq
  %v1426 = vshrl.u32 %v1425, 7
  %v1427 = vsub.s32 1, %v1426
  %v1428 = vrot.slane %v281, %v1427
  %v1429 = vmul.f32 %v1371, %v1428
  %v1430 = vmul.f32 %v1375, %v1428
  %v1431 = vmul.f32 %v1379, %v1428
  %v1432 = vmul.f32 %v1383, %v1428
  %v1433 = vmul.f32 %v1387, %v1428
  %v1434 = vmul.f32 %v1391, %v1428
  %v1435 = vmul.f32 %v1395, %v1428
  %v1436 = vmul.f32 %v1399, %v1428
  %v1437 = vmul.f32 %v1403, %v1428
  %v1438 = vmul.f32 %v1407, %v1428
  %v1439 = vmul.f32 %v1411, %v1428
  %v1440 = vmul.f32 %v1415, %v1428
  %v1441 = vmul.f32 %v1419, %v1428
  %v1442 = vmul.f32 %v1423, %v1428
  %v1443 = vadd.f32 %v1355, %v1429
  %v1444 = vadd.f32 %v1356, %v1430
  %v1445 = vadd.f32 %v1357, %v1431
  %v1446 = vadd.f32 %v1358, %v1432
  %v1447 = vadd.f32 %v1359, %v1433
  %v1448 = vadd.f32 %v1360, %v1434
  %v1449 = vadd.f32 %v1361, %v1435
  %v1450 = vadd.f32 %v1362, %v1436
  %v1451 = vadd.f32 %v1363, %v1437
  %v1452 = vadd.f32 %v1364, %v1438
  %v1453 = vadd.f32 %v1365, %v1439
  %v1454 = vadd.f32 %v1366, %v1440
  %v1455 = vadd.f32 %v1367, %v1441
  %v1456 = vadd.f32 %v1368, %v1442
  %v1457 = vadd.f32 %v1267, %v1443
  %v1458 = vadd.f32 %v1268, %v1444
  %v1459 = vadd.f32 %v1269, %v1445
  %v1460 = vadd.f32 %v1270, %v1446
  %v1461 = vadd.f32 %v1271, %v1447
  %v1462 = vadd.f32 %v1272, %v1448
  %v1463 = vadd.f32 %v1273, %v1449
  %v1464 = vadd.f32 %v1274, %v1450
  %v1465 = vadd.f32 %v1275, %v1451
  %v1466 = vadd.f32 %v1276, %v1452
  %v1467 = vadd.f32 %v1277, %v1453
  %v1468 = vadd.f32 %v1278, %v1454
  %v1469 = vadd.f32 %v1279, %v1455
  %v1470 = vadd.f32 %v1280, %v1456
  %v1472 = vlaneseq
  %v1473 = vshrl.u32 %v1472, 7
  %v1474 = vsub.s32 0, %v1473
  %v1475 = vrot.slane %v285, %v1474
  %v1477 = vadd.f32 %v1457, %v1475
  %v1478 = vadd.f32 %v1458, %v1475
  %v1479 = vadd.f32 %v1459, %v1475
  %v1480 = vadd.f32 %v1460, %v1475
  %v1481 = vadd.f32 %v1461, %v1475
  %v1482 = vadd.f32 %v1462, %v1475
  %v1483 = vadd.f32 %v1463, %v1475
  %v1484 = vadd.f32 %v1464, %v1475
  %v1485 = vadd.f32 %v1465, %v1475
  %v1486 = vadd.f32 %v1466, %v1475
  %v1487 = vadd.f32 %v1467, %v1475
  %v1488 = vadd.f32 %v1468, %v1475
  %v1489 = vadd.f32 %v1469, %v1475
  %v1490 = vadd.f32 %v1470, %v1475
  %v1491 = vxor.u32 %v1477, 2147483648
  %v1492 = vxor.u32 %v1478, 2147483648
  %v1493 = vxor.u32 %v1479, 2147483648
  %v1494 = vxor.u32 %v1480, 2147483648
  %v1495 = vxor.u32 %v1481, 2147483648
  %v1496 = vxor.u32 %v1482, 2147483648
  %v1497 = vxor.u32 %v1483, 2147483648
  %v1498 = vxor.u32 %v1484, 2147483648
  %v1499 = vxor.u32 %v1485, 2147483648
  %v1500 = vxor.u32 %v1486, 2147483648
  %v1501 = vxor.u32 %v1487, 2147483648
  %v1502 = vxor.u32 %v1488, 2147483648
  %v1503 = vxor.u32 %v1489, 2147483648
  %v1504 = vxor.u32 %v1490, 2147483648
  %v1505 = vmul.f32 %v1491, 1.442695
  %v1506 = vpow.pop %v1505
  %v1507 = vmul.f32 %v1492, 1.442695
  %v1508 = vpow.pop %v1507
  %v1509 = vmul.f32 %v1493, 1.442695
  %v1510 = vpow.pop %v1509
  %v1511 = vmul.f32 %v1494, 1.442695
  %v1512 = vpow.pop %v1511
  %v1513 = vmul.f32 %v1495, 1.442695
  %v1514 = vpow.pop %v1513
  %v1515 = vmul.f32 %v1496, 1.442695
  %v1516 = vpow.pop %v1515
  %v1517 = vmul.f32 %v1497, 1.442695
  %v1518 = vpow.pop %v1517
  %v1519 = vmul.f32 %v1498, 1.442695
  %v1520 = vpow.pop %v1519
  %v1521 = vmul.f32 %v1499, 1.442695
  %v1522 = vpow.pop %v1521
  %v1523 = vmul.f32 %v1500, 1.442695
  %v1524 = vpow.pop %v1523
  %v1525 = vmul.f32 %v1501, 1.442695
  %v1526 = vpow.pop %v1525
  %v1527 = vmul.f32 %v1502, 1.442695
  %v1528 = vpow.pop %v1527
  %v1529 = vmul.f32 %v1503, 1.442695
  %v1530 = vpow.pop %v1529
  %v1531 = vmul.f32 %v1504, 1.442695
  %v1532 = vpow.pop %v1531
  %v1533 = vadd.f32 %v1506, 1.0
  %v1534 = vadd.f32 %v1508, 1.0
  %v1535 = vadd.f32 %v1510, 1.0
  %v1536 = vadd.f32 %v1512, 1.0
  %v1537 = vadd.f32 %v1514, 1.0
  %v1538 = vadd.f32 %v1516, 1.0
  %v1539 = vadd.f32 %v1518, 1.0
  %v1540 = vadd.f32 %v1520, 1.0
  %v1541 = vadd.f32 %v1522, 1.0
  %v1542 = vadd.f32 %v1524, 1.0
  %v1543 = vadd.f32 %v1526, 1.0
  %v1544 = vadd.f32 %v1528, 1.0
  %v1545 = vadd.f32 %v1530, 1.0
  %v1546 = vadd.f32 %v1532, 1.0
  %v1547 = vrcp.pop %v1533
  %v1548 = vmul.f32 1.0, %v1547
  %v1549 = vrcp.pop %v1534
  %v1550 = vmul.f32 1.0, %v1549
  %v1551 = vrcp.pop %v1535
  %v1552 = vmul.f32 1.0, %v1551
  %v1553 = vrcp.pop %v1536
  %v1554 = vmul.f32 1.0, %v1553
  %v1555 = vrcp.pop %v1537
  %v1556 = vmul.f32 1.0, %v1555
  %v1557 = vrcp.pop %v1538
  %v1558 = vmul.f32 1.0, %v1557
  %v1559 = vrcp.pop %v1539
  %v1560 = vmul.f32 1.0, %v1559
  %v1561 = vrcp.pop %v1540
  %v1562 = vmul.f32 1.0, %v1561
  %v1563 = vrcp.pop %v1541
  %v1564 = vmul.f32 1.0, %v1563
  %v1565 = vrcp.pop %v1542
  %v1566 = vmul.f32 1.0, %v1565
  %v1567 = vrcp.pop %v1543
  %v1568 = vmul.f32 1.0, %v1567
  %v1569 = vrcp.pop %v1544
  %v1570 = vmul.f32 1.0, %v1569
  %v1571 = vrcp.pop %v1545
  %v1572 = vmul.f32 1.0, %v1571
  %v1573 = vrcp.pop %v1546
  %v1574 = vmul.f32 1.0, %v1573
  %v1575 = vmul.f32 %v1477, %v1548
  %v1576 = vmul.f32 %v1478, %v1550
  %v1577 = vmul.f32 %v1479, %v1552
  %v1578 = vmul.f32 %v1480, %v1554
  %v1579 = vmul.f32 %v1481, %v1556
  %v1580 = vmul.f32 %v1482, %v1558
  %v1581 = vmul.f32 %v1483, %v1560
  %v1582 = vmul.f32 %v1484, %v1562
  %v1583 = vmul.f32 %v1485, %v1564
  %v1584 = vmul.f32 %v1486, %v1566
  %v1585 = vmul.f32 %v1487, %v1568
  %v1586 = vmul.f32 %v1488, %v1570
  %v1587 = vmul.f32 %v1489, %v1572
  %v1588 = vmul.f32 %v1490, %v1574
  %v1589 = vpack.c.bf16 %v1576, %v1575
  %v1590 = vpack.c.bf16 %v1578, %v1577
  %v1591 = vpack.c.bf16 %v1580, %v1579
  %v1592 = vpack.c.bf16 %v1582, %v1581
  %v1593 = vpack.c.bf16 %v1584, %v1583
  %v1594 = vpack.c.bf16 %v1586, %v1585
  %v1595 = vpack.c.bf16 %v1588, %v1587
  %v1597 = vlaneseq
  %v1598 = vshrl.u32 %v1597, 7
  %v1599 = vsub.s32 0, %v1598
  %v1600 = vrot.slane %v305, %v1599
  %v1606 = vunpack.c.l.b16 %v289
  %v1607 = vunpack.c.l.b16 %v290
  %v1608 = vunpack.c.l.b16 %v291
  %v1609 = vunpack.c.l.b16 %v292
  %v1610 = vpack.c.b16 %v1607, %v1606
  %v1611 = vpack.c.b16 %v1609, %v1608
  %v1615 = vsel %vm944, %v1589, 0
  %v1618 = vsel %vm944, %v1590, 0
  %v1621 = vsel %vm944, %v1591, 0
  %v1624 = vsel %vm944, %v1592, 0
  %v1627 = vsel %vm944, %v1593, 0
  %v1630 = vsel %vm944, %v1594, 0
  %v1633 = vsel %vm944, %v1595, 0
  %1635 = vmatprep.subr.bf16.mxu0 0
  %1636 = vmatpush1.bf16.msra.mxu0 %v1610
  %1637 = vmatprep.subr.bf16.mxu0 0
  %1638 = vmatpush1.bf16.msra.mxu0 %v1611
  %1639 = vmatprep.subr.bf16.mxu0 0
  %1640 = vmatpush1.bf16.msra.mxu0 0
  %1641 = vmatprep.subr.bf16.mxu0 0
  %1642 = vmatpush1.bf16.msra.mxu0 0
  %1643 = vmatprep.subr.bf16.mxu0 0
  %1644 = vmatpush1.bf16.msra.mxu0 0
  %1645 = vmatprep.subr.bf16.mxu0 0
  %1646 = vmatpush1.bf16.msra.mxu0 0
  %1647 = vmatprep.subr.bf16.mxu0 0
  %1648 = vmatpush1.bf16.msra.mxu0 0
  %1649 = vmatprep.subr.bf16.mxu0 0
  %1650 = vmatpush1.bf16.msra.mxu0 0
  %1651 = vmatprep.subr.bf16.mxu0 0
  %1652 = vmatpush1.bf16.msra.mxu0 0
  %1653 = vmatprep.subr.bf16.mxu0 0
  %1654 = vmatpush1.bf16.msra.mxu0 0
  %1655 = vmatprep.subr.bf16.mxu0 0
  %1656 = vmatpush1.bf16.msra.mxu0 0
  %1657 = vmatprep.subr.bf16.mxu0 0
  %1658 = vmatpush1.bf16.msra.mxu0 0
  %1659 = vmatprep.subr.bf16.mxu0 0
  %1660 = vmatpush1.bf16.msra.mxu0 0
  %1661 = vmatprep.subr.bf16.mxu0 0
  %1662 = vmatpush1.bf16.msra.mxu0 0
  %1663 = vmatprep.subr.bf16.mxu0 0
  %1664 = vmatpush1.bf16.msra.mxu0 0
  %1665 = vmatprep.subr.bf16.mxu0 0
  %1666 = vmatpush1.bf16.msra.mxu0 0
  %1667 = vmatprep.mubr.bf16.mxu0 0
  %1668 = vmatmul.mubr.bf16.gmra.mrb[0].mxu0 %v1615
  %v1669 = vpop.f32.mrb[0].mxu0
  %v1670 = vadd.f32 %v1600, %v1669
  %v1671 = vpop.f32.mrb[0].mxu0
  %v1672 = vpop.f32.mrb[0].mxu0
  %v1673 = vadd.f32 %v1600, %v1672
  %v1674 = vpop.f32.mrb[0].mxu0
  %1675 = vmatprep.mubr.bf16.mxu0 0
  %1676 = vmatmul.mubr.bf16.gmra.mrb[0].mxu0 %v1618
  %v1677 = vpop.f32.mrb[0].mxu0
  %v1678 = vadd.f32 %v1600, %v1677
  %v1679 = vpop.f32.mrb[0].mxu0
  %v1680 = vpop.f32.mrb[0].mxu0
  %v1681 = vadd.f32 %v1600, %v1680
  %v1682 = vpop.f32.mrb[0].mxu0
  %1683 = vmatprep.mubr.bf16.mxu0 0
  %1684 = vmatmul.mubr.bf16.gmra.mrb[0].mxu0 %v1621
  %v1685 = vpop.f32.mrb[0].mxu0
  %v1686 = vadd.f32 %v1600, %v1685
  %v1687 = vpop.f32.mrb[0].mxu0
  %v1688 = vpop.f32.mrb[0].mxu0
  %v1689 = vadd.f32 %v1600, %v1688
  %v1690 = vpop.f32.mrb[0].mxu0
  %1691 = vmatprep.mubr.bf16.mxu0 0
  %1692 = vmatmul.mubr.bf16.gmra.mrb[0].mxu0 %v1624
  %v1693 = vpop.f32.mrb[0].mxu0
  %v1694 = vadd.f32 %v1600, %v1693
  %v1695 = vpop.f32.mrb[0].mxu0
  %v1696 = vpop.f32.mrb[0].mxu0
  %v1697 = vadd.f32 %v1600, %v1696
  %v1698 = vpop.f32.mrb[0].mxu0
  %1699 = vmatprep.mubr.bf16.mxu0 0
  %1700 = vmatmul.mubr.bf16.gmra.mrb[0].mxu0 %v1627
  %v1701 = vpop.f32.mrb[0].mxu0
  %v1702 = vadd.f32 %v1600, %v1701
  %v1703 = vpop.f32.mrb[0].mxu0
  %v1704 = vpop.f32.mrb[0].mxu0
  %v1705 = vadd.f32 %v1600, %v1704
  %v1706 = vpop.f32.mrb[0].mxu0
  %1707 = vmatprep.mubr.bf16.mxu0 0
  %1708 = vmatmul.mubr.bf16.gmra.mrb[0].mxu0 %v1630
  %v1709 = vpop.f32.mrb[0].mxu0
  %v1710 = vadd.f32 %v1600, %v1709
  %v1711 = vpop.f32.mrb[0].mxu0
  %v1712 = vpop.f32.mrb[0].mxu0
  %v1713 = vadd.f32 %v1600, %v1712
  %v1714 = vpop.f32.mrb[0].mxu0
  %1715 = vmatprep.mubr.bf16.mxu0 0
  %1716 = vmatmul.mubr.bf16.gmra.mrb[0].mxu0 %v1633
  %v1717 = vpop.f32.mrb[0].mxu0
  %v1718 = vadd.f32 %v1600, %v1717
  %v1719 = vpop.f32.mrb[0].mxu0
  %v1720 = vpop.f32.mrb[0].mxu0
  %v1721 = vadd.f32 %v1600, %v1720
  %v1722 = vpop.f32.mrb[0].mxu0
  %1723 = vdwg.mxu0
  %v1724 = vxor.u32 %v1670, 2147483648
  %v1725 = vxor.u32 %v1673, 2147483648
  %v1726 = vxor.u32 %v1678, 2147483648
  %v1727 = vxor.u32 %v1681, 2147483648
  %v1728 = vxor.u32 %v1686, 2147483648
  %v1729 = vxor.u32 %v1689, 2147483648
  %v1730 = vxor.u32 %v1694, 2147483648
  %v1731 = vxor.u32 %v1697, 2147483648
  %v1732 = vxor.u32 %v1702, 2147483648
  %v1733 = vxor.u32 %v1705, 2147483648
  %v1734 = vxor.u32 %v1710, 2147483648
  %v1735 = vxor.u32 %v1713, 2147483648
  %v1736 = vxor.u32 %v1718, 2147483648
  %v1737 = vxor.u32 %v1721, 2147483648
  %v1738 = vmul.f32 %v1724, 1.442695
  %v1739 = vpow.pop %v1738
  %v1740 = vmul.f32 %v1725, 1.442695
  %v1741 = vpow.pop %v1740
  %v1742 = vmul.f32 %v1726, 1.442695
  %v1743 = vpow.pop %v1742
  %v1744 = vmul.f32 %v1727, 1.442695
  %v1745 = vpow.pop %v1744
  %v1746 = vmul.f32 %v1728, 1.442695
  %v1747 = vpow.pop %v1746
  %v1748 = vmul.f32 %v1729, 1.442695
  %v1749 = vpow.pop %v1748
  %v1750 = vmul.f32 %v1730, 1.442695
  %v1751 = vpow.pop %v1750
  %v1752 = vmul.f32 %v1731, 1.442695
  %v1753 = vpow.pop %v1752
  %v1754 = vmul.f32 %v1732, 1.442695
  %v1755 = vpow.pop %v1754
  %v1756 = vmul.f32 %v1733, 1.442695
  %v1757 = vpow.pop %v1756
  %v1758 = vmul.f32 %v1734, 1.442695
  %v1759 = vpow.pop %v1758
  %v1760 = vmul.f32 %v1735, 1.442695
  %v1761 = vpow.pop %v1760
  %v1762 = vmul.f32 %v1736, 1.442695
  %v1763 = vpow.pop %v1762
  %v1764 = vmul.f32 %v1737, 1.442695
  %v1765 = vpow.pop %v1764
  %v1766 = vadd.f32 %v1739, 1.0
  %v1767 = vadd.f32 %v1741, 1.0
  %v1768 = vadd.f32 %v1743, 1.0
  %v1769 = vadd.f32 %v1745, 1.0
  %v1770 = vadd.f32 %v1747, 1.0
  %v1771 = vadd.f32 %v1749, 1.0
  %v1772 = vadd.f32 %v1751, 1.0
  %v1773 = vadd.f32 %v1753, 1.0
  %v1774 = vadd.f32 %v1755, 1.0
  %v1775 = vadd.f32 %v1757, 1.0
  %v1776 = vadd.f32 %v1759, 1.0
  %v1777 = vadd.f32 %v1761, 1.0
  %v1778 = vadd.f32 %v1763, 1.0
  %v1779 = vadd.f32 %v1765, 1.0
  %v1780 = vrcp.pop %v1766
  %v1781 = vmul.f32 1.0, %v1780
  %v1782 = vrcp.pop %v1767
  %v1783 = vmul.f32 1.0, %v1782
  %v1784 = vrcp.pop %v1768
  %v1785 = vmul.f32 1.0, %v1784
  %v1786 = vrcp.pop %v1769
  %v1787 = vmul.f32 1.0, %v1786
  %v1788 = vrcp.pop %v1770
  %v1789 = vmul.f32 1.0, %v1788
  %v1790 = vrcp.pop %v1771
  %v1791 = vmul.f32 1.0, %v1790
  %v1792 = vrcp.pop %v1772
  %v1793 = vmul.f32 1.0, %v1792
  %v1794 = vrcp.pop %v1773
  %v1795 = vmul.f32 1.0, %v1794
  %v1796 = vrcp.pop %v1774
  %v1797 = vmul.f32 1.0, %v1796
  %v1798 = vrcp.pop %v1775
  %v1799 = vmul.f32 1.0, %v1798
  %v1800 = vrcp.pop %v1776
  %v1801 = vmul.f32 1.0, %v1800
  %v1802 = vrcp.pop %v1777
  %v1803 = vmul.f32 1.0, %v1802
  %v1804 = vrcp.pop %v1778
  %v1805 = vmul.f32 1.0, %v1804
  %v1806 = vrcp.pop %v1779
  %v1807 = vmul.f32 1.0, %v1806
  %v1808 = vmul.f32 %v1670, %v1781
  %v1809 = vmul.f32 %v1673, %v1783
  %v1810 = vmul.f32 %v1678, %v1785
  %v1811 = vmul.f32 %v1681, %v1787
  %v1812 = vmul.f32 %v1686, %v1789
  %v1813 = vmul.f32 %v1689, %v1791
  %v1814 = vmul.f32 %v1694, %v1793
  %v1815 = vmul.f32 %v1697, %v1795
  %v1816 = vmul.f32 %v1702, %v1797
  %v1817 = vmul.f32 %v1705, %v1799
  %v1818 = vmul.f32 %v1710, %v1801
  %v1819 = vmul.f32 %v1713, %v1803
  %v1820 = vmul.f32 %v1718, %v1805
  %v1821 = vmul.f32 %v1721, %v1807
  %1823 = vset.pattern.permute.xlu0 0
  %1824 = vperm.xlu0 %1823, %v200
  %v1825 = vpop.permute.xlu0 %1824
  %1828 = vset.pattern.permute.xlu0 0
  %1829 = vperm.xlu0 %1828, %v201
  %v1830 = vpop.permute.xlu0 %1829
  %1833 = vset.pattern.permute.xlu0 0
  %1834 = vperm.xlu0 %1833, %v202
  %v1835 = vpop.permute.xlu0 %1834
  %1838 = vset.pattern.permute.xlu0 0
  %1839 = vperm.xlu0 %1838, %v203
  %v1840 = vpop.permute.xlu0 %1839
  %1843 = vset.pattern.permute.xlu0 0
  %1844 = vperm.xlu0 %1843, %v204
  %v1845 = vpop.permute.xlu0 %1844
  %1848 = vset.pattern.permute.xlu0 0
  %1849 = vperm.xlu0 %1848, %v205
  %v1850 = vpop.permute.xlu0 %1849
  %1853 = vset.pattern.permute.xlu0 0
  %1854 = vperm.xlu0 %1853, %v206
  %v1855 = vpop.permute.xlu0 %1854
  %1858 = vset.pattern.permute.xlu0 0
  %1859 = vperm.xlu0 %1858, %v207
  %v1860 = vpop.permute.xlu0 %1859
  %1863 = vset.pattern.permute.xlu0 0
  %1864 = vperm.xlu0 %1863, %v208
  %v1865 = vpop.permute.xlu0 %1864
  %1868 = vset.pattern.permute.xlu0 0
  %1869 = vperm.xlu0 %1868, %v209
  %v1870 = vpop.permute.xlu0 %1869
  %1873 = vset.pattern.permute.xlu0 0
  %1874 = vperm.xlu0 %1873, %v210
  %v1875 = vpop.permute.xlu0 %1874
  %1878 = vset.pattern.permute.xlu0 0
  %1879 = vperm.xlu0 %1878, %v211
  %v1880 = vpop.permute.xlu0 %1879
  %1883 = vset.pattern.permute.xlu0 0
  %1884 = vperm.xlu0 %1883, %v212
  %v1885 = vpop.permute.xlu0 %1884
  %1888 = vset.pattern.permute.xlu0 0
  %1889 = vperm.xlu0 %1888, %v213
  %v1890 = vpop.permute.xlu0 %1889
  %v1892 = vmul.f32 %v1808, %v1825
  %v1893 = vmul.f32 %v1809, %v1830
  %v1894 = vmul.f32 %v1810, %v1835
  %v1895 = vmul.f32 %v1811, %v1840
  %v1896 = vmul.f32 %v1812, %v1845
  %v1897 = vmul.f32 %v1813, %v1850
  %v1898 = vmul.f32 %v1814, %v1855
  %v1899 = vmul.f32 %v1815, %v1860
  %v1900 = vmul.f32 %v1816, %v1865
  %v1901 = vmul.f32 %v1817, %v1870
  %v1902 = vmul.f32 %v1818, %v1875
  %v1903 = vmul.f32 %v1819, %v1880
  %v1904 = vmul.f32 %v1820, %v1885
  %v1905 = vmul.f32 %v1821, %v1890
  %v1906 = vsel %vm530, 1, 0
  %v1907 = vsel %vm531, 1, 0
  %v1908 = vcvt.s32.f32 %v1906
  %v1909 = vcvt.s32.f32 %v1907
  %v1910 = vpack.c.bf16 %v1909, %v1908
  %v1911 = vpack.c.bf16 %v1893, %v1892
  %v1912 = vpack.c.bf16 %v1895, %v1894
  %v1913 = vpack.c.bf16 %v1897, %v1896
  %v1914 = vpack.c.bf16 %v1899, %v1898
  %v1915 = vpack.c.bf16 %v1901, %v1900
  %v1916 = vpack.c.bf16 %v1903, %v1902
  %v1917 = vpack.c.bf16 %v1905, %v1904
  %vm1918 = vcmask 916480
  %v1920 = vsel %vm1918, %v1910, 0
  %1922 = vmatprep.subr.bf16.mxu0 0
  %1923 = vmatpush1.bf16.msra.mxu0 %v1911
  %1924 = vmatprep.subr.bf16.mxu0 0
  %1925 = vmatpush1.bf16.msra.mxu0 %v1912
  %1926 = vmatprep.subr.bf16.mxu0 0
  %1927 = vmatpush1.bf16.msra.mxu0 %v1913
  %1928 = vmatprep.subr.bf16.mxu0 0
  %1929 = vmatpush1.bf16.msra.mxu0 %v1914
  %1930 = vmatprep.subr.bf16.mxu0 0
  %1931 = vmatpush1.bf16.msra.mxu0 %v1915
  %1932 = vmatprep.subr.bf16.mxu0 0
  %1933 = vmatpush1.bf16.msra.mxu0 %v1916
  %1934 = vmatprep.subr.bf16.mxu0 0
  %1935 = vmatpush1.bf16.msra.mxu0 %v1917
  %1936 = vmatprep.subr.bf16.mxu0 0
  %1937 = vmatpush1.bf16.msra.mxu0 0
  %1938 = vmatprep.subr.bf16.mxu0 0
  %1939 = vmatpush1.bf16.msra.mxu0 0
  %1940 = vmatprep.subr.bf16.mxu0 0
  %1941 = vmatpush1.bf16.msra.mxu0 0
  %1942 = vmatprep.subr.bf16.mxu0 0
  %1943 = vmatpush1.bf16.msra.mxu0 0
  %1944 = vmatprep.subr.bf16.mxu0 0
  %1945 = vmatpush1.bf16.msra.mxu0 0
  %1946 = vmatprep.subr.bf16.mxu0 0
  %1947 = vmatpush1.bf16.msra.mxu0 0
  %1948 = vmatprep.subr.bf16.mxu0 0
  %1949 = vmatpush1.bf16.msra.mxu0 0
  %1950 = vmatprep.subr.bf16.mxu0 0
  %1951 = vmatpush1.bf16.msra.mxu0 0
  %1952 = vmatprep.subr.bf16.mxu0 0
  %1953 = vmatpush1.bf16.msra.mxu0 0
  %1954 = vmatprep.mubr.bf16.mxu0 0
  %1955 = vmatmul.mubr.bf16.gmra.mrb[0].mxu0 %v1920
  %v1956 = vpop.f32.mrb[0].mxu0
  %v1957 = vadd.f32 0.0, %v1956
  %v1958 = vpop.f32.mrb[0].mxu0
  %v1959 = vpop.f32.mrb[0].mxu0
  %v1960 = vadd.f32 0.0, %v1959
  %v1961 = vpop.f32.mrb[0].mxu0
  %1962 = vdwg.mxu0
  %v1963 = vpack.c.bf16 %v1960, %v1957
  %v1968 = vunpack.c.l.b16 %v325
  %v1969 = vunpack.c.l.b16 %v326
  %v1970 = vunpack.c.l.b16 %v327
  %v1971 = vunpack.c.l.b16 %v328
  %v1972 = vpack.c.b16 %v1969, %v1968
  %v1973 = vpack.c.b16 %v1971, %v1970
  %v1977 = vsel %vm944, %v1963, 0
  %1979 = vmatprep.subr.bf16.mxu0 0
  %1980 = vmatpush1.bf16.msra.mxu0 %v1972
  %1981 = vmatprep.subr.bf16.mxu0 0
  %1982 = vmatpush1.bf16.msra.mxu0 %v1973
  %1983 = vmatprep.subr.bf16.mxu0 0
  %1984 = vmatpush1.bf16.msra.mxu0 0
  %1985 = vmatprep.subr.bf16.mxu0 0
  %1986 = vmatpush1.bf16.msra.mxu0 0
  %1987 = vmatprep.subr.bf16.mxu0 0
  %1988 = vmatpush1.bf16.msra.mxu0 0
  %1989 = vmatprep.subr.bf16.mxu0 0
  %1990 = vmatpush1.bf16.msra.mxu0 0
  %1991 = vmatprep.subr.bf16.mxu0 0
  %1992 = vmatpush1.bf16.msra.mxu0 0
  %1993 = vmatprep.subr.bf16.mxu0 0
  %1994 = vmatpush1.bf16.msra.mxu0 0
  %1995 = vmatprep.subr.bf16.mxu0 0
  %1996 = vmatpush1.bf16.msra.mxu0 0
  %1997 = vmatprep.subr.bf16.mxu0 0
  %1998 = vmatpush1.bf16.msra.mxu0 0
  %1999 = vmatprep.subr.bf16.mxu0 0
  %2000 = vmatpush1.bf16.msra.mxu0 0
  %2001 = vmatprep.subr.bf16.mxu0 0
  %2002 = vmatpush1.bf16.msra.mxu0 0
  %2003 = vmatprep.subr.bf16.mxu0 0
  %2004 = vmatpush1.bf16.msra.mxu0 0
  %2005 = vmatprep.subr.bf16.mxu0 0
  %2006 = vmatpush1.bf16.msra.mxu0 0
  %2007 = vmatprep.subr.bf16.mxu0 0
  %2008 = vmatpush1.bf16.msra.mxu0 0
  %2009 = vmatprep.subr.bf16.mxu0 0
  %2010 = vmatpush1.bf16.msra.mxu0 0
  %2011 = vmatprep.mubr.bf16.mxu0 0
  %2012 = vmatmul.mubr.bf16.gmra.mrb[0].mxu0 %v1977
  %v2013 = vpop.f32.mrb[0].mxu0
  %v2014 = vadd.f32 0.0, %v2013
  %v2015 = vpop.f32.mrb[0].mxu0
  %v2016 = vpop.f32.mrb[0].mxu0
  %v2017 = vadd.f32 0.0, %v2016
  %v2018 = vpop.f32.mrb[0].mxu0
  %2019 = vdwg.mxu0
  %v2024 = vunpack.c.l.b16 %v309
  %v2025 = vunpack.c.l.b16 %v310
  %v2026 = vunpack.c.l.b16 %v311
  %v2027 = vunpack.c.l.b16 %v312
  %v2028 = vpack.c.b16 %v2025, %v2024
  %v2029 = vpack.c.b16 %v2027, %v2026
  %v2033 = vsel %vm944, %v661, 0
  %2035 = vmatprep.subr.bf16.mxu0 0
  %2036 = vmatpush1.bf16.msra.mxu0 %v2028
  %2037 = vmatprep.subr.bf16.mxu0 0
  %2038 = vmatpush1.bf16.msra.mxu0 %v2029
  %2039 = vmatprep.subr.bf16.mxu0 0
  %2040 = vmatpush1.bf16.msra.mxu0 0
  %2041 = vmatprep.subr.bf16.mxu0 0
  %2042 = vmatpush1.bf16.msra.mxu0 0
  %2043 = vmatprep.subr.bf16.mxu0 0
  %2044 = vmatpush1.bf16.msra.mxu0 0
  %2045 = vmatprep.subr.bf16.mxu0 0
  %2046 = vmatpush1.bf16.msra.mxu0 0
  %2047 = vmatprep.subr.bf16.mxu0 0
  %2048 = vmatpush1.bf16.msra.mxu0 0
  %2049 = vmatprep.subr.bf16.mxu0 0
  %2050 = vmatpush1.bf16.msra.mxu0 0
  %2051 = vmatprep.subr.bf16.mxu0 0
  %2052 = vmatpush1.bf16.msra.mxu0 0
  %2053 = vmatprep.subr.bf16.mxu0 0
  %2054 = vmatpush1.bf16.msra.mxu0 0
  %2055 = vmatprep.subr.bf16.mxu0 0
  %2056 = vmatpush1.bf16.msra.mxu0 0
  %2057 = vmatprep.subr.bf16.mxu0 0
  %2058 = vmatpush1.bf16.msra.mxu0 0
  %2059 = vmatprep.subr.bf16.mxu0 0
  %2060 = vmatpush1.bf16.msra.mxu0 0
  %2061 = vmatprep.subr.bf16.mxu0 0
  %2062 = vmatpush1.bf16.msra.mxu0 0
  %2063 = vmatprep.subr.bf16.mxu0 0
  %2064 = vmatpush1.bf16.msra.mxu0 0
  %2065 = vmatprep.subr.bf16.mxu0 0
  %2066 = vmatpush1.bf16.msra.mxu0 0
  %2067 = vmatprep.mubr.bf16.mxu0 0
  %2068 = vmatmul.mubr.bf16.gmra.mrb[0].mxu0 %v2033
  %v2069 = vpop.f32.mrb[0].mxu0
  %v2070 = vadd.f32 %v2014, %v2069
  %v2071 = vpop.f32.mrb[0].mxu0
  %v2072 = vpop.f32.mrb[0].mxu0
  %v2073 = vadd.f32 %v2017, %v2072
  %v2074 = vpop.f32.mrb[0].mxu0
  %2075 = vdwg.mxu0
  %v2076 = vlaneseq
  %v2077 = vshrl.u32 %v2076, 7
  %v2078 = vsub.s32 0, %v2077
  %v2079 = vrot.slane %v341, %v2078
  %v2080 = vmul.f32 %v541, %v2079
  %v2081 = vmul.f32 %v546, %v2079
  %v2082 = vlaneseq
  %v2083 = vshrl.u32 %v2082, 7
  %v2084 = vsub.s32 1, %v2083
  %v2085 = vrot.slane %v341, %v2084
  %v2086 = vmul.f32 %v556, %v2085
  %v2087 = vmul.f32 %v560, %v2085
  %v2088 = vadd.f32 %v2080, %v2086
  %v2089 = vadd.f32 %v2081, %v2087
  %v2090 = vlaneseq
  %v2091 = vshrl.u32 %v2090, 7
  %v2092 = vsub.s32 2, %v2091
  %v2093 = vrot.slane %v341, %v2092
  %v2094 = vmul.f32 %v572, %v2093
  %v2095 = vmul.f32 %v576, %v2093
  %v2096 = vadd.f32 %v2088, %v2094
  %v2097 = vadd.f32 %v2089, %v2095
  %v2098 = vlaneseq
  %v2099 = vshrl.u32 %v2098, 7
  %v2100 = vsub.s32 3, %v2099
  %v2101 = vrot.slane %v341, %v2100
  %v2102 = vmul.f32 %v588, %v2101
  %v2103 = vmul.f32 %v592, %v2101
  %v2104 = vadd.f32 %v2096, %v2102
  %v2105 = vadd.f32 %v2097, %v2103
  %v2106 = vlaneseq
  %v2107 = vshrl.u32 %v2106, 7
  %v2108 = vsub.s32 4, %v2107
  %v2109 = vrot.slane %v341, %v2108
  %v2110 = vmul.f32 %v604, %v2109
  %v2111 = vmul.f32 %v608, %v2109
  %v2112 = vadd.f32 %v2104, %v2110
  %v2113 = vadd.f32 %v2105, %v2111
  %v2114 = vadd.f32 %v2070, %v2112
  %v2115 = vadd.f32 %v2073, %v2113
  %v2117 = vlaneseq
  %v2118 = vshrl.u32 %v2117, 7
  %v2119 = vsub.s32 0, %v2118
  %v2120 = vrot.slane %v345, %v2119
  %v2122 = vadd.f32 %v2114, %v2120
  %v2123 = vadd.f32 %v2115, %v2120
  %v2124 = vxor.u32 %v2122, 2147483648
  %v2125 = vxor.u32 %v2123, 2147483648
  %v2126 = vmul.f32 %v2124, 1.442695
  %v2127 = vpow.pop %v2126
  %v2128 = vmul.f32 %v2125, 1.442695
  %v2129 = vpow.pop %v2128
  %v2130 = vadd.f32 %v2127, 1.0
  %v2131 = vadd.f32 %v2129, 1.0
  %v2132 = vrcp.pop %v2130
  %v2133 = vmul.f32 1.0, %v2132
  %v2134 = vrcp.pop %v2131
  %v2135 = vmul.f32 1.0, %v2134
  %v2136 = vmul.f32 %v2122, %v2133
  %v2137 = vmul.f32 %v2123, %v2135
  %v2138 = vpack.c.bf16 %v2137, %v2136
  %v2143 = vunpack.c.l.b16 %v349
  %v2144 = vunpack.c.l.b16 %v350
  %v2145 = vunpack.c.l.b16 %v351
  %v2146 = vunpack.c.l.b16 %v352
  %v2147 = vpack.c.b16 %v2144, %v2143
  %v2148 = vpack.c.b16 %v2146, %v2145
  %v2152 = vsel %vm944, %v2138, 0
  %2154 = vmatprep.subr.bf16.mxu0 0
  %2155 = vmatpush1.bf16.msra.mxu0 %v2147
  %2156 = vmatprep.subr.bf16.mxu0 0
  %2157 = vmatpush1.bf16.msra.mxu0 %v2148
  %2158 = vmatprep.subr.bf16.mxu0 0
  %2159 = vmatpush1.bf16.msra.mxu0 0
  %2160 = vmatprep.subr.bf16.mxu0 0
  %2161 = vmatpush1.bf16.msra.mxu0 0
  %2162 = vmatprep.subr.bf16.mxu0 0
  %2163 = vmatpush1.bf16.msra.mxu0 0
  %2164 = vmatprep.subr.bf16.mxu0 0
  %2165 = vmatpush1.bf16.msra.mxu0 0
  %2166 = vmatprep.subr.bf16.mxu0 0
  %2167 = vmatpush1.bf16.msra.mxu0 0
  %2168 = vmatprep.subr.bf16.mxu0 0
  %2169 = vmatpush1.bf16.msra.mxu0 0
  %2170 = vmatprep.subr.bf16.mxu0 0
  %2171 = vmatpush1.bf16.msra.mxu0 0
  %2172 = vmatprep.subr.bf16.mxu0 0
  %2173 = vmatpush1.bf16.msra.mxu0 0
  %2174 = vmatprep.subr.bf16.mxu0 0
  %2175 = vmatpush1.bf16.msra.mxu0 0
  %2176 = vmatprep.subr.bf16.mxu0 0
  %2177 = vmatpush1.bf16.msra.mxu0 0
  %2178 = vmatprep.subr.bf16.mxu0 0
  %2179 = vmatpush1.bf16.msra.mxu0 0
  %2180 = vmatprep.subr.bf16.mxu0 0
  %2181 = vmatpush1.bf16.msra.mxu0 0
  %2182 = vmatprep.subr.bf16.mxu0 0
  %2183 = vmatpush1.bf16.msra.mxu0 0
  %2184 = vmatprep.subr.bf16.mxu0 0
  %2185 = vmatpush1.bf16.msra.mxu0 0
  %2186 = vmatprep.mubr.bf16.mxu0 0
  %2187 = vmatmul.mubr.bf16.gmra.mrb[0].mxu0 %v2152
  %v2188 = vpop.f32.mrb[0].mxu0
  %v2189 = vadd.f32 0.0, %v2188
  %v2190 = vpop.f32.mrb[0].mxu0
  %v2191 = vpop.f32.mrb[0].mxu0
  %v2192 = vadd.f32 0.0, %v2191
  %v2193 = vpop.f32.mrb[0].mxu0
  %2194 = vdwg.mxu0
  %v2195 = vadd.f32 %v624, %v2189
  %v2196 = vadd.f32 %v625, %v2192
  %v2198 = vlaneseq
  %v2199 = vshrl.u32 %v2198, 7
  %v2200 = vsub.s32 0, %v2199
  %v2201 = vrot.slane %v365, %v2200
  %v2203 = vadd.f32 %v2195, %v2201
  %v2204 = vadd.f32 %v2196, %v2201
  %v2205 = vpack.c.bf16 %v2204, %v2203
  %2206 = vmatprep.subr.bf16.mxu0 0
  %2207 = vmatpush1.bf16.msra.mxu0 %v2205
  %2208 = vmatprep.subr.bf16.mxu0 0
  %2209 = vmatpush1.bf16.msra.mxu0 0
  %2210 = vmatprep.subr.bf16.mxu0 0
  %2211 = vmatpush1.bf16.msra.mxu0 0
  %2212 = vmatprep.subr.bf16.mxu0 0
  %2213 = vmatpush1.bf16.msra.mxu0 0
  %2214 = vmatprep.subr.bf16.mxu0 0
  %2215 = vmatpush1.bf16.msra.mxu0 0
  %2216 = vmatprep.subr.bf16.mxu0 0
  %2217 = vmatpush1.bf16.msra.mxu0 0
  %2218 = vmatprep.subr.bf16.mxu0 0
  %2219 = vmatpush1.bf16.msra.mxu0 0
  %2220 = vmatprep.subr.bf16.mxu0 0
  %2221 = vmatpush1.bf16.msra.mxu0 0
  %2222 = vmatprep.subr.bf16.mxu0 0
  %2223 = vmatpush1.bf16.msra.mxu0 0
  %2224 = vmatprep.subr.bf16.mxu0 0
  %2225 = vmatpush1.bf16.msra.mxu0 0
  %2226 = vmatprep.subr.bf16.mxu0 0
  %2227 = vmatpush1.bf16.msra.mxu0 0
  %2228 = vmatprep.subr.bf16.mxu0 0
  %2229 = vmatpush1.bf16.msra.mxu0 0
  %2230 = vmatprep.subr.bf16.mxu0 0
  %2231 = vmatpush1.bf16.msra.mxu0 0
  %2232 = vmatprep.subr.bf16.mxu0 0
  %2233 = vmatpush1.bf16.msra.mxu0 0
  %2234 = vmatprep.subr.bf16.mxu0 0
  %2235 = vmatpush1.bf16.msra.mxu0 0
  %2236 = vmatprep.subr.bf16.mxu0 0
  %2237 = vmatpush1.bf16.msra.mxu0 0
  %2238 = vmatprep.mubr.bf16.mxu0 0
  %2239 = vmatmul.mubr.bf16.gmra.mrb[0].mxu0 %v664
  %v2240 = vpop.f32.mrb[0].mxu0
  %v2241 = vadd.f32 0.0, %v2240
  %v2242 = vpop.f32.mrb[0].mxu0
  %v2243 = vpop.f32.mrb[0].mxu0
  %v2244 = vadd.f32 0.0, %v2243
  %v2245 = vpop.f32.mrb[0].mxu0
  %2246 = vmatprep.mubr.bf16.mxu0 0
  %2247 = vmatmul.mubr.bf16.gmra.mrb[0].mxu0 %v667
  %v2248 = vpop.f32.mrb[0].mxu0
  %v2249 = vadd.f32 0.0, %v2248
  %v2250 = vpop.f32.mrb[0].mxu0
  %v2251 = vpop.f32.mrb[0].mxu0
  %v2252 = vadd.f32 0.0, %v2251
  %v2253 = vpop.f32.mrb[0].mxu0
  %2254 = vmatprep.mubr.bf16.mxu0 0
  %2255 = vmatmul.mubr.bf16.gmra.mrb[0].mxu0 %v670
  %v2256 = vpop.f32.mrb[0].mxu0
  %v2257 = vadd.f32 0.0, %v2256
  %v2258 = vpop.f32.mrb[0].mxu0
  %v2259 = vpop.f32.mrb[0].mxu0
  %v2260 = vadd.f32 0.0, %v2259
  %v2261 = vpop.f32.mrb[0].mxu0
  %2262 = vmatprep.mubr.bf16.mxu0 0
  %2263 = vmatmul.mubr.bf16.gmra.mrb[0].mxu0 %v673
  %v2264 = vpop.f32.mrb[0].mxu0
  %v2265 = vadd.f32 0.0, %v2264
  %v2266 = vpop.f32.mrb[0].mxu0
  %v2267 = vpop.f32.mrb[0].mxu0
  %v2268 = vadd.f32 0.0, %v2267
  %v2269 = vpop.f32.mrb[0].mxu0
  %2270 = vmatprep.mubr.bf16.mxu0 0
  %2271 = vmatmul.mubr.bf16.gmra.mrb[0].mxu0 %v676
  %v2272 = vpop.f32.mrb[0].mxu0
  %v2273 = vadd.f32 0.0, %v2272
  %v2274 = vpop.f32.mrb[0].mxu0
  %v2275 = vpop.f32.mrb[0].mxu0
  %v2276 = vadd.f32 0.0, %v2275
  %v2277 = vpop.f32.mrb[0].mxu0
  %2278 = vmatprep.mubr.bf16.mxu0 0
  %2279 = vmatmul.mubr.bf16.gmra.mrb[0].mxu0 %v679
  %v2280 = vpop.f32.mrb[0].mxu0
  %v2281 = vadd.f32 0.0, %v2280
  %v2282 = vpop.f32.mrb[0].mxu0
  %v2283 = vpop.f32.mrb[0].mxu0
  %v2284 = vadd.f32 0.0, %v2283
  %v2285 = vpop.f32.mrb[0].mxu0
  %2286 = vmatprep.mubr.bf16.mxu0 0
  %2287 = vmatmul.mubr.bf16.gmra.mrb[0].mxu0 %v682
  %v2288 = vpop.f32.mrb[0].mxu0
  %v2289 = vadd.f32 0.0, %v2288
  %v2290 = vpop.f32.mrb[0].mxu0
  %v2291 = vpop.f32.mrb[0].mxu0
  %v2292 = vadd.f32 0.0, %v2291
  %v2293 = vpop.f32.mrb[0].mxu0
  %2294 = vdwg.mxu0
  %2295 = vmatprep.subr.bf16.mxu0 0
  %2296 = vmatpush1.bf16.msra.mxu0 %v2205
  %2297 = vmatprep.subr.bf16.mxu0 0
  %2298 = vmatpush1.bf16.msra.mxu0 0
  %2299 = vmatprep.subr.bf16.mxu0 0
  %2300 = vmatpush1.bf16.msra.mxu0 0
  %2301 = vmatprep.subr.bf16.mxu0 0
  %2302 = vmatpush1.bf16.msra.mxu0 0
  %2303 = vmatprep.subr.bf16.mxu0 0
  %2304 = vmatpush1.bf16.msra.mxu0 0
  %2305 = vmatprep.subr.bf16.mxu0 0
  %2306 = vmatpush1.bf16.msra.mxu0 0
  %2307 = vmatprep.subr.bf16.mxu0 0
  %2308 = vmatpush1.bf16.msra.mxu0 0
  %2309 = vmatprep.subr.bf16.mxu0 0
  %2310 = vmatpush1.bf16.msra.mxu0 0
  %2311 = vmatprep.subr.bf16.mxu0 0
  %2312 = vmatpush1.bf16.msra.mxu0 0
  %2313 = vmatprep.subr.bf16.mxu0 0
  %2314 = vmatpush1.bf16.msra.mxu0 0
  %2315 = vmatprep.subr.bf16.mxu0 0
  %2316 = vmatpush1.bf16.msra.mxu0 0
  %2317 = vmatprep.subr.bf16.mxu0 0
  %2318 = vmatpush1.bf16.msra.mxu0 0
  %2319 = vmatprep.subr.bf16.mxu0 0
  %2320 = vmatpush1.bf16.msra.mxu0 0
  %2321 = vmatprep.subr.bf16.mxu0 0
  %2322 = vmatpush1.bf16.msra.mxu0 0
  %2323 = vmatprep.subr.bf16.mxu0 0
  %2324 = vmatpush1.bf16.msra.mxu0 0
  %2325 = vmatprep.subr.bf16.mxu0 0
  %2326 = vmatpush1.bf16.msra.mxu0 0
  %2327 = vmatprep.mubr.bf16.mxu0 0
  %2328 = vmatmul.mubr.bf16.gmra.mrb[0].mxu0 %v809
  %v2329 = vpop.f32.mrb[0].mxu0
  %v2330 = vadd.f32 0.0, %v2329
  %v2331 = vpop.f32.mrb[0].mxu0
  %v2332 = vpop.f32.mrb[0].mxu0
  %v2333 = vadd.f32 0.0, %v2332
  %v2334 = vpop.f32.mrb[0].mxu0
  %2335 = vmatprep.mubr.bf16.mxu0 0
  %2336 = vmatmul.mubr.bf16.gmra.mrb[0].mxu0 %v812
  %v2337 = vpop.f32.mrb[0].mxu0
  %v2338 = vadd.f32 0.0, %v2337
  %v2339 = vpop.f32.mrb[0].mxu0
  %v2340 = vpop.f32.mrb[0].mxu0
  %v2341 = vadd.f32 0.0, %v2340
  %v2342 = vpop.f32.mrb[0].mxu0
  %2343 = vmatprep.mubr.bf16.mxu0 0
  %2344 = vmatmul.mubr.bf16.gmra.mrb[0].mxu0 %v815
  %v2345 = vpop.f32.mrb[0].mxu0
  %v2346 = vadd.f32 0.0, %v2345
  %v2347 = vpop.f32.mrb[0].mxu0
  %v2348 = vpop.f32.mrb[0].mxu0
  %v2349 = vadd.f32 0.0, %v2348
  %v2350 = vpop.f32.mrb[0].mxu0
  %2351 = vmatprep.mubr.bf16.mxu0 0
  %2352 = vmatmul.mubr.bf16.gmra.mrb[0].mxu0 %v818
  %v2353 = vpop.f32.mrb[0].mxu0
  %v2354 = vadd.f32 0.0, %v2353
  %v2355 = vpop.f32.mrb[0].mxu0
  %v2356 = vpop.f32.mrb[0].mxu0
  %v2357 = vadd.f32 0.0, %v2356
  %v2358 = vpop.f32.mrb[0].mxu0
  %2359 = vmatprep.mubr.bf16.mxu0 0
  %2360 = vmatmul.mubr.bf16.gmra.mrb[0].mxu0 %v821
  %v2361 = vpop.f32.mrb[0].mxu0
  %v2362 = vadd.f32 0.0, %v2361
  %v2363 = vpop.f32.mrb[0].mxu0
  %v2364 = vpop.f32.mrb[0].mxu0
  %v2365 = vadd.f32 0.0, %v2364
  %v2366 = vpop.f32.mrb[0].mxu0
  %2367 = vmatprep.mubr.bf16.mxu0 0
  %2368 = vmatmul.mubr.bf16.gmra.mrb[0].mxu0 %v824
  %v2369 = vpop.f32.mrb[0].mxu0
  %v2370 = vadd.f32 0.0, %v2369
  %v2371 = vpop.f32.mrb[0].mxu0
  %v2372 = vpop.f32.mrb[0].mxu0
  %v2373 = vadd.f32 0.0, %v2372
  %v2374 = vpop.f32.mrb[0].mxu0
  %2375 = vmatprep.mubr.bf16.mxu0 0
  %2376 = vmatmul.mubr.bf16.gmra.mrb[0].mxu0 %v827
  %v2377 = vpop.f32.mrb[0].mxu0
  %v2378 = vadd.f32 0.0, %v2377
  %v2379 = vpop.f32.mrb[0].mxu0
  %v2380 = vpop.f32.mrb[0].mxu0
  %v2381 = vadd.f32 0.0, %v2380
  %v2382 = vpop.f32.mrb[0].mxu0
  %2383 = vdwg.mxu0
  %v2384 = vpack.c.bf16 %v2244, %v2241
  %v2385 = vpack.c.bf16 %v2252, %v2249
  %v2386 = vpack.c.bf16 %v2260, %v2257
  %v2387 = vpack.c.bf16 %v2268, %v2265
  %v2388 = vpack.c.bf16 %v2276, %v2273
  %v2389 = vpack.c.bf16 %v2284, %v2281
  %v2390 = vpack.c.bf16 %v2292, %v2289
  %v2391 = vpack.c.bf16 %v2333, %v2330
  %v2392 = vpack.c.bf16 %v2341, %v2338
  %v2393 = vpack.c.bf16 %v2349, %v2346
  %v2394 = vpack.c.bf16 %v2357, %v2354
  %v2395 = vpack.c.bf16 %v2365, %v2362
  %v2396 = vpack.c.bf16 %v2373, %v2370
  %v2397 = vpack.c.bf16 %v2381, %v2378
  %v2402 = vunpack.c.l.b16 %v265
  %v2403 = vunpack.c.l.b16 %v266
  %v2404 = vunpack.c.l.b16 %v267
  %v2405 = vunpack.c.l.b16 %v268
  %v2406 = vpack.c.b16 %v2403, %v2402
  %v2407 = vpack.c.b16 %v2405, %v2404
  %v2411 = vsel %vm944, %v2391, 0
  %v2414 = vsel %vm944, %v2392, 0
  %v2417 = vsel %vm944, %v2393, 0
  %v2420 = vsel %vm944, %v2394, 0
  %v2423 = vsel %vm944, %v2395, 0
  %v2426 = vsel %vm944, %v2396, 0
  %v2429 = vsel %vm944, %v2397, 0
  %2431 = vmatprep.subr.bf16.mxu0 0
  %2432 = vmatpush1.bf16.msra.mxu0 %v2406
  %2433 = vmatprep.subr.bf16.mxu0 0
  %2434 = vmatpush1.bf16.msra.mxu0 %v2407
  %2435 = vmatprep.subr.bf16.mxu0 0
  %2436 = vmatpush1.bf16.msra.mxu0 0
  %2437 = vmatprep.subr.bf16.mxu0 0
  %2438 = vmatpush1.bf16.msra.mxu0 0
  %2439 = vmatprep.subr.bf16.mxu0 0
  %2440 = vmatpush1.bf16.msra.mxu0 0
  %2441 = vmatprep.subr.bf16.mxu0 0
  %2442 = vmatpush1.bf16.msra.mxu0 0
  %2443 = vmatprep.subr.bf16.mxu0 0
  %2444 = vmatpush1.bf16.msra.mxu0 0
  %2445 = vmatprep.subr.bf16.mxu0 0
  %2446 = vmatpush1.bf16.msra.mxu0 0
  %2447 = vmatprep.subr.bf16.mxu0 0
  %2448 = vmatpush1.bf16.msra.mxu0 0
  %2449 = vmatprep.subr.bf16.mxu0 0
  %2450 = vmatpush1.bf16.msra.mxu0 0
  %2451 = vmatprep.subr.bf16.mxu0 0
  %2452 = vmatpush1.bf16.msra.mxu0 0
  %2453 = vmatprep.subr.bf16.mxu0 0
  %2454 = vmatpush1.bf16.msra.mxu0 0
  %2455 = vmatprep.subr.bf16.mxu0 0
  %2456 = vmatpush1.bf16.msra.mxu0 0
  %2457 = vmatprep.subr.bf16.mxu0 0
  %2458 = vmatpush1.bf16.msra.mxu0 0
  %2459 = vmatprep.subr.bf16.mxu0 0
  %2460 = vmatpush1.bf16.msra.mxu0 0
  %2461 = vmatprep.subr.bf16.mxu0 0
  %2462 = vmatpush1.bf16.msra.mxu0 0
  %2463 = vmatprep.mubr.bf16.mxu0 0
  %2464 = vmatmul.mubr.bf16.gmra.mrb[0].mxu0 %v2411
  %v2465 = vpop.f32.mrb[0].mxu0
  %v2466 = vadd.f32 0.0, %v2465
  %v2467 = vpop.f32.mrb[0].mxu0
  %v2468 = vpop.f32.mrb[0].mxu0
  %v2469 = vadd.f32 0.0, %v2468
  %v2470 = vpop.f32.mrb[0].mxu0
  %2471 = vmatprep.mubr.bf16.mxu0 0
  %2472 = vmatmul.mubr.bf16.gmra.mrb[0].mxu0 %v2414
  %v2473 = vpop.f32.mrb[0].mxu0
  %v2474 = vadd.f32 0.0, %v2473
  %v2475 = vpop.f32.mrb[0].mxu0
  %v2476 = vpop.f32.mrb[0].mxu0
  %v2477 = vadd.f32 0.0, %v2476
  %v2478 = vpop.f32.mrb[0].mxu0
  %2479 = vmatprep.mubr.bf16.mxu0 0
  %2480 = vmatmul.mubr.bf16.gmra.mrb[0].mxu0 %v2417
  %v2481 = vpop.f32.mrb[0].mxu0
  %v2482 = vadd.f32 0.0, %v2481
  %v2483 = vpop.f32.mrb[0].mxu0
  %v2484 = vpop.f32.mrb[0].mxu0
  %v2485 = vadd.f32 0.0, %v2484
  %v2486 = vpop.f32.mrb[0].mxu0
  %2487 = vmatprep.mubr.bf16.mxu0 0
  %2488 = vmatmul.mubr.bf16.gmra.mrb[0].mxu0 %v2420
  %v2489 = vpop.f32.mrb[0].mxu0
  %v2490 = vadd.f32 0.0, %v2489
  %v2491 = vpop.f32.mrb[0].mxu0
  %v2492 = vpop.f32.mrb[0].mxu0
  %v2493 = vadd.f32 0.0, %v2492
  %v2494 = vpop.f32.mrb[0].mxu0
  %2495 = vmatprep.mubr.bf16.mxu0 0
  %2496 = vmatmul.mubr.bf16.gmra.mrb[0].mxu0 %v2423
  %v2497 = vpop.f32.mrb[0].mxu0
  %v2498 = vadd.f32 0.0, %v2497
  %v2499 = vpop.f32.mrb[0].mxu0
  %v2500 = vpop.f32.mrb[0].mxu0
  %v2501 = vadd.f32 0.0, %v2500
  %v2502 = vpop.f32.mrb[0].mxu0
  %2503 = vmatprep.mubr.bf16.mxu0 0
  %2504 = vmatmul.mubr.bf16.gmra.mrb[0].mxu0 %v2426
  %v2505 = vpop.f32.mrb[0].mxu0
  %v2506 = vadd.f32 0.0, %v2505
  %v2507 = vpop.f32.mrb[0].mxu0
  %v2508 = vpop.f32.mrb[0].mxu0
  %v2509 = vadd.f32 0.0, %v2508
  %v2510 = vpop.f32.mrb[0].mxu0
  %2511 = vmatprep.mubr.bf16.mxu0 0
  %2512 = vmatmul.mubr.bf16.gmra.mrb[0].mxu0 %v2429
  %v2513 = vpop.f32.mrb[0].mxu0
  %v2514 = vadd.f32 0.0, %v2513
  %v2515 = vpop.f32.mrb[0].mxu0
  %v2516 = vpop.f32.mrb[0].mxu0
  %v2517 = vadd.f32 0.0, %v2516
  %v2518 = vpop.f32.mrb[0].mxu0
  %2519 = vdwg.mxu0
  %v2524 = vunpack.c.l.b16 %v249
  %v2525 = vunpack.c.l.b16 %v250
  %v2526 = vunpack.c.l.b16 %v251
  %v2527 = vunpack.c.l.b16 %v252
  %v2528 = vpack.c.b16 %v2525, %v2524
  %v2529 = vpack.c.b16 %v2527, %v2526
  %v2533 = vsel %vm944, %v2384, 0
  %v2536 = vsel %vm944, %v2385, 0
  %v2539 = vsel %vm944, %v2386, 0
  %v2542 = vsel %vm944, %v2387, 0
  %v2545 = vsel %vm944, %v2388, 0
  %v2548 = vsel %vm944, %v2389, 0
  %v2551 = vsel %vm944, %v2390, 0
  %2553 = vmatprep.subr.bf16.mxu0 0
  %2554 = vmatpush1.bf16.msra.mxu0 %v2528
  %2555 = vmatprep.subr.bf16.mxu0 0
  %2556 = vmatpush1.bf16.msra.mxu0 %v2529
  %2557 = vmatprep.subr.bf16.mxu0 0
  %2558 = vmatpush1.bf16.msra.mxu0 0
  %2559 = vmatprep.subr.bf16.mxu0 0
  %2560 = vmatpush1.bf16.msra.mxu0 0
  %2561 = vmatprep.subr.bf16.mxu0 0
  %2562 = vmatpush1.bf16.msra.mxu0 0
  %2563 = vmatprep.subr.bf16.mxu0 0
  %2564 = vmatpush1.bf16.msra.mxu0 0
  %2565 = vmatprep.subr.bf16.mxu0 0
  %2566 = vmatpush1.bf16.msra.mxu0 0
  %2567 = vmatprep.subr.bf16.mxu0 0
  %2568 = vmatpush1.bf16.msra.mxu0 0
  %2569 = vmatprep.subr.bf16.mxu0 0
  %2570 = vmatpush1.bf16.msra.mxu0 0
  %2571 = vmatprep.subr.bf16.mxu0 0
  %2572 = vmatpush1.bf16.msra.mxu0 0
  %2573 = vmatprep.subr.bf16.mxu0 0
  %2574 = vmatpush1.bf16.msra.mxu0 0
  %2575 = vmatprep.subr.bf16.mxu0 0
  %2576 = vmatpush1.bf16.msra.mxu0 0
  %2577 = vmatprep.subr.bf16.mxu0 0
  %2578 = vmatpush1.bf16.msra.mxu0 0
  %2579 = vmatprep.subr.bf16.mxu0 0
  %2580 = vmatpush1.bf16.msra.mxu0 0
  %2581 = vmatprep.subr.bf16.mxu0 0
  %2582 = vmatpush1.bf16.msra.mxu0 0
  %2583 = vmatprep.subr.bf16.mxu0 0
  %2584 = vmatpush1.bf16.msra.mxu0 0
  %2585 = vmatprep.mubr.bf16.mxu0 0
  %2586 = vmatmul.mubr.bf16.gmra.mrb[0].mxu0 %v2533
  %v2587 = vpop.f32.mrb[0].mxu0
  %v2588 = vadd.f32 %v2466, %v2587
  %v2589 = vpop.f32.mrb[0].mxu0
  %v2590 = vpop.f32.mrb[0].mxu0
  %v2591 = vadd.f32 %v2469, %v2590
  %v2592 = vpop.f32.mrb[0].mxu0
  %2593 = vmatprep.mubr.bf16.mxu0 0
  %2594 = vmatmul.mubr.bf16.gmra.mrb[0].mxu0 %v2536
  %v2595 = vpop.f32.mrb[0].mxu0
  %v2596 = vadd.f32 %v2474, %v2595
  %v2597 = vpop.f32.mrb[0].mxu0
  %v2598 = vpop.f32.mrb[0].mxu0
  %v2599 = vadd.f32 %v2477, %v2598
  %v2600 = vpop.f32.mrb[0].mxu0
  %2601 = vmatprep.mubr.bf16.mxu0 0
  %2602 = vmatmul.mubr.bf16.gmra.mrb[0].mxu0 %v2539
  %v2603 = vpop.f32.mrb[0].mxu0
  %v2604 = vadd.f32 %v2482, %v2603
  %v2605 = vpop.f32.mrb[0].mxu0
  %v2606 = vpop.f32.mrb[0].mxu0
  %v2607 = vadd.f32 %v2485, %v2606
  %v2608 = vpop.f32.mrb[0].mxu0
  %2609 = vmatprep.mubr.bf16.mxu0 0
  %2610 = vmatmul.mubr.bf16.gmra.mrb[0].mxu0 %v2542
  %v2611 = vpop.f32.mrb[0].mxu0
  %v2612 = vadd.f32 %v2490, %v2611
  %v2613 = vpop.f32.mrb[0].mxu0
  %v2614 = vpop.f32.mrb[0].mxu0
  %v2615 = vadd.f32 %v2493, %v2614
  %v2616 = vpop.f32.mrb[0].mxu0
  %2617 = vmatprep.mubr.bf16.mxu0 0
  %2618 = vmatmul.mubr.bf16.gmra.mrb[0].mxu0 %v2545
  %v2619 = vpop.f32.mrb[0].mxu0
  %v2620 = vadd.f32 %v2498, %v2619
  %v2621 = vpop.f32.mrb[0].mxu0
  %v2622 = vpop.f32.mrb[0].mxu0
  %v2623 = vadd.f32 %v2501, %v2622
  %v2624 = vpop.f32.mrb[0].mxu0
  %2625 = vmatprep.mubr.bf16.mxu0 0
  %2626 = vmatmul.mubr.bf16.gmra.mrb[0].mxu0 %v2548
  %v2627 = vpop.f32.mrb[0].mxu0
  %v2628 = vadd.f32 %v2506, %v2627
  %v2629 = vpop.f32.mrb[0].mxu0
  %v2630 = vpop.f32.mrb[0].mxu0
  %v2631 = vadd.f32 %v2509, %v2630
  %v2632 = vpop.f32.mrb[0].mxu0
  %2633 = vmatprep.mubr.bf16.mxu0 0
  %2634 = vmatmul.mubr.bf16.gmra.mrb[0].mxu0 %v2551
  %v2635 = vpop.f32.mrb[0].mxu0
  %v2636 = vadd.f32 %v2514, %v2635
  %v2637 = vpop.f32.mrb[0].mxu0
  %v2638 = vpop.f32.mrb[0].mxu0
  %v2639 = vadd.f32 %v2517, %v2638
  %v2640 = vpop.f32.mrb[0].mxu0
  %2641 = vdwg.mxu0
  %v2643 = vlaneseq
  %v2644 = vshrl.u32 %v2643, 7
  %v2645 = vsub.s32 0, %v2644
  %v2646 = vrot.slane %v278, %v2645
  %v2648 = vmul.f32 %v1180, %v2646
  %v2649 = vmul.f32 %v1185, %v2646
  %v2650 = vmul.f32 %v1190, %v2646
  %v2651 = vmul.f32 %v1195, %v2646
  %v2652 = vmul.f32 %v1200, %v2646
  %v2653 = vmul.f32 %v1205, %v2646
  %v2654 = vmul.f32 %v1210, %v2646
  %v2655 = vmul.f32 %v1215, %v2646
  %v2656 = vmul.f32 %v1220, %v2646
  %v2657 = vmul.f32 %v1225, %v2646
  %v2658 = vmul.f32 %v1230, %v2646
  %v2659 = vmul.f32 %v1235, %v2646
  %v2660 = vmul.f32 %v1240, %v2646
  %v2661 = vmul.f32 %v1245, %v2646
  %v2662 = vadd.f32 %v2588, %v2648
  %v2663 = vadd.f32 %v2591, %v2649
  %v2664 = vadd.f32 %v2596, %v2650
  %v2665 = vadd.f32 %v2599, %v2651
  %v2666 = vadd.f32 %v2604, %v2652
  %v2667 = vadd.f32 %v2607, %v2653
  %v2668 = vadd.f32 %v2612, %v2654
  %v2669 = vadd.f32 %v2615, %v2655
  %v2670 = vadd.f32 %v2620, %v2656
  %v2671 = vadd.f32 %v2623, %v2657
  %v2672 = vadd.f32 %v2628, %v2658
  %v2673 = vadd.f32 %v2631, %v2659
  %v2674 = vadd.f32 %v2636, %v2660
  %v2675 = vadd.f32 %v2639, %v2661
  %v2676 = vlaneseq
  %v2677 = vshrl.u32 %v2676, 7
  %v2678 = vsub.s32 0, %v2677
  %v2679 = vrot.slane %v282, %v2678
  %v2680 = vmul.f32 %v1284, %v2679
  %v2681 = vmul.f32 %v1289, %v2679
  %v2682 = vmul.f32 %v1294, %v2679
  %v2683 = vmul.f32 %v1299, %v2679
  %v2684 = vmul.f32 %v1304, %v2679
  %v2685 = vmul.f32 %v1309, %v2679
  %v2686 = vmul.f32 %v1314, %v2679
  %v2687 = vmul.f32 %v1319, %v2679
  %v2688 = vmul.f32 %v1324, %v2679
  %v2689 = vmul.f32 %v1329, %v2679
  %v2690 = vmul.f32 %v1334, %v2679
  %v2691 = vmul.f32 %v1339, %v2679
  %v2692 = vmul.f32 %v1344, %v2679
  %v2693 = vmul.f32 %v1349, %v2679
  %v2694 = vlaneseq
  %v2695 = vshrl.u32 %v2694, 7
  %v2696 = vsub.s32 1, %v2695
  %v2697 = vrot.slane %v282, %v2696
  %v2698 = vmul.f32 %v1371, %v2697
  %v2699 = vmul.f32 %v1375, %v2697
  %v2700 = vmul.f32 %v1379, %v2697
  %v2701 = vmul.f32 %v1383, %v2697
  %v2702 = vmul.f32 %v1387, %v2697
  %v2703 = vmul.f32 %v1391, %v2697
  %v2704 = vmul.f32 %v1395, %v2697
  %v2705 = vmul.f32 %v1399, %v2697
  %v2706 = vmul.f32 %v1403, %v2697
  %v2707 = vmul.f32 %v1407, %v2697
  %v2708 = vmul.f32 %v1411, %v2697
  %v2709 = vmul.f32 %v1415, %v2697
  %v2710 = vmul.f32 %v1419, %v2697
  %v2711 = vmul.f32 %v1423, %v2697
  %v2712 = vadd.f32 %v2680, %v2698
  %v2713 = vadd.f32 %v2681, %v2699
  %v2714 = vadd.f32 %v2682, %v2700
  %v2715 = vadd.f32 %v2683, %v2701
  %v2716 = vadd.f32 %v2684, %v2702
  %v2717 = vadd.f32 %v2685, %v2703
  %v2718 = vadd.f32 %v2686, %v2704
  %v2719 = vadd.f32 %v2687, %v2705
  %v2720 = vadd.f32 %v2688, %v2706
  %v2721 = vadd.f32 %v2689, %v2707
  %v2722 = vadd.f32 %v2690, %v2708
  %v2723 = vadd.f32 %v2691, %v2709
  %v2724 = vadd.f32 %v2692, %v2710
  %v2725 = vadd.f32 %v2693, %v2711
  %v2726 = vadd.f32 %v2662, %v2712
  %v2727 = vadd.f32 %v2663, %v2713
  %v2728 = vadd.f32 %v2664, %v2714
  %v2729 = vadd.f32 %v2665, %v2715
  %v2730 = vadd.f32 %v2666, %v2716
  %v2731 = vadd.f32 %v2667, %v2717
  %v2732 = vadd.f32 %v2668, %v2718
  %v2733 = vadd.f32 %v2669, %v2719
  %v2734 = vadd.f32 %v2670, %v2720
  %v2735 = vadd.f32 %v2671, %v2721
  %v2736 = vadd.f32 %v2672, %v2722
  %v2737 = vadd.f32 %v2673, %v2723
  %v2738 = vadd.f32 %v2674, %v2724
  %v2739 = vadd.f32 %v2675, %v2725
  %v2741 = vlaneseq
  %v2742 = vshrl.u32 %v2741, 7
  %v2743 = vsub.s32 0, %v2742
  %v2744 = vrot.slane %v286, %v2743
  %v2746 = vadd.f32 %v2726, %v2744
  %v2747 = vadd.f32 %v2727, %v2744
  %v2748 = vadd.f32 %v2728, %v2744
  %v2749 = vadd.f32 %v2729, %v2744
  %v2750 = vadd.f32 %v2730, %v2744
  %v2751 = vadd.f32 %v2731, %v2744
  %v2752 = vadd.f32 %v2732, %v2744
  %v2753 = vadd.f32 %v2733, %v2744
  %v2754 = vadd.f32 %v2734, %v2744
  %v2755 = vadd.f32 %v2735, %v2744
  %v2756 = vadd.f32 %v2736, %v2744
  %v2757 = vadd.f32 %v2737, %v2744
  %v2758 = vadd.f32 %v2738, %v2744
  %v2759 = vadd.f32 %v2739, %v2744
  %v2760 = vxor.u32 %v2746, 2147483648
  %v2761 = vxor.u32 %v2747, 2147483648
  %v2762 = vxor.u32 %v2748, 2147483648
  %v2763 = vxor.u32 %v2749, 2147483648
  %v2764 = vxor.u32 %v2750, 2147483648
  %v2765 = vxor.u32 %v2751, 2147483648
  %v2766 = vxor.u32 %v2752, 2147483648
  %v2767 = vxor.u32 %v2753, 2147483648
  %v2768 = vxor.u32 %v2754, 2147483648
  %v2769 = vxor.u32 %v2755, 2147483648
  %v2770 = vxor.u32 %v2756, 2147483648
  %v2771 = vxor.u32 %v2757, 2147483648
  %v2772 = vxor.u32 %v2758, 2147483648
  %v2773 = vxor.u32 %v2759, 2147483648
  %v2774 = vmul.f32 %v2760, 1.442695
  %v2775 = vpow.pop %v2774
  %v2776 = vmul.f32 %v2761, 1.442695
  %v2777 = vpow.pop %v2776
  %v2778 = vmul.f32 %v2762, 1.442695
  %v2779 = vpow.pop %v2778
  %v2780 = vmul.f32 %v2763, 1.442695
  %v2781 = vpow.pop %v2780
  %v2782 = vmul.f32 %v2764, 1.442695
  %v2783 = vpow.pop %v2782
  %v2784 = vmul.f32 %v2765, 1.442695
  %v2785 = vpow.pop %v2784
  %v2786 = vmul.f32 %v2766, 1.442695
  %v2787 = vpow.pop %v2786
  %v2788 = vmul.f32 %v2767, 1.442695
  %v2789 = vpow.pop %v2788
  %v2790 = vmul.f32 %v2768, 1.442695
  %v2791 = vpow.pop %v2790
  %v2792 = vmul.f32 %v2769, 1.442695
  %v2793 = vpow.pop %v2792
  %v2794 = vmul.f32 %v2770, 1.442695
  %v2795 = vpow.pop %v2794
  %v2796 = vmul.f32 %v2771, 1.442695
  %v2797 = vpow.pop %v2796
  %v2798 = vmul.f32 %v2772, 1.442695
  %v2799 = vpow.pop %v2798
  %v2800 = vmul.f32 %v2773, 1.442695
  %v2801 = vpow.pop %v2800
  %v2802 = vadd.f32 %v2775, 1.0
  %v2803 = vadd.f32 %v2777, 1.0
  %v2804 = vadd.f32 %v2779, 1.0
  %v2805 = vadd.f32 %v2781, 1.0
  %v2806 = vadd.f32 %v2783, 1.0
  %v2807 = vadd.f32 %v2785, 1.0
  %v2808 = vadd.f32 %v2787, 1.0
  %v2809 = vadd.f32 %v2789, 1.0
  %v2810 = vadd.f32 %v2791, 1.0
  %v2811 = vadd.f32 %v2793, 1.0
  %v2812 = vadd.f32 %v2795, 1.0
  %v2813 = vadd.f32 %v2797, 1.0
  %v2814 = vadd.f32 %v2799, 1.0
  %v2815 = vadd.f32 %v2801, 1.0
  %v2816 = vrcp.pop %v2802
  %v2817 = vmul.f32 1.0, %v2816
  %v2818 = vrcp.pop %v2803
  %v2819 = vmul.f32 1.0, %v2818
  %v2820 = vrcp.pop %v2804
  %v2821 = vmul.f32 1.0, %v2820
  %v2822 = vrcp.pop %v2805
  %v2823 = vmul.f32 1.0, %v2822
  %v2824 = vrcp.pop %v2806
  %v2825 = vmul.f32 1.0, %v2824
  %v2826 = vrcp.pop %v2807
  %v2827 = vmul.f32 1.0, %v2826
  %v2828 = vrcp.pop %v2808
  %v2829 = vmul.f32 1.0, %v2828
  %v2830 = vrcp.pop %v2809
  %v2831 = vmul.f32 1.0, %v2830
  %v2832 = vrcp.pop %v2810
  %v2833 = vmul.f32 1.0, %v2832
  %v2834 = vrcp.pop %v2811
  %v2835 = vmul.f32 1.0, %v2834
  %v2836 = vrcp.pop %v2812
  %v2837 = vmul.f32 1.0, %v2836
  %v2838 = vrcp.pop %v2813
  %v2839 = vmul.f32 1.0, %v2838
  %v2840 = vrcp.pop %v2814
  %v2841 = vmul.f32 1.0, %v2840
  %v2842 = vrcp.pop %v2815
  %v2843 = vmul.f32 1.0, %v2842
  %v2844 = vmul.f32 %v2746, %v2817
  %v2845 = vmul.f32 %v2747, %v2819
  %v2846 = vmul.f32 %v2748, %v2821
  %v2847 = vmul.f32 %v2749, %v2823
  %v2848 = vmul.f32 %v2750, %v2825
  %v2849 = vmul.f32 %v2751, %v2827
  %v2850 = vmul.f32 %v2752, %v2829
  %v2851 = vmul.f32 %v2753, %v2831
  %v2852 = vmul.f32 %v2754, %v2833
  %v2853 = vmul.f32 %v2755, %v2835
  %v2854 = vmul.f32 %v2756, %v2837
  %v2855 = vmul.f32 %v2757, %v2839
  %v2856 = vmul.f32 %v2758, %v2841
  %v2857 = vmul.f32 %v2759, %v2843
  %v2858 = vpack.c.bf16 %v2845, %v2844
  %v2859 = vpack.c.bf16 %v2847, %v2846
  %v2860 = vpack.c.bf16 %v2849, %v2848
  %v2861 = vpack.c.bf16 %v2851, %v2850
  %v2862 = vpack.c.bf16 %v2853, %v2852
  %v2863 = vpack.c.bf16 %v2855, %v2854
  %v2864 = vpack.c.bf16 %v2857, %v2856
  %v2866 = vlaneseq
  %v2867 = vshrl.u32 %v2866, 7
  %v2868 = vsub.s32 0, %v2867
  %v2869 = vrot.slane %v306, %v2868
  %v2875 = vunpack.c.l.b16 %v293
  %v2876 = vunpack.c.l.b16 %v294
  %v2877 = vunpack.c.l.b16 %v295
  %v2878 = vunpack.c.l.b16 %v296
  %v2879 = vpack.c.b16 %v2876, %v2875
  %v2880 = vpack.c.b16 %v2878, %v2877
  %v2884 = vsel %vm944, %v2858, 0
  %v2887 = vsel %vm944, %v2859, 0
  %v2890 = vsel %vm944, %v2860, 0
  %v2893 = vsel %vm944, %v2861, 0
  %v2896 = vsel %vm944, %v2862, 0
  %v2899 = vsel %vm944, %v2863, 0
  %v2902 = vsel %vm944, %v2864, 0
  %2904 = vmatprep.subr.bf16.mxu0 0
  %2905 = vmatpush1.bf16.msra.mxu0 %v2879
  %2906 = vmatprep.subr.bf16.mxu0 0
  %2907 = vmatpush1.bf16.msra.mxu0 %v2880
  %2908 = vmatprep.subr.bf16.mxu0 0
  %2909 = vmatpush1.bf16.msra.mxu0 0
  %2910 = vmatprep.subr.bf16.mxu0 0
  %2911 = vmatpush1.bf16.msra.mxu0 0
  %2912 = vmatprep.subr.bf16.mxu0 0
  %2913 = vmatpush1.bf16.msra.mxu0 0
  %2914 = vmatprep.subr.bf16.mxu0 0
  %2915 = vmatpush1.bf16.msra.mxu0 0
  %2916 = vmatprep.subr.bf16.mxu0 0
  %2917 = vmatpush1.bf16.msra.mxu0 0
  %2918 = vmatprep.subr.bf16.mxu0 0
  %2919 = vmatpush1.bf16.msra.mxu0 0
  %2920 = vmatprep.subr.bf16.mxu0 0
  %2921 = vmatpush1.bf16.msra.mxu0 0
  %2922 = vmatprep.subr.bf16.mxu0 0
  %2923 = vmatpush1.bf16.msra.mxu0 0
  %2924 = vmatprep.subr.bf16.mxu0 0
  %2925 = vmatpush1.bf16.msra.mxu0 0
  %2926 = vmatprep.subr.bf16.mxu0 0
  %2927 = vmatpush1.bf16.msra.mxu0 0
  %2928 = vmatprep.subr.bf16.mxu0 0
  %2929 = vmatpush1.bf16.msra.mxu0 0
  %2930 = vmatprep.subr.bf16.mxu0 0
  %2931 = vmatpush1.bf16.msra.mxu0 0
  %2932 = vmatprep.subr.bf16.mxu0 0
  %2933 = vmatpush1.bf16.msra.mxu0 0
  %2934 = vmatprep.subr.bf16.mxu0 0
  %2935 = vmatpush1.bf16.msra.mxu0 0
  %2936 = vmatprep.mubr.bf16.mxu0 0
  %2937 = vmatmul.mubr.bf16.gmra.mrb[0].mxu0 %v2884
  %v2938 = vpop.f32.mrb[0].mxu0
  %v2939 = vadd.f32 %v2869, %v2938
  %v2940 = vpop.f32.mrb[0].mxu0
  %v2941 = vpop.f32.mrb[0].mxu0
  %v2942 = vadd.f32 %v2869, %v2941
  %v2943 = vpop.f32.mrb[0].mxu0
  %2944 = vmatprep.mubr.bf16.mxu0 0
  %2945 = vmatmul.mubr.bf16.gmra.mrb[0].mxu0 %v2887
  %v2946 = vpop.f32.mrb[0].mxu0
  %v2947 = vadd.f32 %v2869, %v2946
  %v2948 = vpop.f32.mrb[0].mxu0
  %v2949 = vpop.f32.mrb[0].mxu0
  %v2950 = vadd.f32 %v2869, %v2949
  %v2951 = vpop.f32.mrb[0].mxu0
  %2952 = vmatprep.mubr.bf16.mxu0 0
  %2953 = vmatmul.mubr.bf16.gmra.mrb[0].mxu0 %v2890
  %v2954 = vpop.f32.mrb[0].mxu0
  %v2955 = vadd.f32 %v2869, %v2954
  %v2956 = vpop.f32.mrb[0].mxu0
  %v2957 = vpop.f32.mrb[0].mxu0
  %v2958 = vadd.f32 %v2869, %v2957
  %v2959 = vpop.f32.mrb[0].mxu0
  %2960 = vmatprep.mubr.bf16.mxu0 0
  %2961 = vmatmul.mubr.bf16.gmra.mrb[0].mxu0 %v2893
  %v2962 = vpop.f32.mrb[0].mxu0
  %v2963 = vadd.f32 %v2869, %v2962
  %v2964 = vpop.f32.mrb[0].mxu0
  %v2965 = vpop.f32.mrb[0].mxu0
  %v2966 = vadd.f32 %v2869, %v2965
  %v2967 = vpop.f32.mrb[0].mxu0
  %2968 = vmatprep.mubr.bf16.mxu0 0
  %2969 = vmatmul.mubr.bf16.gmra.mrb[0].mxu0 %v2896
  %v2970 = vpop.f32.mrb[0].mxu0
  %v2971 = vadd.f32 %v2869, %v2970
  %v2972 = vpop.f32.mrb[0].mxu0
  %v2973 = vpop.f32.mrb[0].mxu0
  %v2974 = vadd.f32 %v2869, %v2973
  %v2975 = vpop.f32.mrb[0].mxu0
  %2976 = vmatprep.mubr.bf16.mxu0 0
  %2977 = vmatmul.mubr.bf16.gmra.mrb[0].mxu0 %v2899
  %v2978 = vpop.f32.mrb[0].mxu0
  %v2979 = vadd.f32 %v2869, %v2978
  %v2980 = vpop.f32.mrb[0].mxu0
  %v2981 = vpop.f32.mrb[0].mxu0
  %v2982 = vadd.f32 %v2869, %v2981
  %v2983 = vpop.f32.mrb[0].mxu0
  %2984 = vmatprep.mubr.bf16.mxu0 0
  %2985 = vmatmul.mubr.bf16.gmra.mrb[0].mxu0 %v2902
  %v2986 = vpop.f32.mrb[0].mxu0
  %v2987 = vadd.f32 %v2869, %v2986
  %v2988 = vpop.f32.mrb[0].mxu0
  %v2989 = vpop.f32.mrb[0].mxu0
  %v2990 = vadd.f32 %v2869, %v2989
  %v2991 = vpop.f32.mrb[0].mxu0
  %2992 = vdwg.mxu0
  %v2993 = vxor.u32 %v2939, 2147483648
  %v2994 = vxor.u32 %v2942, 2147483648
  %v2995 = vxor.u32 %v2947, 2147483648
  %v2996 = vxor.u32 %v2950, 2147483648
  %v2997 = vxor.u32 %v2955, 2147483648
  %v2998 = vxor.u32 %v2958, 2147483648
  %v2999 = vxor.u32 %v2963, 2147483648
  %v3000 = vxor.u32 %v2966, 2147483648
  %v3001 = vxor.u32 %v2971, 2147483648
  %v3002 = vxor.u32 %v2974, 2147483648
  %v3003 = vxor.u32 %v2979, 2147483648
  %v3004 = vxor.u32 %v2982, 2147483648
  %v3005 = vxor.u32 %v2987, 2147483648
  %v3006 = vxor.u32 %v2990, 2147483648
  %v3007 = vmul.f32 %v2993, 1.442695
  %v3008 = vpow.pop %v3007
  %v3009 = vmul.f32 %v2994, 1.442695
  %v3010 = vpow.pop %v3009
  %v3011 = vmul.f32 %v2995, 1.442695
  %v3012 = vpow.pop %v3011
  %v3013 = vmul.f32 %v2996, 1.442695
  %v3014 = vpow.pop %v3013
  %v3015 = vmul.f32 %v2997, 1.442695
  %v3016 = vpow.pop %v3015
  %v3017 = vmul.f32 %v2998, 1.442695
  %v3018 = vpow.pop %v3017
  %v3019 = vmul.f32 %v2999, 1.442695
  %v3020 = vpow.pop %v3019
  %v3021 = vmul.f32 %v3000, 1.442695
  %v3022 = vpow.pop %v3021
  %v3023 = vmul.f32 %v3001, 1.442695
  %v3024 = vpow.pop %v3023
  %v3025 = vmul.f32 %v3002, 1.442695
  %v3026 = vpow.pop %v3025
  %v3027 = vmul.f32 %v3003, 1.442695
  %v3028 = vpow.pop %v3027
  %v3029 = vmul.f32 %v3004, 1.442695
  %v3030 = vpow.pop %v3029
  %v3031 = vmul.f32 %v3005, 1.442695
  %v3032 = vpow.pop %v3031
  %v3033 = vmul.f32 %v3006, 1.442695
  %v3034 = vpow.pop %v3033
  %v3035 = vadd.f32 %v3008, 1.0
  %v3036 = vadd.f32 %v3010, 1.0
  %v3037 = vadd.f32 %v3012, 1.0
  %v3038 = vadd.f32 %v3014, 1.0
  %v3039 = vadd.f32 %v3016, 1.0
  %v3040 = vadd.f32 %v3018, 1.0
  %v3041 = vadd.f32 %v3020, 1.0
  %v3042 = vadd.f32 %v3022, 1.0
  %v3043 = vadd.f32 %v3024, 1.0
  %v3044 = vadd.f32 %v3026, 1.0
  %v3045 = vadd.f32 %v3028, 1.0
  %v3046 = vadd.f32 %v3030, 1.0
  %v3047 = vadd.f32 %v3032, 1.0
  %v3048 = vadd.f32 %v3034, 1.0
  %v3049 = vrcp.pop %v3035
  %v3050 = vmul.f32 1.0, %v3049
  %v3051 = vrcp.pop %v3036
  %v3052 = vmul.f32 1.0, %v3051
  %v3053 = vrcp.pop %v3037
  %v3054 = vmul.f32 1.0, %v3053
  %v3055 = vrcp.pop %v3038
  %v3056 = vmul.f32 1.0, %v3055
  %v3057 = vrcp.pop %v3039
  %v3058 = vmul.f32 1.0, %v3057
  %v3059 = vrcp.pop %v3040
  %v3060 = vmul.f32 1.0, %v3059
  %v3061 = vrcp.pop %v3041
  %v3062 = vmul.f32 1.0, %v3061
  %v3063 = vrcp.pop %v3042
  %v3064 = vmul.f32 1.0, %v3063
  %v3065 = vrcp.pop %v3043
  %v3066 = vmul.f32 1.0, %v3065
  %v3067 = vrcp.pop %v3044
  %v3068 = vmul.f32 1.0, %v3067
  %v3069 = vrcp.pop %v3045
  %v3070 = vmul.f32 1.0, %v3069
  %v3071 = vrcp.pop %v3046
  %v3072 = vmul.f32 1.0, %v3071
  %v3073 = vrcp.pop %v3047
  %v3074 = vmul.f32 1.0, %v3073
  %v3075 = vrcp.pop %v3048
  %v3076 = vmul.f32 1.0, %v3075
  %v3077 = vmul.f32 %v2939, %v3050
  %v3078 = vmul.f32 %v2942, %v3052
  %v3079 = vmul.f32 %v2947, %v3054
  %v3080 = vmul.f32 %v2950, %v3056
  %v3081 = vmul.f32 %v2955, %v3058
  %v3082 = vmul.f32 %v2958, %v3060
  %v3083 = vmul.f32 %v2963, %v3062
  %v3084 = vmul.f32 %v2966, %v3064
  %v3085 = vmul.f32 %v2971, %v3066
  %v3086 = vmul.f32 %v2974, %v3068
  %v3087 = vmul.f32 %v2979, %v3070
  %v3088 = vmul.f32 %v2982, %v3072
  %v3089 = vmul.f32 %v2987, %v3074
  %v3090 = vmul.f32 %v2990, %v3076
  %v3091 = vmul.f32 %v3077, %v1825
  %v3092 = vmul.f32 %v3078, %v1830
  %v3093 = vmul.f32 %v3079, %v1835
  %v3094 = vmul.f32 %v3080, %v1840
  %v3095 = vmul.f32 %v3081, %v1845
  %v3096 = vmul.f32 %v3082, %v1850
  %v3097 = vmul.f32 %v3083, %v1855
  %v3098 = vmul.f32 %v3084, %v1860
  %v3099 = vmul.f32 %v3085, %v1865
  %v3100 = vmul.f32 %v3086, %v1870
  %v3101 = vmul.f32 %v3087, %v1875
  %v3102 = vmul.f32 %v3088, %v1880
  %v3103 = vmul.f32 %v3089, %v1885
  %v3104 = vmul.f32 %v3090, %v1890
  %v3105 = vpack.c.bf16 %v3092, %v3091
  %v3106 = vpack.c.bf16 %v3094, %v3093
  %v3107 = vpack.c.bf16 %v3096, %v3095
  %v3108 = vpack.c.bf16 %v3098, %v3097
  %v3109 = vpack.c.bf16 %v3100, %v3099
  %v3110 = vpack.c.bf16 %v3102, %v3101
  %v3111 = vpack.c.bf16 %v3104, %v3103
  %3112 = vmatprep.subr.bf16.mxu0 0
  %3113 = vmatpush1.bf16.msra.mxu0 %v3105
  %3114 = vmatprep.subr.bf16.mxu0 0
  %3115 = vmatpush1.bf16.msra.mxu0 %v3106
  %3116 = vmatprep.subr.bf16.mxu0 0
  %3117 = vmatpush1.bf16.msra.mxu0 %v3107
  %3118 = vmatprep.subr.bf16.mxu0 0
  %3119 = vmatpush1.bf16.msra.mxu0 %v3108
  %3120 = vmatprep.subr.bf16.mxu0 0
  %3121 = vmatpush1.bf16.msra.mxu0 %v3109
  %3122 = vmatprep.subr.bf16.mxu0 0
  %3123 = vmatpush1.bf16.msra.mxu0 %v3110
  %3124 = vmatprep.subr.bf16.mxu0 0
  %3125 = vmatpush1.bf16.msra.mxu0 %v3111
  %3126 = vmatprep.subr.bf16.mxu0 0
  %3127 = vmatpush1.bf16.msra.mxu0 0
  %3128 = vmatprep.subr.bf16.mxu0 0
  %3129 = vmatpush1.bf16.msra.mxu0 0
  %3130 = vmatprep.subr.bf16.mxu0 0
  %3131 = vmatpush1.bf16.msra.mxu0 0
  %3132 = vmatprep.subr.bf16.mxu0 0
  %3133 = vmatpush1.bf16.msra.mxu0 0
  %3134 = vmatprep.subr.bf16.mxu0 0
  %3135 = vmatpush1.bf16.msra.mxu0 0
  %3136 = vmatprep.subr.bf16.mxu0 0
  %3137 = vmatpush1.bf16.msra.mxu0 0
  %3138 = vmatprep.subr.bf16.mxu0 0
  %3139 = vmatpush1.bf16.msra.mxu0 0
  %3140 = vmatprep.subr.bf16.mxu0 0
  %3141 = vmatpush1.bf16.msra.mxu0 0
  %3142 = vmatprep.subr.bf16.mxu0 0
  %3143 = vmatpush1.bf16.msra.mxu0 0
  %3144 = vmatprep.mubr.bf16.mxu0 0
  %3145 = vmatmul.mubr.bf16.gmra.mrb[0].mxu0 %v1920
  %v3146 = vpop.f32.mrb[0].mxu0
  %v3147 = vadd.f32 0.0, %v3146
  %v3148 = vpop.f32.mrb[0].mxu0
  %v3149 = vpop.f32.mrb[0].mxu0
  %v3150 = vadd.f32 0.0, %v3149
  %v3151 = vpop.f32.mrb[0].mxu0
  %3152 = vdwg.mxu0
  %v3153 = vpack.c.bf16 %v3150, %v3147
  %v3158 = vunpack.c.l.b16 %v329
  %v3159 = vunpack.c.l.b16 %v330
  %v3160 = vunpack.c.l.b16 %v331
  %v3161 = vunpack.c.l.b16 %v332
  %v3162 = vpack.c.b16 %v3159, %v3158
  %v3163 = vpack.c.b16 %v3161, %v3160
  %v3167 = vsel %vm944, %v3153, 0
  %3169 = vmatprep.subr.bf16.mxu0 0
  %3170 = vmatpush1.bf16.msra.mxu0 %v3162
  %3171 = vmatprep.subr.bf16.mxu0 0
  %3172 = vmatpush1.bf16.msra.mxu0 %v3163
  %3173 = vmatprep.subr.bf16.mxu0 0
  %3174 = vmatpush1.bf16.msra.mxu0 0
  %3175 = vmatprep.subr.bf16.mxu0 0
  %3176 = vmatpush1.bf16.msra.mxu0 0
  %3177 = vmatprep.subr.bf16.mxu0 0
  %3178 = vmatpush1.bf16.msra.mxu0 0
  %3179 = vmatprep.subr.bf16.mxu0 0
  %3180 = vmatpush1.bf16.msra.mxu0 0
  %3181 = vmatprep.subr.bf16.mxu0 0
  %3182 = vmatpush1.bf16.msra.mxu0 0
  %3183 = vmatprep.subr.bf16.mxu0 0
  %3184 = vmatpush1.bf16.msra.mxu0 0
  %3185 = vmatprep.subr.bf16.mxu0 0
  %3186 = vmatpush1.bf16.msra.mxu0 0
  %3187 = vmatprep.subr.bf16.mxu0 0
  %3188 = vmatpush1.bf16.msra.mxu0 0
  %3189 = vmatprep.subr.bf16.mxu0 0
  %3190 = vmatpush1.bf16.msra.mxu0 0
  %3191 = vmatprep.subr.bf16.mxu0 0
  %3192 = vmatpush1.bf16.msra.mxu0 0
  %3193 = vmatprep.subr.bf16.mxu0 0
  %3194 = vmatpush1.bf16.msra.mxu0 0
  %3195 = vmatprep.subr.bf16.mxu0 0
  %3196 = vmatpush1.bf16.msra.mxu0 0
  %3197 = vmatprep.subr.bf16.mxu0 0
  %3198 = vmatpush1.bf16.msra.mxu0 0
  %3199 = vmatprep.subr.bf16.mxu0 0
  %3200 = vmatpush1.bf16.msra.mxu0 0
  %3201 = vmatprep.mubr.bf16.mxu0 0
  %3202 = vmatmul.mubr.bf16.gmra.mrb[0].mxu0 %v3167
  %v3203 = vpop.f32.mrb[0].mxu0
  %v3204 = vadd.f32 0.0, %v3203
  %v3205 = vpop.f32.mrb[0].mxu0
  %v3206 = vpop.f32.mrb[0].mxu0
  %v3207 = vadd.f32 0.0, %v3206
  %v3208 = vpop.f32.mrb[0].mxu0
  %3209 = vdwg.mxu0
  %v3214 = vunpack.c.l.b16 %v313
  %v3215 = vunpack.c.l.b16 %v314
  %v3216 = vunpack.c.l.b16 %v315
  %v3217 = vunpack.c.l.b16 %v316
  %v3218 = vpack.c.b16 %v3215, %v3214
  %v3219 = vpack.c.b16 %v3217, %v3216
  %v3223 = vsel %vm944, %v2205, 0
  %3225 = vmatprep.subr.bf16.mxu0 0
  %3226 = vmatpush1.bf16.msra.mxu0 %v3218
  %3227 = vmatprep.subr.bf16.mxu0 0
  %3228 = vmatpush1.bf16.msra.mxu0 %v3219
  %3229 = vmatprep.subr.bf16.mxu0 0
  %3230 = vmatpush1.bf16.msra.mxu0 0
  %3231 = vmatprep.subr.bf16.mxu0 0
  %3232 = vmatpush1.bf16.msra.mxu0 0
  %3233 = vmatprep.subr.bf16.mxu0 0
  %3234 = vmatpush1.bf16.msra.mxu0 0
  %3235 = vmatprep.subr.bf16.mxu0 0
  %3236 = vmatpush1.bf16.msra.mxu0 0
  %3237 = vmatprep.subr.bf16.mxu0 0
  %3238 = vmatpush1.bf16.msra.mxu0 0
  %3239 = vmatprep.subr.bf16.mxu0 0
  %3240 = vmatpush1.bf16.msra.mxu0 0
  %3241 = vmatprep.subr.bf16.mxu0 0
  %3242 = vmatpush1.bf16.msra.mxu0 0
  %3243 = vmatprep.subr.bf16.mxu0 0
  %3244 = vmatpush1.bf16.msra.mxu0 0
  %3245 = vmatprep.subr.bf16.mxu0 0
  %3246 = vmatpush1.bf16.msra.mxu0 0
  %3247 = vmatprep.subr.bf16.mxu0 0
  %3248 = vmatpush1.bf16.msra.mxu0 0
  %3249 = vmatprep.subr.bf16.mxu0 0
  %3250 = vmatpush1.bf16.msra.mxu0 0
  %3251 = vmatprep.subr.bf16.mxu0 0
  %3252 = vmatpush1.bf16.msra.mxu0 0
  %3253 = vmatprep.subr.bf16.mxu0 0
  %3254 = vmatpush1.bf16.msra.mxu0 0
  %3255 = vmatprep.subr.bf16.mxu0 0
  %3256 = vmatpush1.bf16.msra.mxu0 0
  %3257 = vmatprep.mubr.bf16.mxu0 0
  %3258 = vmatmul.mubr.bf16.gmra.mrb[0].mxu0 %v3223
  %v3259 = vpop.f32.mrb[0].mxu0
  %v3260 = vadd.f32 %v3204, %v3259
  %v3261 = vpop.f32.mrb[0].mxu0
  %v3262 = vpop.f32.mrb[0].mxu0
  %v3263 = vadd.f32 %v3207, %v3262
  %v3264 = vpop.f32.mrb[0].mxu0
  %3265 = vdwg.mxu0
  %v3266 = vlaneseq
  %v3267 = vshrl.u32 %v3266, 7
  %v3268 = vsub.s32 0, %v3267
  %v3269 = vrot.slane %v342, %v3268
  %v3270 = vmul.f32 %v541, %v3269
  %v3271 = vmul.f32 %v546, %v3269
  %v3272 = vlaneseq
  %v3273 = vshrl.u32 %v3272, 7
  %v3274 = vsub.s32 1, %v3273
  %v3275 = vrot.slane %v342, %v3274
  %v3276 = vmul.f32 %v556, %v3275
  %v3277 = vmul.f32 %v560, %v3275
  %v3278 = vadd.f32 %v3270, %v3276
  %v3279 = vadd.f32 %v3271, %v3277
  %v3280 = vlaneseq
  %v3281 = vshrl.u32 %v3280, 7
  %v3282 = vsub.s32 2, %v3281
  %v3283 = vrot.slane %v342, %v3282
  %v3284 = vmul.f32 %v572, %v3283
  %v3285 = vmul.f32 %v576, %v3283
  %v3286 = vadd.f32 %v3278, %v3284
  %v3287 = vadd.f32 %v3279, %v3285
  %v3288 = vlaneseq
  %v3289 = vshrl.u32 %v3288, 7
  %v3290 = vsub.s32 3, %v3289
  %v3291 = vrot.slane %v342, %v3290
  %v3292 = vmul.f32 %v588, %v3291
  %v3293 = vmul.f32 %v592, %v3291
  %v3294 = vadd.f32 %v3286, %v3292
  %v3295 = vadd.f32 %v3287, %v3293
  %v3296 = vlaneseq
  %v3297 = vshrl.u32 %v3296, 7
  %v3298 = vsub.s32 4, %v3297
  %v3299 = vrot.slane %v342, %v3298
  %v3300 = vmul.f32 %v604, %v3299
  %v3301 = vmul.f32 %v608, %v3299
  %v3302 = vadd.f32 %v3294, %v3300
  %v3303 = vadd.f32 %v3295, %v3301
  %v3304 = vadd.f32 %v3260, %v3302
  %v3305 = vadd.f32 %v3263, %v3303
  %v3307 = vlaneseq
  %v3308 = vshrl.u32 %v3307, 7
  %v3309 = vsub.s32 0, %v3308
  %v3310 = vrot.slane %v346, %v3309
  %v3312 = vadd.f32 %v3304, %v3310
  %v3313 = vadd.f32 %v3305, %v3310
  %v3314 = vxor.u32 %v3312, 2147483648
  %v3315 = vxor.u32 %v3313, 2147483648
  %v3316 = vmul.f32 %v3314, 1.442695
  %v3317 = vpow.pop %v3316
  %v3318 = vmul.f32 %v3315, 1.442695
  %v3319 = vpow.pop %v3318
  %v3320 = vadd.f32 %v3317, 1.0
  %v3321 = vadd.f32 %v3319, 1.0
  %v3322 = vrcp.pop %v3320
  %v3323 = vmul.f32 1.0, %v3322
  %v3324 = vrcp.pop %v3321
  %v3325 = vmul.f32 1.0, %v3324
  %v3326 = vmul.f32 %v3312, %v3323
  %v3327 = vmul.f32 %v3313, %v3325
  %v3328 = vpack.c.bf16 %v3327, %v3326
  %v3333 = vunpack.c.l.b16 %v353
  %v3334 = vunpack.c.l.b16 %v354
  %v3335 = vunpack.c.l.b16 %v355
  %v3336 = vunpack.c.l.b16 %v356
  %v3337 = vpack.c.b16 %v3334, %v3333
  %v3338 = vpack.c.b16 %v3336, %v3335
  %v3342 = vsel %vm944, %v3328, 0
  %3344 = vmatprep.subr.bf16.mxu0 0
  %3345 = vmatpush1.bf16.msra.mxu0 %v3337
  %3346 = vmatprep.subr.bf16.mxu0 0
  %3347 = vmatpush1.bf16.msra.mxu0 %v3338
  %3348 = vmatprep.subr.bf16.mxu0 0
  %3349 = vmatpush1.bf16.msra.mxu0 0
  %3350 = vmatprep.subr.bf16.mxu0 0
  %3351 = vmatpush1.bf16.msra.mxu0 0
  %3352 = vmatprep.subr.bf16.mxu0 0
  %3353 = vmatpush1.bf16.msra.mxu0 0
  %3354 = vmatprep.subr.bf16.mxu0 0
  %3355 = vmatpush1.bf16.msra.mxu0 0
  %3356 = vmatprep.subr.bf16.mxu0 0
  %3357 = vmatpush1.bf16.msra.mxu0 0
  %3358 = vmatprep.subr.bf16.mxu0 0
  %3359 = vmatpush1.bf16.msra.mxu0 0
  %3360 = vmatprep.subr.bf16.mxu0 0
  %3361 = vmatpush1.bf16.msra.mxu0 0
  %3362 = vmatprep.subr.bf16.mxu0 0
  %3363 = vmatpush1.bf16.msra.mxu0 0
  %3364 = vmatprep.subr.bf16.mxu0 0
  %3365 = vmatpush1.bf16.msra.mxu0 0
  %3366 = vmatprep.subr.bf16.mxu0 0
  %3367 = vmatpush1.bf16.msra.mxu0 0
  %3368 = vmatprep.subr.bf16.mxu0 0
  %3369 = vmatpush1.bf16.msra.mxu0 0
  %3370 = vmatprep.subr.bf16.mxu0 0
  %3371 = vmatpush1.bf16.msra.mxu0 0
  %3372 = vmatprep.subr.bf16.mxu0 0
  %3373 = vmatpush1.bf16.msra.mxu0 0
  %3374 = vmatprep.subr.bf16.mxu0 0
  %3375 = vmatpush1.bf16.msra.mxu0 0
  %3376 = vmatprep.mubr.bf16.mxu0 0
  %3377 = vmatmul.mubr.bf16.gmra.mrb[0].mxu0 %v3342
  %v3378 = vpop.f32.mrb[0].mxu0
  %v3379 = vadd.f32 0.0, %v3378
  %v3380 = vpop.f32.mrb[0].mxu0
  %v3381 = vpop.f32.mrb[0].mxu0
  %v3382 = vadd.f32 0.0, %v3381
  %v3383 = vpop.f32.mrb[0].mxu0
  %3384 = vdwg.mxu0
  %v3385 = vadd.f32 %v2203, %v3379
  %v3386 = vadd.f32 %v2204, %v3382
  %v3388 = vlaneseq
  %v3389 = vshrl.u32 %v3388, 7
  %v3390 = vsub.s32 0, %v3389
  %v3391 = vrot.slane %v366, %v3390
  %v3393 = vadd.f32 %v3385, %v3391
  %v3394 = vadd.f32 %v3386, %v3391
  %v3395 = vpack.c.bf16 %v3394, %v3393
  %3396 = vmatprep.subr.bf16.mxu0 0
  %3397 = vmatpush1.bf16.msra.mxu0 %v3395
  %3398 = vmatprep.subr.bf16.mxu0 0
  %3399 = vmatpush1.bf16.msra.mxu0 0
  %3400 = vmatprep.subr.bf16.mxu0 0
  %3401 = vmatpush1.bf16.msra.mxu0 0
  %3402 = vmatprep.subr.bf16.mxu0 0
  %3403 = vmatpush1.bf16.msra.mxu0 0
  %3404 = vmatprep.subr.bf16.mxu0 0
  %3405 = vmatpush1.bf16.msra.mxu0 0
  %3406 = vmatprep.subr.bf16.mxu0 0
  %3407 = vmatpush1.bf16.msra.mxu0 0
  %3408 = vmatprep.subr.bf16.mxu0 0
  %3409 = vmatpush1.bf16.msra.mxu0 0
  %3410 = vmatprep.subr.bf16.mxu0 0
  %3411 = vmatpush1.bf16.msra.mxu0 0
  %3412 = vmatprep.subr.bf16.mxu0 0
  %3413 = vmatpush1.bf16.msra.mxu0 0
  %3414 = vmatprep.subr.bf16.mxu0 0
  %3415 = vmatpush1.bf16.msra.mxu0 0
  %3416 = vmatprep.subr.bf16.mxu0 0
  %3417 = vmatpush1.bf16.msra.mxu0 0
  %3418 = vmatprep.subr.bf16.mxu0 0
  %3419 = vmatpush1.bf16.msra.mxu0 0
  %3420 = vmatprep.subr.bf16.mxu0 0
  %3421 = vmatpush1.bf16.msra.mxu0 0
  %3422 = vmatprep.subr.bf16.mxu0 0
  %3423 = vmatpush1.bf16.msra.mxu0 0
  %3424 = vmatprep.subr.bf16.mxu0 0
  %3425 = vmatpush1.bf16.msra.mxu0 0
  %3426 = vmatprep.subr.bf16.mxu0 0
  %3427 = vmatpush1.bf16.msra.mxu0 0
  %3428 = vmatprep.mubr.bf16.mxu0 0
  %3429 = vmatmul.mubr.bf16.gmra.mrb[0].mxu0 %v664
  %v3430 = vpop.f32.mrb[0].mxu0
  %v3431 = vadd.f32 0.0, %v3430
  %v3432 = vpop.f32.mrb[0].mxu0
  %v3433 = vpop.f32.mrb[0].mxu0
  %v3434 = vadd.f32 0.0, %v3433
  %v3435 = vpop.f32.mrb[0].mxu0
  %3436 = vmatprep.mubr.bf16.mxu0 0
  %3437 = vmatmul.mubr.bf16.gmra.mrb[0].mxu0 %v667
  %v3438 = vpop.f32.mrb[0].mxu0
  %v3439 = vadd.f32 0.0, %v3438
  %v3440 = vpop.f32.mrb[0].mxu0
  %v3441 = vpop.f32.mrb[0].mxu0
  %v3442 = vadd.f32 0.0, %v3441
  %v3443 = vpop.f32.mrb[0].mxu0
  %3444 = vmatprep.mubr.bf16.mxu0 0
  %3445 = vmatmul.mubr.bf16.gmra.mrb[0].mxu0 %v670
  %v3446 = vpop.f32.mrb[0].mxu0
  %v3447 = vadd.f32 0.0, %v3446
  %v3448 = vpop.f32.mrb[0].mxu0
  %v3449 = vpop.f32.mrb[0].mxu0
  %v3450 = vadd.f32 0.0, %v3449
  %v3451 = vpop.f32.mrb[0].mxu0
  %3452 = vmatprep.mubr.bf16.mxu0 0
  %3453 = vmatmul.mubr.bf16.gmra.mrb[0].mxu0 %v673
  %v3454 = vpop.f32.mrb[0].mxu0
  %v3455 = vadd.f32 0.0, %v3454
  %v3456 = vpop.f32.mrb[0].mxu0
  %v3457 = vpop.f32.mrb[0].mxu0
  %v3458 = vadd.f32 0.0, %v3457
  %v3459 = vpop.f32.mrb[0].mxu0
  %3460 = vmatprep.mubr.bf16.mxu0 0
  %3461 = vmatmul.mubr.bf16.gmra.mrb[0].mxu0 %v676
  %v3462 = vpop.f32.mrb[0].mxu0
  %v3463 = vadd.f32 0.0, %v3462
  %v3464 = vpop.f32.mrb[0].mxu0
  %v3465 = vpop.f32.mrb[0].mxu0
  %v3466 = vadd.f32 0.0, %v3465
  %v3467 = vpop.f32.mrb[0].mxu0
  %3468 = vmatprep.mubr.bf16.mxu0 0
  %3469 = vmatmul.mubr.bf16.gmra.mrb[0].mxu0 %v679
  %v3470 = vpop.f32.mrb[0].mxu0
  %v3471 = vadd.f32 0.0, %v3470
  %v3472 = vpop.f32.mrb[0].mxu0
  %v3473 = vpop.f32.mrb[0].mxu0
  %v3474 = vadd.f32 0.0, %v3473
  %v3475 = vpop.f32.mrb[0].mxu0
  %3476 = vmatprep.mubr.bf16.mxu0 0
  %3477 = vmatmul.mubr.bf16.gmra.mrb[0].mxu0 %v682
  %v3478 = vpop.f32.mrb[0].mxu0
  %v3479 = vadd.f32 0.0, %v3478
  %v3480 = vpop.f32.mrb[0].mxu0
  %v3481 = vpop.f32.mrb[0].mxu0
  %v3482 = vadd.f32 0.0, %v3481
  %v3483 = vpop.f32.mrb[0].mxu0
  %3484 = vdwg.mxu0
  %3485 = vmatprep.subr.bf16.mxu0 0
  %3486 = vmatpush1.bf16.msra.mxu0 %v3395
  %3487 = vmatprep.subr.bf16.mxu0 0
  %3488 = vmatpush1.bf16.msra.mxu0 0
  %3489 = vmatprep.subr.bf16.mxu0 0
  %3490 = vmatpush1.bf16.msra.mxu0 0
  %3491 = vmatprep.subr.bf16.mxu0 0
  %3492 = vmatpush1.bf16.msra.mxu0 0
  %3493 = vmatprep.subr.bf16.mxu0 0
  %3494 = vmatpush1.bf16.msra.mxu0 0
  %3495 = vmatprep.subr.bf16.mxu0 0
  %3496 = vmatpush1.bf16.msra.mxu0 0
  %3497 = vmatprep.subr.bf16.mxu0 0
  %3498 = vmatpush1.bf16.msra.mxu0 0
  %3499 = vmatprep.subr.bf16.mxu0 0
  %3500 = vmatpush1.bf16.msra.mxu0 0
  %3501 = vmatprep.subr.bf16.mxu0 0
  %3502 = vmatpush1.bf16.msra.mxu0 0
  %3503 = vmatprep.subr.bf16.mxu0 0
  %3504 = vmatpush1.bf16.msra.mxu0 0
  %3505 = vmatprep.subr.bf16.mxu0 0
  %3506 = vmatpush1.bf16.msra.mxu0 0
  %3507 = vmatprep.subr.bf16.mxu0 0
  %3508 = vmatpush1.bf16.msra.mxu0 0
  %3509 = vmatprep.subr.bf16.mxu0 0
  %3510 = vmatpush1.bf16.msra.mxu0 0
  %3511 = vmatprep.subr.bf16.mxu0 0
  %3512 = vmatpush1.bf16.msra.mxu0 0
  %3513 = vmatprep.subr.bf16.mxu0 0
  %3514 = vmatpush1.bf16.msra.mxu0 0
  %3515 = vmatprep.subr.bf16.mxu0 0
  %3516 = vmatpush1.bf16.msra.mxu0 0
  %3517 = vmatprep.mubr.bf16.mxu0 0
  %3518 = vmatmul.mubr.bf16.gmra.mrb[0].mxu0 %v809
  %v3519 = vpop.f32.mrb[0].mxu0
  %v3520 = vadd.f32 0.0, %v3519
  %v3521 = vpop.f32.mrb[0].mxu0
  %v3522 = vpop.f32.mrb[0].mxu0
  %v3523 = vadd.f32 0.0, %v3522
  %v3524 = vpop.f32.mrb[0].mxu0
  %3525 = vmatprep.mubr.bf16.mxu0 0
  %3526 = vmatmul.mubr.bf16.gmra.mrb[0].mxu0 %v812
  %v3527 = vpop.f32.mrb[0].mxu0
  %v3528 = vadd.f32 0.0, %v3527
  %v3529 = vpop.f32.mrb[0].mxu0
  %v3530 = vpop.f32.mrb[0].mxu0
  %v3531 = vadd.f32 0.0, %v3530
  %v3532 = vpop.f32.mrb[0].mxu0
  %3533 = vmatprep.mubr.bf16.mxu0 0
  %3534 = vmatmul.mubr.bf16.gmra.mrb[0].mxu0 %v815
  %v3535 = vpop.f32.mrb[0].mxu0
  %v3536 = vadd.f32 0.0, %v3535
  %v3537 = vpop.f32.mrb[0].mxu0
  %v3538 = vpop.f32.mrb[0].mxu0
  %v3539 = vadd.f32 0.0, %v3538
  %v3540 = vpop.f32.mrb[0].mxu0
  %3541 = vmatprep.mubr.bf16.mxu0 0
  %3542 = vmatmul.mubr.bf16.gmra.mrb[0].mxu0 %v818
  %v3543 = vpop.f32.mrb[0].mxu0
  %v3544 = vadd.f32 0.0, %v3543
  %v3545 = vpop.f32.mrb[0].mxu0
  %v3546 = vpop.f32.mrb[0].mxu0
  %v3547 = vadd.f32 0.0, %v3546
  %v3548 = vpop.f32.mrb[0].mxu0
  %3549 = vmatprep.mubr.bf16.mxu0 0
  %3550 = vmatmul.mubr.bf16.gmra.mrb[0].mxu0 %v821
  %v3551 = vpop.f32.mrb[0].mxu0
  %v3552 = vadd.f32 0.0, %v3551
  %v3553 = vpop.f32.mrb[0].mxu0
  %v3554 = vpop.f32.mrb[0].mxu0
  %v3555 = vadd.f32 0.0, %v3554
  %v3556 = vpop.f32.mrb[0].mxu0
  %3557 = vmatprep.mubr.bf16.mxu0 0
  %3558 = vmatmul.mubr.bf16.gmra.mrb[0].mxu0 %v824
  %v3559 = vpop.f32.mrb[0].mxu0
  %v3560 = vadd.f32 0.0, %v3559
  %v3561 = vpop.f32.mrb[0].mxu0
  %v3562 = vpop.f32.mrb[0].mxu0
  %v3563 = vadd.f32 0.0, %v3562
  %v3564 = vpop.f32.mrb[0].mxu0
  %3565 = vmatprep.mubr.bf16.mxu0 0
  %3566 = vmatmul.mubr.bf16.gmra.mrb[0].mxu0 %v827
  %v3567 = vpop.f32.mrb[0].mxu0
  %v3568 = vadd.f32 0.0, %v3567
  %v3569 = vpop.f32.mrb[0].mxu0
  %v3570 = vpop.f32.mrb[0].mxu0
  %v3571 = vadd.f32 0.0, %v3570
  %v3572 = vpop.f32.mrb[0].mxu0
  %3573 = vdwg.mxu0
  %v3574 = vpack.c.bf16 %v3434, %v3431
  %v3575 = vpack.c.bf16 %v3442, %v3439
  %v3576 = vpack.c.bf16 %v3450, %v3447
  %v3577 = vpack.c.bf16 %v3458, %v3455
  %v3578 = vpack.c.bf16 %v3466, %v3463
  %v3579 = vpack.c.bf16 %v3474, %v3471
  %v3580 = vpack.c.bf16 %v3482, %v3479
  %v3581 = vpack.c.bf16 %v3523, %v3520
  %v3582 = vpack.c.bf16 %v3531, %v3528
  %v3583 = vpack.c.bf16 %v3539, %v3536
  %v3584 = vpack.c.bf16 %v3547, %v3544
  %v3585 = vpack.c.bf16 %v3555, %v3552
  %v3586 = vpack.c.bf16 %v3563, %v3560
  %v3587 = vpack.c.bf16 %v3571, %v3568
  %v3592 = vunpack.c.l.b16 %v269
  %v3593 = vunpack.c.l.b16 %v270
  %v3594 = vunpack.c.l.b16 %v271
  %v3595 = vunpack.c.l.b16 %v272
  %v3596 = vpack.c.b16 %v3593, %v3592
  %v3597 = vpack.c.b16 %v3595, %v3594
  %v3601 = vsel %vm944, %v3581, 0
  %v3604 = vsel %vm944, %v3582, 0
  %v3607 = vsel %vm944, %v3583, 0
  %v3610 = vsel %vm944, %v3584, 0
  %v3613 = vsel %vm944, %v3585, 0
  %v3616 = vsel %vm944, %v3586, 0
  %v3619 = vsel %vm944, %v3587, 0
  %3621 = vmatprep.subr.bf16.mxu0 0
  %3622 = vmatpush1.bf16.msra.mxu0 %v3596
  %3623 = vmatprep.subr.bf16.mxu0 0
  %3624 = vmatpush1.bf16.msra.mxu0 %v3597
  %3625 = vmatprep.subr.bf16.mxu0 0
  %3626 = vmatpush1.bf16.msra.mxu0 0
  %3627 = vmatprep.subr.bf16.mxu0 0
  %3628 = vmatpush1.bf16.msra.mxu0 0
  %3629 = vmatprep.subr.bf16.mxu0 0
  %3630 = vmatpush1.bf16.msra.mxu0 0
  %3631 = vmatprep.subr.bf16.mxu0 0
  %3632 = vmatpush1.bf16.msra.mxu0 0
  %3633 = vmatprep.subr.bf16.mxu0 0
  %3634 = vmatpush1.bf16.msra.mxu0 0
  %3635 = vmatprep.subr.bf16.mxu0 0
  %3636 = vmatpush1.bf16.msra.mxu0 0
  %3637 = vmatprep.subr.bf16.mxu0 0
  %3638 = vmatpush1.bf16.msra.mxu0 0
  %3639 = vmatprep.subr.bf16.mxu0 0
  %3640 = vmatpush1.bf16.msra.mxu0 0
  %3641 = vmatprep.subr.bf16.mxu0 0
  %3642 = vmatpush1.bf16.msra.mxu0 0
  %3643 = vmatprep.subr.bf16.mxu0 0
  %3644 = vmatpush1.bf16.msra.mxu0 0
  %3645 = vmatprep.subr.bf16.mxu0 0
  %3646 = vmatpush1.bf16.msra.mxu0 0
  %3647 = vmatprep.subr.bf16.mxu0 0
  %3648 = vmatpush1.bf16.msra.mxu0 0
  %3649 = vmatprep.subr.bf16.mxu0 0
  %3650 = vmatpush1.bf16.msra.mxu0 0
  %3651 = vmatprep.subr.bf16.mxu0 0
  %3652 = vmatpush1.bf16.msra.mxu0 0
  %3653 = vmatprep.mubr.bf16.mxu0 0
  %3654 = vmatmul.mubr.bf16.gmra.mrb[0].mxu0 %v3601
  %v3655 = vpop.f32.mrb[0].mxu0
  %v3656 = vadd.f32 0.0, %v3655
  %v3657 = vpop.f32.mrb[0].mxu0
  %v3658 = vpop.f32.mrb[0].mxu0
  %v3659 = vadd.f32 0.0, %v3658
  %v3660 = vpop.f32.mrb[0].mxu0
  %3661 = vmatprep.mubr.bf16.mxu0 0
  %3662 = vmatmul.mubr.bf16.gmra.mrb[0].mxu0 %v3604
  %v3663 = vpop.f32.mrb[0].mxu0
  %v3664 = vadd.f32 0.0, %v3663
  %v3665 = vpop.f32.mrb[0].mxu0
  %v3666 = vpop.f32.mrb[0].mxu0
  %v3667 = vadd.f32 0.0, %v3666
  %v3668 = vpop.f32.mrb[0].mxu0
  %3669 = vmatprep.mubr.bf16.mxu0 0
  %3670 = vmatmul.mubr.bf16.gmra.mrb[0].mxu0 %v3607
  %v3671 = vpop.f32.mrb[0].mxu0
  %v3672 = vadd.f32 0.0, %v3671
  %v3673 = vpop.f32.mrb[0].mxu0
  %v3674 = vpop.f32.mrb[0].mxu0
  %v3675 = vadd.f32 0.0, %v3674
  %v3676 = vpop.f32.mrb[0].mxu0
  %3677 = vmatprep.mubr.bf16.mxu0 0
  %3678 = vmatmul.mubr.bf16.gmra.mrb[0].mxu0 %v3610
  %v3679 = vpop.f32.mrb[0].mxu0
  %v3680 = vadd.f32 0.0, %v3679
  %v3681 = vpop.f32.mrb[0].mxu0
  %v3682 = vpop.f32.mrb[0].mxu0
  %v3683 = vadd.f32 0.0, %v3682
  %v3684 = vpop.f32.mrb[0].mxu0
  %3685 = vmatprep.mubr.bf16.mxu0 0
  %3686 = vmatmul.mubr.bf16.gmra.mrb[0].mxu0 %v3613
  %v3687 = vpop.f32.mrb[0].mxu0
  %v3688 = vadd.f32 0.0, %v3687
  %v3689 = vpop.f32.mrb[0].mxu0
  %v3690 = vpop.f32.mrb[0].mxu0
  %v3691 = vadd.f32 0.0, %v3690
  %v3692 = vpop.f32.mrb[0].mxu0
  %3693 = vmatprep.mubr.bf16.mxu0 0
  %3694 = vmatmul.mubr.bf16.gmra.mrb[0].mxu0 %v3616
  %v3695 = vpop.f32.mrb[0].mxu0
  %v3696 = vadd.f32 0.0, %v3695
  %v3697 = vpop.f32.mrb[0].mxu0
  %v3698 = vpop.f32.mrb[0].mxu0
  %v3699 = vadd.f32 0.0, %v3698
  %v3700 = vpop.f32.mrb[0].mxu0
  %3701 = vmatprep.mubr.bf16.mxu0 0
  %3702 = vmatmul.mubr.bf16.gmra.mrb[0].mxu0 %v3619
  %v3703 = vpop.f32.mrb[0].mxu0
  %v3704 = vadd.f32 0.0, %v3703
  %v3705 = vpop.f32.mrb[0].mxu0
  %v3706 = vpop.f32.mrb[0].mxu0
  %v3707 = vadd.f32 0.0, %v3706
  %v3708 = vpop.f32.mrb[0].mxu0
  %3709 = vdwg.mxu0
  %v3714 = vunpack.c.l.b16 %v253
  %v3715 = vunpack.c.l.b16 %v254
  %v3716 = vunpack.c.l.b16 %v255
  %v3717 = vunpack.c.l.b16 %v256
  %v3718 = vpack.c.b16 %v3715, %v3714
  %v3719 = vpack.c.b16 %v3717, %v3716
  %v3723 = vsel %vm944, %v3574, 0
  %v3726 = vsel %vm944, %v3575, 0
  %v3729 = vsel %vm944, %v3576, 0
  %v3732 = vsel %vm944, %v3577, 0
  %v3735 = vsel %vm944, %v3578, 0
  %v3738 = vsel %vm944, %v3579, 0
  %v3741 = vsel %vm944, %v3580, 0
  %3743 = vmatprep.subr.bf16.mxu0 0
  %3744 = vmatpush1.bf16.msra.mxu0 %v3718
  %3745 = vmatprep.subr.bf16.mxu0 0
  %3746 = vmatpush1.bf16.msra.mxu0 %v3719
  %3747 = vmatprep.subr.bf16.mxu0 0
  %3748 = vmatpush1.bf16.msra.mxu0 0
  %3749 = vmatprep.subr.bf16.mxu0 0
  %3750 = vmatpush1.bf16.msra.mxu0 0
  %3751 = vmatprep.subr.bf16.mxu0 0
  %3752 = vmatpush1.bf16.msra.mxu0 0
  %3753 = vmatprep.subr.bf16.mxu0 0
  %3754 = vmatpush1.bf16.msra.mxu0 0
  %3755 = vmatprep.subr.bf16.mxu0 0
  %3756 = vmatpush1.bf16.msra.mxu0 0
  %3757 = vmatprep.subr.bf16.mxu0 0
  %3758 = vmatpush1.bf16.msra.mxu0 0
  %3759 = vmatprep.subr.bf16.mxu0 0
  %3760 = vmatpush1.bf16.msra.mxu0 0
  %3761 = vmatprep.subr.bf16.mxu0 0
  %3762 = vmatpush1.bf16.msra.mxu0 0
  %3763 = vmatprep.subr.bf16.mxu0 0
  %3764 = vmatpush1.bf16.msra.mxu0 0
  %3765 = vmatprep.subr.bf16.mxu0 0
  %3766 = vmatpush1.bf16.msra.mxu0 0
  %3767 = vmatprep.subr.bf16.mxu0 0
  %3768 = vmatpush1.bf16.msra.mxu0 0
  %3769 = vmatprep.subr.bf16.mxu0 0
  %3770 = vmatpush1.bf16.msra.mxu0 0
  %3771 = vmatprep.subr.bf16.mxu0 0
  %3772 = vmatpush1.bf16.msra.mxu0 0
  %3773 = vmatprep.subr.bf16.mxu0 0
  %3774 = vmatpush1.bf16.msra.mxu0 0
  %3775 = vmatprep.mubr.bf16.mxu0 0
  %3776 = vmatmul.mubr.bf16.gmra.mrb[0].mxu0 %v3723
  %v3777 = vpop.f32.mrb[0].mxu0
  %v3778 = vadd.f32 %v3656, %v3777
  %v3779 = vpop.f32.mrb[0].mxu0
  %v3780 = vpop.f32.mrb[0].mxu0
  %v3781 = vadd.f32 %v3659, %v3780
  %v3782 = vpop.f32.mrb[0].mxu0
  %3783 = vmatprep.mubr.bf16.mxu0 0
  %3784 = vmatmul.mubr.bf16.gmra.mrb[0].mxu0 %v3726
  %v3785 = vpop.f32.mrb[0].mxu0
  %v3786 = vadd.f32 %v3664, %v3785
  %v3787 = vpop.f32.mrb[0].mxu0
  %v3788 = vpop.f32.mrb[0].mxu0
  %v3789 = vadd.f32 %v3667, %v3788
  %v3790 = vpop.f32.mrb[0].mxu0
  %3791 = vmatprep.mubr.bf16.mxu0 0
  %3792 = vmatmul.mubr.bf16.gmra.mrb[0].mxu0 %v3729
  %v3793 = vpop.f32.mrb[0].mxu0
  %v3794 = vadd.f32 %v3672, %v3793
  %v3795 = vpop.f32.mrb[0].mxu0
  %v3796 = vpop.f32.mrb[0].mxu0
  %v3797 = vadd.f32 %v3675, %v3796
  %v3798 = vpop.f32.mrb[0].mxu0
  %3799 = vmatprep.mubr.bf16.mxu0 0
  %3800 = vmatmul.mubr.bf16.gmra.mrb[0].mxu0 %v3732
  %v3801 = vpop.f32.mrb[0].mxu0
  %v3802 = vadd.f32 %v3680, %v3801
  %v3803 = vpop.f32.mrb[0].mxu0
  %v3804 = vpop.f32.mrb[0].mxu0
  %v3805 = vadd.f32 %v3683, %v3804
  %v3806 = vpop.f32.mrb[0].mxu0
  %3807 = vmatprep.mubr.bf16.mxu0 0
  %3808 = vmatmul.mubr.bf16.gmra.mrb[0].mxu0 %v3735
  %v3809 = vpop.f32.mrb[0].mxu0
  %v3810 = vadd.f32 %v3688, %v3809
  %v3811 = vpop.f32.mrb[0].mxu0
  %v3812 = vpop.f32.mrb[0].mxu0
  %v3813 = vadd.f32 %v3691, %v3812
  %v3814 = vpop.f32.mrb[0].mxu0
  %3815 = vmatprep.mubr.bf16.mxu0 0
  %3816 = vmatmul.mubr.bf16.gmra.mrb[0].mxu0 %v3738
  %v3817 = vpop.f32.mrb[0].mxu0
  %v3818 = vadd.f32 %v3696, %v3817
  %v3819 = vpop.f32.mrb[0].mxu0
  %v3820 = vpop.f32.mrb[0].mxu0
  %v3821 = vadd.f32 %v3699, %v3820
  %v3822 = vpop.f32.mrb[0].mxu0
  %3823 = vmatprep.mubr.bf16.mxu0 0
  %3824 = vmatmul.mubr.bf16.gmra.mrb[0].mxu0 %v3741
  %v3825 = vpop.f32.mrb[0].mxu0
  %v3826 = vadd.f32 %v3704, %v3825
  %v3827 = vpop.f32.mrb[0].mxu0
  %v3828 = vpop.f32.mrb[0].mxu0
  %v3829 = vadd.f32 %v3707, %v3828
  %v3830 = vpop.f32.mrb[0].mxu0
  %3831 = vdwg.mxu0
  %v3833 = vlaneseq
  %v3834 = vshrl.u32 %v3833, 7
  %v3835 = vsub.s32 0, %v3834
  %v3836 = vrot.slane %v279, %v3835
  %v3838 = vmul.f32 %v1180, %v3836
  %v3839 = vmul.f32 %v1185, %v3836
  %v3840 = vmul.f32 %v1190, %v3836
  %v3841 = vmul.f32 %v1195, %v3836
  %v3842 = vmul.f32 %v1200, %v3836
  %v3843 = vmul.f32 %v1205, %v3836
  %v3844 = vmul.f32 %v1210, %v3836
  %v3845 = vmul.f32 %v1215, %v3836
  %v3846 = vmul.f32 %v1220, %v3836
  %v3847 = vmul.f32 %v1225, %v3836
  %v3848 = vmul.f32 %v1230, %v3836
  %v3849 = vmul.f32 %v1235, %v3836
  %v3850 = vmul.f32 %v1240, %v3836
  %v3851 = vmul.f32 %v1245, %v3836
  %v3852 = vadd.f32 %v3778, %v3838
  %v3853 = vadd.f32 %v3781, %v3839
  %v3854 = vadd.f32 %v3786, %v3840
  %v3855 = vadd.f32 %v3789, %v3841
  %v3856 = vadd.f32 %v3794, %v3842
  %v3857 = vadd.f32 %v3797, %v3843
  %v3858 = vadd.f32 %v3802, %v3844
  %v3859 = vadd.f32 %v3805, %v3845
  %v3860 = vadd.f32 %v3810, %v3846
  %v3861 = vadd.f32 %v3813, %v3847
  %v3862 = vadd.f32 %v3818, %v3848
  %v3863 = vadd.f32 %v3821, %v3849
  %v3864 = vadd.f32 %v3826, %v3850
  %v3865 = vadd.f32 %v3829, %v3851
  %v3866 = vlaneseq
  %v3867 = vshrl.u32 %v3866, 7
  %v3868 = vsub.s32 0, %v3867
  %v3869 = vrot.slane %v283, %v3868
  %v3870 = vmul.f32 %v1284, %v3869
  %v3871 = vmul.f32 %v1289, %v3869
  %v3872 = vmul.f32 %v1294, %v3869
  %v3873 = vmul.f32 %v1299, %v3869
  %v3874 = vmul.f32 %v1304, %v3869
  %v3875 = vmul.f32 %v1309, %v3869
  %v3876 = vmul.f32 %v1314, %v3869
  %v3877 = vmul.f32 %v1319, %v3869
  %v3878 = vmul.f32 %v1324, %v3869
  %v3879 = vmul.f32 %v1329, %v3869
  %v3880 = vmul.f32 %v1334, %v3869
  %v3881 = vmul.f32 %v1339, %v3869
  %v3882 = vmul.f32 %v1344, %v3869
  %v3883 = vmul.f32 %v1349, %v3869
  %v3884 = vlaneseq
  %v3885 = vshrl.u32 %v3884, 7
  %v3886 = vsub.s32 1, %v3885
  %v3887 = vrot.slane %v283, %v3886
  %v3888 = vmul.f32 %v1371, %v3887
  %v3889 = vmul.f32 %v1375, %v3887
  %v3890 = vmul.f32 %v1379, %v3887
  %v3891 = vmul.f32 %v1383, %v3887
  %v3892 = vmul.f32 %v1387, %v3887
  %v3893 = vmul.f32 %v1391, %v3887
  %v3894 = vmul.f32 %v1395, %v3887
  %v3895 = vmul.f32 %v1399, %v3887
  %v3896 = vmul.f32 %v1403, %v3887
  %v3897 = vmul.f32 %v1407, %v3887
  %v3898 = vmul.f32 %v1411, %v3887
  %v3899 = vmul.f32 %v1415, %v3887
  %v3900 = vmul.f32 %v1419, %v3887
  %v3901 = vmul.f32 %v1423, %v3887
  %v3902 = vadd.f32 %v3870, %v3888
  %v3903 = vadd.f32 %v3871, %v3889
  %v3904 = vadd.f32 %v3872, %v3890
  %v3905 = vadd.f32 %v3873, %v3891
  %v3906 = vadd.f32 %v3874, %v3892
  %v3907 = vadd.f32 %v3875, %v3893
  %v3908 = vadd.f32 %v3876, %v3894
  %v3909 = vadd.f32 %v3877, %v3895
  %v3910 = vadd.f32 %v3878, %v3896
  %v3911 = vadd.f32 %v3879, %v3897
  %v3912 = vadd.f32 %v3880, %v3898
  %v3913 = vadd.f32 %v3881, %v3899
  %v3914 = vadd.f32 %v3882, %v3900
  %v3915 = vadd.f32 %v3883, %v3901
  %v3916 = vadd.f32 %v3852, %v3902
  %v3917 = vadd.f32 %v3853, %v3903
  %v3918 = vadd.f32 %v3854, %v3904
  %v3919 = vadd.f32 %v3855, %v3905
  %v3920 = vadd.f32 %v3856, %v3906
  %v3921 = vadd.f32 %v3857, %v3907
  %v3922 = vadd.f32 %v3858, %v3908
  %v3923 = vadd.f32 %v3859, %v3909
  %v3924 = vadd.f32 %v3860, %v3910
  %v3925 = vadd.f32 %v3861, %v3911
  %v3926 = vadd.f32 %v3862, %v3912
  %v3927 = vadd.f32 %v3863, %v3913
  %v3928 = vadd.f32 %v3864, %v3914
  %v3929 = vadd.f32 %v3865, %v3915
  %v3931 = vlaneseq
  %v3932 = vshrl.u32 %v3931, 7
  %v3933 = vsub.s32 0, %v3932
  %v3934 = vrot.slane %v287, %v3933
  %v3936 = vadd.f32 %v3916, %v3934
  %v3937 = vadd.f32 %v3917, %v3934
  %v3938 = vadd.f32 %v3918, %v3934
  %v3939 = vadd.f32 %v3919, %v3934
  %v3940 = vadd.f32 %v3920, %v3934
  %v3941 = vadd.f32 %v3921, %v3934
  %v3942 = vadd.f32 %v3922, %v3934
  %v3943 = vadd.f32 %v3923, %v3934
  %v3944 = vadd.f32 %v3924, %v3934
  %v3945 = vadd.f32 %v3925, %v3934
  %v3946 = vadd.f32 %v3926, %v3934
  %v3947 = vadd.f32 %v3927, %v3934
  %v3948 = vadd.f32 %v3928, %v3934
  %v3949 = vadd.f32 %v3929, %v3934
  %v3950 = vxor.u32 %v3936, 2147483648
  %v3951 = vxor.u32 %v3937, 2147483648
  %v3952 = vxor.u32 %v3938, 2147483648
  %v3953 = vxor.u32 %v3939, 2147483648
  %v3954 = vxor.u32 %v3940, 2147483648
  %v3955 = vxor.u32 %v3941, 2147483648
  %v3956 = vxor.u32 %v3942, 2147483648
  %v3957 = vxor.u32 %v3943, 2147483648
  %v3958 = vxor.u32 %v3944, 2147483648
  %v3959 = vxor.u32 %v3945, 2147483648
  %v3960 = vxor.u32 %v3946, 2147483648
  %v3961 = vxor.u32 %v3947, 2147483648
  %v3962 = vxor.u32 %v3948, 2147483648
  %v3963 = vxor.u32 %v3949, 2147483648
  %v3964 = vmul.f32 %v3950, 1.442695
  %v3965 = vpow.pop %v3964
  %v3966 = vmul.f32 %v3951, 1.442695
  %v3967 = vpow.pop %v3966
  %v3968 = vmul.f32 %v3952, 1.442695
  %v3969 = vpow.pop %v3968
  %v3970 = vmul.f32 %v3953, 1.442695
  %v3971 = vpow.pop %v3970
  %v3972 = vmul.f32 %v3954, 1.442695
  %v3973 = vpow.pop %v3972
  %v3974 = vmul.f32 %v3955, 1.442695
  %v3975 = vpow.pop %v3974
  %v3976 = vmul.f32 %v3956, 1.442695
  %v3977 = vpow.pop %v3976
  %v3978 = vmul.f32 %v3957, 1.442695
  %v3979 = vpow.pop %v3978
  %v3980 = vmul.f32 %v3958, 1.442695
  %v3981 = vpow.pop %v3980
  %v3982 = vmul.f32 %v3959, 1.442695
  %v3983 = vpow.pop %v3982
  %v3984 = vmul.f32 %v3960, 1.442695
  %v3985 = vpow.pop %v3984
  %v3986 = vmul.f32 %v3961, 1.442695
  %v3987 = vpow.pop %v3986
  %v3988 = vmul.f32 %v3962, 1.442695
  %v3989 = vpow.pop %v3988
  %v3990 = vmul.f32 %v3963, 1.442695
  %v3991 = vpow.pop %v3990
  %v3992 = vadd.f32 %v3965, 1.0
  %v3993 = vadd.f32 %v3967, 1.0
  %v3994 = vadd.f32 %v3969, 1.0
  %v3995 = vadd.f32 %v3971, 1.0
  %v3996 = vadd.f32 %v3973, 1.0
  %v3997 = vadd.f32 %v3975, 1.0
  %v3998 = vadd.f32 %v3977, 1.0
  %v3999 = vadd.f32 %v3979, 1.0
  %v4000 = vadd.f32 %v3981, 1.0
  %v4001 = vadd.f32 %v3983, 1.0
  %v4002 = vadd.f32 %v3985, 1.0
  %v4003 = vadd.f32 %v3987, 1.0
  %v4004 = vadd.f32 %v3989, 1.0
  %v4005 = vadd.f32 %v3991, 1.0
  %v4006 = vrcp.pop %v3992
  %v4007 = vmul.f32 1.0, %v4006
  %v4008 = vrcp.pop %v3993
  %v4009 = vmul.f32 1.0, %v4008
  %v4010 = vrcp.pop %v3994
  %v4011 = vmul.f32 1.0, %v4010
  %v4012 = vrcp.pop %v3995
  %v4013 = vmul.f32 1.0, %v4012
  %v4014 = vrcp.pop %v3996
  %v4015 = vmul.f32 1.0, %v4014
  %v4016 = vrcp.pop %v3997
  %v4017 = vmul.f32 1.0, %v4016
  %v4018 = vrcp.pop %v3998
  %v4019 = vmul.f32 1.0, %v4018
  %v4020 = vrcp.pop %v3999
  %v4021 = vmul.f32 1.0, %v4020
  %v4022 = vrcp.pop %v4000
  %v4023 = vmul.f32 1.0, %v4022
  %v4024 = vrcp.pop %v4001
  %v4025 = vmul.f32 1.0, %v4024
  %v4026 = vrcp.pop %v4002
  %v4027 = vmul.f32 1.0, %v4026
  %v4028 = vrcp.pop %v4003
  %v4029 = vmul.f32 1.0, %v4028
  %v4030 = vrcp.pop %v4004
  %v4031 = vmul.f32 1.0, %v4030
  %v4032 = vrcp.pop %v4005
  %v4033 = vmul.f32 1.0, %v4032
  %v4034 = vmul.f32 %v3936, %v4007
  %v4035 = vmul.f32 %v3937, %v4009
  %v4036 = vmul.f32 %v3938, %v4011
  %v4037 = vmul.f32 %v3939, %v4013
  %v4038 = vmul.f32 %v3940, %v4015
  %v4039 = vmul.f32 %v3941, %v4017
  %v4040 = vmul.f32 %v3942, %v4019
  %v4041 = vmul.f32 %v3943, %v4021
  %v4042 = vmul.f32 %v3944, %v4023
  %v4043 = vmul.f32 %v3945, %v4025
  %v4044 = vmul.f32 %v3946, %v4027
  %v4045 = vmul.f32 %v3947, %v4029
  %v4046 = vmul.f32 %v3948, %v4031
  %v4047 = vmul.f32 %v3949, %v4033
  %v4048 = vpack.c.bf16 %v4035, %v4034
  %v4049 = vpack.c.bf16 %v4037, %v4036
  %v4050 = vpack.c.bf16 %v4039, %v4038
  %v4051 = vpack.c.bf16 %v4041, %v4040
  %v4052 = vpack.c.bf16 %v4043, %v4042
  %v4053 = vpack.c.bf16 %v4045, %v4044
  %v4054 = vpack.c.bf16 %v4047, %v4046
  %v4056 = vlaneseq
  %v4057 = vshrl.u32 %v4056, 7
  %v4058 = vsub.s32 0, %v4057
  %v4059 = vrot.slane %v307, %v4058
  %v4065 = vunpack.c.l.b16 %v297
  %v4066 = vunpack.c.l.b16 %v298
  %v4067 = vunpack.c.l.b16 %v299
  %v4068 = vunpack.c.l.b16 %v300
  %v4069 = vpack.c.b16 %v4066, %v4065
  %v4070 = vpack.c.b16 %v4068, %v4067
  %v4074 = vsel %vm944, %v4048, 0
  %v4077 = vsel %vm944, %v4049, 0
  %v4080 = vsel %vm944, %v4050, 0
  %v4083 = vsel %vm944, %v4051, 0
  %v4086 = vsel %vm944, %v4052, 0
  %v4089 = vsel %vm944, %v4053, 0
  %v4092 = vsel %vm944, %v4054, 0
  %4094 = vmatprep.subr.bf16.mxu0 0
  %4095 = vmatpush1.bf16.msra.mxu0 %v4069
  %4096 = vmatprep.subr.bf16.mxu0 0
  %4097 = vmatpush1.bf16.msra.mxu0 %v4070
  %4098 = vmatprep.subr.bf16.mxu0 0
  %4099 = vmatpush1.bf16.msra.mxu0 0
  %4100 = vmatprep.subr.bf16.mxu0 0
  %4101 = vmatpush1.bf16.msra.mxu0 0
  %4102 = vmatprep.subr.bf16.mxu0 0
  %4103 = vmatpush1.bf16.msra.mxu0 0
  %4104 = vmatprep.subr.bf16.mxu0 0
  %4105 = vmatpush1.bf16.msra.mxu0 0
  %4106 = vmatprep.subr.bf16.mxu0 0
  %4107 = vmatpush1.bf16.msra.mxu0 0
  %4108 = vmatprep.subr.bf16.mxu0 0
  %4109 = vmatpush1.bf16.msra.mxu0 0
  %4110 = vmatprep.subr.bf16.mxu0 0
  %4111 = vmatpush1.bf16.msra.mxu0 0
  %4112 = vmatprep.subr.bf16.mxu0 0
  %4113 = vmatpush1.bf16.msra.mxu0 0
  %4114 = vmatprep.subr.bf16.mxu0 0
  %4115 = vmatpush1.bf16.msra.mxu0 0
  %4116 = vmatprep.subr.bf16.mxu0 0
  %4117 = vmatpush1.bf16.msra.mxu0 0
  %4118 = vmatprep.subr.bf16.mxu0 0
  %4119 = vmatpush1.bf16.msra.mxu0 0
  %4120 = vmatprep.subr.bf16.mxu0 0
  %4121 = vmatpush1.bf16.msra.mxu0 0
  %4122 = vmatprep.subr.bf16.mxu0 0
  %4123 = vmatpush1.bf16.msra.mxu0 0
  %4124 = vmatprep.subr.bf16.mxu0 0
  %4125 = vmatpush1.bf16.msra.mxu0 0
  %4126 = vmatprep.mubr.bf16.mxu0 0
  %4127 = vmatmul.mubr.bf16.gmra.mrb[0].mxu0 %v4074
  %v4128 = vpop.f32.mrb[0].mxu0
  %v4129 = vadd.f32 %v4059, %v4128
  %v4130 = vpop.f32.mrb[0].mxu0
  %v4131 = vpop.f32.mrb[0].mxu0
  %v4132 = vadd.f32 %v4059, %v4131
  %v4133 = vpop.f32.mrb[0].mxu0
  %4134 = vmatprep.mubr.bf16.mxu0 0
  %4135 = vmatmul.mubr.bf16.gmra.mrb[0].mxu0 %v4077
  %v4136 = vpop.f32.mrb[0].mxu0
  %v4137 = vadd.f32 %v4059, %v4136
  %v4138 = vpop.f32.mrb[0].mxu0
  %v4139 = vpop.f32.mrb[0].mxu0
  %v4140 = vadd.f32 %v4059, %v4139
  %v4141 = vpop.f32.mrb[0].mxu0
  %4142 = vmatprep.mubr.bf16.mxu0 0
  %4143 = vmatmul.mubr.bf16.gmra.mrb[0].mxu0 %v4080
  %v4144 = vpop.f32.mrb[0].mxu0
  %v4145 = vadd.f32 %v4059, %v4144
  %v4146 = vpop.f32.mrb[0].mxu0
  %v4147 = vpop.f32.mrb[0].mxu0
  %v4148 = vadd.f32 %v4059, %v4147
  %v4149 = vpop.f32.mrb[0].mxu0
  %4150 = vmatprep.mubr.bf16.mxu0 0
  %4151 = vmatmul.mubr.bf16.gmra.mrb[0].mxu0 %v4083
  %v4152 = vpop.f32.mrb[0].mxu0
  %v4153 = vadd.f32 %v4059, %v4152
  %v4154 = vpop.f32.mrb[0].mxu0
  %v4155 = vpop.f32.mrb[0].mxu0
  %v4156 = vadd.f32 %v4059, %v4155
  %v4157 = vpop.f32.mrb[0].mxu0
  %4158 = vmatprep.mubr.bf16.mxu0 0
  %4159 = vmatmul.mubr.bf16.gmra.mrb[0].mxu0 %v4086
  %v4160 = vpop.f32.mrb[0].mxu0
  %v4161 = vadd.f32 %v4059, %v4160
  %v4162 = vpop.f32.mrb[0].mxu0
  %v4163 = vpop.f32.mrb[0].mxu0
  %v4164 = vadd.f32 %v4059, %v4163
  %v4165 = vpop.f32.mrb[0].mxu0
  %4166 = vmatprep.mubr.bf16.mxu0 0
  %4167 = vmatmul.mubr.bf16.gmra.mrb[0].mxu0 %v4089
  %v4168 = vpop.f32.mrb[0].mxu0
  %v4169 = vadd.f32 %v4059, %v4168
  %v4170 = vpop.f32.mrb[0].mxu0
  %v4171 = vpop.f32.mrb[0].mxu0
  %v4172 = vadd.f32 %v4059, %v4171
  %v4173 = vpop.f32.mrb[0].mxu0
  %4174 = vmatprep.mubr.bf16.mxu0 0
  %4175 = vmatmul.mubr.bf16.gmra.mrb[0].mxu0 %v4092
  %v4176 = vpop.f32.mrb[0].mxu0
  %v4177 = vadd.f32 %v4059, %v4176
  %v4178 = vpop.f32.mrb[0].mxu0
  %v4179 = vpop.f32.mrb[0].mxu0
  %v4180 = vadd.f32 %v4059, %v4179
  %v4181 = vpop.f32.mrb[0].mxu0
  %4182 = vdwg.mxu0
  %v4183 = vxor.u32 %v4129, 2147483648
  %v4184 = vxor.u32 %v4132, 2147483648
  %v4185 = vxor.u32 %v4137, 2147483648
  %v4186 = vxor.u32 %v4140, 2147483648
  %v4187 = vxor.u32 %v4145, 2147483648
  %v4188 = vxor.u32 %v4148, 2147483648
  %v4189 = vxor.u32 %v4153, 2147483648
  %v4190 = vxor.u32 %v4156, 2147483648
  %v4191 = vxor.u32 %v4161, 2147483648
  %v4192 = vxor.u32 %v4164, 2147483648
  %v4193 = vxor.u32 %v4169, 2147483648
  %v4194 = vxor.u32 %v4172, 2147483648
  %v4195 = vxor.u32 %v4177, 2147483648
  %v4196 = vxor.u32 %v4180, 2147483648
  %v4197 = vmul.f32 %v4183, 1.442695
  %v4198 = vpow.pop %v4197
  %v4199 = vmul.f32 %v4184, 1.442695
  %v4200 = vpow.pop %v4199
  %v4201 = vmul.f32 %v4185, 1.442695
  %v4202 = vpow.pop %v4201
  %v4203 = vmul.f32 %v4186, 1.442695
  %v4204 = vpow.pop %v4203
  %v4205 = vmul.f32 %v4187, 1.442695
  %v4206 = vpow.pop %v4205
  %v4207 = vmul.f32 %v4188, 1.442695
  %v4208 = vpow.pop %v4207
  %v4209 = vmul.f32 %v4189, 1.442695
  %v4210 = vpow.pop %v4209
  %v4211 = vmul.f32 %v4190, 1.442695
  %v4212 = vpow.pop %v4211
  %v4213 = vmul.f32 %v4191, 1.442695
  %v4214 = vpow.pop %v4213
  %v4215 = vmul.f32 %v4192, 1.442695
  %v4216 = vpow.pop %v4215
  %v4217 = vmul.f32 %v4193, 1.442695
  %v4218 = vpow.pop %v4217
  %v4219 = vmul.f32 %v4194, 1.442695
  %v4220 = vpow.pop %v4219
  %v4221 = vmul.f32 %v4195, 1.442695
  %v4222 = vpow.pop %v4221
  %v4223 = vmul.f32 %v4196, 1.442695
  %v4224 = vpow.pop %v4223
  %v4225 = vadd.f32 %v4198, 1.0
  %v4226 = vadd.f32 %v4200, 1.0
  %v4227 = vadd.f32 %v4202, 1.0
  %v4228 = vadd.f32 %v4204, 1.0
  %v4229 = vadd.f32 %v4206, 1.0
  %v4230 = vadd.f32 %v4208, 1.0
  %v4231 = vadd.f32 %v4210, 1.0
  %v4232 = vadd.f32 %v4212, 1.0
  %v4233 = vadd.f32 %v4214, 1.0
  %v4234 = vadd.f32 %v4216, 1.0
  %v4235 = vadd.f32 %v4218, 1.0
  %v4236 = vadd.f32 %v4220, 1.0
  %v4237 = vadd.f32 %v4222, 1.0
  %v4238 = vadd.f32 %v4224, 1.0
  %v4239 = vrcp.pop %v4225
  %v4240 = vmul.f32 1.0, %v4239
  %v4241 = vrcp.pop %v4226
  %v4242 = vmul.f32 1.0, %v4241
  %v4243 = vrcp.pop %v4227
  %v4244 = vmul.f32 1.0, %v4243
  %v4245 = vrcp.pop %v4228
  %v4246 = vmul.f32 1.0, %v4245
  %v4247 = vrcp.pop %v4229
  %v4248 = vmul.f32 1.0, %v4247
  %v4249 = vrcp.pop %v4230
  %v4250 = vmul.f32 1.0, %v4249
  %v4251 = vrcp.pop %v4231
  %v4252 = vmul.f32 1.0, %v4251
  %v4253 = vrcp.pop %v4232
  %v4254 = vmul.f32 1.0, %v4253
  %v4255 = vrcp.pop %v4233
  %v4256 = vmul.f32 1.0, %v4255
  %v4257 = vrcp.pop %v4234
  %v4258 = vmul.f32 1.0, %v4257
  %v4259 = vrcp.pop %v4235
  %v4260 = vmul.f32 1.0, %v4259
  %v4261 = vrcp.pop %v4236
  %v4262 = vmul.f32 1.0, %v4261
  %v4263 = vrcp.pop %v4237
  %v4264 = vmul.f32 1.0, %v4263
  %v4265 = vrcp.pop %v4238
  %v4266 = vmul.f32 1.0, %v4265
  %v4267 = vmul.f32 %v4129, %v4240
  %v4268 = vmul.f32 %v4132, %v4242
  %v4269 = vmul.f32 %v4137, %v4244
  %v4270 = vmul.f32 %v4140, %v4246
  %v4271 = vmul.f32 %v4145, %v4248
  %v4272 = vmul.f32 %v4148, %v4250
  %v4273 = vmul.f32 %v4153, %v4252
  %v4274 = vmul.f32 %v4156, %v4254
  %v4275 = vmul.f32 %v4161, %v4256
  %v4276 = vmul.f32 %v4164, %v4258
  %v4277 = vmul.f32 %v4169, %v4260
  %v4278 = vmul.f32 %v4172, %v4262
  %v4279 = vmul.f32 %v4177, %v4264
  %v4280 = vmul.f32 %v4180, %v4266
  %v4281 = vmul.f32 %v4267, %v1825
  %v4282 = vmul.f32 %v4268, %v1830
  %v4283 = vmul.f32 %v4269, %v1835
  %v4284 = vmul.f32 %v4270, %v1840
  %v4285 = vmul.f32 %v4271, %v1845
  %v4286 = vmul.f32 %v4272, %v1850
  %v4287 = vmul.f32 %v4273, %v1855
  %v4288 = vmul.f32 %v4274, %v1860
  %v4289 = vmul.f32 %v4275, %v1865
  %v4290 = vmul.f32 %v4276, %v1870
  %v4291 = vmul.f32 %v4277, %v1875
  %v4292 = vmul.f32 %v4278, %v1880
  %v4293 = vmul.f32 %v4279, %v1885
  %v4294 = vmul.f32 %v4280, %v1890
  %v4295 = vpack.c.bf16 %v4282, %v4281
  %v4296 = vpack.c.bf16 %v4284, %v4283
  %v4297 = vpack.c.bf16 %v4286, %v4285
  %v4298 = vpack.c.bf16 %v4288, %v4287
  %v4299 = vpack.c.bf16 %v4290, %v4289
  %v4300 = vpack.c.bf16 %v4292, %v4291
  %v4301 = vpack.c.bf16 %v4294, %v4293
  %4302 = vmatprep.subr.bf16.mxu0 0
  %4303 = vmatpush1.bf16.msra.mxu0 %v4295
  %4304 = vmatprep.subr.bf16.mxu0 0
  %4305 = vmatpush1.bf16.msra.mxu0 %v4296
  %4306 = vmatprep.subr.bf16.mxu0 0
  %4307 = vmatpush1.bf16.msra.mxu0 %v4297
  %4308 = vmatprep.subr.bf16.mxu0 0
  %4309 = vmatpush1.bf16.msra.mxu0 %v4298
  %4310 = vmatprep.subr.bf16.mxu0 0
  %4311 = vmatpush1.bf16.msra.mxu0 %v4299
  %4312 = vmatprep.subr.bf16.mxu0 0
  %4313 = vmatpush1.bf16.msra.mxu0 %v4300
  %4314 = vmatprep.subr.bf16.mxu0 0
  %4315 = vmatpush1.bf16.msra.mxu0 %v4301
  %4316 = vmatprep.subr.bf16.mxu0 0
  %4317 = vmatpush1.bf16.msra.mxu0 0
  %4318 = vmatprep.subr.bf16.mxu0 0
  %4319 = vmatpush1.bf16.msra.mxu0 0
  %4320 = vmatprep.subr.bf16.mxu0 0
  %4321 = vmatpush1.bf16.msra.mxu0 0
  %4322 = vmatprep.subr.bf16.mxu0 0
  %4323 = vmatpush1.bf16.msra.mxu0 0
  %4324 = vmatprep.subr.bf16.mxu0 0
  %4325 = vmatpush1.bf16.msra.mxu0 0
  %4326 = vmatprep.subr.bf16.mxu0 0
  %4327 = vmatpush1.bf16.msra.mxu0 0
  %4328 = vmatprep.subr.bf16.mxu0 0
  %4329 = vmatpush1.bf16.msra.mxu0 0
  %4330 = vmatprep.subr.bf16.mxu0 0
  %4331 = vmatpush1.bf16.msra.mxu0 0
  %4332 = vmatprep.subr.bf16.mxu0 0
  %4333 = vmatpush1.bf16.msra.mxu0 0
  %4334 = vmatprep.mubr.bf16.mxu0 0
  %4335 = vmatmul.mubr.bf16.gmra.mrb[0].mxu0 %v1920
  %v4336 = vpop.f32.mrb[0].mxu0
  %v4337 = vadd.f32 0.0, %v4336
  %v4338 = vpop.f32.mrb[0].mxu0
  %v4339 = vpop.f32.mrb[0].mxu0
  %v4340 = vadd.f32 0.0, %v4339
  %v4341 = vpop.f32.mrb[0].mxu0
  %4342 = vdwg.mxu0
  %v4343 = vpack.c.bf16 %v4340, %v4337
  %v4348 = vunpack.c.l.b16 %v333
  %v4349 = vunpack.c.l.b16 %v334
  %v4350 = vunpack.c.l.b16 %v335
  %v4351 = vunpack.c.l.b16 %v336
  %v4352 = vpack.c.b16 %v4349, %v4348
  %v4353 = vpack.c.b16 %v4351, %v4350
  %v4357 = vsel %vm944, %v4343, 0
  %4359 = vmatprep.subr.bf16.mxu0 0
  %4360 = vmatpush1.bf16.msra.mxu0 %v4352
  %4361 = vmatprep.subr.bf16.mxu0 0
  %4362 = vmatpush1.bf16.msra.mxu0 %v4353
  %4363 = vmatprep.subr.bf16.mxu0 0
  %4364 = vmatpush1.bf16.msra.mxu0 0
  %4365 = vmatprep.subr.bf16.mxu0 0
  %4366 = vmatpush1.bf16.msra.mxu0 0
  %4367 = vmatprep.subr.bf16.mxu0 0
  %4368 = vmatpush1.bf16.msra.mxu0 0
  %4369 = vmatprep.subr.bf16.mxu0 0
  %4370 = vmatpush1.bf16.msra.mxu0 0
  %4371 = vmatprep.subr.bf16.mxu0 0
  %4372 = vmatpush1.bf16.msra.mxu0 0
  %4373 = vmatprep.subr.bf16.mxu0 0
  %4374 = vmatpush1.bf16.msra.mxu0 0
  %4375 = vmatprep.subr.bf16.mxu0 0
  %4376 = vmatpush1.bf16.msra.mxu0 0
  %4377 = vmatprep.subr.bf16.mxu0 0
  %4378 = vmatpush1.bf16.msra.mxu0 0
  %4379 = vmatprep.subr.bf16.mxu0 0
  %4380 = vmatpush1.bf16.msra.mxu0 0
  %4381 = vmatprep.subr.bf16.mxu0 0
  %4382 = vmatpush1.bf16.msra.mxu0 0
  %4383 = vmatprep.subr.bf16.mxu0 0
  %4384 = vmatpush1.bf16.msra.mxu0 0
  %4385 = vmatprep.subr.bf16.mxu0 0
  %4386 = vmatpush1.bf16.msra.mxu0 0
  %4387 = vmatprep.subr.bf16.mxu0 0
  %4388 = vmatpush1.bf16.msra.mxu0 0
  %4389 = vmatprep.subr.bf16.mxu0 0
  %4390 = vmatpush1.bf16.msra.mxu0 0
  %4391 = vmatprep.mubr.bf16.mxu0 0
  %4392 = vmatmul.mubr.bf16.gmra.mrb[0].mxu0 %v4357
  %v4393 = vpop.f32.mrb[0].mxu0
  %v4394 = vadd.f32 0.0, %v4393
  %v4395 = vpop.f32.mrb[0].mxu0
  %v4396 = vpop.f32.mrb[0].mxu0
  %v4397 = vadd.f32 0.0, %v4396
  %v4398 = vpop.f32.mrb[0].mxu0
  %4399 = vdwg.mxu0
  %v4404 = vunpack.c.l.b16 %v317
  %v4405 = vunpack.c.l.b16 %v318
  %v4406 = vunpack.c.l.b16 %v319
  %v4407 = vunpack.c.l.b16 %v320
  %v4408 = vpack.c.b16 %v4405, %v4404
  %v4409 = vpack.c.b16 %v4407, %v4406
  %v4413 = vsel %vm944, %v3395, 0
  %4415 = vmatprep.subr.bf16.mxu0 0
  %4416 = vmatpush1.bf16.msra.mxu0 %v4408
  %4417 = vmatprep.subr.bf16.mxu0 0
  %4418 = vmatpush1.bf16.msra.mxu0 %v4409
  %4419 = vmatprep.subr.bf16.mxu0 0
  %4420 = vmatpush1.bf16.msra.mxu0 0
  %4421 = vmatprep.subr.bf16.mxu0 0
  %4422 = vmatpush1.bf16.msra.mxu0 0
  %4423 = vmatprep.subr.bf16.mxu0 0
  %4424 = vmatpush1.bf16.msra.mxu0 0
  %4425 = vmatprep.subr.bf16.mxu0 0
  %4426 = vmatpush1.bf16.msra.mxu0 0
  %4427 = vmatprep.subr.bf16.mxu0 0
  %4428 = vmatpush1.bf16.msra.mxu0 0
  %4429 = vmatprep.subr.bf16.mxu0 0
  %4430 = vmatpush1.bf16.msra.mxu0 0
  %4431 = vmatprep.subr.bf16.mxu0 0
  %4432 = vmatpush1.bf16.msra.mxu0 0
  %4433 = vmatprep.subr.bf16.mxu0 0
  %4434 = vmatpush1.bf16.msra.mxu0 0
  %4435 = vmatprep.subr.bf16.mxu0 0
  %4436 = vmatpush1.bf16.msra.mxu0 0
  %4437 = vmatprep.subr.bf16.mxu0 0
  %4438 = vmatpush1.bf16.msra.mxu0 0
  %4439 = vmatprep.subr.bf16.mxu0 0
  %4440 = vmatpush1.bf16.msra.mxu0 0
  %4441 = vmatprep.subr.bf16.mxu0 0
  %4442 = vmatpush1.bf16.msra.mxu0 0
  %4443 = vmatprep.subr.bf16.mxu0 0
  %4444 = vmatpush1.bf16.msra.mxu0 0
  %4445 = vmatprep.subr.bf16.mxu0 0
  %4446 = vmatpush1.bf16.msra.mxu0 0
  %4447 = vmatprep.mubr.bf16.mxu0 0
  %4448 = vmatmul.mubr.bf16.gmra.mrb[0].mxu0 %v4413
  %v4449 = vpop.f32.mrb[0].mxu0
  %v4450 = vadd.f32 %v4394, %v4449
  %v4451 = vpop.f32.mrb[0].mxu0
  %v4452 = vpop.f32.mrb[0].mxu0
  %v4453 = vadd.f32 %v4397, %v4452
  %v4454 = vpop.f32.mrb[0].mxu0
  %4455 = vdwg.mxu0
  %v4456 = vlaneseq
  %v4457 = vshrl.u32 %v4456, 7
  %v4458 = vsub.s32 0, %v4457
  %v4459 = vrot.slane %v343, %v4458
  %v4460 = vmul.f32 %v541, %v4459
  %v4461 = vmul.f32 %v546, %v4459
  %v4462 = vlaneseq
  %v4463 = vshrl.u32 %v4462, 7
  %v4464 = vsub.s32 1, %v4463
  %v4465 = vrot.slane %v343, %v4464
  %v4466 = vmul.f32 %v556, %v4465
  %v4467 = vmul.f32 %v560, %v4465
  %v4468 = vadd.f32 %v4460, %v4466
  %v4469 = vadd.f32 %v4461, %v4467
  %v4470 = vlaneseq
  %v4471 = vshrl.u32 %v4470, 7
  %v4472 = vsub.s32 2, %v4471
  %v4473 = vrot.slane %v343, %v4472
  %v4474 = vmul.f32 %v572, %v4473
  %v4475 = vmul.f32 %v576, %v4473
  %v4476 = vadd.f32 %v4468, %v4474
  %v4477 = vadd.f32 %v4469, %v4475
  %v4478 = vlaneseq
  %v4479 = vshrl.u32 %v4478, 7
  %v4480 = vsub.s32 3, %v4479
  %v4481 = vrot.slane %v343, %v4480
  %v4482 = vmul.f32 %v588, %v4481
  %v4483 = vmul.f32 %v592, %v4481
  %v4484 = vadd.f32 %v4476, %v4482
  %v4485 = vadd.f32 %v4477, %v4483
  %v4486 = vlaneseq
  %v4487 = vshrl.u32 %v4486, 7
  %v4488 = vsub.s32 4, %v4487
  %v4489 = vrot.slane %v343, %v4488
  %v4490 = vmul.f32 %v604, %v4489
  %v4491 = vmul.f32 %v608, %v4489
  %v4492 = vadd.f32 %v4484, %v4490
  %v4493 = vadd.f32 %v4485, %v4491
  %v4494 = vadd.f32 %v4450, %v4492
  %v4495 = vadd.f32 %v4453, %v4493
  %v4497 = vlaneseq
  %v4498 = vshrl.u32 %v4497, 7
  %v4499 = vsub.s32 0, %v4498
  %v4500 = vrot.slane %v347, %v4499
  %v4502 = vadd.f32 %v4494, %v4500
  %v4503 = vadd.f32 %v4495, %v4500
  %v4504 = vxor.u32 %v4502, 2147483648
  %v4505 = vxor.u32 %v4503, 2147483648
  %v4506 = vmul.f32 %v4504, 1.442695
  %v4507 = vpow.pop %v4506
  %v4508 = vmul.f32 %v4505, 1.442695
  %v4509 = vpow.pop %v4508
  %v4510 = vadd.f32 %v4507, 1.0
  %v4511 = vadd.f32 %v4509, 1.0
  %v4512 = vrcp.pop %v4510
  %v4513 = vmul.f32 1.0, %v4512
  %v4514 = vrcp.pop %v4511
  %v4515 = vmul.f32 1.0, %v4514
  %v4516 = vmul.f32 %v4502, %v4513
  %v4517 = vmul.f32 %v4503, %v4515
  %v4518 = vpack.c.bf16 %v4517, %v4516
  %v4523 = vunpack.c.l.b16 %v357
  %v4524 = vunpack.c.l.b16 %v358
  %v4525 = vunpack.c.l.b16 %v359
  %v4526 = vunpack.c.l.b16 %v360
  %v4527 = vpack.c.b16 %v4524, %v4523
  %v4528 = vpack.c.b16 %v4526, %v4525
  %v4532 = vsel %vm944, %v4518, 0
  %4534 = vmatprep.subr.bf16.mxu0 0
  %4535 = vmatpush1.bf16.msra.mxu0 %v4527
  %4536 = vmatprep.subr.bf16.mxu0 0
  %4537 = vmatpush1.bf16.msra.mxu0 %v4528
  %4538 = vmatprep.subr.bf16.mxu0 0
  %4539 = vmatpush1.bf16.msra.mxu0 0
  %4540 = vmatprep.subr.bf16.mxu0 0
  %4541 = vmatpush1.bf16.msra.mxu0 0
  %4542 = vmatprep.subr.bf16.mxu0 0
  %4543 = vmatpush1.bf16.msra.mxu0 0
  %4544 = vmatprep.subr.bf16.mxu0 0
  %4545 = vmatpush1.bf16.msra.mxu0 0
  %4546 = vmatprep.subr.bf16.mxu0 0
  %4547 = vmatpush1.bf16.msra.mxu0 0
  %4548 = vmatprep.subr.bf16.mxu0 0
  %4549 = vmatpush1.bf16.msra.mxu0 0
  %4550 = vmatprep.subr.bf16.mxu0 0
  %4551 = vmatpush1.bf16.msra.mxu0 0
  %4552 = vmatprep.subr.bf16.mxu0 0
  %4553 = vmatpush1.bf16.msra.mxu0 0
  %4554 = vmatprep.subr.bf16.mxu0 0
  %4555 = vmatpush1.bf16.msra.mxu0 0
  %4556 = vmatprep.subr.bf16.mxu0 0
  %4557 = vmatpush1.bf16.msra.mxu0 0
  %4558 = vmatprep.subr.bf16.mxu0 0
  %4559 = vmatpush1.bf16.msra.mxu0 0
  %4560 = vmatprep.subr.bf16.mxu0 0
  %4561 = vmatpush1.bf16.msra.mxu0 0
  %4562 = vmatprep.subr.bf16.mxu0 0
  %4563 = vmatpush1.bf16.msra.mxu0 0
  %4564 = vmatprep.subr.bf16.mxu0 0
  %4565 = vmatpush1.bf16.msra.mxu0 0
  %4566 = vmatprep.mubr.bf16.mxu0 0
  %4567 = vmatmul.mubr.bf16.gmra.mrb[0].mxu0 %v4532
  %v4568 = vpop.f32.mrb[0].mxu0
  %v4569 = vadd.f32 0.0, %v4568
  %v4570 = vpop.f32.mrb[0].mxu0
  %v4571 = vpop.f32.mrb[0].mxu0
  %v4572 = vadd.f32 0.0, %v4571
  %v4573 = vpop.f32.mrb[0].mxu0
  %4574 = vdwg.mxu0
  %v4575 = vadd.f32 %v3393, %v4569
  %v4576 = vadd.f32 %v3394, %v4572
  %v4578 = vlaneseq
  %v4579 = vshrl.u32 %v4578, 7
  %v4580 = vsub.s32 0, %v4579
  %v4581 = vrot.slane %v367, %v4580
  %v4583 = vadd.f32 %v4575, %v4581
  %v4584 = vadd.f32 %v4576, %v4581
  %v4585 = vpack.c.bf16 %v4584, %v4583
  %4586 = vmatprep.subr.bf16.mxu0 0
  %4587 = vmatpush1.bf16.msra.mxu0 %v4585
  %4588 = vmatprep.subr.bf16.mxu0 0
  %4589 = vmatpush1.bf16.msra.mxu0 0
  %4590 = vmatprep.subr.bf16.mxu0 0
  %4591 = vmatpush1.bf16.msra.mxu0 0
  %4592 = vmatprep.subr.bf16.mxu0 0
  %4593 = vmatpush1.bf16.msra.mxu0 0
  %4594 = vmatprep.subr.bf16.mxu0 0
  %4595 = vmatpush1.bf16.msra.mxu0 0
  %4596 = vmatprep.subr.bf16.mxu0 0
  %4597 = vmatpush1.bf16.msra.mxu0 0
  %4598 = vmatprep.subr.bf16.mxu0 0
  %4599 = vmatpush1.bf16.msra.mxu0 0
  %4600 = vmatprep.subr.bf16.mxu0 0
  %4601 = vmatpush1.bf16.msra.mxu0 0
  %4602 = vmatprep.subr.bf16.mxu0 0
  %4603 = vmatpush1.bf16.msra.mxu0 0
  %4604 = vmatprep.subr.bf16.mxu0 0
  %4605 = vmatpush1.bf16.msra.mxu0 0
  %4606 = vmatprep.subr.bf16.mxu0 0
  %4607 = vmatpush1.bf16.msra.mxu0 0
  %4608 = vmatprep.subr.bf16.mxu0 0
  %4609 = vmatpush1.bf16.msra.mxu0 0
  %4610 = vmatprep.subr.bf16.mxu0 0
  %4611 = vmatpush1.bf16.msra.mxu0 0
  %4612 = vmatprep.subr.bf16.mxu0 0
  %4613 = vmatpush1.bf16.msra.mxu0 0
  %4614 = vmatprep.subr.bf16.mxu0 0
  %4615 = vmatpush1.bf16.msra.mxu0 0
  %4616 = vmatprep.subr.bf16.mxu0 0
  %4617 = vmatpush1.bf16.msra.mxu0 0
  %4618 = vmatprep.mubr.bf16.mxu0 0
  %4619 = vmatmul.mubr.bf16.gmra.mrb[0].mxu0 %v664
  %v4620 = vpop.f32.mrb[0].mxu0
  %v4621 = vadd.f32 0.0, %v4620
  %v4622 = vpop.f32.mrb[0].mxu0
  %v4623 = vpop.f32.mrb[0].mxu0
  %v4624 = vadd.f32 0.0, %v4623
  %v4625 = vpop.f32.mrb[0].mxu0
  %4626 = vmatprep.mubr.bf16.mxu0 0
  %4627 = vmatmul.mubr.bf16.gmra.mrb[0].mxu0 %v667
  %v4628 = vpop.f32.mrb[0].mxu0
  %v4629 = vadd.f32 0.0, %v4628
  %v4630 = vpop.f32.mrb[0].mxu0
  %v4631 = vpop.f32.mrb[0].mxu0
  %v4632 = vadd.f32 0.0, %v4631
  %v4633 = vpop.f32.mrb[0].mxu0
  %4634 = vmatprep.mubr.bf16.mxu0 0
  %4635 = vmatmul.mubr.bf16.gmra.mrb[0].mxu0 %v670
  %v4636 = vpop.f32.mrb[0].mxu0
  %v4637 = vadd.f32 0.0, %v4636
  %v4638 = vpop.f32.mrb[0].mxu0
  %v4639 = vpop.f32.mrb[0].mxu0
  %v4640 = vadd.f32 0.0, %v4639
  %v4641 = vpop.f32.mrb[0].mxu0
  %4642 = vmatprep.mubr.bf16.mxu0 0
  %4643 = vmatmul.mubr.bf16.gmra.mrb[0].mxu0 %v673
  %v4644 = vpop.f32.mrb[0].mxu0
  %v4645 = vadd.f32 0.0, %v4644
  %v4646 = vpop.f32.mrb[0].mxu0
  %v4647 = vpop.f32.mrb[0].mxu0
  %v4648 = vadd.f32 0.0, %v4647
  %v4649 = vpop.f32.mrb[0].mxu0
  %4650 = vmatprep.mubr.bf16.mxu0 0
  %4651 = vmatmul.mubr.bf16.gmra.mrb[0].mxu0 %v676
  %v4652 = vpop.f32.mrb[0].mxu0
  %v4653 = vadd.f32 0.0, %v4652
  %v4654 = vpop.f32.mrb[0].mxu0
  %v4655 = vpop.f32.mrb[0].mxu0
  %v4656 = vadd.f32 0.0, %v4655
  %v4657 = vpop.f32.mrb[0].mxu0
  %4658 = vmatprep.mubr.bf16.mxu0 0
  %4659 = vmatmul.mubr.bf16.gmra.mrb[0].mxu0 %v679
  %v4660 = vpop.f32.mrb[0].mxu0
  %v4661 = vadd.f32 0.0, %v4660
  %v4662 = vpop.f32.mrb[0].mxu0
  %v4663 = vpop.f32.mrb[0].mxu0
  %v4664 = vadd.f32 0.0, %v4663
  %v4665 = vpop.f32.mrb[0].mxu0
  %4666 = vmatprep.mubr.bf16.mxu0 0
  %4667 = vmatmul.mubr.bf16.gmra.mrb[0].mxu0 %v682
  %v4668 = vpop.f32.mrb[0].mxu0
  %v4669 = vadd.f32 0.0, %v4668
  %v4670 = vpop.f32.mrb[0].mxu0
  %v4671 = vpop.f32.mrb[0].mxu0
  %v4672 = vadd.f32 0.0, %v4671
  %v4673 = vpop.f32.mrb[0].mxu0
  %4674 = vdwg.mxu0
  %4675 = vmatprep.subr.bf16.mxu0 0
  %4676 = vmatpush1.bf16.msra.mxu0 %v4585
  %4677 = vmatprep.subr.bf16.mxu0 0
  %4678 = vmatpush1.bf16.msra.mxu0 0
  %4679 = vmatprep.subr.bf16.mxu0 0
  %4680 = vmatpush1.bf16.msra.mxu0 0
  %4681 = vmatprep.subr.bf16.mxu0 0
  %4682 = vmatpush1.bf16.msra.mxu0 0
  %4683 = vmatprep.subr.bf16.mxu0 0
  %4684 = vmatpush1.bf16.msra.mxu0 0
  %4685 = vmatprep.subr.bf16.mxu0 0
  %4686 = vmatpush1.bf16.msra.mxu0 0
  %4687 = vmatprep.subr.bf16.mxu0 0
  %4688 = vmatpush1.bf16.msra.mxu0 0
  %4689 = vmatprep.subr.bf16.mxu0 0
  %4690 = vmatpush1.bf16.msra.mxu0 0
  %4691 = vmatprep.subr.bf16.mxu0 0
  %4692 = vmatpush1.bf16.msra.mxu0 0
  %4693 = vmatprep.subr.bf16.mxu0 0
  %4694 = vmatpush1.bf16.msra.mxu0 0
  %4695 = vmatprep.subr.bf16.mxu0 0
  %4696 = vmatpush1.bf16.msra.mxu0 0
  %4697 = vmatprep.subr.bf16.mxu0 0
  %4698 = vmatpush1.bf16.msra.mxu0 0
  %4699 = vmatprep.subr.bf16.mxu0 0
  %4700 = vmatpush1.bf16.msra.mxu0 0
  %4701 = vmatprep.subr.bf16.mxu0 0
  %4702 = vmatpush1.bf16.msra.mxu0 0
  %4703 = vmatprep.subr.bf16.mxu0 0
  %4704 = vmatpush1.bf16.msra.mxu0 0
  %4705 = vmatprep.subr.bf16.mxu0 0
  %4706 = vmatpush1.bf16.msra.mxu0 0
  %4707 = vmatprep.mubr.bf16.mxu0 0
  %4708 = vmatmul.mubr.bf16.gmra.mrb[0].mxu0 %v809
  %v4709 = vpop.f32.mrb[0].mxu0
  %v4710 = vadd.f32 0.0, %v4709
  %v4711 = vpop.f32.mrb[0].mxu0
  %v4712 = vpop.f32.mrb[0].mxu0
  %v4713 = vadd.f32 0.0, %v4712
  %v4714 = vpop.f32.mrb[0].mxu0
  %4715 = vmatprep.mubr.bf16.mxu0 0
  %4716 = vmatmul.mubr.bf16.gmra.mrb[0].mxu0 %v812
  %v4717 = vpop.f32.mrb[0].mxu0
  %v4718 = vadd.f32 0.0, %v4717
  %v4719 = vpop.f32.mrb[0].mxu0
  %v4720 = vpop.f32.mrb[0].mxu0
  %v4721 = vadd.f32 0.0, %v4720
  %v4722 = vpop.f32.mrb[0].mxu0
  %4723 = vmatprep.mubr.bf16.mxu0 0
  %4724 = vmatmul.mubr.bf16.gmra.mrb[0].mxu0 %v815
  %v4725 = vpop.f32.mrb[0].mxu0
  %v4726 = vadd.f32 0.0, %v4725
  %v4727 = vpop.f32.mrb[0].mxu0
  %v4728 = vpop.f32.mrb[0].mxu0
  %v4729 = vadd.f32 0.0, %v4728
  %v4730 = vpop.f32.mrb[0].mxu0
  %4731 = vmatprep.mubr.bf16.mxu0 0
  %4732 = vmatmul.mubr.bf16.gmra.mrb[0].mxu0 %v818
  %v4733 = vpop.f32.mrb[0].mxu0
  %v4734 = vadd.f32 0.0, %v4733
  %v4735 = vpop.f32.mrb[0].mxu0
  %v4736 = vpop.f32.mrb[0].mxu0
  %v4737 = vadd.f32 0.0, %v4736
  %v4738 = vpop.f32.mrb[0].mxu0
  %4739 = vmatprep.mubr.bf16.mxu0 0
  %4740 = vmatmul.mubr.bf16.gmra.mrb[0].mxu0 %v821
  %v4741 = vpop.f32.mrb[0].mxu0
  %v4742 = vadd.f32 0.0, %v4741
  %v4743 = vpop.f32.mrb[0].mxu0
  %v4744 = vpop.f32.mrb[0].mxu0
  %v4745 = vadd.f32 0.0, %v4744
  %v4746 = vpop.f32.mrb[0].mxu0
  %4747 = vmatprep.mubr.bf16.mxu0 0
  %4748 = vmatmul.mubr.bf16.gmra.mrb[0].mxu0 %v824
  %v4749 = vpop.f32.mrb[0].mxu0
  %v4750 = vadd.f32 0.0, %v4749
  %v4751 = vpop.f32.mrb[0].mxu0
  %v4752 = vpop.f32.mrb[0].mxu0
  %v4753 = vadd.f32 0.0, %v4752
  %v4754 = vpop.f32.mrb[0].mxu0
  %4755 = vmatprep.mubr.bf16.mxu0 0
  %4756 = vmatmul.mubr.bf16.gmra.mrb[0].mxu0 %v827
  %v4757 = vpop.f32.mrb[0].mxu0
  %v4758 = vadd.f32 0.0, %v4757
  %v4759 = vpop.f32.mrb[0].mxu0
  %v4760 = vpop.f32.mrb[0].mxu0
  %v4761 = vadd.f32 0.0, %v4760
  %v4762 = vpop.f32.mrb[0].mxu0
  %4763 = vdwg.mxu0
  %v4764 = vpack.c.bf16 %v4624, %v4621
  %v4765 = vpack.c.bf16 %v4632, %v4629
  %v4766 = vpack.c.bf16 %v4640, %v4637
  %v4767 = vpack.c.bf16 %v4648, %v4645
  %v4768 = vpack.c.bf16 %v4656, %v4653
  %v4769 = vpack.c.bf16 %v4664, %v4661
  %v4770 = vpack.c.bf16 %v4672, %v4669
  %v4771 = vpack.c.bf16 %v4713, %v4710
  %v4772 = vpack.c.bf16 %v4721, %v4718
  %v4773 = vpack.c.bf16 %v4729, %v4726
  %v4774 = vpack.c.bf16 %v4737, %v4734
  %v4775 = vpack.c.bf16 %v4745, %v4742
  %v4776 = vpack.c.bf16 %v4753, %v4750
  %v4777 = vpack.c.bf16 %v4761, %v4758
  %v4782 = vunpack.c.l.b16 %v273
  %v4783 = vunpack.c.l.b16 %v274
  %v4784 = vunpack.c.l.b16 %v275
  %v4785 = vunpack.c.l.b16 %v276
  %v4786 = vpack.c.b16 %v4783, %v4782
  %v4787 = vpack.c.b16 %v4785, %v4784
  %v4791 = vsel %vm944, %v4771, 0
  %v4794 = vsel %vm944, %v4772, 0
  %v4797 = vsel %vm944, %v4773, 0
  %v4800 = vsel %vm944, %v4774, 0
  %v4803 = vsel %vm944, %v4775, 0
  %v4806 = vsel %vm944, %v4776, 0
  %v4809 = vsel %vm944, %v4777, 0
  %4811 = vmatprep.subr.bf16.mxu0 0
  %4812 = vmatpush1.bf16.msra.mxu0 %v4786
  %4813 = vmatprep.subr.bf16.mxu0 0
  %4814 = vmatpush1.bf16.msra.mxu0 %v4787
  %4815 = vmatprep.subr.bf16.mxu0 0
  %4816 = vmatpush1.bf16.msra.mxu0 0
  %4817 = vmatprep.subr.bf16.mxu0 0
  %4818 = vmatpush1.bf16.msra.mxu0 0
  %4819 = vmatprep.subr.bf16.mxu0 0
  %4820 = vmatpush1.bf16.msra.mxu0 0
  %4821 = vmatprep.subr.bf16.mxu0 0
  %4822 = vmatpush1.bf16.msra.mxu0 0
  %4823 = vmatprep.subr.bf16.mxu0 0
  %4824 = vmatpush1.bf16.msra.mxu0 0
  %4825 = vmatprep.subr.bf16.mxu0 0
  %4826 = vmatpush1.bf16.msra.mxu0 0
  %4827 = vmatprep.subr.bf16.mxu0 0
  %4828 = vmatpush1.bf16.msra.mxu0 0
  %4829 = vmatprep.subr.bf16.mxu0 0
  %4830 = vmatpush1.bf16.msra.mxu0 0
  %4831 = vmatprep.subr.bf16.mxu0 0
  %4832 = vmatpush1.bf16.msra.mxu0 0
  %4833 = vmatprep.subr.bf16.mxu0 0
  %4834 = vmatpush1.bf16.msra.mxu0 0
  %4835 = vmatprep.subr.bf16.mxu0 0
  %4836 = vmatpush1.bf16.msra.mxu0 0
  %4837 = vmatprep.subr.bf16.mxu0 0
  %4838 = vmatpush1.bf16.msra.mxu0 0
  %4839 = vmatprep.subr.bf16.mxu0 0
  %4840 = vmatpush1.bf16.msra.mxu0 0
  %4841 = vmatprep.subr.bf16.mxu0 0
  %4842 = vmatpush1.bf16.msra.mxu0 0
  %4843 = vmatprep.mubr.bf16.mxu0 0
  %4844 = vmatmul.mubr.bf16.gmra.mrb[0].mxu0 %v4791
  %v4845 = vpop.f32.mrb[0].mxu0
  %v4846 = vadd.f32 0.0, %v4845
  %v4847 = vpop.f32.mrb[0].mxu0
  %v4848 = vpop.f32.mrb[0].mxu0
  %v4849 = vadd.f32 0.0, %v4848
  %v4850 = vpop.f32.mrb[0].mxu0
  %4851 = vmatprep.mubr.bf16.mxu0 0
  %4852 = vmatmul.mubr.bf16.gmra.mrb[0].mxu0 %v4794
  %v4853 = vpop.f32.mrb[0].mxu0
  %v4854 = vadd.f32 0.0, %v4853
  %v4855 = vpop.f32.mrb[0].mxu0
  %v4856 = vpop.f32.mrb[0].mxu0
  %v4857 = vadd.f32 0.0, %v4856
  %v4858 = vpop.f32.mrb[0].mxu0
  %4859 = vmatprep.mubr.bf16.mxu0 0
  %4860 = vmatmul.mubr.bf16.gmra.mrb[0].mxu0 %v4797
  %v4861 = vpop.f32.mrb[0].mxu0
  %v4862 = vadd.f32 0.0, %v4861
  %v4863 = vpop.f32.mrb[0].mxu0
  %v4864 = vpop.f32.mrb[0].mxu0
  %v4865 = vadd.f32 0.0, %v4864
  %v4866 = vpop.f32.mrb[0].mxu0
  %4867 = vmatprep.mubr.bf16.mxu0 0
  %4868 = vmatmul.mubr.bf16.gmra.mrb[0].mxu0 %v4800
  %v4869 = vpop.f32.mrb[0].mxu0
  %v4870 = vadd.f32 0.0, %v4869
  %v4871 = vpop.f32.mrb[0].mxu0
  %v4872 = vpop.f32.mrb[0].mxu0
  %v4873 = vadd.f32 0.0, %v4872
  %v4874 = vpop.f32.mrb[0].mxu0
  %4875 = vmatprep.mubr.bf16.mxu0 0
  %4876 = vmatmul.mubr.bf16.gmra.mrb[0].mxu0 %v4803
  %v4877 = vpop.f32.mrb[0].mxu0
  %v4878 = vadd.f32 0.0, %v4877
  %v4879 = vpop.f32.mrb[0].mxu0
  %v4880 = vpop.f32.mrb[0].mxu0
  %v4881 = vadd.f32 0.0, %v4880
  %v4882 = vpop.f32.mrb[0].mxu0
  %4883 = vmatprep.mubr.bf16.mxu0 0
  %4884 = vmatmul.mubr.bf16.gmra.mrb[0].mxu0 %v4806
  %v4885 = vpop.f32.mrb[0].mxu0
  %v4886 = vadd.f32 0.0, %v4885
  %v4887 = vpop.f32.mrb[0].mxu0
  %v4888 = vpop.f32.mrb[0].mxu0
  %v4889 = vadd.f32 0.0, %v4888
  %v4890 = vpop.f32.mrb[0].mxu0
  %4891 = vmatprep.mubr.bf16.mxu0 0
  %4892 = vmatmul.mubr.bf16.gmra.mrb[0].mxu0 %v4809
  %v4893 = vpop.f32.mrb[0].mxu0
  %v4894 = vadd.f32 0.0, %v4893
  %v4895 = vpop.f32.mrb[0].mxu0
  %v4896 = vpop.f32.mrb[0].mxu0
  %v4897 = vadd.f32 0.0, %v4896
  %v4898 = vpop.f32.mrb[0].mxu0
  %4899 = vdwg.mxu0
  %v4904 = vunpack.c.l.b16 %v257
  %v4905 = vunpack.c.l.b16 %v258
  %v4906 = vunpack.c.l.b16 %v259
  %v4907 = vunpack.c.l.b16 %v260
  %v4908 = vpack.c.b16 %v4905, %v4904
  %v4909 = vpack.c.b16 %v4907, %v4906
  %v4913 = vsel %vm944, %v4764, 0
  %v4916 = vsel %vm944, %v4765, 0
  %v4919 = vsel %vm944, %v4766, 0
  %v4922 = vsel %vm944, %v4767, 0
  %v4925 = vsel %vm944, %v4768, 0
  %v4928 = vsel %vm944, %v4769, 0
  %v4931 = vsel %vm944, %v4770, 0
  %4933 = vmatprep.subr.bf16.mxu0 0
  %4934 = vmatpush1.bf16.msra.mxu0 %v4908
  %4935 = vmatprep.subr.bf16.mxu0 0
  %4936 = vmatpush1.bf16.msra.mxu0 %v4909
  %4937 = vmatprep.subr.bf16.mxu0 0
  %4938 = vmatpush1.bf16.msra.mxu0 0
  %4939 = vmatprep.subr.bf16.mxu0 0
  %4940 = vmatpush1.bf16.msra.mxu0 0
  %4941 = vmatprep.subr.bf16.mxu0 0
  %4942 = vmatpush1.bf16.msra.mxu0 0
  %4943 = vmatprep.subr.bf16.mxu0 0
  %4944 = vmatpush1.bf16.msra.mxu0 0
  %4945 = vmatprep.subr.bf16.mxu0 0
  %4946 = vmatpush1.bf16.msra.mxu0 0
  %4947 = vmatprep.subr.bf16.mxu0 0
  %4948 = vmatpush1.bf16.msra.mxu0 0
  %4949 = vmatprep.subr.bf16.mxu0 0
  %4950 = vmatpush1.bf16.msra.mxu0 0
  %4951 = vmatprep.subr.bf16.mxu0 0
  %4952 = vmatpush1.bf16.msra.mxu0 0
  %4953 = vmatprep.subr.bf16.mxu0 0
  %4954 = vmatpush1.bf16.msra.mxu0 0
  %4955 = vmatprep.subr.bf16.mxu0 0
  %4956 = vmatpush1.bf16.msra.mxu0 0
  %4957 = vmatprep.subr.bf16.mxu0 0
  %4958 = vmatpush1.bf16.msra.mxu0 0
  %4959 = vmatprep.subr.bf16.mxu0 0
  %4960 = vmatpush1.bf16.msra.mxu0 0
  %4961 = vmatprep.subr.bf16.mxu0 0
  %4962 = vmatpush1.bf16.msra.mxu0 0
  %4963 = vmatprep.subr.bf16.mxu0 0
  %4964 = vmatpush1.bf16.msra.mxu0 0
  %4965 = vmatprep.mubr.bf16.mxu0 0
  %4966 = vmatmul.mubr.bf16.gmra.mrb[0].mxu0 %v4913
  %v4967 = vpop.f32.mrb[0].mxu0
  %v4968 = vadd.f32 %v4846, %v4967
  %v4969 = vpop.f32.mrb[0].mxu0
  %v4970 = vpop.f32.mrb[0].mxu0
  %v4971 = vadd.f32 %v4849, %v4970
  %v4972 = vpop.f32.mrb[0].mxu0
  %4973 = vmatprep.mubr.bf16.mxu0 0
  %4974 = vmatmul.mubr.bf16.gmra.mrb[0].mxu0 %v4916
  %v4975 = vpop.f32.mrb[0].mxu0
  %v4976 = vadd.f32 %v4854, %v4975
  %v4977 = vpop.f32.mrb[0].mxu0
  %v4978 = vpop.f32.mrb[0].mxu0
  %v4979 = vadd.f32 %v4857, %v4978
  %v4980 = vpop.f32.mrb[0].mxu0
  %4981 = vmatprep.mubr.bf16.mxu0 0
  %4982 = vmatmul.mubr.bf16.gmra.mrb[0].mxu0 %v4919
  %v4983 = vpop.f32.mrb[0].mxu0
  %v4984 = vadd.f32 %v4862, %v4983
  %v4985 = vpop.f32.mrb[0].mxu0
  %v4986 = vpop.f32.mrb[0].mxu0
  %v4987 = vadd.f32 %v4865, %v4986
  %v4988 = vpop.f32.mrb[0].mxu0
  %4989 = vmatprep.mubr.bf16.mxu0 0
  %4990 = vmatmul.mubr.bf16.gmra.mrb[0].mxu0 %v4922
  %v4991 = vpop.f32.mrb[0].mxu0
  %v4992 = vadd.f32 %v4870, %v4991
  %v4993 = vpop.f32.mrb[0].mxu0
  %v4994 = vpop.f32.mrb[0].mxu0
  %v4995 = vadd.f32 %v4873, %v4994
  %v4996 = vpop.f32.mrb[0].mxu0
  %4997 = vmatprep.mubr.bf16.mxu0 0
  %4998 = vmatmul.mubr.bf16.gmra.mrb[0].mxu0 %v4925
  %v4999 = vpop.f32.mrb[0].mxu0
  %v5000 = vadd.f32 %v4878, %v4999
  %v5001 = vpop.f32.mrb[0].mxu0
  %v5002 = vpop.f32.mrb[0].mxu0
  %v5003 = vadd.f32 %v4881, %v5002
  %v5004 = vpop.f32.mrb[0].mxu0
  %5005 = vmatprep.mubr.bf16.mxu0 0
  %5006 = vmatmul.mubr.bf16.gmra.mrb[0].mxu0 %v4928
  %v5007 = vpop.f32.mrb[0].mxu0
  %v5008 = vadd.f32 %v4886, %v5007
  %v5009 = vpop.f32.mrb[0].mxu0
  %v5010 = vpop.f32.mrb[0].mxu0
  %v5011 = vadd.f32 %v4889, %v5010
  %v5012 = vpop.f32.mrb[0].mxu0
  %5013 = vmatprep.mubr.bf16.mxu0 0
  %5014 = vmatmul.mubr.bf16.gmra.mrb[0].mxu0 %v4931
  %v5015 = vpop.f32.mrb[0].mxu0
  %v5016 = vadd.f32 %v4894, %v5015
  %v5017 = vpop.f32.mrb[0].mxu0
  %v5018 = vpop.f32.mrb[0].mxu0
  %v5019 = vadd.f32 %v4897, %v5018
  %v5020 = vpop.f32.mrb[0].mxu0
  %5021 = vdwg.mxu0
  %v5023 = vlaneseq
  %v5024 = vshrl.u32 %v5023, 7
  %v5025 = vsub.s32 0, %v5024
  %v5026 = vrot.slane %v280, %v5025
  %v5028 = vmul.f32 %v1180, %v5026
  %v5029 = vmul.f32 %v1185, %v5026
  %v5030 = vmul.f32 %v1190, %v5026
  %v5031 = vmul.f32 %v1195, %v5026
  %v5032 = vmul.f32 %v1200, %v5026
  %v5033 = vmul.f32 %v1205, %v5026
  %v5034 = vmul.f32 %v1210, %v5026
  %v5035 = vmul.f32 %v1215, %v5026
  %v5036 = vmul.f32 %v1220, %v5026
  %v5037 = vmul.f32 %v1225, %v5026
  %v5038 = vmul.f32 %v1230, %v5026
  %v5039 = vmul.f32 %v1235, %v5026
  %v5040 = vmul.f32 %v1240, %v5026
  %v5041 = vmul.f32 %v1245, %v5026
  %v5042 = vadd.f32 %v4968, %v5028
  %v5043 = vadd.f32 %v4971, %v5029
  %v5044 = vadd.f32 %v4976, %v5030
  %v5045 = vadd.f32 %v4979, %v5031
  %v5046 = vadd.f32 %v4984, %v5032
  %v5047 = vadd.f32 %v4987, %v5033
  %v5048 = vadd.f32 %v4992, %v5034
  %v5049 = vadd.f32 %v4995, %v5035
  %v5050 = vadd.f32 %v5000, %v5036
  %v5051 = vadd.f32 %v5003, %v5037
  %v5052 = vadd.f32 %v5008, %v5038
  %v5053 = vadd.f32 %v5011, %v5039
  %v5054 = vadd.f32 %v5016, %v5040
  %v5055 = vadd.f32 %v5019, %v5041
  %v5056 = vlaneseq
  %v5057 = vshrl.u32 %v5056, 7
  %v5058 = vsub.s32 0, %v5057
  %v5059 = vrot.slane %v284, %v5058
  %v5060 = vmul.f32 %v1284, %v5059
  %v5061 = vmul.f32 %v1289, %v5059
  %v5062 = vmul.f32 %v1294, %v5059
  %v5063 = vmul.f32 %v1299, %v5059
  %v5064 = vmul.f32 %v1304, %v5059
  %v5065 = vmul.f32 %v1309, %v5059
  %v5066 = vmul.f32 %v1314, %v5059
  %v5067 = vmul.f32 %v1319, %v5059
  %v5068 = vmul.f32 %v1324, %v5059
  %v5069 = vmul.f32 %v1329, %v5059
  %v5070 = vmul.f32 %v1334, %v5059
  %v5071 = vmul.f32 %v1339, %v5059
  %v5072 = vmul.f32 %v1344, %v5059
  %v5073 = vmul.f32 %v1349, %v5059
  %v5074 = vlaneseq
  %v5075 = vshrl.u32 %v5074, 7
  %v5076 = vsub.s32 1, %v5075
  %v5077 = vrot.slane %v284, %v5076
  %v5078 = vmul.f32 %v1371, %v5077
  %v5079 = vmul.f32 %v1375, %v5077
  %v5080 = vmul.f32 %v1379, %v5077
  %v5081 = vmul.f32 %v1383, %v5077
  %v5082 = vmul.f32 %v1387, %v5077
  %v5083 = vmul.f32 %v1391, %v5077
  %v5084 = vmul.f32 %v1395, %v5077
  %v5085 = vmul.f32 %v1399, %v5077
  %v5086 = vmul.f32 %v1403, %v5077
  %v5087 = vmul.f32 %v1407, %v5077
  %v5088 = vmul.f32 %v1411, %v5077
  %v5089 = vmul.f32 %v1415, %v5077
  %v5090 = vmul.f32 %v1419, %v5077
  %v5091 = vmul.f32 %v1423, %v5077
  %v5092 = vadd.f32 %v5060, %v5078
  %v5093 = vadd.f32 %v5061, %v5079
  %v5094 = vadd.f32 %v5062, %v5080
  %v5095 = vadd.f32 %v5063, %v5081
  %v5096 = vadd.f32 %v5064, %v5082
  %v5097 = vadd.f32 %v5065, %v5083
  %v5098 = vadd.f32 %v5066, %v5084
  %v5099 = vadd.f32 %v5067, %v5085
  %v5100 = vadd.f32 %v5068, %v5086
  %v5101 = vadd.f32 %v5069, %v5087
  %v5102 = vadd.f32 %v5070, %v5088
  %v5103 = vadd.f32 %v5071, %v5089
  %v5104 = vadd.f32 %v5072, %v5090
  %v5105 = vadd.f32 %v5073, %v5091
  %v5106 = vadd.f32 %v5042, %v5092
  %v5107 = vadd.f32 %v5043, %v5093
  %v5108 = vadd.f32 %v5044, %v5094
  %v5109 = vadd.f32 %v5045, %v5095
  %v5110 = vadd.f32 %v5046, %v5096
  %v5111 = vadd.f32 %v5047, %v5097
  %v5112 = vadd.f32 %v5048, %v5098
  %v5113 = vadd.f32 %v5049, %v5099
  %v5114 = vadd.f32 %v5050, %v5100
  %v5115 = vadd.f32 %v5051, %v5101
  %v5116 = vadd.f32 %v5052, %v5102
  %v5117 = vadd.f32 %v5053, %v5103
  %v5118 = vadd.f32 %v5054, %v5104
  %v5119 = vadd.f32 %v5055, %v5105
  %v5121 = vlaneseq
  %v5122 = vshrl.u32 %v5121, 7
  %v5123 = vsub.s32 0, %v5122
  %v5124 = vrot.slane %v288, %v5123
  %v5126 = vadd.f32 %v5106, %v5124
  %v5127 = vadd.f32 %v5107, %v5124
  %v5128 = vadd.f32 %v5108, %v5124
  %v5129 = vadd.f32 %v5109, %v5124
  %v5130 = vadd.f32 %v5110, %v5124
  %v5131 = vadd.f32 %v5111, %v5124
  %v5132 = vadd.f32 %v5112, %v5124
  %v5133 = vadd.f32 %v5113, %v5124
  %v5134 = vadd.f32 %v5114, %v5124
  %v5135 = vadd.f32 %v5115, %v5124
  %v5136 = vadd.f32 %v5116, %v5124
  %v5137 = vadd.f32 %v5117, %v5124
  %v5138 = vadd.f32 %v5118, %v5124
  %v5139 = vadd.f32 %v5119, %v5124
  %v5140 = vxor.u32 %v5126, 2147483648
  %v5141 = vxor.u32 %v5127, 2147483648
  %v5142 = vxor.u32 %v5128, 2147483648
  %v5143 = vxor.u32 %v5129, 2147483648
  %v5144 = vxor.u32 %v5130, 2147483648
  %v5145 = vxor.u32 %v5131, 2147483648
  %v5146 = vxor.u32 %v5132, 2147483648
  %v5147 = vxor.u32 %v5133, 2147483648
  %v5148 = vxor.u32 %v5134, 2147483648
  %v5149 = vxor.u32 %v5135, 2147483648
  %v5150 = vxor.u32 %v5136, 2147483648
  %v5151 = vxor.u32 %v5137, 2147483648
  %v5152 = vxor.u32 %v5138, 2147483648
  %v5153 = vxor.u32 %v5139, 2147483648
  %v5154 = vmul.f32 %v5140, 1.442695
  %v5155 = vpow.pop %v5154
  %v5156 = vmul.f32 %v5141, 1.442695
  %v5157 = vpow.pop %v5156
  %v5158 = vmul.f32 %v5142, 1.442695
  %v5159 = vpow.pop %v5158
  %v5160 = vmul.f32 %v5143, 1.442695
  %v5161 = vpow.pop %v5160
  %v5162 = vmul.f32 %v5144, 1.442695
  %v5163 = vpow.pop %v5162
  %v5164 = vmul.f32 %v5145, 1.442695
  %v5165 = vpow.pop %v5164
  %v5166 = vmul.f32 %v5146, 1.442695
  %v5167 = vpow.pop %v5166
  %v5168 = vmul.f32 %v5147, 1.442695
  %v5169 = vpow.pop %v5168
  %v5170 = vmul.f32 %v5148, 1.442695
  %v5171 = vpow.pop %v5170
  %v5172 = vmul.f32 %v5149, 1.442695
  %v5173 = vpow.pop %v5172
  %v5174 = vmul.f32 %v5150, 1.442695
  %v5175 = vpow.pop %v5174
  %v5176 = vmul.f32 %v5151, 1.442695
  %v5177 = vpow.pop %v5176
  %v5178 = vmul.f32 %v5152, 1.442695
  %v5179 = vpow.pop %v5178
  %v5180 = vmul.f32 %v5153, 1.442695
  %v5181 = vpow.pop %v5180
  %v5182 = vadd.f32 %v5155, 1.0
  %v5183 = vadd.f32 %v5157, 1.0
  %v5184 = vadd.f32 %v5159, 1.0
  %v5185 = vadd.f32 %v5161, 1.0
  %v5186 = vadd.f32 %v5163, 1.0
  %v5187 = vadd.f32 %v5165, 1.0
  %v5188 = vadd.f32 %v5167, 1.0
  %v5189 = vadd.f32 %v5169, 1.0
  %v5190 = vadd.f32 %v5171, 1.0
  %v5191 = vadd.f32 %v5173, 1.0
  %v5192 = vadd.f32 %v5175, 1.0
  %v5193 = vadd.f32 %v5177, 1.0
  %v5194 = vadd.f32 %v5179, 1.0
  %v5195 = vadd.f32 %v5181, 1.0
  %v5196 = vrcp.pop %v5182
  %v5197 = vmul.f32 1.0, %v5196
  %v5198 = vrcp.pop %v5183
  %v5199 = vmul.f32 1.0, %v5198
  %v5200 = vrcp.pop %v5184
  %v5201 = vmul.f32 1.0, %v5200
  %v5202 = vrcp.pop %v5185
  %v5203 = vmul.f32 1.0, %v5202
  %v5204 = vrcp.pop %v5186
  %v5205 = vmul.f32 1.0, %v5204
  %v5206 = vrcp.pop %v5187
  %v5207 = vmul.f32 1.0, %v5206
  %v5208 = vrcp.pop %v5188
  %v5209 = vmul.f32 1.0, %v5208
  %v5210 = vrcp.pop %v5189
  %v5211 = vmul.f32 1.0, %v5210
  %v5212 = vrcp.pop %v5190
  %v5213 = vmul.f32 1.0, %v5212
  %v5214 = vrcp.pop %v5191
  %v5215 = vmul.f32 1.0, %v5214
  %v5216 = vrcp.pop %v5192
  %v5217 = vmul.f32 1.0, %v5216
  %v5218 = vrcp.pop %v5193
  %v5219 = vmul.f32 1.0, %v5218
  %v5220 = vrcp.pop %v5194
  %v5221 = vmul.f32 1.0, %v5220
  %v5222 = vrcp.pop %v5195
  %v5223 = vmul.f32 1.0, %v5222
  %v5224 = vmul.f32 %v5126, %v5197
  %v5225 = vmul.f32 %v5127, %v5199
  %v5226 = vmul.f32 %v5128, %v5201
  %v5227 = vmul.f32 %v5129, %v5203
  %v5228 = vmul.f32 %v5130, %v5205
  %v5229 = vmul.f32 %v5131, %v5207
  %v5230 = vmul.f32 %v5132, %v5209
  %v5231 = vmul.f32 %v5133, %v5211
  %v5232 = vmul.f32 %v5134, %v5213
  %v5233 = vmul.f32 %v5135, %v5215
  %v5234 = vmul.f32 %v5136, %v5217
  %v5235 = vmul.f32 %v5137, %v5219
  %v5236 = vmul.f32 %v5138, %v5221
  %v5237 = vmul.f32 %v5139, %v5223
  %v5238 = vpack.c.bf16 %v5225, %v5224
  %v5239 = vpack.c.bf16 %v5227, %v5226
  %v5240 = vpack.c.bf16 %v5229, %v5228
  %v5241 = vpack.c.bf16 %v5231, %v5230
  %v5242 = vpack.c.bf16 %v5233, %v5232
  %v5243 = vpack.c.bf16 %v5235, %v5234
  %v5244 = vpack.c.bf16 %v5237, %v5236
  %v5246 = vlaneseq
  %v5247 = vshrl.u32 %v5246, 7
  %v5248 = vsub.s32 0, %v5247
  %v5249 = vrot.slane %v308, %v5248
  %v5255 = vunpack.c.l.b16 %v301
  %v5256 = vunpack.c.l.b16 %v302
  %v5257 = vunpack.c.l.b16 %v303
  %v5258 = vunpack.c.l.b16 %v304
  %v5259 = vpack.c.b16 %v5256, %v5255
  %v5260 = vpack.c.b16 %v5258, %v5257
  %v5264 = vsel %vm944, %v5238, 0
  %v5267 = vsel %vm944, %v5239, 0
  %v5270 = vsel %vm944, %v5240, 0
  %v5273 = vsel %vm944, %v5241, 0
  %v5276 = vsel %vm944, %v5242, 0
  %v5279 = vsel %vm944, %v5243, 0
  %v5282 = vsel %vm944, %v5244, 0
  %5284 = vmatprep.subr.bf16.mxu0 0
  %5285 = vmatpush1.bf16.msra.mxu0 %v5259
  %5286 = vmatprep.subr.bf16.mxu0 0
  %5287 = vmatpush1.bf16.msra.mxu0 %v5260
  %5288 = vmatprep.subr.bf16.mxu0 0
  %5289 = vmatpush1.bf16.msra.mxu0 0
  %5290 = vmatprep.subr.bf16.mxu0 0
  %5291 = vmatpush1.bf16.msra.mxu0 0
  %5292 = vmatprep.subr.bf16.mxu0 0
  %5293 = vmatpush1.bf16.msra.mxu0 0
  %5294 = vmatprep.subr.bf16.mxu0 0
  %5295 = vmatpush1.bf16.msra.mxu0 0
  %5296 = vmatprep.subr.bf16.mxu0 0
  %5297 = vmatpush1.bf16.msra.mxu0 0
  %5298 = vmatprep.subr.bf16.mxu0 0
  %5299 = vmatpush1.bf16.msra.mxu0 0
  %5300 = vmatprep.subr.bf16.mxu0 0
  %5301 = vmatpush1.bf16.msra.mxu0 0
  %5302 = vmatprep.subr.bf16.mxu0 0
  %5303 = vmatpush1.bf16.msra.mxu0 0
  %5304 = vmatprep.subr.bf16.mxu0 0
  %5305 = vmatpush1.bf16.msra.mxu0 0
  %5306 = vmatprep.subr.bf16.mxu0 0
  %5307 = vmatpush1.bf16.msra.mxu0 0
  %5308 = vmatprep.subr.bf16.mxu0 0
  %5309 = vmatpush1.bf16.msra.mxu0 0
  %5310 = vmatprep.subr.bf16.mxu0 0
  %5311 = vmatpush1.bf16.msra.mxu0 0
  %5312 = vmatprep.subr.bf16.mxu0 0
  %5313 = vmatpush1.bf16.msra.mxu0 0
  %5314 = vmatprep.subr.bf16.mxu0 0
  %5315 = vmatpush1.bf16.msra.mxu0 0
  %5316 = vmatprep.mubr.bf16.mxu0 0
  %5317 = vmatmul.mubr.bf16.gmra.mrb[0].mxu0 %v5264
  %v5318 = vpop.f32.mrb[0].mxu0
  %v5319 = vadd.f32 %v5249, %v5318
  %v5320 = vpop.f32.mrb[0].mxu0
  %v5321 = vpop.f32.mrb[0].mxu0
  %v5322 = vadd.f32 %v5249, %v5321
  %v5323 = vpop.f32.mrb[0].mxu0
  %5324 = vmatprep.mubr.bf16.mxu0 0
  %5325 = vmatmul.mubr.bf16.gmra.mrb[0].mxu0 %v5267
  %v5326 = vpop.f32.mrb[0].mxu0
  %v5327 = vadd.f32 %v5249, %v5326
  %v5328 = vpop.f32.mrb[0].mxu0
  %v5329 = vpop.f32.mrb[0].mxu0
  %v5330 = vadd.f32 %v5249, %v5329
  %v5331 = vpop.f32.mrb[0].mxu0
  %5332 = vmatprep.mubr.bf16.mxu0 0
  %5333 = vmatmul.mubr.bf16.gmra.mrb[0].mxu0 %v5270
  %v5334 = vpop.f32.mrb[0].mxu0
  %v5335 = vadd.f32 %v5249, %v5334
  %v5336 = vpop.f32.mrb[0].mxu0
  %v5337 = vpop.f32.mrb[0].mxu0
  %v5338 = vadd.f32 %v5249, %v5337
  %v5339 = vpop.f32.mrb[0].mxu0
  %5340 = vmatprep.mubr.bf16.mxu0 0
  %5341 = vmatmul.mubr.bf16.gmra.mrb[0].mxu0 %v5273
  %v5342 = vpop.f32.mrb[0].mxu0
  %v5343 = vadd.f32 %v5249, %v5342
  %v5344 = vpop.f32.mrb[0].mxu0
  %v5345 = vpop.f32.mrb[0].mxu0
  %v5346 = vadd.f32 %v5249, %v5345
  %v5347 = vpop.f32.mrb[0].mxu0
  %5348 = vmatprep.mubr.bf16.mxu0 0
  %5349 = vmatmul.mubr.bf16.gmra.mrb[0].mxu0 %v5276
  %v5350 = vpop.f32.mrb[0].mxu0
  %v5351 = vadd.f32 %v5249, %v5350
  %v5352 = vpop.f32.mrb[0].mxu0
  %v5353 = vpop.f32.mrb[0].mxu0
  %v5354 = vadd.f32 %v5249, %v5353
  %v5355 = vpop.f32.mrb[0].mxu0
  %5356 = vmatprep.mubr.bf16.mxu0 0
  %5357 = vmatmul.mubr.bf16.gmra.mrb[0].mxu0 %v5279
  %v5358 = vpop.f32.mrb[0].mxu0
  %v5359 = vadd.f32 %v5249, %v5358
  %v5360 = vpop.f32.mrb[0].mxu0
  %v5361 = vpop.f32.mrb[0].mxu0
  %v5362 = vadd.f32 %v5249, %v5361
  %v5363 = vpop.f32.mrb[0].mxu0
  %5364 = vmatprep.mubr.bf16.mxu0 0
  %5365 = vmatmul.mubr.bf16.gmra.mrb[0].mxu0 %v5282
  %v5366 = vpop.f32.mrb[0].mxu0
  %v5367 = vadd.f32 %v5249, %v5366
  %v5368 = vpop.f32.mrb[0].mxu0
  %v5369 = vpop.f32.mrb[0].mxu0
  %v5370 = vadd.f32 %v5249, %v5369
  %v5371 = vpop.f32.mrb[0].mxu0
  %5372 = vdwg.mxu0
  %v5373 = vxor.u32 %v5319, 2147483648
  %v5374 = vxor.u32 %v5322, 2147483648
  %v5375 = vxor.u32 %v5327, 2147483648
  %v5376 = vxor.u32 %v5330, 2147483648
  %v5377 = vxor.u32 %v5335, 2147483648
  %v5378 = vxor.u32 %v5338, 2147483648
  %v5379 = vxor.u32 %v5343, 2147483648
  %v5380 = vxor.u32 %v5346, 2147483648
  %v5381 = vxor.u32 %v5351, 2147483648
  %v5382 = vxor.u32 %v5354, 2147483648
  %v5383 = vxor.u32 %v5359, 2147483648
  %v5384 = vxor.u32 %v5362, 2147483648
  %v5385 = vxor.u32 %v5367, 2147483648
  %v5386 = vxor.u32 %v5370, 2147483648
  %v5387 = vmul.f32 %v5373, 1.442695
  %v5388 = vpow.pop %v5387
  %v5389 = vmul.f32 %v5374, 1.442695
  %v5390 = vpow.pop %v5389
  %v5391 = vmul.f32 %v5375, 1.442695
  %v5392 = vpow.pop %v5391
  %v5393 = vmul.f32 %v5376, 1.442695
  %v5394 = vpow.pop %v5393
  %v5395 = vmul.f32 %v5377, 1.442695
  %v5396 = vpow.pop %v5395
  %v5397 = vmul.f32 %v5378, 1.442695
  %v5398 = vpow.pop %v5397
  %v5399 = vmul.f32 %v5379, 1.442695
  %v5400 = vpow.pop %v5399
  %v5401 = vmul.f32 %v5380, 1.442695
  %v5402 = vpow.pop %v5401
  %v5403 = vmul.f32 %v5381, 1.442695
  %v5404 = vpow.pop %v5403
  %v5405 = vmul.f32 %v5382, 1.442695
  %v5406 = vpow.pop %v5405
  %v5407 = vmul.f32 %v5383, 1.442695
  %v5408 = vpow.pop %v5407
  %v5409 = vmul.f32 %v5384, 1.442695
  %v5410 = vpow.pop %v5409
  %v5411 = vmul.f32 %v5385, 1.442695
  %v5412 = vpow.pop %v5411
  %v5413 = vmul.f32 %v5386, 1.442695
  %v5414 = vpow.pop %v5413
  %v5415 = vadd.f32 %v5388, 1.0
  %v5416 = vadd.f32 %v5390, 1.0
  %v5417 = vadd.f32 %v5392, 1.0
  %v5418 = vadd.f32 %v5394, 1.0
  %v5419 = vadd.f32 %v5396, 1.0
  %v5420 = vadd.f32 %v5398, 1.0
  %v5421 = vadd.f32 %v5400, 1.0
  %v5422 = vadd.f32 %v5402, 1.0
  %v5423 = vadd.f32 %v5404, 1.0
  %v5424 = vadd.f32 %v5406, 1.0
  %v5425 = vadd.f32 %v5408, 1.0
  %v5426 = vadd.f32 %v5410, 1.0
  %v5427 = vadd.f32 %v5412, 1.0
  %v5428 = vadd.f32 %v5414, 1.0
  %v5429 = vrcp.pop %v5415
  %v5430 = vmul.f32 1.0, %v5429
  %v5431 = vrcp.pop %v5416
  %v5432 = vmul.f32 1.0, %v5431
  %v5433 = vrcp.pop %v5417
  %v5434 = vmul.f32 1.0, %v5433
  %v5435 = vrcp.pop %v5418
  %v5436 = vmul.f32 1.0, %v5435
  %v5437 = vrcp.pop %v5419
  %v5438 = vmul.f32 1.0, %v5437
  %v5439 = vrcp.pop %v5420
  %v5440 = vmul.f32 1.0, %v5439
  %v5441 = vrcp.pop %v5421
  %v5442 = vmul.f32 1.0, %v5441
  %v5443 = vrcp.pop %v5422
  %v5444 = vmul.f32 1.0, %v5443
  %v5445 = vrcp.pop %v5423
  %v5446 = vmul.f32 1.0, %v5445
  %v5447 = vrcp.pop %v5424
  %v5448 = vmul.f32 1.0, %v5447
  %v5449 = vrcp.pop %v5425
  %v5450 = vmul.f32 1.0, %v5449
  %v5451 = vrcp.pop %v5426
  %v5452 = vmul.f32 1.0, %v5451
  %v5453 = vrcp.pop %v5427
  %v5454 = vmul.f32 1.0, %v5453
  %v5455 = vrcp.pop %v5428
  %v5456 = vmul.f32 1.0, %v5455
  %v5457 = vmul.f32 %v5319, %v5430
  %v5458 = vmul.f32 %v5322, %v5432
  %v5459 = vmul.f32 %v5327, %v5434
  %v5460 = vmul.f32 %v5330, %v5436
  %v5461 = vmul.f32 %v5335, %v5438
  %v5462 = vmul.f32 %v5338, %v5440
  %v5463 = vmul.f32 %v5343, %v5442
  %v5464 = vmul.f32 %v5346, %v5444
  %v5465 = vmul.f32 %v5351, %v5446
  %v5466 = vmul.f32 %v5354, %v5448
  %v5467 = vmul.f32 %v5359, %v5450
  %v5468 = vmul.f32 %v5362, %v5452
  %v5469 = vmul.f32 %v5367, %v5454
  %v5470 = vmul.f32 %v5370, %v5456
  %v5471 = vmul.f32 %v5457, %v1825
  %v5472 = vmul.f32 %v5458, %v1830
  %v5473 = vmul.f32 %v5459, %v1835
  %v5474 = vmul.f32 %v5460, %v1840
  %v5475 = vmul.f32 %v5461, %v1845
  %v5476 = vmul.f32 %v5462, %v1850
  %v5477 = vmul.f32 %v5463, %v1855
  %v5478 = vmul.f32 %v5464, %v1860
  %v5479 = vmul.f32 %v5465, %v1865
  %v5480 = vmul.f32 %v5466, %v1870
  %v5481 = vmul.f32 %v5467, %v1875
  %v5482 = vmul.f32 %v5468, %v1880
  %v5483 = vmul.f32 %v5469, %v1885
  %v5484 = vmul.f32 %v5470, %v1890
  %v5485 = vpack.c.bf16 %v5472, %v5471
  %v5486 = vpack.c.bf16 %v5474, %v5473
  %v5487 = vpack.c.bf16 %v5476, %v5475
  %v5488 = vpack.c.bf16 %v5478, %v5477
  %v5489 = vpack.c.bf16 %v5480, %v5479
  %v5490 = vpack.c.bf16 %v5482, %v5481
  %v5491 = vpack.c.bf16 %v5484, %v5483
  %5492 = vmatprep.subr.bf16.mxu0 0
  %5493 = vmatpush1.bf16.msra.mxu0 %v5485
  %5494 = vmatprep.subr.bf16.mxu0 0
  %5495 = vmatpush1.bf16.msra.mxu0 %v5486
  %5496 = vmatprep.subr.bf16.mxu0 0
  %5497 = vmatpush1.bf16.msra.mxu0 %v5487
  %5498 = vmatprep.subr.bf16.mxu0 0
  %5499 = vmatpush1.bf16.msra.mxu0 %v5488
  %5500 = vmatprep.subr.bf16.mxu0 0
  %5501 = vmatpush1.bf16.msra.mxu0 %v5489
  %5502 = vmatprep.subr.bf16.mxu0 0
  %5503 = vmatpush1.bf16.msra.mxu0 %v5490
  %5504 = vmatprep.subr.bf16.mxu0 0
  %5505 = vmatpush1.bf16.msra.mxu0 %v5491
  %5506 = vmatprep.subr.bf16.mxu0 0
  %5507 = vmatpush1.bf16.msra.mxu0 0
  %5508 = vmatprep.subr.bf16.mxu0 0
  %5509 = vmatpush1.bf16.msra.mxu0 0
  %5510 = vmatprep.subr.bf16.mxu0 0
  %5511 = vmatpush1.bf16.msra.mxu0 0
  %5512 = vmatprep.subr.bf16.mxu0 0
  %5513 = vmatpush1.bf16.msra.mxu0 0
  %5514 = vmatprep.subr.bf16.mxu0 0
  %5515 = vmatpush1.bf16.msra.mxu0 0
  %5516 = vmatprep.subr.bf16.mxu0 0
  %5517 = vmatpush1.bf16.msra.mxu0 0
  %5518 = vmatprep.subr.bf16.mxu0 0
  %5519 = vmatpush1.bf16.msra.mxu0 0
  %5520 = vmatprep.subr.bf16.mxu0 0
  %5521 = vmatpush1.bf16.msra.mxu0 0
  %5522 = vmatprep.subr.bf16.mxu0 0
  %5523 = vmatpush1.bf16.msra.mxu0 0
  %5524 = vmatprep.mubr.bf16.mxu0 0
  %5525 = vmatmul.mubr.bf16.gmra.mrb[0].mxu0 %v1920
  %v5526 = vpop.f32.mrb[0].mxu0
  %v5527 = vadd.f32 0.0, %v5526
  %v5528 = vpop.f32.mrb[0].mxu0
  %v5529 = vpop.f32.mrb[0].mxu0
  %v5530 = vadd.f32 0.0, %v5529
  %v5531 = vpop.f32.mrb[0].mxu0
  %5532 = vdwg.mxu0
  %v5533 = vpack.c.bf16 %v5530, %v5527
  %v5538 = vunpack.c.l.b16 %v337
  %v5539 = vunpack.c.l.b16 %v338
  %v5540 = vunpack.c.l.b16 %v339
  %v5541 = vunpack.c.l.b16 %v340
  %v5542 = vpack.c.b16 %v5539, %v5538
  %v5543 = vpack.c.b16 %v5541, %v5540
  %v5547 = vsel %vm944, %v5533, 0
  %5549 = vmatprep.subr.bf16.mxu0 0
  %5550 = vmatpush1.bf16.msra.mxu0 %v5542
  %5551 = vmatprep.subr.bf16.mxu0 0
  %5552 = vmatpush1.bf16.msra.mxu0 %v5543
  %5553 = vmatprep.subr.bf16.mxu0 0
  %5554 = vmatpush1.bf16.msra.mxu0 0
  %5555 = vmatprep.subr.bf16.mxu0 0
  %5556 = vmatpush1.bf16.msra.mxu0 0
  %5557 = vmatprep.subr.bf16.mxu0 0
  %5558 = vmatpush1.bf16.msra.mxu0 0
  %5559 = vmatprep.subr.bf16.mxu0 0
  %5560 = vmatpush1.bf16.msra.mxu0 0
  %5561 = vmatprep.subr.bf16.mxu0 0
  %5562 = vmatpush1.bf16.msra.mxu0 0
  %5563 = vmatprep.subr.bf16.mxu0 0
  %5564 = vmatpush1.bf16.msra.mxu0 0
  %5565 = vmatprep.subr.bf16.mxu0 0
  %5566 = vmatpush1.bf16.msra.mxu0 0
  %5567 = vmatprep.subr.bf16.mxu0 0
  %5568 = vmatpush1.bf16.msra.mxu0 0
  %5569 = vmatprep.subr.bf16.mxu0 0
  %5570 = vmatpush1.bf16.msra.mxu0 0
  %5571 = vmatprep.subr.bf16.mxu0 0
  %5572 = vmatpush1.bf16.msra.mxu0 0
  %5573 = vmatprep.subr.bf16.mxu0 0
  %5574 = vmatpush1.bf16.msra.mxu0 0
  %5575 = vmatprep.subr.bf16.mxu0 0
  %5576 = vmatpush1.bf16.msra.mxu0 0
  %5577 = vmatprep.subr.bf16.mxu0 0
  %5578 = vmatpush1.bf16.msra.mxu0 0
  %5579 = vmatprep.subr.bf16.mxu0 0
  %5580 = vmatpush1.bf16.msra.mxu0 0
  %5581 = vmatprep.mubr.bf16.mxu0 0
  %5582 = vmatmul.mubr.bf16.gmra.mrb[0].mxu0 %v5547
  %v5583 = vpop.f32.mrb[0].mxu0
  %v5584 = vadd.f32 0.0, %v5583
  %v5585 = vpop.f32.mrb[0].mxu0
  %v5586 = vpop.f32.mrb[0].mxu0
  %v5587 = vadd.f32 0.0, %v5586
  %v5588 = vpop.f32.mrb[0].mxu0
  %5589 = vdwg.mxu0
  %v5594 = vunpack.c.l.b16 %v321
  %v5595 = vunpack.c.l.b16 %v322
  %v5596 = vunpack.c.l.b16 %v323
  %v5597 = vunpack.c.l.b16 %v324
  %v5598 = vpack.c.b16 %v5595, %v5594
  %v5599 = vpack.c.b16 %v5597, %v5596
  %v5603 = vsel %vm944, %v4585, 0
  %5605 = vmatprep.subr.bf16.mxu0 0
  %5606 = vmatpush1.bf16.msra.mxu0 %v5598
  %5607 = vmatprep.subr.bf16.mxu0 0
  %5608 = vmatpush1.bf16.msra.mxu0 %v5599
  %5609 = vmatprep.subr.bf16.mxu0 0
  %5610 = vmatpush1.bf16.msra.mxu0 0
  %5611 = vmatprep.subr.bf16.mxu0 0
  %5612 = vmatpush1.bf16.msra.mxu0 0
  %5613 = vmatprep.subr.bf16.mxu0 0
  %5614 = vmatpush1.bf16.msra.mxu0 0
  %5615 = vmatprep.subr.bf16.mxu0 0
  %5616 = vmatpush1.bf16.msra.mxu0 0
  %5617 = vmatprep.subr.bf16.mxu0 0
  %5618 = vmatpush1.bf16.msra.mxu0 0
  %5619 = vmatprep.subr.bf16.mxu0 0
  %5620 = vmatpush1.bf16.msra.mxu0 0
  %5621 = vmatprep.subr.bf16.mxu0 0
  %5622 = vmatpush1.bf16.msra.mxu0 0
  %5623 = vmatprep.subr.bf16.mxu0 0
  %5624 = vmatpush1.bf16.msra.mxu0 0
  %5625 = vmatprep.subr.bf16.mxu0 0
  %5626 = vmatpush1.bf16.msra.mxu0 0
  %5627 = vmatprep.subr.bf16.mxu0 0
  %5628 = vmatpush1.bf16.msra.mxu0 0
  %5629 = vmatprep.subr.bf16.mxu0 0
  %5630 = vmatpush1.bf16.msra.mxu0 0
  %5631 = vmatprep.subr.bf16.mxu0 0
  %5632 = vmatpush1.bf16.msra.mxu0 0
  %5633 = vmatprep.subr.bf16.mxu0 0
  %5634 = vmatpush1.bf16.msra.mxu0 0
  %5635 = vmatprep.subr.bf16.mxu0 0
  %5636 = vmatpush1.bf16.msra.mxu0 0
  %5637 = vmatprep.mubr.bf16.mxu0 0
  %5638 = vmatmul.mubr.bf16.gmra.mrb[0].mxu0 %v5603
  %v5639 = vpop.f32.mrb[0].mxu0
  %v5640 = vadd.f32 %v5584, %v5639
  %v5641 = vpop.f32.mrb[0].mxu0
  %v5642 = vpop.f32.mrb[0].mxu0
  %v5643 = vadd.f32 %v5587, %v5642
  %v5644 = vpop.f32.mrb[0].mxu0
  %5645 = vdwg.mxu0
  %v5646 = vlaneseq
  %v5647 = vshrl.u32 %v5646, 7
  %v5648 = vsub.s32 0, %v5647
  %v5649 = vrot.slane %v344, %v5648
  %v5650 = vmul.f32 %v541, %v5649
  %v5651 = vmul.f32 %v546, %v5649
  %v5652 = vlaneseq
  %v5653 = vshrl.u32 %v5652, 7
  %v5654 = vsub.s32 1, %v5653
  %v5655 = vrot.slane %v344, %v5654
  %v5656 = vmul.f32 %v556, %v5655
  %v5657 = vmul.f32 %v560, %v5655
  %v5658 = vadd.f32 %v5650, %v5656
  %v5659 = vadd.f32 %v5651, %v5657
  %v5660 = vlaneseq
  %v5661 = vshrl.u32 %v5660, 7
  %v5662 = vsub.s32 2, %v5661
  %v5663 = vrot.slane %v344, %v5662
  %v5664 = vmul.f32 %v572, %v5663
  %v5665 = vmul.f32 %v576, %v5663
  %v5666 = vadd.f32 %v5658, %v5664
  %v5667 = vadd.f32 %v5659, %v5665
  %v5668 = vlaneseq
  %v5669 = vshrl.u32 %v5668, 7
  %v5670 = vsub.s32 3, %v5669
  %v5671 = vrot.slane %v344, %v5670
  %v5672 = vmul.f32 %v588, %v5671
  %v5673 = vmul.f32 %v592, %v5671
  %v5674 = vadd.f32 %v5666, %v5672
  %v5675 = vadd.f32 %v5667, %v5673
  %v5676 = vlaneseq
  %v5677 = vshrl.u32 %v5676, 7
  %v5678 = vsub.s32 4, %v5677
  %v5679 = vrot.slane %v344, %v5678
  %v5680 = vmul.f32 %v604, %v5679
  %v5681 = vmul.f32 %v608, %v5679
  %v5682 = vadd.f32 %v5674, %v5680
  %v5683 = vadd.f32 %v5675, %v5681
  %v5684 = vadd.f32 %v5640, %v5682
  %v5685 = vadd.f32 %v5643, %v5683
  %v5687 = vlaneseq
  %v5688 = vshrl.u32 %v5687, 7
  %v5689 = vsub.s32 0, %v5688
  %v5690 = vrot.slane %v348, %v5689
  %v5692 = vadd.f32 %v5684, %v5690
  %v5693 = vadd.f32 %v5685, %v5690
  %v5694 = vxor.u32 %v5692, 2147483648
  %v5695 = vxor.u32 %v5693, 2147483648
  %v5696 = vmul.f32 %v5694, 1.442695
  %v5697 = vpow.pop %v5696
  %v5698 = vmul.f32 %v5695, 1.442695
  %v5699 = vpow.pop %v5698
  %v5700 = vadd.f32 %v5697, 1.0
  %v5701 = vadd.f32 %v5699, 1.0
  %v5702 = vrcp.pop %v5700
  %v5703 = vmul.f32 1.0, %v5702
  %v5704 = vrcp.pop %v5701
  %v5705 = vmul.f32 1.0, %v5704
  %v5706 = vmul.f32 %v5692, %v5703
  %v5707 = vmul.f32 %v5693, %v5705
  %v5708 = vpack.c.bf16 %v5707, %v5706
  %v5713 = vunpack.c.l.b16 %v361
  %v5714 = vunpack.c.l.b16 %v362
  %v5715 = vunpack.c.l.b16 %v363
  %v5716 = vunpack.c.l.b16 %v364
  %v5717 = vpack.c.b16 %v5714, %v5713
  %v5718 = vpack.c.b16 %v5716, %v5715
  %v5722 = vsel %vm944, %v5708, 0
  %5724 = vmatprep.subr.bf16.mxu0 0
  %5725 = vmatpush1.bf16.msra.mxu0 %v5717
  %5726 = vmatprep.subr.bf16.mxu0 0
  %5727 = vmatpush1.bf16.msra.mxu0 %v5718
  %5728 = vmatprep.subr.bf16.mxu0 0
  %5729 = vmatpush1.bf16.msra.mxu0 0
  %5730 = vmatprep.subr.bf16.mxu0 0
  %5731 = vmatpush1.bf16.msra.mxu0 0
  %5732 = vmatprep.subr.bf16.mxu0 0
  %5733 = vmatpush1.bf16.msra.mxu0 0
  %5734 = vmatprep.subr.bf16.mxu0 0
  %5735 = vmatpush1.bf16.msra.mxu0 0
  %5736 = vmatprep.subr.bf16.mxu0 0
  %5737 = vmatpush1.bf16.msra.mxu0 0
  %5738 = vmatprep.subr.bf16.mxu0 0
  %5739 = vmatpush1.bf16.msra.mxu0 0
  %5740 = vmatprep.subr.bf16.mxu0 0
  %5741 = vmatpush1.bf16.msra.mxu0 0
  %5742 = vmatprep.subr.bf16.mxu0 0
  %5743 = vmatpush1.bf16.msra.mxu0 0
  %5744 = vmatprep.subr.bf16.mxu0 0
  %5745 = vmatpush1.bf16.msra.mxu0 0
  %5746 = vmatprep.subr.bf16.mxu0 0
  %5747 = vmatpush1.bf16.msra.mxu0 0
  %5748 = vmatprep.subr.bf16.mxu0 0
  %5749 = vmatpush1.bf16.msra.mxu0 0
  %5750 = vmatprep.subr.bf16.mxu0 0
  %5751 = vmatpush1.bf16.msra.mxu0 0
  %5752 = vmatprep.subr.bf16.mxu0 0
  %5753 = vmatpush1.bf16.msra.mxu0 0
  %5754 = vmatprep.subr.bf16.mxu0 0
  %5755 = vmatpush1.bf16.msra.mxu0 0
  %5756 = vmatprep.mubr.bf16.mxu0 0
  %5757 = vmatmul.mubr.bf16.gmra.mrb[0].mxu0 %v5722
  %v5758 = vpop.f32.mrb[0].mxu0
  %v5759 = vadd.f32 0.0, %v5758
  %v5760 = vpop.f32.mrb[0].mxu0
  %v5761 = vpop.f32.mrb[0].mxu0
  %v5762 = vadd.f32 0.0, %v5761
  %v5763 = vpop.f32.mrb[0].mxu0
  %5764 = vdwg.mxu0
  %v5765 = vadd.f32 %v4583, %v5759
  %v5766 = vadd.f32 %v4584, %v5762
  %v5768 = vlaneseq
  %v5769 = vshrl.u32 %v5768, 7
  %v5770 = vsub.s32 0, %v5769
  %v5771 = vrot.slane %v368, %v5770
  %v5773 = vadd.f32 %v5765, %v5771
  %v5774 = vadd.f32 %v5766, %v5771
  %v5775 = vpack.c.bf16 %v5774, %v5773
  %v5777 = vlaneseq
  %v5778 = vshrl.u32 %v5777, 7
  %v5779 = vsub.s32 0, %v5778
  %v5780 = vrot.slane %v373, %v5779
  %v5786 = vunpack.c.l.b16 %v369
  %v5787 = vunpack.c.l.b16 %v370
  %v5788 = vunpack.c.l.b16 %v371
  %v5789 = vunpack.c.l.b16 %v372
  %v5790 = vpack.c.b16 %v5787, %v5786
  %v5791 = vpack.c.b16 %v5789, %v5788
  %v5795 = vsel %vm944, %v5775, 0
  %5797 = vmatprep.subr.bf16.mxu0 0
  %5798 = vmatpush1.bf16.msra.mxu0 %v5790
  %5799 = vmatprep.subr.bf16.mxu0 0
  %5800 = vmatpush1.bf16.msra.mxu0 %v5791
  %5801 = vmatprep.subr.bf16.mxu0 0
  %5802 = vmatpush1.bf16.msra.mxu0 0
  %5803 = vmatprep.subr.bf16.mxu0 0
  %5804 = vmatpush1.bf16.msra.mxu0 0
  %5805 = vmatprep.subr.bf16.mxu0 0
  %5806 = vmatpush1.bf16.msra.mxu0 0
  %5807 = vmatprep.subr.bf16.mxu0 0
  %5808 = vmatpush1.bf16.msra.mxu0 0
  %5809 = vmatprep.subr.bf16.mxu0 0
  %5810 = vmatpush1.bf16.msra.mxu0 0
  %5811 = vmatprep.subr.bf16.mxu0 0
  %5812 = vmatpush1.bf16.msra.mxu0 0
  %5813 = vmatprep.subr.bf16.mxu0 0
  %5814 = vmatpush1.bf16.msra.mxu0 0
  %5815 = vmatprep.subr.bf16.mxu0 0
  %5816 = vmatpush1.bf16.msra.mxu0 0
  %5817 = vmatprep.subr.bf16.mxu0 0
  %5818 = vmatpush1.bf16.msra.mxu0 0
  %5819 = vmatprep.subr.bf16.mxu0 0
  %5820 = vmatpush1.bf16.msra.mxu0 0
  %5821 = vmatprep.subr.bf16.mxu0 0
  %5822 = vmatpush1.bf16.msra.mxu0 0
  %5823 = vmatprep.subr.bf16.mxu0 0
  %5824 = vmatpush1.bf16.msra.mxu0 0
  %5825 = vmatprep.subr.bf16.mxu0 0
  %5826 = vmatpush1.bf16.msra.mxu0 0
  %5827 = vmatprep.subr.bf16.mxu0 0
  %5828 = vmatpush1.bf16.msra.mxu0 0
  %5829 = vmatprep.mubr.bf16.mxu0 0
  %5830 = vmatmul.mubr.bf16.gmra.mrb[0].mxu0 %v5795
  %v5831 = vpop.f32.mrb[0].mxu0
  %v5832 = vadd.f32 %v5780, %v5831
  %v5833 = vpop.f32.mrb[0].mxu0
  %v5834 = vpop.f32.mrb[0].mxu0
  %v5835 = vadd.f32 %v5780, %v5834
  %v5836 = vpop.f32.mrb[0].mxu0
  %5837 = vdwg.mxu0
  %v5838 = vxor.u32 %v5832, 2147483648
  %v5839 = vxor.u32 %v5835, 2147483648
  %v5840 = vmul.f32 %v5838, 1.442695
  %v5841 = vpow.pop %v5840
  %v5842 = vmul.f32 %v5839, 1.442695
  %v5843 = vpow.pop %v5842
  %v5844 = vadd.f32 %v5841, 1.0
  %v5845 = vadd.f32 %v5843, 1.0
  %v5846 = vrcp.pop %v5844
  %v5847 = vmul.f32 1.0, %v5846
  %v5848 = vrcp.pop %v5845
  %v5849 = vmul.f32 1.0, %v5848
  %v5850 = vmul.f32 %v5832, %v5847
  %v5851 = vmul.f32 %v5835, %v5849
  %v5852 = vpack.c.bf16 %v5851, %v5850
  %v5854 = vlaneseq
  %v5855 = vshrl.u32 %v5854, 7
  %v5856 = vsub.s32 0, %v5855
  %v5857 = vrot.slane %v378, %v5856
  %v5863 = vunpack.c.l.b16 %v374
  %v5864 = vunpack.c.l.b16 %v375
  %v5865 = vunpack.c.l.b16 %v376
  %v5866 = vunpack.c.l.b16 %v377
  %v5867 = vpack.c.b16 %v5864, %v5863
  %v5868 = vpack.c.b16 %v5866, %v5865
  %v5872 = vsel %vm944, %v5852, 0
  %5874 = vmatprep.subr.bf16.mxu0 0
  %5875 = vmatpush1.bf16.msra.mxu0 %v5867
  %5876 = vmatprep.subr.bf16.mxu0 0
  %5877 = vmatpush1.bf16.msra.mxu0 %v5868
  %5878 = vmatprep.subr.bf16.mxu0 0
  %5879 = vmatpush1.bf16.msra.mxu0 0
  %5880 = vmatprep.subr.bf16.mxu0 0
  %5881 = vmatpush1.bf16.msra.mxu0 0
  %5882 = vmatprep.subr.bf16.mxu0 0
  %5883 = vmatpush1.bf16.msra.mxu0 0
  %5884 = vmatprep.subr.bf16.mxu0 0
  %5885 = vmatpush1.bf16.msra.mxu0 0
  %5886 = vmatprep.subr.bf16.mxu0 0
  %5887 = vmatpush1.bf16.msra.mxu0 0
  %5888 = vmatprep.subr.bf16.mxu0 0
  %5889 = vmatpush1.bf16.msra.mxu0 0
  %5890 = vmatprep.subr.bf16.mxu0 0
  %5891 = vmatpush1.bf16.msra.mxu0 0
  %5892 = vmatprep.subr.bf16.mxu0 0
  %5893 = vmatpush1.bf16.msra.mxu0 0
  %5894 = vmatprep.subr.bf16.mxu0 0
  %5895 = vmatpush1.bf16.msra.mxu0 0
  %5896 = vmatprep.subr.bf16.mxu0 0
  %5897 = vmatpush1.bf16.msra.mxu0 0
  %5898 = vmatprep.subr.bf16.mxu0 0
  %5899 = vmatpush1.bf16.msra.mxu0 0
  %5900 = vmatprep.subr.bf16.mxu0 0
  %5901 = vmatpush1.bf16.msra.mxu0 0
  %5902 = vmatprep.subr.bf16.mxu0 0
  %5903 = vmatpush1.bf16.msra.mxu0 0
  %5904 = vmatprep.subr.bf16.mxu0 0
  %5905 = vmatpush1.bf16.msra.mxu0 0
  %5906 = vmatprep.mubr.bf16.mxu0 0
  %5907 = vmatmul.mubr.bf16.gmra.mrb[0].mxu0 %v5872
  %v5908 = vpop.f32.mrb[0].mxu0
  %v5909 = vadd.f32 %v5857, %v5908
  %v5910 = vpop.f32.mrb[0].mxu0
  %v5911 = vpop.f32.mrb[0].mxu0
  %v5912 = vadd.f32 %v5857, %v5911
  %v5913 = vpop.f32.mrb[0].mxu0
  %5914 = vdwg.mxu0
  %5916 = vset.pattern.permute.xlu0 0
  %5917 = vperm.xlu0 %5916, %v198
  %v5918 = vpop.permute.xlu0 %5917
  %5921 = vset.pattern.permute.xlu0 0
  %5922 = vperm.xlu0 %5921, %v199
  %v5923 = vpop.permute.xlu0 %5922
  %v5925 = vmul.f32 %v5909, %v5918
  %v5926 = vmul.f32 %v5912, %v5923
  %v5927 = vsel %vm537, 1, 0
  %v5928 = vcvt.s32.f32 %v5927
  %v5929 = vpack.c.bf16 %v5928, %v5928
  %v5930 = vpack.c.bf16 %v5926, %v5925
  %v5932 = vsel %vm662, %v5929, 0
  %5934 = vmatprep.subr.bf16.mxu0 0
  %5935 = vmatpush1.bf16.msra.mxu0 %v5930
  %5936 = vmatprep.subr.bf16.mxu0 0
  %5937 = vmatpush1.bf16.msra.mxu0 0
  %5938 = vmatprep.subr.bf16.mxu0 0
  %5939 = vmatpush1.bf16.msra.mxu0 0
  %5940 = vmatprep.subr.bf16.mxu0 0
  %5941 = vmatpush1.bf16.msra.mxu0 0
  %5942 = vmatprep.subr.bf16.mxu0 0
  %5943 = vmatpush1.bf16.msra.mxu0 0
  %5944 = vmatprep.subr.bf16.mxu0 0
  %5945 = vmatpush1.bf16.msra.mxu0 0
  %5946 = vmatprep.subr.bf16.mxu0 0
  %5947 = vmatpush1.bf16.msra.mxu0 0
  %5948 = vmatprep.subr.bf16.mxu0 0
  %5949 = vmatpush1.bf16.msra.mxu0 0
  %5950 = vmatprep.subr.bf16.mxu0 0
  %5951 = vmatpush1.bf16.msra.mxu0 0
  %5952 = vmatprep.subr.bf16.mxu0 0
  %5953 = vmatpush1.bf16.msra.mxu0 0
  %5954 = vmatprep.subr.bf16.mxu0 0
  %5955 = vmatpush1.bf16.msra.mxu0 0
  %5956 = vmatprep.subr.bf16.mxu0 0
  %5957 = vmatpush1.bf16.msra.mxu0 0
  %5958 = vmatprep.subr.bf16.mxu0 0
  %5959 = vmatpush1.bf16.msra.mxu0 0
  %5960 = vmatprep.subr.bf16.mxu0 0
  %5961 = vmatpush1.bf16.msra.mxu0 0
  %5962 = vmatprep.subr.bf16.mxu0 0
  %5963 = vmatpush1.bf16.msra.mxu0 0
  %5964 = vmatprep.subr.bf16.mxu0 0
  %5965 = vmatpush1.bf16.msra.mxu0 0
  %5966 = vmatprep.mubr.bf16.mxu0 0
  %5967 = vmatmul.mubr.bf16.gmra.mrb[0].mxu0 %v5932
  %v5968 = vpop.f32.mrb[0].mxu0
  %v5969 = vadd.f32 0.0, %v5968
  %v5970 = vpop.f32.mrb[0].mxu0
  %v5971 = vpop.f32.mrb[0].mxu0
  %v5972 = vpop.f32.mrb[0].mxu0
  %5973 = vdwg.mxu0
  %v5974 = vpack.c.bf16 %v5969, %v5969
  %v5976 = vlaneseq
  %v5977 = vshrl.u32 %v5976, 7
  %v5978 = vsub.s32 0, %v5977
  %v5979 = vrot.slane %v393, %v5978
  %v5985 = vunpack.c.l.b16 %v389
  %v5986 = vunpack.c.l.b16 %v390
  %v5987 = vunpack.c.l.b16 %v391
  %v5988 = vunpack.c.l.b16 %v392
  %v5989 = vpack.c.b16 %v5986, %v5985
  %v5990 = vpack.c.b16 %v5988, %v5987
  %v5994 = vsel %vm944, %v5974, 0
  %5996 = vmatprep.subr.bf16.mxu0 0
  %5997 = vmatpush1.bf16.msra.mxu0 %v5989
  %5998 = vmatprep.subr.bf16.mxu0 0
  %5999 = vmatpush1.bf16.msra.mxu0 %v5990
  %6000 = vmatprep.subr.bf16.mxu0 0
  %6001 = vmatpush1.bf16.msra.mxu0 0
  %6002 = vmatprep.subr.bf16.mxu0 0
  %6003 = vmatpush1.bf16.msra.mxu0 0
  %6004 = vmatprep.subr.bf16.mxu0 0
  %6005 = vmatpush1.bf16.msra.mxu0 0
  %6006 = vmatprep.subr.bf16.mxu0 0
  %6007 = vmatpush1.bf16.msra.mxu0 0
  %6008 = vmatprep.subr.bf16.mxu0 0
  %6009 = vmatpush1.bf16.msra.mxu0 0
  %6010 = vmatprep.subr.bf16.mxu0 0
  %6011 = vmatpush1.bf16.msra.mxu0 0
  %6012 = vmatprep.subr.bf16.mxu0 0
  %6013 = vmatpush1.bf16.msra.mxu0 0
  %6014 = vmatprep.subr.bf16.mxu0 0
  %6015 = vmatpush1.bf16.msra.mxu0 0
  %6016 = vmatprep.subr.bf16.mxu0 0
  %6017 = vmatpush1.bf16.msra.mxu0 0
  %6018 = vmatprep.subr.bf16.mxu0 0
  %6019 = vmatpush1.bf16.msra.mxu0 0
  %6020 = vmatprep.subr.bf16.mxu0 0
  %6021 = vmatpush1.bf16.msra.mxu0 0
  %6022 = vmatprep.subr.bf16.mxu0 0
  %6023 = vmatpush1.bf16.msra.mxu0 0
  %6024 = vmatprep.subr.bf16.mxu0 0
  %6025 = vmatpush1.bf16.msra.mxu0 0
  %6026 = vmatprep.subr.bf16.mxu0 0
  %6027 = vmatpush1.bf16.msra.mxu0 0
  %6028 = vmatprep.mubr.bf16.mxu0 0
  %6029 = vmatmul.mubr.bf16.gmra.mrb[0].mxu0 %v5994
  %v6030 = vpop.f32.mrb[0].mxu0
  %v6031 = vadd.f32 %v5979, %v6030
  %v6032 = vpop.f32.mrb[0].mxu0
  %v6033 = vpop.f32.mrb[0].mxu0
  %v6034 = vpop.f32.mrb[0].mxu0
  %6035 = vdwg.mxu0
  %v6036 = vxor.u32 %v6031, 2147483648
  %v6037 = vmul.f32 %v6036, 1.442695
  %v6038 = vpow.pop %v6037
  %v6039 = vadd.f32 %v6038, 1.0
  %v6040 = vrcp.pop %v6039
  %v6041 = vmul.f32 1.0, %v6040
  %v6042 = vmul.f32 %v6031, %v6041
  %v6043 = vpack.c.bf16 %v6042, %v6042
  %v6045 = vlaneseq
  %v6046 = vshrl.u32 %v6045, 7
  %v6047 = vsub.s32 0, %v6046
  %v6048 = vrot.slane %v398, %v6047
  %v6054 = vunpack.c.l.b16 %v394
  %v6055 = vunpack.c.l.b16 %v395
  %v6056 = vunpack.c.l.b16 %v396
  %v6057 = vunpack.c.l.b16 %v397
  %v6058 = vpack.c.b16 %v6055, %v6054
  %v6059 = vpack.c.b16 %v6057, %v6056
  %v6063 = vsel %vm944, %v6043, 0
  %6065 = vmatprep.subr.bf16.mxu0 0
  %6066 = vmatpush1.bf16.msra.mxu0 %v6058
  %6067 = vmatprep.subr.bf16.mxu0 0
  %6068 = vmatpush1.bf16.msra.mxu0 %v6059
  %6069 = vmatprep.subr.bf16.mxu0 0
  %6070 = vmatpush1.bf16.msra.mxu0 0
  %6071 = vmatprep.subr.bf16.mxu0 0
  %6072 = vmatpush1.bf16.msra.mxu0 0
  %6073 = vmatprep.subr.bf16.mxu0 0
  %6074 = vmatpush1.bf16.msra.mxu0 0
  %6075 = vmatprep.subr.bf16.mxu0 0
  %6076 = vmatpush1.bf16.msra.mxu0 0
  %6077 = vmatprep.subr.bf16.mxu0 0
  %6078 = vmatpush1.bf16.msra.mxu0 0
  %6079 = vmatprep.subr.bf16.mxu0 0
  %6080 = vmatpush1.bf16.msra.mxu0 0
  %6081 = vmatprep.subr.bf16.mxu0 0
  %6082 = vmatpush1.bf16.msra.mxu0 0
  %6083 = vmatprep.subr.bf16.mxu0 0
  %6084 = vmatpush1.bf16.msra.mxu0 0
  %6085 = vmatprep.subr.bf16.mxu0 0
  %6086 = vmatpush1.bf16.msra.mxu0 0
  %6087 = vmatprep.subr.bf16.mxu0 0
  %6088 = vmatpush1.bf16.msra.mxu0 0
  %6089 = vmatprep.subr.bf16.mxu0 0
  %6090 = vmatpush1.bf16.msra.mxu0 0
  %6091 = vmatprep.subr.bf16.mxu0 0
  %6092 = vmatpush1.bf16.msra.mxu0 0
  %6093 = vmatprep.subr.bf16.mxu0 0
  %6094 = vmatpush1.bf16.msra.mxu0 0
  %6095 = vmatprep.subr.bf16.mxu0 0
  %6096 = vmatpush1.bf16.msra.mxu0 0
  %6097 = vmatprep.mubr.bf16.mxu0 0
  %6098 = vmatmul.mubr.bf16.gmra.mrb[0].mxu0 %v6063
  %v6099 = vpop.f32.mrb[0].mxu0
  %v6100 = vadd.f32 %v6048, %v6099
  %v6101 = vpop.f32.mrb[0].mxu0
  %v6102 = vpop.f32.mrb[0].mxu0
  %v6103 = vpop.f32.mrb[0].mxu0
  %6104 = vdwg.mxu0
  %v6106 = vlaneseq
  %v6107 = vshrl.u32 %v6106, 7
  %v6108 = vsub.s32 0, %v6107
  %v6109 = vrot.slane %v383, %v6108
  %v6115 = vunpack.c.l.b16 %v379
  %v6116 = vunpack.c.l.b16 %v380
  %v6117 = vunpack.c.l.b16 %v381
  %v6118 = vunpack.c.l.b16 %v382
  %v6119 = vpack.c.b16 %v6116, %v6115
  %v6120 = vpack.c.b16 %v6118, %v6117
  %6123 = vmatprep.subr.bf16.mxu0 0
  %6124 = vmatpush1.bf16.msra.mxu0 %v6119
  %6125 = vmatprep.subr.bf16.mxu0 0
  %6126 = vmatpush1.bf16.msra.mxu0 %v6120
  %6127 = vmatprep.subr.bf16.mxu0 0
  %6128 = vmatpush1.bf16.msra.mxu0 0
  %6129 = vmatprep.subr.bf16.mxu0 0
  %6130 = vmatpush1.bf16.msra.mxu0 0
  %6131 = vmatprep.subr.bf16.mxu0 0
  %6132 = vmatpush1.bf16.msra.mxu0 0
  %6133 = vmatprep.subr.bf16.mxu0 0
  %6134 = vmatpush1.bf16.msra.mxu0 0
  %6135 = vmatprep.subr.bf16.mxu0 0
  %6136 = vmatpush1.bf16.msra.mxu0 0
  %6137 = vmatprep.subr.bf16.mxu0 0
  %6138 = vmatpush1.bf16.msra.mxu0 0
  %6139 = vmatprep.subr.bf16.mxu0 0
  %6140 = vmatpush1.bf16.msra.mxu0 0
  %6141 = vmatprep.subr.bf16.mxu0 0
  %6142 = vmatpush1.bf16.msra.mxu0 0
  %6143 = vmatprep.subr.bf16.mxu0 0
  %6144 = vmatpush1.bf16.msra.mxu0 0
  %6145 = vmatprep.subr.bf16.mxu0 0
  %6146 = vmatpush1.bf16.msra.mxu0 0
  %6147 = vmatprep.subr.bf16.mxu0 0
  %6148 = vmatpush1.bf16.msra.mxu0 0
  %6149 = vmatprep.subr.bf16.mxu0 0
  %6150 = vmatpush1.bf16.msra.mxu0 0
  %6151 = vmatprep.subr.bf16.mxu0 0
  %6152 = vmatpush1.bf16.msra.mxu0 0
  %6153 = vmatprep.subr.bf16.mxu0 0
  %6154 = vmatpush1.bf16.msra.mxu0 0
  %6155 = vmatprep.mubr.bf16.mxu0 0
  %6156 = vmatmul.mubr.bf16.gmra.mrb[0].mxu0 %v5795
  %v6157 = vpop.f32.mrb[0].mxu0
  %v6158 = vadd.f32 %v6109, %v6157
  %v6159 = vpop.f32.mrb[0].mxu0
  %v6160 = vpop.f32.mrb[0].mxu0
  %v6161 = vadd.f32 %v6109, %v6160
  %v6162 = vpop.f32.mrb[0].mxu0
  %6163 = vdwg.mxu0
  %v6164 = vxor.u32 %v6158, 2147483648
  %v6165 = vxor.u32 %v6161, 2147483648
  %v6166 = vmul.f32 %v6164, 1.442695
  %v6167 = vpow.pop %v6166
  %v6168 = vmul.f32 %v6165, 1.442695
  %v6169 = vpow.pop %v6168
  %v6170 = vadd.f32 %v6167, 1.0
  %v6171 = vadd.f32 %v6169, 1.0
  %v6172 = vrcp.pop %v6170
  %v6173 = vmul.f32 1.0, %v6172
  %v6174 = vrcp.pop %v6171
  %v6175 = vmul.f32 1.0, %v6174
  %v6176 = vmul.f32 %v6158, %v6173
  %v6177 = vmul.f32 %v6161, %v6175
  %v6178 = vpack.c.bf16 %v6177, %v6176
  %v6180 = vlaneseq
  %v6181 = vshrl.u32 %v6180, 7
  %v6182 = vsub.s32 0, %v6181
  %v6183 = vrot.slane %v388, %v6182
  %v6189 = vunpack.c.l.b16 %v384
  %v6190 = vunpack.c.l.b16 %v385
  %v6191 = vunpack.c.l.b16 %v386
  %v6192 = vunpack.c.l.b16 %v387
  %v6193 = vpack.c.b16 %v6190, %v6189
  %v6194 = vpack.c.b16 %v6192, %v6191
  %v6198 = vsel %vm944, %v6178, 0
  %6200 = vmatprep.subr.bf16.mxu0 0
  %6201 = vmatpush1.bf16.msra.mxu0 %v6193
  %6202 = vmatprep.subr.bf16.mxu0 0
  %6203 = vmatpush1.bf16.msra.mxu0 %v6194
  %6204 = vmatprep.subr.bf16.mxu0 0
  %6205 = vmatpush1.bf16.msra.mxu0 0
  %6206 = vmatprep.subr.bf16.mxu0 0
  %6207 = vmatpush1.bf16.msra.mxu0 0
  %6208 = vmatprep.subr.bf16.mxu0 0
  %6209 = vmatpush1.bf16.msra.mxu0 0
  %6210 = vmatprep.subr.bf16.mxu0 0
  %6211 = vmatpush1.bf16.msra.mxu0 0
  %6212 = vmatprep.subr.bf16.mxu0 0
  %6213 = vmatpush1.bf16.msra.mxu0 0
  %6214 = vmatprep.subr.bf16.mxu0 0
  %6215 = vmatpush1.bf16.msra.mxu0 0
  %6216 = vmatprep.subr.bf16.mxu0 0
  %6217 = vmatpush1.bf16.msra.mxu0 0
  %6218 = vmatprep.subr.bf16.mxu0 0
  %6219 = vmatpush1.bf16.msra.mxu0 0
  %6220 = vmatprep.subr.bf16.mxu0 0
  %6221 = vmatpush1.bf16.msra.mxu0 0
  %6222 = vmatprep.subr.bf16.mxu0 0
  %6223 = vmatpush1.bf16.msra.mxu0 0
  %6224 = vmatprep.subr.bf16.mxu0 0
  %6225 = vmatpush1.bf16.msra.mxu0 0
  %6226 = vmatprep.subr.bf16.mxu0 0
  %6227 = vmatpush1.bf16.msra.mxu0 0
  %6228 = vmatprep.subr.bf16.mxu0 0
  %6229 = vmatpush1.bf16.msra.mxu0 0
  %6230 = vmatprep.subr.bf16.mxu0 0
  %6231 = vmatpush1.bf16.msra.mxu0 0
  %6232 = vmatprep.mubr.bf16.mxu0 0
  %6233 = vmatmul.mubr.bf16.gmra.mrb[0].mxu0 %v6198
  %v6234 = vpop.f32.mrb[0].mxu0
  %v6235 = vadd.f32 %v6183, %v6234
  %v6236 = vpop.f32.mrb[0].mxu0
  %v6237 = vpop.f32.mrb[0].mxu0
  %v6238 = vadd.f32 %v6183, %v6237
  %v6239 = vpop.f32.mrb[0].mxu0
  %6240 = vdwg.mxu0
  %v6241 = vmul.f32 %v6235, %v5918
  %v6242 = vmul.f32 %v6238, %v5923
  %v6243 = vpack.c.bf16 %v6242, %v6241
  %v6245 = vlaneseq
  %v6246 = vshrl.u32 %v6245, 7
  %v6247 = vsub.s32 0, %v6246
  %v6248 = vrot.slane %v403, %v6247
  %v6254 = vunpack.c.l.b16 %v399
  %v6255 = vunpack.c.l.b16 %v400
  %v6256 = vunpack.c.l.b16 %v401
  %v6257 = vunpack.c.l.b16 %v402
  %v6258 = vpack.c.b16 %v6255, %v6254
  %v6259 = vpack.c.b16 %v6257, %v6256
  %v6263 = vsel %vm944, %v6243, 0
  %6265 = vmatprep.subr.bf16.mxu0 0
  %6266 = vmatpush1.bf16.msra.mxu0 %v6258
  %6267 = vmatprep.subr.bf16.mxu0 0
  %6268 = vmatpush1.bf16.msra.mxu0 %v6259
  %6269 = vmatprep.subr.bf16.mxu0 0
  %6270 = vmatpush1.bf16.msra.mxu0 0
  %6271 = vmatprep.subr.bf16.mxu0 0
  %6272 = vmatpush1.bf16.msra.mxu0 0
  %6273 = vmatprep.subr.bf16.mxu0 0
  %6274 = vmatpush1.bf16.msra.mxu0 0
  %6275 = vmatprep.subr.bf16.mxu0 0
  %6276 = vmatpush1.bf16.msra.mxu0 0
  %6277 = vmatprep.subr.bf16.mxu0 0
  %6278 = vmatpush1.bf16.msra.mxu0 0
  %6279 = vmatprep.subr.bf16.mxu0 0
  %6280 = vmatpush1.bf16.msra.mxu0 0
  %6281 = vmatprep.subr.bf16.mxu0 0
  %6282 = vmatpush1.bf16.msra.mxu0 0
  %6283 = vmatprep.subr.bf16.mxu0 0
  %6284 = vmatpush1.bf16.msra.mxu0 0
  %6285 = vmatprep.subr.bf16.mxu0 0
  %6286 = vmatpush1.bf16.msra.mxu0 0
  %6287 = vmatprep.subr.bf16.mxu0 0
  %6288 = vmatpush1.bf16.msra.mxu0 0
  %6289 = vmatprep.subr.bf16.mxu0 0
  %6290 = vmatpush1.bf16.msra.mxu0 0
  %6291 = vmatprep.subr.bf16.mxu0 0
  %6292 = vmatpush1.bf16.msra.mxu0 0
  %6293 = vmatprep.subr.bf16.mxu0 0
  %6294 = vmatpush1.bf16.msra.mxu0 0
  %6295 = vmatprep.subr.bf16.mxu0 0
  %6296 = vmatpush1.bf16.msra.mxu0 0
  %6297 = vmatprep.mubr.bf16.mxu0 0
  %6298 = vmatmul.mubr.bf16.gmra.mrb[0].mxu0 %v6263
  %v6299 = vpop.f32.mrb[0].mxu0
  %v6300 = vadd.f32 %v6248, %v6299
  %v6301 = vpop.f32.mrb[0].mxu0
  %v6302 = vpop.f32.mrb[0].mxu0
  %v6303 = vadd.f32 %v6248, %v6302
  %v6304 = vpop.f32.mrb[0].mxu0
  %6305 = vdwg.mxu0
  %v6306 = vxor.u32 %v6300, 2147483648
  %v6307 = vxor.u32 %v6303, 2147483648
  %v6308 = vmul.f32 %v6306, 1.442695
  %v6309 = vpow.pop %v6308
  %v6310 = vmul.f32 %v6307, 1.442695
  %v6311 = vpow.pop %v6310
  %v6312 = vadd.f32 %v6309, 1.0
  %v6313 = vadd.f32 %v6311, 1.0
  %v6314 = vrcp.pop %v6312
  %v6315 = vmul.f32 1.0, %v6314
  %v6316 = vrcp.pop %v6313
  %v6317 = vmul.f32 1.0, %v6316
  %v6318 = vmul.f32 %v6300, %v6315
  %v6319 = vmul.f32 %v6303, %v6317
  %v6320 = vpack.c.bf16 %v6319, %v6318
  %v6322 = vlaneseq
  %v6323 = vshrl.u32 %v6322, 7
  %v6324 = vsub.s32 0, %v6323
  %v6325 = vrot.slane %v408, %v6324
  %v6331 = vunpack.c.l.b16 %v404
  %v6332 = vunpack.c.l.b16 %v405
  %v6333 = vunpack.c.l.b16 %v406
  %v6334 = vunpack.c.l.b16 %v407
  %v6335 = vpack.c.b16 %v6332, %v6331
  %v6336 = vpack.c.b16 %v6334, %v6333
  %v6340 = vsel %vm944, %v6320, 0
  %6342 = vmatprep.subr.bf16.mxu0 0
  %6343 = vmatpush1.bf16.msra.mxu0 %v6335
  %6344 = vmatprep.subr.bf16.mxu0 0
  %6345 = vmatpush1.bf16.msra.mxu0 %v6336
  %6346 = vmatprep.subr.bf16.mxu0 0
  %6347 = vmatpush1.bf16.msra.mxu0 0
  %6348 = vmatprep.subr.bf16.mxu0 0
  %6349 = vmatpush1.bf16.msra.mxu0 0
  %6350 = vmatprep.subr.bf16.mxu0 0
  %6351 = vmatpush1.bf16.msra.mxu0 0
  %6352 = vmatprep.subr.bf16.mxu0 0
  %6353 = vmatpush1.bf16.msra.mxu0 0
  %6354 = vmatprep.subr.bf16.mxu0 0
  %6355 = vmatpush1.bf16.msra.mxu0 0
  %6356 = vmatprep.subr.bf16.mxu0 0
  %6357 = vmatpush1.bf16.msra.mxu0 0
  %6358 = vmatprep.subr.bf16.mxu0 0
  %6359 = vmatpush1.bf16.msra.mxu0 0
  %6360 = vmatprep.subr.bf16.mxu0 0
  %6361 = vmatpush1.bf16.msra.mxu0 0
  %6362 = vmatprep.subr.bf16.mxu0 0
  %6363 = vmatpush1.bf16.msra.mxu0 0
  %6364 = vmatprep.subr.bf16.mxu0 0
  %6365 = vmatpush1.bf16.msra.mxu0 0
  %6366 = vmatprep.subr.bf16.mxu0 0
  %6367 = vmatpush1.bf16.msra.mxu0 0
  %6368 = vmatprep.subr.bf16.mxu0 0
  %6369 = vmatpush1.bf16.msra.mxu0 0
  %6370 = vmatprep.subr.bf16.mxu0 0
  %6371 = vmatpush1.bf16.msra.mxu0 0
  %6372 = vmatprep.subr.bf16.mxu0 0
  %6373 = vmatpush1.bf16.msra.mxu0 0
  %6374 = vmatprep.mubr.bf16.mxu0 0
  %6375 = vmatmul.mubr.bf16.gmra.mrb[0].mxu0 %v6340
  %v6376 = vpop.f32.mrb[0].mxu0
  %v6377 = vadd.f32 %v6325, %v6376
  %v6378 = vpop.f32.mrb[0].mxu0
  %v6379 = vpop.f32.mrb[0].mxu0
  %v6380 = vadd.f32 %v6325, %v6379
  %v6381 = vpop.f32.mrb[0].mxu0
  %6382 = vdwg.mxu0
  %vm6383 = vcmask 1024
  %6384 = vst.msk [vmem:[%s79] sm:$0x3] %vm6383, %v6100
  %vm6385 = vcmask 23552
  %6386 = vst.msk [vmem:[%s81] sm:$0xff] %vm6385, %v6377
  %6387 = vst.msk [vmem:[%s81 + $0x8] sm:$0xff] %vm6385, %v6380
  // Predicated region
  $region158: #{two_headed_egnn_forward.1} parent=0 // pred_check
    _
  $region159: #{two_headed_egnn_forward.1} parent=0 // pred_check_branch
    %6389 = sbr.rel (0) target = $region161
  $region160: #{two_headed_egnn_forward.1} parent=0 // pred_region
    _
  $region161: #{two_headed_egnn_forward.1} parent=0 // pred_fallthru
    _
  // Predicated region
  $region162: #{two_headed_egnn_forward.1} parent=0 // pred_check
    _
  $region163: #{two_headed_egnn_forward.1} parent=0 // pred_check_branch
    %6391 = sbr.rel (0) target = $region165
  $region164: #{two_headed_egnn_forward.1} parent=0 // pred_region
    _
  $region165: #{two_headed_egnn_forward.1} parent=0 // pred_fallthru
    _
  // Predicated region
  $region166: #{two_headed_egnn_forward.1} parent=0 // pred_check
    _
  $region167: #{two_headed_egnn_forward.1} parent=0 // pred_check_branch
    %6393 = sbr.rel (0) target = $region169
  $region168: #{two_headed_egnn_forward.1} parent=0 // pred_region
    _
  $region169: #{two_headed_egnn_forward.1} parent=0 // pred_fallthru
    _
  // Predicated region
  $region170: #{two_headed_egnn_forward.1} parent=0 // pred_check
    _
  $region171: #{two_headed_egnn_forward.1} parent=0 // pred_check_branch
    %6395 = sbr.rel (0) target = $region173
  $region172: #{two_headed_egnn_forward.1} parent=0 // pred_region
    _
  $region173: #{two_headed_egnn_forward.1} parent=0 // pred_fallthru
    _

</llo_original>
